<compile_context>
chip_gen: v7x
topology: tpu7x:2x2x1
jax: 0.10.0
libtpu: 0.0.40
codegen_flags: <defaults>
</compile_context>

<pallas_src>
from functools import partial

import jax
import jax.numpy as jnp
from jax import lax
from jax.experimental import pallas as pl
from jax.experimental.pallas import tpu as pltpu


def _double_conv_kernel(x_ref, w1_ref, b1_ref, w2_ref, b2_ref, o_ref, mid_ref):
    """Fused (conv3x3 -> BN -> ReLU) x 2 for one batch element / one row tile.

    x_ref:   (H+4, W+2, Cin)     bf16  full zero-padded NHWC image of batch n
    w1_ref:  (9*Cin, Cmid)       bf16  im2col conv1 weights, BN1 scale folded in
    b1_ref:  (1, Cmid)           f32   folded BN1 bias
    w2_ref:  (9, Cmid, Cout)     bf16  per-tap conv2 weights, BN2 scale folded in
    b2_ref:  (1, Cout)           f32   folded BN2 bias
    o_ref:   (Cout, TH*W)        f32   lane-dense NCHW-flat output row tile
    mid_ref: (TH+2, W+2, Cmid)   bf16  scratch: conv1 activation + 1px halo/pad
    """
    W = x_ref.shape[1] - 2
    Cin = x_ref.shape[2]
    THp2, _, Cmid = mid_ref.shape                 # TH + 2
    TH = THp2 - 2
    Cout = o_ref.shape[0]

    t = pl.program_id(1)
    n_t = pl.num_programs(1)
    r0 = pl.multiple_of(t * TH, TH)               # first output row of this tile

    # ---- conv1 over TH+2 halo rows: one fat-K im2col matmul (K = 9*Cin) ----
    # padded-row index of (global conv1 row r0-1+m, tap kh) is r0 + m + kh
    cols1 = [x_ref[pl.ds(r0 + kh, THp2), kw:kw + W, :].reshape(THp2 * W, Cin)
             for kh in range(3) for kw in range(3)]
    im1 = jnp.concatenate(cols1, axis=-1)                       # ((TH+2)*W, 9*Cin) bf16
    y1 = jnp.dot(im1, w1_ref[...], preferred_element_type=jnp.float32)
    y1 = jnp.maximum(y1 + b1_ref[...], 0.0)                     # ((TH+2)*W, Cmid) f32

    # Store the conv1 activation (bf16) into the padded VMEM scratch.
    # Only the 1-px pad columns are zeroed (no full-buffer memset).
    mid_ref[:, 0:1, :] = jnp.zeros((THp2, 1, Cmid), mid_ref.dtype)
    mid_ref[:, W + 1:W + 2, :] = jnp.zeros((THp2, 1, Cmid), mid_ref.dtype)
    mid_ref[:, 1:W + 1, :] = y1.reshape(THp2, W, Cmid).astype(mid_ref.dtype)

    # Halo rows that fall outside the image are conv2's zero padding.
    @pl.when(t == 0)
    def _zero_top_pad_row():
        mid_ref[0:1, :, :] = jnp.zeros((1, W + 2, Cmid), mid_ref.dtype)

    @pl.when(t == n_t - 1)
    def _zero_bottom_pad_row():
        mid_ref[TH + 1:TH + 2, :, :] = jnp.zeros((1, W + 2, Cmid), mid_ref.dtype)

    # ---- conv2 on this row tile: 9 accumulating MXU matmuls (no concat) ----
    acc = jnp.zeros((TH * W, Cout), jnp.float32)
    for kh in range(3):
        for kw in range(3):
            win = mid_ref[kh:kh + TH, kw:kw + W, :].reshape(TH * W, Cmid)
            acc = acc + jnp.dot(win, w2_ref[kh * 3 + kw],
                                preferred_element_type=jnp.float32)
    y2 = jnp.maximum(acc + b2_ref[...], 0.0)                    # (TH*W, Cout) f32

    # Lane-dense store: (Cout, TH*W) with TH*W a multiple of 128 (NCHW-flat).
    o_ref[...] = y2.T.astype(o_ref.dtype)


def _vmem_bytes(th, H, W, Cin, Cmid, Cout):
    """Rough per-core VMEM estimate for row tile `th` (bytes)."""
    x_blk = 2 * (H + 4) * (W + 2) * Cin * 2      # padded bf16 image block, double-buffered
    mid = (th + 2) * (W + 2) * Cmid * 2          # bf16 conv1 scratch
    im1 = (th + 2) * W * 9 * Cin * 2             # conv1 im2col temporary (bf16)
    y1 = (th + 2) * W * Cmid * 4                 # conv1 f32 activation temporary
    acc2 = th * W * Cout * 4                     # conv2 f32 accumulator
    out = 2 * th * W * Cout * 4                  # f32 output block, double-buffered
    wgt = 2 * (9 * Cin * Cmid + 9 * Cmid * Cout) * 2 + 4 * (Cmid + Cout)
    return x_blk + mid + im1 + y1 + acc2 + out + wgt


def _pick_row_tile(H, W, Cin, Cmid, Cout, budget_bytes):
    """Largest row tile TH with H % TH == 0, lane-dense output (TH*W % 128 == 0
    or TH == H), sublane-aligned TH where possible, fitting the VMEM budget."""
    cands = [th for th in range(1, H + 1)
             if H % th == 0 and ((th * W) % 128 == 0 or th == H)]
    aligned = [th for th in cands if th % 8 == 0 or th == H]
    for pool in (aligned, cands):
        fits = [th for th in sorted(pool, reverse=True)
                if _vmem_bytes(th, H, W, Cin, Cmid, Cout) <= budget_bytes]
        if fits:
            return fits[0]
    return min(cands)


def fold_bn_into_conv(w_hwio, gamma, beta, running_mean, running_var, eps=1e-5):
    """Fold inference-mode BN into the conv: scale into W (im2col layout, bf16),
    bias kept separate in f32."""
    scale = gamma / jnp.sqrt(running_var + eps)               # (Cout,)
    bias = beta - running_mean * scale                        # (Cout,)
    k_h, k_w, cin, cout = w_hwio.shape
    w_im2col = (w_hwio * scale[None, None, None, :]).reshape(k_h * k_w * cin, cout)
    return w_im2col.astype(jnp.bfloat16), bias.reshape(1, cout).astype(jnp.float32)


@partial(jax.jit, static_argnames=("budget_bytes",))
def double_conv_forward(x_nchw, params, budget_bytes=40 * 1024 * 1024):
    """Equivalent of DoubleConv.forward on an NCHW input (inference-mode BN)."""
    N, Cin, H, W = x_nchw.shape
    w1, b1 = fold_bn_into_conv(params["w1"], *params["bn1"])
    w2_flat, b2 = fold_bn_into_conv(params["w2"], *params["bn2"])
    Cmid = w1.shape[-1]
    Cout = w2_flat.shape[-1]
    w2 = w2_flat.reshape(9, Cmid, Cout)          # per-tap slices for accumulating dots

    # NCHW -> NHWC bf16 (halves input DMA); 'same' pad done once here:
    # 2 rows top/bottom (conv1 needs a 1-row halo beyond conv2's 1-row halo),
    # 1 col left/right.
    x_nhwc = jnp.transpose(x_nchw, (0, 2, 3, 1)).astype(jnp.bfloat16)
    xp = jnp.pad(x_nhwc, ((0, 0), (2, 2), (1, 1), (0, 0)))

    TH = _pick_row_tile(H, W, Cin, Cmid, Cout, budget_bytes)
    n_t = H // TH
    est = _vmem_bytes(TH, H, W, Cin, Cmid, Cout)
    vmem_limit = int(max(32 * 1024 * 1024, min(96 * 1024 * 1024, est + 16 * 1024 * 1024)))

    out_flat = pl.pallas_call(
        _double_conv_kernel,
        out_shape=jax.ShapeDtypeStruct((N, Cout, H * W), jnp.float32),
        grid=(N, n_t),
        in_specs=[
            pl.BlockSpec((None, H + 4, W + 2, Cin), lambda n, t: (n, 0, 0, 0)),
            pl.BlockSpec((9 * Cin, Cmid), lambda n, t: (0, 0)),
            pl.BlockSpec((1, Cmid), lambda n, t: (0, 0)),
            pl.BlockSpec((9, Cmid, Cout), lambda n, t: (0, 0, 0)),
            pl.BlockSpec((1, Cout), lambda n, t: (0, 0)),
        ],
        out_specs=pl.BlockSpec((None, Cout, TH * W), lambda n, t: (n, 0, t)),
        scratch_shapes=[
            pltpu.VMEM((TH + 2, W + 2, Cmid), jnp.bfloat16),
        ],
        compiler_params=pltpu.CompilerParams(
            # every (n, t) step is now self-contained -> both axes parallel
            dimension_semantics=("parallel", "parallel"),
            vmem_limit_bytes=vmem_limit,
        ),
    )(xp, w1, b1, w2, b2)                        # (N, Cout, H*W), NCHW-flat

    return out_flat.reshape(N, Cout, H, W)


def init_double_conv_params(key, in_channels, out_channels, mid_channels=None):
    if not mid_channels:
        mid_channels = out_channels
    k1, k2, k3, k4 = jax.random.split(key, 4)

    def conv_w(k, cin, cout):
        # torch layout (Cout, Cin, 3, 3) -> HWIO (3, 3, Cin, Cout)
        fan_in = cin * 9
        w_oihw = jax.random.normal(k, (cout, cin, 3, 3), jnp.float32) / jnp.sqrt(fan_in)
        return jnp.transpose(w_oihw, (2, 3, 1, 0))

    def bn_params(k, c):
        ka, kb, kc = jax.random.split(k, 3)
        gamma = 1.0 + 0.1 * jax.random.normal(ka, (c,), jnp.float32)
        beta = 0.1 * jax.random.normal(kb, (c,), jnp.float32)
        running_mean = 0.1 * jax.random.normal(kc, (c,), jnp.float32)
        running_var = jnp.ones((c,), jnp.float32)
        return gamma, beta, running_mean, running_var

    return {
        "w1": conv_w(k1, in_channels, mid_channels),
        "bn1": bn_params(k2, mid_channels),
        "w2": conv_w(k3, mid_channels, out_channels),
        "bn2": bn_params(k4, out_channels),
    }


def _reference_double_conv(x_nchw, params):
    """Pure-JAX reference with the same bf16 rounding points as the kernel."""
    x = jnp.transpose(x_nchw, (0, 2, 3, 1)).astype(jnp.bfloat16).astype(jnp.float32)

    def layer(h, w_key, bn_key):
        w_flat, b = fold_bn_into_conv(params[w_key], *params[bn_key])
        cin, cout = h.shape[-1], w_flat.shape[-1]
        w = w_flat.astype(jnp.float32).reshape(3, 3, cin, cout)
        y = lax.conv_general_dilated(
            h, w, window_strides=(1, 1), padding="SAME",
            dimension_numbers=("NHWC", "HWIO", "NHWC"))
        return jnp.maximum(y + b.reshape(1, 1, 1, cout), 0.0)

    h = layer(x, "w1", "bn1")
    h = h.astype(jnp.bfloat16).astype(jnp.float32)   # kernel feeds conv2 in bf16
    y = layer(h, "w2", "bn2")
    return jnp.transpose(y, (0, 3, 1, 2))


if __name__ == "__main__":
    key = jax.random.PRNGKey(0)
    kx, kp = jax.random.split(key)

    N, C_in, H, W = 2, 4, 16, 16
    C_out = 8

    x = jax.random.normal(kx, (N, C_in, H, W), jnp.float32)
    params = init_double_conv_params(kp, C_in, C_out)
    y_ref = _reference_double_conv(x, params)

    # Default budget -> single row tile per image (TH = H).
    y = double_conv_forward(x, params)
    jax.block_until_ready(y)
    assert y.shape == (N, C_out, H, W), y.shape
    assert bool(jnp.all(y >= 0.0))                      # ReLU output is non-negative
    err = float(jnp.max(jnp.abs(y - y_ref)))
    assert err < 5e-2, f"max |err| (single tile) = {err}"

    # Tight budget -> forces TH = 8 (two row tiles), exercising the halo path.
    y_tiled = double_conv_forward(x, params, budget_bytes=50_000)
    jax.block_until_ready(y_tiled)
    err_t = float(jnp.max(jnp.abs(y_tiled - y_ref)))
    assert err_t < 5e-2, f"max |err| (halo-tiled) = {err_t}"

    print("KERNEL_OK")
</pallas_src>

<mosaic_0001>
module attributes {stable_mosaic.version = 11 : i64} {
  func.func @_double_conv_kernel(%arg0: i32, %arg1: i32, %arg2: memref<1x20x18x4xbf16, #tpu.memory_space<vmem>>, %arg3: memref<36x8xbf16, #tpu.memory_space<vmem>>, %arg4: memref<1x8xf32, #tpu.memory_space<vmem>>, %arg5: memref<9x8x8xbf16, #tpu.memory_space<vmem>>, %arg6: memref<1x8xf32, #tpu.memory_space<vmem>>, %arg7: memref<1x8x256xf32, #tpu.memory_space<vmem>>, %arg8: memref<18x18x8xbf16, #tpu.memory_space<vmem>>) attributes {dimension_semantics = [#tpu.dimension_semantics<parallel>, #tpu.dimension_semantics<parallel>], iteration_bounds = array<i64: 2, 1>, scalar_prefetch = 0 : i64, scratch_operands = 1 : i64, tpu.core_type = #tpu.core_type<tc>, window_params = [{transform_indices = @transform_0, window_bounds = array<i64: 1, 20, 18, 4>}, {pipeline_mode = #tpu.pipeline_mode<synchronous>, transform_indices = @transform_1, window_bounds = array<i64: 36, 8>}, {pipeline_mode = #tpu.pipeline_mode<synchronous>, transform_indices = @transform_2, window_bounds = array<i64: 1, 8>}, {pipeline_mode = #tpu.pipeline_mode<synchronous>, transform_indices = @transform_3, window_bounds = array<i64: 9, 8, 8>}, {pipeline_mode = #tpu.pipeline_mode<synchronous>, transform_indices = @transform_4, window_bounds = array<i64: 1, 8>}, {transform_indices = @transform_5, window_bounds = array<i64: 1, 8, 256>}]} {
    %c16_i32 = arith.constant 16 : i32
    %0 = arith.muli %arg1, %c16_i32 : i32
    %1 = tpu.assume_multiple %0, 16 : i32
    %c0_i32 = arith.constant 0 : i32
    %2 = arith.addi %1, %c0_i32 : i32
    %c0 = arith.constant 0 : index
    %3 = arith.index_cast %2 : i32 to index
    %c0_0 = arith.constant 0 : index
    %c0_1 = arith.constant 0 : index
    %4 = vector.load %arg2[%c0, %3, %c0_0, %c0_1] : memref<1x20x18x4xbf16, #tpu.memory_space<vmem>>, vector<1x18x16x4xbf16>
    %5 = vector.shape_cast %4 : vector<1x18x16x4xbf16> to vector<18x16x4xbf16>
    %6 = vector.shape_cast %5 : vector<18x16x4xbf16> to vector<288x4xbf16>
    %c0_i32_2 = arith.constant 0 : i32
    %7 = arith.addi %1, %c0_i32_2 : i32
    %c0_3 = arith.constant 0 : index
    %8 = arith.index_cast %7 : i32 to index
    %c1 = arith.constant 1 : index
    %c0_4 = arith.constant 0 : index
    %9 = vector.load %arg2[%c0_3, %8, %c1, %c0_4] : memref<1x20x18x4xbf16, #tpu.memory_space<vmem>>, vector<1x18x16x4xbf16>
    %10 = vector.shape_cast %9 : vector<1x18x16x4xbf16> to vector<18x16x4xbf16>
    %11 = vector.shape_cast %10 : vector<18x16x4xbf16> to vector<288x4xbf16>
    %c0_i32_5 = arith.constant 0 : i32
    %12 = arith.addi %1, %c0_i32_5 : i32
    %c0_6 = arith.constant 0 : index
    %13 = arith.index_cast %12 : i32 to index
    %c2 = arith.constant 2 : index
    %c0_7 = arith.constant 0 : index
    %14 = vector.load %arg2[%c0_6, %13, %c2, %c0_7] : memref<1x20x18x4xbf16, #tpu.memory_space<vmem>>, vector<1x18x16x4xbf16>
    %15 = vector.shape_cast %14 : vector<1x18x16x4xbf16> to vector<18x16x4xbf16>
    %16 = vector.shape_cast %15 : vector<18x16x4xbf16> to vector<288x4xbf16>
    %c1_i32 = arith.constant 1 : i32
    %17 = arith.addi %1, %c1_i32 : i32
    %c0_8 = arith.constant 0 : index
    %18 = arith.index_cast %17 : i32 to index
    %c0_9 = arith.constant 0 : index
    %c0_10 = arith.constant 0 : index
    %19 = vector.load %arg2[%c0_8, %18, %c0_9, %c0_10] : memref<1x20x18x4xbf16, #tpu.memory_space<vmem>>, vector<1x18x16x4xbf16>
    %20 = vector.shape_cast %19 : vector<1x18x16x4xbf16> to vector<18x16x4xbf16>
    %21 = vector.shape_cast %20 : vector<18x16x4xbf16> to vector<288x4xbf16>
    %c1_i32_11 = arith.constant 1 : i32
    %22 = arith.addi %1, %c1_i32_11 : i32
    %c0_12 = arith.constant 0 : index
    %23 = arith.index_cast %22 : i32 to index
    %c1_13 = arith.constant 1 : index
    %c0_14 = arith.constant 0 : index
    %24 = vector.load %arg2[%c0_12, %23, %c1_13, %c0_14] : memref<1x20x18x4xbf16, #tpu.memory_space<vmem>>, vector<1x18x16x4xbf16>
    %25 = vector.shape_cast %24 : vector<1x18x16x4xbf16> to vector<18x16x4xbf16>
    %26 = vector.shape_cast %25 : vector<18x16x4xbf16> to vector<288x4xbf16>
    %c1_i32_15 = arith.constant 1 : i32
    %27 = arith.addi %1, %c1_i32_15 : i32
    %c0_16 = arith.constant 0 : index
    %28 = arith.index_cast %27 : i32 to index
    %c2_17 = arith.constant 2 : index
    %c0_18 = arith.constant 0 : index
    %29 = vector.load %arg2[%c0_16, %28, %c2_17, %c0_18] : memref<1x20x18x4xbf16, #tpu.memory_space<vmem>>, vector<1x18x16x4xbf16>
    %30 = vector.shape_cast %29 : vector<1x18x16x4xbf16> to vector<18x16x4xbf16>
    %31 = vector.shape_cast %30 : vector<18x16x4xbf16> to vector<288x4xbf16>
    %c2_i32 = arith.constant 2 : i32
    %32 = arith.addi %1, %c2_i32 : i32
    %c0_19 = arith.constant 0 : index
    %33 = arith.index_cast %32 : i32 to index
    %c0_20 = arith.constant 0 : index
    %c0_21 = arith.constant 0 : index
    %34 = vector.load %arg2[%c0_19, %33, %c0_20, %c0_21] : memref<1x20x18x4xbf16, #tpu.memory_space<vmem>>, vector<1x18x16x4xbf16>
    %35 = vector.shape_cast %34 : vector<1x18x16x4xbf16> to vector<18x16x4xbf16>
    %36 = vector.shape_cast %35 : vector<18x16x4xbf16> to vector<288x4xbf16>
    %c2_i32_22 = arith.constant 2 : i32
    %37 = arith.addi %1, %c2_i32_22 : i32
    %c0_23 = arith.constant 0 : index
    %38 = arith.index_cast %37 : i32 to index
    %c1_24 = arith.constant 1 : index
    %c0_25 = arith.constant 0 : index
    %39 = vector.load %arg2[%c0_23, %38, %c1_24, %c0_25] : memref<1x20x18x4xbf16, #tpu.memory_space<vmem>>, vector<1x18x16x4xbf16>
    %40 = vector.shape_cast %39 : vector<1x18x16x4xbf16> to vector<18x16x4xbf16>
    %41 = vector.shape_cast %40 : vector<18x16x4xbf16> to vector<288x4xbf16>
    %c2_i32_26 = arith.constant 2 : i32
    %42 = arith.addi %1, %c2_i32_26 : i32
    %c0_27 = arith.constant 0 : index
    %43 = arith.index_cast %42 : i32 to index
    %c2_28 = arith.constant 2 : index
    %c0_29 = arith.constant 0 : index
    %44 = vector.load %arg2[%c0_27, %43, %c2_28, %c0_29] : memref<1x20x18x4xbf16, #tpu.memory_space<vmem>>, vector<1x18x16x4xbf16>
    %45 = vector.shape_cast %44 : vector<1x18x16x4xbf16> to vector<18x16x4xbf16>
    %46 = vector.shape_cast %45 : vector<18x16x4xbf16> to vector<288x4xbf16>
    %47 = tpu.concatenate %6, %11, %16, %21, %26, %31, %36, %41, %46 in 1 : vector<288x4xbf16>, vector<288x4xbf16>, vector<288x4xbf16>, vector<288x4xbf16>, vector<288x4xbf16>, vector<288x4xbf16>, vector<288x4xbf16>, vector<288x4xbf16>, vector<288x4xbf16> -> vector<288x36xbf16>
    %c0_30 = arith.constant 0 : index
    %c0_31 = arith.constant 0 : index
    %48 = vector.load %arg3[%c0_30, %c0_31] : memref<36x8xbf16, #tpu.memory_space<vmem>>, vector<36x8xbf16>
    %cst = arith.constant dense<0.000000e+00> : vector<288x8xf32>
    %49 = tpu.matmul %47, %48, %cst {dimension_numbers = #tpu.dot_dimension_numbers<[1], [0], [0], [1], [0, 0, 1, 1], [], []>} : vector<288x36xbf16>, vector<36x8xbf16>, vector<288x8xf32> -> vector<288x8xf32>
    %c0_32 = arith.constant 0 : index
    %c0_33 = arith.constant 0 : index
    %50 = vector.load %arg4[%c0_32, %c0_33] : memref<1x8xf32, #tpu.memory_space<vmem>>, vector<1x8xf32>
    %51 = vector.broadcast %50 : vector<1x8xf32> to vector<288x8xf32>
    %52 = arith.addf %49, %51 : vector<288x8xf32>
    %cst_34 = arith.constant 0.000000e+00 : f32
    %53 = vector.broadcast %cst_34 : f32 to vector<288x8xf32>
    %54 = arith.maximumf %52, %53 : vector<288x8xf32>
    %cst_35 = arith.constant 0.000000e+00 : bf16
    %55 = vector.broadcast %cst_35 : bf16 to vector<18x1x8xbf16>
    %c0_36 = arith.constant 0 : index
    %c0_37 = arith.constant 0 : index
    %c0_38 = arith.constant 0 : index
    %56 = vector.load %arg8[%c0_36, %c0_37, %c0_38] : memref<18x18x8xbf16, #tpu.memory_space<vmem>>, vector<18x1x8xbf16>
    tpu.vector_store %arg8[%c0_36, %c0_37, %c0_38], %55 {strides = array<i32>} : memref<18x18x8xbf16, #tpu.memory_space<vmem>>, vector<18x1x8xbf16>,
    %cst_39 = arith.constant 0.000000e+00 : bf16
    %57 = vector.broadcast %cst_39 : bf16 to vector<18x1x8xbf16>
    %c0_40 = arith.constant 0 : index
    %c17 = arith.constant 17 : index
    %c0_41 = arith.constant 0 : index
    %58 = vector.load %arg8[%c0_40, %c17, %c0_41] : memref<18x18x8xbf16, #tpu.memory_space<vmem>>, vector<18x1x8xbf16>
    tpu.vector_store %arg8[%c0_40, %c17, %c0_41], %57 {strides = array<i32>} : memref<18x18x8xbf16, #tpu.memory_space<vmem>>, vector<18x1x8xbf16>,
    %59 = vector.shape_cast %54 : vector<288x8xf32> to vector<18x16x8xf32>
    %60 = arith.truncf %59 : vector<18x16x8xf32> to vector<18x16x8xbf16>
    %c0_42 = arith.constant 0 : index
    %c1_43 = arith.constant 1 : index
    %c0_44 = arith.constant 0 : index
    %61 = vector.load %arg8[%c0_42, %c1_43, %c0_44] : memref<18x18x8xbf16, #tpu.memory_space<vmem>>, vector<18x16x8xbf16>
    tpu.vector_store %arg8[%c0_42, %c1_43, %c0_44], %60 {strides = array<i32>} : memref<18x18x8xbf16, #tpu.memory_space<vmem>>, vector<18x16x8xbf16>,
    %c0_i32_45 = arith.constant 0 : i32
    %62 = arith.cmpi eq, %arg1, %c0_i32_45 : i32
    %63 = arith.extui %62 : i1 to i32
    %c0_i32_46 = arith.constant 0 : i32
    %64 = arith.cmpi ne, %63, %c0_i32_46 : i32
    scf.if %64 {
      %cst_113 = arith.constant 0.000000e+00 : bf16
      %132 = vector.broadcast %cst_113 : bf16 to vector<1x18x8xbf16>
      %c0_114 = arith.constant 0 : index
      %c0_115 = arith.constant 0 : index
      %c0_116 = arith.constant 0 : index
      %133 = vector.load %arg8[%c0_114, %c0_115, %c0_116] : memref<18x18x8xbf16, #tpu.memory_space<vmem>>, vector<1x18x8xbf16>
      tpu.vector_store %arg8[%c0_114, %c0_115, %c0_116], %132 {strides = array<i32>} : memref<18x18x8xbf16, #tpu.memory_space<vmem>>, vector<1x18x8xbf16>,
    } else {
    }
    %c0_i32_47 = arith.constant 0 : i32
    %65 = arith.cmpi eq, %arg1, %c0_i32_47 : i32
    %66 = arith.extui %65 : i1 to i32
    %c0_i32_48 = arith.constant 0 : i32
    %67 = arith.cmpi ne, %66, %c0_i32_48 : i32
    scf.if %67 {
      %cst_113 = arith.constant 0.000000e+00 : bf16
      %132 = vector.broadcast %cst_113 : bf16 to vector<1x18x8xbf16>
      %c17_114 = arith.constant 17 : index
      %c0_115 = arith.constant 0 : index
      %c0_116 = arith.constant 0 : index
      %133 = vector.load %arg8[%c17_114, %c0_115, %c0_116] : memref<18x18x8xbf16, #tpu.memory_space<vmem>>, vector<1x18x8xbf16>
      tpu.vector_store %arg8[%c17_114, %c0_115, %c0_116], %132 {strides = array<i32>} : memref<18x18x8xbf16, #tpu.memory_space<vmem>>, vector<1x18x8xbf16>,
    } else {
    }
    %cst_49 = arith.constant 0.000000e+00 : f32
    %68 = vector.broadcast %cst_49 : f32 to vector<256x8xf32>
    %c0_50 = arith.constant 0 : index
    %c0_51 = arith.constant 0 : index
    %c0_52 = arith.constant 0 : index
    %69 = vector.load %arg8[%c0_50, %c0_51, %c0_52] : memref<18x18x8xbf16, #tpu.memory_space<vmem>>, vector<16x16x8xbf16>
    %70 = vector.shape_cast %69 : vector<16x16x8xbf16> to vector<256x8xbf16>
    %c0_53 = arith.constant 0 : index
    %c0_54 = arith.constant 0 : index
    %c0_55 = arith.constant 0 : index
    %71 = vector.load %arg5[%c0_53, %c0_54, %c0_55] : memref<9x8x8xbf16, #tpu.memory_space<vmem>>, vector<1x8x8xbf16>
    %72 = vector.shape_cast %71 : vector<1x8x8xbf16> to vector<8x8xbf16>
    %cst_56 = arith.constant dense<0.000000e+00> : vector<256x8xf32>
    %73 = tpu.matmul %70, %72, %cst_56 {dimension_numbers = #tpu.dot_dimension_numbers<[1], [0], [0], [1], [0, 0, 1, 1], [], []>} : vector<256x8xbf16>, vector<8x8xbf16>, vector<256x8xf32> -> vector<256x8xf32>
    %74 = arith.addf %68, %73 : vector<256x8xf32>
    %c0_57 = arith.constant 0 : index
    %c1_58 = arith.constant 1 : index
    %c0_59 = arith.constant 0 : index
    %75 = vector.load %arg8[%c0_57, %c1_58, %c0_59] : memref<18x18x8xbf16, #tpu.memory_space<vmem>>, vector<16x16x8xbf16>
    %76 = vector.shape_cast %75 : vector<16x16x8xbf16> to vector<256x8xbf16>
    %c1_60 = arith.constant 1 : index
    %c0_61 = arith.constant 0 : index
    %c0_62 = arith.constant 0 : index
    %77 = vector.load %arg5[%c1_60, %c0_61, %c0_62] : memref<9x8x8xbf16, #tpu.memory_space<vmem>>, vector<1x8x8xbf16>
    %78 = vector.shape_cast %77 : vector<1x8x8xbf16> to vector<8x8xbf16>
    %cst_63 = arith.constant dense<0.000000e+00> : vector<256x8xf32>
    %79 = tpu.matmul %76, %78, %cst_63 {dimension_numbers = #tpu.dot_dimension_numbers<[1], [0], [0], [1], [0, 0, 1, 1], [], []>} : vector<256x8xbf16>, vector<8x8xbf16>, vector<256x8xf32> -> vector<256x8xf32>
    %80 = arith.addf %74, %79 : vector<256x8xf32>
    %c0_64 = arith.constant 0 : index
    %c2_65 = arith.constant 2 : index
    %c0_66 = arith.constant 0 : index
    %81 = vector.load %arg8[%c0_64, %c2_65, %c0_66] : memref<18x18x8xbf16, #tpu.memory_space<vmem>>, vector<16x16x8xbf16>
    %82 = vector.shape_cast %81 : vector<16x16x8xbf16> to vector<256x8xbf16>
    %c2_67 = arith.constant 2 : index
    %c0_68 = arith.constant 0 : index
    %c0_69 = arith.constant 0 : index
    %83 = vector.load %arg5[%c2_67, %c0_68, %c0_69] : memref<9x8x8xbf16, #tpu.memory_space<vmem>>, vector<1x8x8xbf16>
    %84 = vector.shape_cast %83 : vector<1x8x8xbf16> to vector<8x8xbf16>
    %cst_70 = arith.constant dense<0.000000e+00> : vector<256x8xf32>
    %85 = tpu.matmul %82, %84, %cst_70 {dimension_numbers = #tpu.dot_dimension_numbers<[1], [0], [0], [1], [0, 0, 1, 1], [], []>} : vector<256x8xbf16>, vector<8x8xbf16>, vector<256x8xf32> -> vector<256x8xf32>
    %86 = arith.addf %80, %85 : vector<256x8xf32>
    %c1_71 = arith.constant 1 : index
    %c0_72 = arith.constant 0 : index
    %c0_73 = arith.constant 0 : index
    %87 = vector.load %arg8[%c1_71, %c0_72, %c0_73] : memref<18x18x8xbf16, #tpu.memory_space<vmem>>, vector<16x16x8xbf16>
    %88 = vector.shape_cast %87 : vector<16x16x8xbf16> to vector<256x8xbf16>
    %c3 = arith.constant 3 : index
    %c0_74 = arith.constant 0 : index
    %c0_75 = arith.constant 0 : index
    %89 = vector.load %arg5[%c3, %c0_74, %c0_75] : memref<9x8x8xbf16, #tpu.memory_space<vmem>>, vector<1x8x8xbf16>
    %90 = vector.shape_cast %89 : vector<1x8x8xbf16> to vector<8x8xbf16>
    %cst_76 = arith.constant dense<0.000000e+00> : vector<256x8xf32>
    %91 = tpu.matmul %88, %90, %cst_76 {dimension_numbers = #tpu.dot_dimension_numbers<[1], [0], [0], [1], [0, 0, 1, 1], [], []>} : vector<256x8xbf16>, vector<8x8xbf16>, vector<256x8xf32> -> vector<256x8xf32>
    %92 = arith.addf %86, %91 : vector<256x8xf32>
    %c1_77 = arith.constant 1 : index
    %c1_78 = arith.constant 1 : index
    %c0_79 = arith.constant 0 : index
    %93 = vector.load %arg8[%c1_77, %c1_78, %c0_79] : memref<18x18x8xbf16, #tpu.memory_space<vmem>>, vector<16x16x8xbf16>
    %94 = vector.shape_cast %93 : vector<16x16x8xbf16> to vector<256x8xbf16>
    %c4 = arith.constant 4 : index
    %c0_80 = arith.constant 0 : index
    %c0_81 = arith.constant 0 : index
    %95 = vector.load %arg5[%c4, %c0_80, %c0_81] : memref<9x8x8xbf16, #tpu.memory_space<vmem>>, vector<1x8x8xbf16>
    %96 = vector.shape_cast %95 : vector<1x8x8xbf16> to vector<8x8xbf16>
    %cst_82 = arith.constant dense<0.000000e+00> : vector<256x8xf32>
    %97 = tpu.matmul %94, %96, %cst_82 {dimension_numbers = #tpu.dot_dimension_numbers<[1], [0], [0], [1], [0, 0, 1, 1], [], []>} : vector<256x8xbf16>, vector<8x8xbf16>, vector<256x8xf32> -> vector<256x8xf32>
    %98 = arith.addf %92, %97 : vector<256x8xf32>
    %c1_83 = arith.constant 1 : index
    %c2_84 = arith.constant 2 : index
    %c0_85 = arith.constant 0 : index
    %99 = vector.load %arg8[%c1_83, %c2_84, %c0_85] : memref<18x18x8xbf16, #tpu.memory_space<vmem>>, vector<16x16x8xbf16>
    %100 = vector.shape_cast %99 : vector<16x16x8xbf16> to vector<256x8xbf16>
    %c5 = arith.constant 5 : index
    %c0_86 = arith.constant 0 : index
    %c0_87 = arith.constant 0 : index
    %101 = vector.load %arg5[%c5, %c0_86, %c0_87] : memref<9x8x8xbf16, #tpu.memory_space<vmem>>, vector<1x8x8xbf16>
    %102 = vector.shape_cast %101 : vector<1x8x8xbf16> to vector<8x8xbf16>
    %cst_88 = arith.constant dense<0.000000e+00> : vector<256x8xf32>
    %103 = tpu.matmul %100, %102, %cst_88 {dimension_numbers = #tpu.dot_dimension_numbers<[1], [0], [0], [1], [0, 0, 1, 1], [], []>} : vector<256x8xbf16>, vector<8x8xbf16>, vector<256x8xf32> -> vector<256x8xf32>
    %104 = arith.addf %98, %103 : vector<256x8xf32>
    %c2_89 = arith.constant 2 : index
    %c0_90 = arith.constant 0 : index
    %c0_91 = arith.constant 0 : index
    %105 = vector.load %arg8[%c2_89, %c0_90, %c0_91] : memref<18x18x8xbf16, #tpu.memory_space<vmem>>, vector<16x16x8xbf16>
    %106 = vector.shape_cast %105 : vector<16x16x8xbf16> to vector<256x8xbf16>
    %c6 = arith.constant 6 : index
    %c0_92 = arith.constant 0 : index
    %c0_93 = arith.constant 0 : index
    %107 = vector.load %arg5[%c6, %c0_92, %c0_93] : memref<9x8x8xbf16, #tpu.memory_space<vmem>>, vector<1x8x8xbf16>
    %108 = vector.shape_cast %107 : vector<1x8x8xbf16> to vector<8x8xbf16>
    %cst_94 = arith.constant dense<0.000000e+00> : vector<256x8xf32>
    %109 = tpu.matmul %106, %108, %cst_94 {dimension_numbers = #tpu.dot_dimension_numbers<[1], [0], [0], [1], [0, 0, 1, 1], [], []>} : vector<256x8xbf16>, vector<8x8xbf16>, vector<256x8xf32> -> vector<256x8xf32>
    %110 = arith.addf %104, %109 : vector<256x8xf32>
    %c2_95 = arith.constant 2 : index
    %c1_96 = arith.constant 1 : index
    %c0_97 = arith.constant 0 : index
    %111 = vector.load %arg8[%c2_95, %c1_96, %c0_97] : memref<18x18x8xbf16, #tpu.memory_space<vmem>>, vector<16x16x8xbf16>
    %112 = vector.shape_cast %111 : vector<16x16x8xbf16> to vector<256x8xbf16>
    %c7 = arith.constant 7 : index
    %c0_98 = arith.constant 0 : index
    %c0_99 = arith.constant 0 : index
    %113 = vector.load %arg5[%c7, %c0_98, %c0_99] : memref<9x8x8xbf16, #tpu.memory_space<vmem>>, vector<1x8x8xbf16>
    %114 = vector.shape_cast %113 : vector<1x8x8xbf16> to vector<8x8xbf16>
    %cst_100 = arith.constant dense<0.000000e+00> : vector<256x8xf32>
    %115 = tpu.matmul %112, %114, %cst_100 {dimension_numbers = #tpu.dot_dimension_numbers<[1], [0], [0], [1], [0, 0, 1, 1], [], []>} : vector<256x8xbf16>, vector<8x8xbf16>, vector<256x8xf32> -> vector<256x8xf32>
    %116 = arith.addf %110, %115 : vector<256x8xf32>
    %c2_101 = arith.constant 2 : index
    %c2_102 = arith.constant 2 : index
    %c0_103 = arith.constant 0 : index
    %117 = vector.load %arg8[%c2_101, %c2_102, %c0_103] : memref<18x18x8xbf16, #tpu.memory_space<vmem>>, vector<16x16x8xbf16>
    %118 = vector.shape_cast %117 : vector<16x16x8xbf16> to vector<256x8xbf16>
    %c8 = arith.constant 8 : index
    %c0_104 = arith.constant 0 : index
    %c0_105 = arith.constant 0 : index
    %119 = vector.load %arg5[%c8, %c0_104, %c0_105] : memref<9x8x8xbf16, #tpu.memory_space<vmem>>, vector<1x8x8xbf16>
    %120 = vector.shape_cast %119 : vector<1x8x8xbf16> to vector<8x8xbf16>
    %cst_106 = arith.constant dense<0.000000e+00> : vector<256x8xf32>
    %121 = tpu.matmul %118, %120, %cst_106 {dimension_numbers = #tpu.dot_dimension_numbers<[1], [0], [0], [1], [0, 0, 1, 1], [], []>} : vector<256x8xbf16>, vector<8x8xbf16>, vector<256x8xf32> -> vector<256x8xf32>
    %122 = arith.addf %116, %121 : vector<256x8xf32>
    %c0_107 = arith.constant 0 : index
    %c0_108 = arith.constant 0 : index
    %123 = vector.load %arg6[%c0_107, %c0_108] : memref<1x8xf32, #tpu.memory_space<vmem>>, vector<1x8xf32>
    %124 = vector.broadcast %123 : vector<1x8xf32> to vector<256x8xf32>
    %125 = arith.addf %122, %124 : vector<256x8xf32>
    %cst_109 = arith.constant 0.000000e+00 : f32
    %126 = vector.broadcast %cst_109 : f32 to vector<256x8xf32>
    %127 = arith.maximumf %125, %126 : vector<256x8xf32>
    %128 = tpu.transpose %127, [1, 0] : vector<256x8xf32> -> vector<8x256xf32>
    %c0_110 = arith.constant 0 : index
    %c0_111 = arith.constant 0 : index
    %c0_112 = arith.constant 0 : index
    %129 = vector.load %arg7[%c0_110, %c0_111, %c0_112] : memref<1x8x256xf32, #tpu.memory_space<vmem>>, vector<1x8x256xf32>
    %130 = vector.shape_cast %129 : vector<1x8x256xf32> to vector<8x256xf32>
    %131 = vector.shape_cast %128 : vector<8x256xf32> to vector<1x8x256xf32>
    tpu.vector_store %arg7[%c0_110, %c0_111, %c0_112], %131 {strides = array<i32>} : memref<1x8x256xf32, #tpu.memory_space<vmem>>, vector<1x8x256xf32>,
    return
  }
  func.func @transform_0(%arg0: i32, %arg1: i32) -> (i32, i32, i32, i32) {
    %c0_i32 = arith.constant 0 : i32
    %c0_i32_0 = arith.constant 0 : i32
    %c0_i32_1 = arith.constant 0 : i32
    %c0_i32_2 = arith.constant 0 : i32
    return %arg0, %c0_i32, %c0_i32_0, %c0_i32_1 : i32, i32, i32, i32
  }
  func.func @transform_1(%arg0: i32, %arg1: i32) -> (i32, i32) {
    %c0_i32 = arith.constant 0 : i32
    %c0_i32_0 = arith.constant 0 : i32
    %c0_i32_1 = arith.constant 0 : i32
    return %c0_i32, %c0_i32_0 : i32, i32
  }
  func.func @transform_2(%arg0: i32, %arg1: i32) -> (i32, i32) {
    %c0_i32 = arith.constant 0 : i32
    %c0_i32_0 = arith.constant 0 : i32
    %c0_i32_1 = arith.constant 0 : i32
    return %c0_i32, %c0_i32_0 : i32, i32
  }
  func.func @transform_3(%arg0: i32, %arg1: i32) -> (i32, i32, i32) {
    %c0_i32 = arith.constant 0 : i32
    %c0_i32_0 = arith.constant 0 : i32
    %c0_i32_1 = arith.constant 0 : i32
    %c0_i32_2 = arith.constant 0 : i32
    return %c0_i32, %c0_i32_0, %c0_i32_1 : i32, i32, i32
  }
  func.func @transform_4(%arg0: i32, %arg1: i32) -> (i32, i32) {
    %c0_i32 = arith.constant 0 : i32
    %c0_i32_0 = arith.constant 0 : i32
    %c0_i32_1 = arith.constant 0 : i32
    return %c0_i32, %c0_i32_0 : i32, i32
  }
  func.func @transform_5(%arg0: i32, %arg1: i32) -> (i32, i32, i32) {
    %c0_i32 = arith.constant 0 : i32
    %c0_i32_0 = arith.constant 0 : i32
    return %arg0, %c0_i32, %arg1 : i32, i32, i32
  }
}

</mosaic_0001>

<llo_original>
// kernel: double_conv_forward.1
$region0: #{double_conv_forward.1}
  #allocation0 [shape = 'u32[]', space=smem, size = 0x4, offset = 0x4, fixed_abs, tag = 'smem constant byte address 0x4 - core index']
  #allocation1 [shape = 'u32[144,128]{1,0:T(1,128)}', space=vmem, size = 0x12000, scoped, tag = 'internal scratch']
  #allocation2 [shape = 'bf16[18,18,8]{2,1,0:T(8,128)(2,1)}', space=vmem, size = 0x1b000, scoped, tag = 'scratch operand']
  %s0 = inlined_call_operand.vmem [shape: bf16[2,20,18,4], index: 0, kind: input, shape index: {}]
  %s1 = inlined_call_operand.vmem [shape: bf16[36,8], index: 1, kind: input, shape index: {}]
  %s2 = inlined_call_operand.vmem [shape: f32[1,8], index: 2, kind: input, shape index: {}]
  %s3 = inlined_call_operand.vmem [shape: bf16[9,8,8], index: 3, kind: input, shape index: {}]
  %s4 = inlined_call_operand.vmem [shape: f32[1,8], index: 4, kind: input, shape index: {}]
  %s5 = inlined_call_operand.vmem [shape: f32[2,8,256], index: 5, kind: output, shape index: {}]
  %s6 = sld [smem:[#allocation0]]
  $region57: #{double_conv_forward.1} parent=0
    _
  %s8 = ssub.s32 1, %s6
  %s9 = scalar_select 0, %s8, %s6
  loop: start=0, step=1, limit=4
  $region2: #{double_conv_forward.1} parent=0 // loop_pre_header
    _
  $region3: #{double_conv_forward.1} parent=0 // loop_header
    %s11 = sphi 0, %s15
    %p12 = scmp.ge.s32.totalorder %s11, 4
    %s18 = sphi 0, %s30
    %s19 = sphi 0, %s26
    %s20 = sphi 0, %s18
    %s21 = sphi 0, %s19
    %s22 = sphi 0, %s20
    %s23 = sphi 0, %s21
    %s33 = sphi 0, %s35
    %s36 = sphi 0, %s33
    %s37 = sphi 0, %s36
    %s53 = sphi 0, %s37
    %s57 = sphi 0, %s57
    %s59 = sphi 0, %s57
    %s60 = sphi 0, %s59
    %s74 = sphi 0, %s60
    %s78 = sphi 0, %s78
    %s80 = sphi 0, %s78
    %s81 = sphi 0, %s80
    %s95 = sphi 0, %s81
    %s99 = sphi 0, %s99
    %s101 = sphi 0, %s99
    %s102 = sphi 0, %s101
    %s116 = sphi 0, %s102
    %s120 = sphi 0, %s120
    %s122 = sphi 0, %s120
    %s123 = sphi 0, %s122
    %s137 = sphi 0, %s123
    %s145 = sphi 0, %s147
    %s148 = sphi 0, %s145
    %s149 = sphi 0, %s148
    %s165 = sphi 0, %s149
  $region4: #{double_conv_forward.1} parent=0 // loop_header_branch
    %14 = sbr.rel (%p12) target = $region8
  $region5: #{double_conv_forward.1} parent=0 // loop_body
    %s16 = ssub.s32 %s11, 1
    %s17 = ssub.s32 %s11, 2
    %s24 = sadd.s32 1, %s19
    %p25 = scmp.ge.s32.totalorder %s24, 1
    %s26 = scalar_select %p25, 0, %s24
    %s27 = sadd.s32 1, %s18
    %s28 = scalar_select %p25, %s27, %s18
    %p29 = scmp.ge.s32.totalorder %s28, 2
    %s30 = scalar_select %p29, 0, %s28
    %s31 = ssub.s32 %s18, %s30
    %p32 = scmp.eq.s32.totalorder %s31, 0
    %s34 = sadd.s32 %s33, 1
    %s35 = scalar_select %p32, %s33, %s34
    %p38 = pneg %p32
    %p39 = scmp.eq.s32.totalorder %s11, 1
    %p40 = por %p38, %p39
    %p41 = scmp.ne.s32.totalorder %s33, %s36
    %p42 = scmp.eq.s32.totalorder %s11, 0
    %p43 = por %p41, %p42
    %p44 = scmp.ne.s32.totalorder %s33, %s36
    %p45 = scmp.eq.s32.totalorder %s16, 1
    %p46 = por %p44, %p45
    %p47 = scmp.ne.s32.totalorder %s36, %s37
    %p48 = scmp.eq.s32.totalorder %s16, 0
    %p49 = por %p47, %p48
    %p50 = scmp.ne.s32.totalorder %s36, %s37
    %p51 = scmp.eq.s32.totalorder %s17, 1
    %p52 = por %p50, %p51
    %p54 = scmp.ne.s32.totalorder %s37, %s53
    %p55 = scmp.eq.s32.totalorder %s17, 0
    %p56 = por %p54, %p55
    %s58 = sadd.s32 %s57, 1
    %p61 = scmp.eq.s32.totalorder %s11, 1
    %p62 = scmp.ne.s32.totalorder %s57, %s59
    %p63 = scmp.eq.s32.totalorder %s11, 0
    %p64 = por %p62, %p63
    %p65 = scmp.ne.s32.totalorder %s57, %s59
    %p66 = scmp.eq.s32.totalorder %s16, 1
    %p67 = por %p65, %p66
    %p68 = scmp.ne.s32.totalorder %s59, %s60
    %p69 = scmp.eq.s32.totalorder %s16, 0
    %p70 = por %p68, %p69
    %p71 = scmp.ne.s32.totalorder %s59, %s60
    %p72 = scmp.eq.s32.totalorder %s17, 1
    %p73 = por %p71, %p72
    %p75 = scmp.ne.s32.totalorder %s60, %s74
    %p76 = scmp.eq.s32.totalorder %s17, 0
    %p77 = por %p75, %p76
    %s79 = sadd.s32 %s78, 1
    %p82 = scmp.eq.s32.totalorder %s11, 1
    %p83 = scmp.ne.s32.totalorder %s78, %s80
    %p84 = scmp.eq.s32.totalorder %s11, 0
    %p85 = por %p83, %p84
    %p86 = scmp.ne.s32.totalorder %s78, %s80
    %p87 = scmp.eq.s32.totalorder %s16, 1
    %p88 = por %p86, %p87
    %p89 = scmp.ne.s32.totalorder %s80, %s81
    %p90 = scmp.eq.s32.totalorder %s16, 0
    %p91 = por %p89, %p90
    %p92 = scmp.ne.s32.totalorder %s80, %s81
    %p93 = scmp.eq.s32.totalorder %s17, 1
    %p94 = por %p92, %p93
    %p96 = scmp.ne.s32.totalorder %s81, %s95
    %p97 = scmp.eq.s32.totalorder %s17, 0
    %p98 = por %p96, %p97
    %s100 = sadd.s32 %s99, 1
    %p103 = scmp.eq.s32.totalorder %s11, 1
    %p104 = scmp.ne.s32.totalorder %s99, %s101
    %p105 = scmp.eq.s32.totalorder %s11, 0
    %p106 = por %p104, %p105
    %p107 = scmp.ne.s32.totalorder %s99, %s101
    %p108 = scmp.eq.s32.totalorder %s16, 1
    %p109 = por %p107, %p108
    %p110 = scmp.ne.s32.totalorder %s101, %s102
    %p111 = scmp.eq.s32.totalorder %s16, 0
    %p112 = por %p110, %p111
    %p113 = scmp.ne.s32.totalorder %s101, %s102
    %p114 = scmp.eq.s32.totalorder %s17, 1
    %p115 = por %p113, %p114
    %p117 = scmp.ne.s32.totalorder %s102, %s116
    %p118 = scmp.eq.s32.totalorder %s17, 0
    %p119 = por %p117, %p118
    %s121 = sadd.s32 %s120, 1
    %p124 = scmp.eq.s32.totalorder %s11, 1
    %p125 = scmp.ne.s32.totalorder %s120, %s122
    %p126 = scmp.eq.s32.totalorder %s11, 0
    %p127 = por %p125, %p126
    %p128 = scmp.ne.s32.totalorder %s120, %s122
    %p129 = scmp.eq.s32.totalorder %s16, 1
    %p130 = por %p128, %p129
    %p131 = scmp.ne.s32.totalorder %s122, %s123
    %p132 = scmp.eq.s32.totalorder %s16, 0
    %p133 = por %p131, %p132
    %p134 = scmp.ne.s32.totalorder %s122, %s123
    %p135 = scmp.eq.s32.totalorder %s17, 1
    %p136 = por %p134, %p135
    %p138 = scmp.ne.s32.totalorder %s123, %s137
    %p139 = scmp.eq.s32.totalorder %s17, 0
    %p140 = por %p138, %p139
    %s141 = ssub.s32 %s18, %s30
    %s142 = ssub.s32 %s19, %s26
    %s143 = sor.u32 %s141, %s142
    %p144 = scmp.eq.s32.totalorder %s143, 0
    %s146 = sadd.s32 %s145, 1
    %s147 = scalar_select %p144, %s145, %s146
    %p150 = pneg %p144
    %p151 = scmp.eq.s32.totalorder %s11, 1
    %p152 = por %p150, %p151
    %p153 = scmp.ne.s32.totalorder %s145, %s148
    %p154 = scmp.eq.s32.totalorder %s11, 0
    %p155 = por %p153, %p154
    %p156 = scmp.ne.s32.totalorder %s145, %s148
    %p157 = scmp.eq.s32.totalorder %s16, 1
    %p158 = por %p156, %p157
    %p159 = scmp.ne.s32.totalorder %s148, %s149
    %p160 = scmp.eq.s32.totalorder %s16, 0
    %p161 = por %p159, %p160
    %p162 = scmp.ne.s32.totalorder %s148, %s149
    %p163 = scmp.eq.s32.totalorder %s17, 1
    %p164 = por %p162, %p163
    %p166 = scmp.ne.s32.totalorder %s149, %s165
    %p167 = scmp.eq.s32.totalorder %s17, 0
    %p168 = por %p166, %p167
    %p169 = scmp.le.s32.totalorder 1, %s11
    %p170 = scmp.lt.s32.totalorder %s11, 3
    %p171 = pnand %p169, %p170
    %p172 = pneg %p171
    // Predicated region
    $region9: #{double_conv_forward.1} parent=5 // pred_check
      _
    $region10: #{double_conv_forward.1} parent=5 // pred_check_branch
      %174 = sbr.rel (%p171) target = $region12
    $region11: #{double_conv_forward.1} parent=5 // pred_region
      %s175 = ssub.s32 %s11, 1
      // Predicated region
      $region13: #{double_conv_forward.1} parent=11 // pred_check
        %p176 = pneg %p70
      $region14: #{double_conv_forward.1} parent=11 // pred_check_branch
        %178 = sbr.rel (%p176) target = $region16
      $region15: #{double_conv_forward.1} parent=11 // pred_region
        _
      $region16: #{double_conv_forward.1} parent=11 // pred_fallthru
        _
      // Predicated region
      $region17: #{double_conv_forward.1} parent=11 // pred_check
        %p179 = pneg %p91
      $region18: #{double_conv_forward.1} parent=11 // pred_check_branch
        %181 = sbr.rel (%p179) target = $region20
      $region19: #{double_conv_forward.1} parent=11 // pred_region
        _
      $region20: #{double_conv_forward.1} parent=11 // pred_fallthru
        _
      // Predicated region
      $region21: #{double_conv_forward.1} parent=11 // pred_check
        %p182 = pneg %p112
      $region22: #{double_conv_forward.1} parent=11 // pred_check_branch
        %184 = sbr.rel (%p182) target = $region24
      $region23: #{double_conv_forward.1} parent=11 // pred_region
        _
      $region24: #{double_conv_forward.1} parent=11 // pred_fallthru
        _
      // Predicated region
      $region25: #{double_conv_forward.1} parent=11 // pred_check
        %p185 = pneg %p133
      $region26: #{double_conv_forward.1} parent=11 // pred_check_branch
        %187 = sbr.rel (%p185) target = $region28
      $region27: #{double_conv_forward.1} parent=11 // pred_region
        _
      $region28: #{double_conv_forward.1} parent=11 // pred_fallthru
        _
    $region12: #{double_conv_forward.1} parent=5 // pred_fallthru
      _
    %p188 = scmp.lt.s32.totalorder %s11, 2
    // Predicated region
    $region29: #{double_conv_forward.1} parent=5 // pred_check
      %p189 = pneg %p188
    $region30: #{double_conv_forward.1} parent=5 // pred_check_branch
      %191 = sbr.rel (%p189) target = $region32
    $region31: #{double_conv_forward.1} parent=5 // pred_region
      // Predicated region
      $region33: #{double_conv_forward.1} parent=31 // pred_check
        %p192 = pneg %p43
      $region34: #{double_conv_forward.1} parent=31 // pred_check_branch
        %194 = sbr.rel (%p192) target = $region36
      $region35: #{double_conv_forward.1} parent=31 // pred_region
        %p195 = scmp.lt.s32.totalorder %s18, 1
        %s196 = scalar_select %p195, %s18, 1
        %s197 = smul.addr %s196, 60
        %s198 = smul.addr %s197, 4
        %s199 = scalar_lea.vmem %s0, %s198
      $region36: #{double_conv_forward.1} parent=31 // pred_fallthru
        _
    $region32: #{double_conv_forward.1} parent=5 // pred_fallthru
      _
    %p200 = scmp.le.s32.totalorder 1, %s11
    %p201 = scmp.lt.s32.totalorder %s11, 3
    %p202 = pnand %p200, %p201
    %p203 = pneg %p202
    // Predicated region
    $region37: #{double_conv_forward.1} parent=5 // pred_check
      _
    $region38: #{double_conv_forward.1} parent=5 // pred_check_branch
      %205 = sbr.rel (%p202) target = $region40
    $region39: #{double_conv_forward.1} parent=5 // pred_region
      %s206 = ssub.s32 %s11, 1
      %p207 = scmp.lt.s32.totalorder %s20, 1
      %s208 = scalar_select %p207, %s20, 1
      %s209 = smul.addr %s208, 60
      %s210 = smul.addr %s209, 4
      %s211 = scalar_lea.vmem %s0, %s210
      %p212 = pneg %p49
      %p213 = pneg %p46
      %p214 = pneg %p70
      %p215 = pneg %p67
      %p216 = pneg %p91
      %p217 = pneg %p88
      %p218 = pneg %p112
      %p219 = pneg %p109
      %p220 = pneg %p133
      %p221 = pneg %p130
      %p222 = pneg %p161
      %p223 = pneg %p158
      %s224 = smul.u32 2, %s21
      %p225 = scmp.lt.s32.totalorder %s20, 1
      %s226 = scalar_select %p225, %s20, 1
      %p227 = scmp.lt.s32.totalorder %s224, 1
      %s228 = scalar_select %p227, %s224, 1
      %s229 = smul.addr %s226, 2
      %s230 = sadd.s32 %s228, %s229
      %s231 = smul.addr %s230, 8
      %s232 = scalar_lea.vmem %s5, %s231
      %p233 = scmp.lt.s32.totalorder %s20, 1
      %s234 = scalar_select %p233, %s20, 1
      %s235 = smul.addr %s234, 60
      %s236 = smul.addr %s235, 4
      %s237 = scalar_lea.vmem %s0, %s236
      %s238 = smul.u32 2, %s21
      %p239 = scmp.lt.s32.totalorder %s20, 1
      %s240 = scalar_select %p239, %s20, 1
      %p241 = scmp.lt.s32.totalorder %s238, 1
      %s242 = scalar_select %p241, %s238, 1
      %s243 = smul.addr %s240, 2
      %s244 = sadd.s32 %s242, %s243
      %s245 = smul.addr %s244, 8
      %s246 = scalar_lea.vmem %s5, %s245
      %s247 = smul.u32 2, %s21
      %s249 = smul.u32 %s21, 16
      %s250 = smul.u32 %s249, 3
      %s251 = smul.addr %s250, 4
      %s252 = scalar_lea.vmem %s237, %s251
      %v253 = vld [vmem:[%s252] sm:$0xf]
      %v254 = vld [vmem:[%s252 + $0x4] sm:$0xf]
      %v255 = vld [vmem:[%s252 + $0xc] sm:$0xf]
      %v256 = vld [vmem:[%s252 + $0x10] sm:$0xf]
      %v257 = vld [vmem:[%s252 + $0x18] sm:$0xf]
      %v258 = vld [vmem:[%s252 + $0x1c] sm:$0xf]
      %v259 = vld [vmem:[%s252 + $0x24] sm:$0xf]
      %v260 = vld [vmem:[%s252 + $0x28] sm:$0xf]
      %v261 = vld [vmem:[%s252 + $0x30] sm:$0xf]
      %v262 = vld [vmem:[%s252 + $0x34] sm:$0xf]
      %v263 = vld [vmem:[%s252 + $0x3c] sm:$0xf]
      %v264 = vld [vmem:[%s252 + $0x40] sm:$0xf]
      %v265 = vld [vmem:[%s252 + $0x48] sm:$0xf]
      %v266 = vld [vmem:[%s252 + $0x4c] sm:$0xf]
      %v267 = vld [vmem:[%s252 + $0x54] sm:$0xf]
      %v268 = vld [vmem:[%s252 + $0x58] sm:$0xf]
      %v269 = vld [vmem:[%s252 + $0x60] sm:$0xf]
      %v270 = vld [vmem:[%s252 + $0x64] sm:$0xf]
      %v271 = vld [vmem:[%s252 + $0x6c] sm:$0xf]
      %v272 = vld [vmem:[%s252 + $0x70] sm:$0xf]
      %v273 = vld [vmem:[%s252 + $0x78] sm:$0xf]
      %v274 = vld [vmem:[%s252 + $0x7c] sm:$0xf]
      %v275 = vld [vmem:[%s252 + $0x84] sm:$0xf]
      %v276 = vld [vmem:[%s252 + $0x88] sm:$0xf]
      %v277 = vld [vmem:[%s252 + $0x90] sm:$0xf]
      %v278 = vld [vmem:[%s252 + $0x94] sm:$0xf]
      %v279 = vld [vmem:[%s252 + $0x9c] sm:$0xf]
      %v280 = vld [vmem:[%s252 + $0xa0] sm:$0xf]
      %v281 = vld [vmem:[%s252 + $0xa8] sm:$0xf]
      %v282 = vld [vmem:[%s252 + $0xac] sm:$0xf]
      %v283 = vld [vmem:[%s252 + $0xb4] sm:$0xf]
      %v284 = vld [vmem:[%s252 + $0xb8] sm:$0xf]
      %v285 = vld [vmem:[%s252 + $0xc0] sm:$0xf]
      %v286 = vld [vmem:[%s252 + $0xc4] sm:$0xf]
      %v287 = vld [vmem:[%s252 + $0xcc] sm:$0xf]
      %v288 = vld [vmem:[%s252 + $0xd0] sm:$0xf]
      %v289 = vld [vmem:[%s252 + $0x8] sm:$0x1]
      %v290 = vld [vmem:[%s252 + $0x14] sm:$0x1]
      %v291 = vld [vmem:[%s252 + $0x20] sm:$0x1]
      %v292 = vld [vmem:[%s252 + $0x2c] sm:$0x1]
      %v293 = vld [vmem:[%s252 + $0x38] sm:$0x1]
      %v294 = vld [vmem:[%s252 + $0x44] sm:$0x1]
      %v295 = vld [vmem:[%s252 + $0x50] sm:$0x1]
      %v296 = vld [vmem:[%s252 + $0x5c] sm:$0x1]
      %v297 = vld [vmem:[%s252 + $0x68] sm:$0x1]
      %v298 = vld [vmem:[%s252 + $0x74] sm:$0x1]
      %v299 = vld [vmem:[%s252 + $0x80] sm:$0x1]
      %v300 = vld [vmem:[%s252 + $0x8c] sm:$0x1]
      %v301 = vld [vmem:[%s252 + $0x98] sm:$0x1]
      %v302 = vld [vmem:[%s252 + $0xa4] sm:$0x1]
      %v303 = vld [vmem:[%s252 + $0xb0] sm:$0x1]
      %v304 = vld [vmem:[%s252 + $0xbc] sm:$0x1]
      %v305 = vld [vmem:[%s252 + $0xc8] sm:$0x1]
      %v306 = vld [vmem:[%s252 + $0xd4] sm:$0x1]
      %vm307 = vsmask.f32 3328
      %vm308 = vsmask.f32 7440
      %vm309 = vmor %vm307, %vm308
      %v311 = vshrl.u32 %v253, 16
      %v313 = vrot.slane %v311, 4
      %v314 = vshll.u32 %v253, 16
      %v316 = vrot.slane %v314, 5
      %v317 = vor.u32 %v313, %v316
      %v318 = vrot.slane %v317, 4
      %v320 = vshll.u32 %v254, 16
      %v322 = vrot.slane %v320, 5
      %v323 = vsel %vm309, %v318, %v322
      %v324 = vshrl.u32 %v254, 16
      %v326 = vrot.slane %v324, 4
      %v327 = vor.u32 %v326, %v322
      %v328 = vrot.slane %v327, 4
      %v330 = vshll.u32 %v289, 16
      %v332 = vrot.slane %v330, 5
      %v333 = vsel %vm309, %v328, %v332
      %v335 = vshrl.u32 %v255, 16
      %v337 = vrot.slane %v335, 4
      %v338 = vshll.u32 %v255, 16
      %v340 = vrot.slane %v338, 5
      %v341 = vor.u32 %v337, %v340
      %v342 = vrot.slane %v341, 4
      %v344 = vshll.u32 %v256, 16
      %v346 = vrot.slane %v344, 5
      %v347 = vsel %vm309, %v342, %v346
      %v348 = vshrl.u32 %v256, 16
      %v350 = vrot.slane %v348, 4
      %v351 = vor.u32 %v350, %v346
      %v352 = vrot.slane %v351, 4
      %v354 = vshll.u32 %v290, 16
      %v356 = vrot.slane %v354, 5
      %v357 = vsel %vm309, %v352, %v356
      %v359 = vshrl.u32 %v257, 16
      %v361 = vrot.slane %v359, 4
      %v362 = vshll.u32 %v257, 16
      %v364 = vrot.slane %v362, 5
      %v365 = vor.u32 %v361, %v364
      %v366 = vrot.slane %v365, 4
      %v368 = vshll.u32 %v258, 16
      %v370 = vrot.slane %v368, 5
      %v371 = vsel %vm309, %v366, %v370
      %v372 = vshrl.u32 %v258, 16
      %v374 = vrot.slane %v372, 4
      %v375 = vor.u32 %v374, %v370
      %v376 = vrot.slane %v375, 4
      %v378 = vshll.u32 %v291, 16
      %v380 = vrot.slane %v378, 5
      %v381 = vsel %vm309, %v376, %v380
      %v383 = vshrl.u32 %v259, 16
      %v385 = vrot.slane %v383, 4
      %v386 = vshll.u32 %v259, 16
      %v388 = vrot.slane %v386, 5
      %v389 = vor.u32 %v385, %v388
      %v390 = vrot.slane %v389, 4
      %v392 = vshll.u32 %v260, 16
      %v394 = vrot.slane %v392, 5
      %v395 = vsel %vm309, %v390, %v394
      %v396 = vshrl.u32 %v260, 16
      %v398 = vrot.slane %v396, 4
      %v399 = vor.u32 %v398, %v394
      %v400 = vrot.slane %v399, 4
      %v402 = vshll.u32 %v292, 16
      %v404 = vrot.slane %v402, 5
      %v405 = vsel %vm309, %v400, %v404
      %v407 = vshrl.u32 %v261, 16
      %v409 = vrot.slane %v407, 4
      %v410 = vshll.u32 %v261, 16
      %v412 = vrot.slane %v410, 5
      %v413 = vor.u32 %v409, %v412
      %v414 = vrot.slane %v413, 4
      %v416 = vshll.u32 %v262, 16
      %v418 = vrot.slane %v416, 5
      %v419 = vsel %vm309, %v414, %v418
      %v420 = vshrl.u32 %v262, 16
      %v422 = vrot.slane %v420, 4
      %v423 = vor.u32 %v422, %v418
      %v424 = vrot.slane %v423, 4
      %v426 = vshll.u32 %v293, 16
      %v428 = vrot.slane %v426, 5
      %v429 = vsel %vm309, %v424, %v428
      %v431 = vshrl.u32 %v263, 16
      %v433 = vrot.slane %v431, 4
      %v434 = vshll.u32 %v263, 16
      %v436 = vrot.slane %v434, 5
      %v437 = vor.u32 %v433, %v436
      %v438 = vrot.slane %v437, 4
      %v440 = vshll.u32 %v264, 16
      %v442 = vrot.slane %v440, 5
      %v443 = vsel %vm309, %v438, %v442
      %v444 = vshrl.u32 %v264, 16
      %v446 = vrot.slane %v444, 4
      %v447 = vor.u32 %v446, %v442
      %v448 = vrot.slane %v447, 4
      %v450 = vshll.u32 %v294, 16
      %v452 = vrot.slane %v450, 5
      %v453 = vsel %vm309, %v448, %v452
      %v455 = vshrl.u32 %v265, 16
      %v457 = vrot.slane %v455, 4
      %v458 = vshll.u32 %v265, 16
      %v460 = vrot.slane %v458, 5
      %v461 = vor.u32 %v457, %v460
      %v462 = vrot.slane %v461, 4
      %v464 = vshll.u32 %v266, 16
      %v466 = vrot.slane %v464, 5
      %v467 = vsel %vm309, %v462, %v466
      %v468 = vshrl.u32 %v266, 16
      %v470 = vrot.slane %v468, 4
      %v471 = vor.u32 %v470, %v466
      %v472 = vrot.slane %v471, 4
      %v474 = vshll.u32 %v295, 16
      %v476 = vrot.slane %v474, 5
      %v477 = vsel %vm309, %v472, %v476
      %v479 = vshrl.u32 %v267, 16
      %v481 = vrot.slane %v479, 4
      %v482 = vshll.u32 %v267, 16
      %v484 = vrot.slane %v482, 5
      %v485 = vor.u32 %v481, %v484
      %v486 = vrot.slane %v485, 4
      %v488 = vshll.u32 %v268, 16
      %v490 = vrot.slane %v488, 5
      %v491 = vsel %vm309, %v486, %v490
      %v492 = vshrl.u32 %v268, 16
      %v494 = vrot.slane %v492, 4
      %v495 = vor.u32 %v494, %v490
      %v496 = vrot.slane %v495, 4
      %v498 = vshll.u32 %v296, 16
      %v500 = vrot.slane %v498, 5
      %v501 = vsel %vm309, %v496, %v500
      %v503 = vshrl.u32 %v269, 16
      %v505 = vrot.slane %v503, 4
      %v506 = vshll.u32 %v269, 16
      %v508 = vrot.slane %v506, 5
      %v509 = vor.u32 %v505, %v508
      %v510 = vrot.slane %v509, 4
      %v512 = vshll.u32 %v270, 16
      %v514 = vrot.slane %v512, 5
      %v515 = vsel %vm309, %v510, %v514
      %v516 = vshrl.u32 %v270, 16
      %v518 = vrot.slane %v516, 4
      %v519 = vor.u32 %v518, %v514
      %v520 = vrot.slane %v519, 4
      %v522 = vshll.u32 %v297, 16
      %v524 = vrot.slane %v522, 5
      %v525 = vsel %vm309, %v520, %v524
      %v527 = vshrl.u32 %v271, 16
      %v529 = vrot.slane %v527, 4
      %v530 = vshll.u32 %v271, 16
      %v532 = vrot.slane %v530, 5
      %v533 = vor.u32 %v529, %v532
      %v534 = vrot.slane %v533, 4
      %v536 = vshll.u32 %v272, 16
      %v538 = vrot.slane %v536, 5
      %v539 = vsel %vm309, %v534, %v538
      %v540 = vshrl.u32 %v272, 16
      %v542 = vrot.slane %v540, 4
      %v543 = vor.u32 %v542, %v538
      %v544 = vrot.slane %v543, 4
      %v546 = vshll.u32 %v298, 16
      %v548 = vrot.slane %v546, 5
      %v549 = vsel %vm309, %v544, %v548
      %v551 = vshrl.u32 %v273, 16
      %v553 = vrot.slane %v551, 4
      %v554 = vshll.u32 %v273, 16
      %v556 = vrot.slane %v554, 5
      %v557 = vor.u32 %v553, %v556
      %v558 = vrot.slane %v557, 4
      %v560 = vshll.u32 %v274, 16
      %v562 = vrot.slane %v560, 5
      %v563 = vsel %vm309, %v558, %v562
      %v564 = vshrl.u32 %v274, 16
      %v566 = vrot.slane %v564, 4
      %v567 = vor.u32 %v566, %v562
      %v568 = vrot.slane %v567, 4
      %v570 = vshll.u32 %v299, 16
      %v572 = vrot.slane %v570, 5
      %v573 = vsel %vm309, %v568, %v572
      %v575 = vshrl.u32 %v275, 16
      %v577 = vrot.slane %v575, 4
      %v578 = vshll.u32 %v275, 16
      %v580 = vrot.slane %v578, 5
      %v581 = vor.u32 %v577, %v580
      %v582 = vrot.slane %v581, 4
      %v584 = vshll.u32 %v276, 16
      %v586 = vrot.slane %v584, 5
      %v587 = vsel %vm309, %v582, %v586
      %v588 = vshrl.u32 %v276, 16
      %v590 = vrot.slane %v588, 4
      %v591 = vor.u32 %v590, %v586
      %v592 = vrot.slane %v591, 4
      %v594 = vshll.u32 %v300, 16
      %v596 = vrot.slane %v594, 5
      %v597 = vsel %vm309, %v592, %v596
      %v599 = vshrl.u32 %v277, 16
      %v601 = vrot.slane %v599, 4
      %v602 = vshll.u32 %v277, 16
      %v604 = vrot.slane %v602, 5
      %v605 = vor.u32 %v601, %v604
      %v606 = vrot.slane %v605, 4
      %v608 = vshll.u32 %v278, 16
      %v610 = vrot.slane %v608, 5
      %v611 = vsel %vm309, %v606, %v610
      %v612 = vshrl.u32 %v278, 16
      %v614 = vrot.slane %v612, 4
      %v615 = vor.u32 %v614, %v610
      %v616 = vrot.slane %v615, 4
      %v618 = vshll.u32 %v301, 16
      %v620 = vrot.slane %v618, 5
      %v621 = vsel %vm309, %v616, %v620
      %v623 = vshrl.u32 %v279, 16
      %v625 = vrot.slane %v623, 4
      %v626 = vshll.u32 %v279, 16
      %v628 = vrot.slane %v626, 5
      %v629 = vor.u32 %v625, %v628
      %v630 = vrot.slane %v629, 4
      %v632 = vshll.u32 %v280, 16
      %v634 = vrot.slane %v632, 5
      %v635 = vsel %vm309, %v630, %v634
      %v636 = vshrl.u32 %v280, 16
      %v638 = vrot.slane %v636, 4
      %v639 = vor.u32 %v638, %v634
      %v640 = vrot.slane %v639, 4
      %v642 = vshll.u32 %v302, 16
      %v644 = vrot.slane %v642, 5
      %v645 = vsel %vm309, %v640, %v644
      %v647 = vshrl.u32 %v281, 16
      %v649 = vrot.slane %v647, 4
      %v650 = vshll.u32 %v281, 16
      %v652 = vrot.slane %v650, 5
      %v653 = vor.u32 %v649, %v652
      %v654 = vrot.slane %v653, 4
      %v656 = vshll.u32 %v282, 16
      %v658 = vrot.slane %v656, 5
      %v659 = vsel %vm309, %v654, %v658
      %v660 = vshrl.u32 %v282, 16
      %v662 = vrot.slane %v660, 4
      %v663 = vor.u32 %v662, %v658
      %v664 = vrot.slane %v663, 4
      %v666 = vshll.u32 %v303, 16
      %v668 = vrot.slane %v666, 5
      %v669 = vsel %vm309, %v664, %v668
      %v671 = vshrl.u32 %v283, 16
      %v673 = vrot.slane %v671, 4
      %v674 = vshll.u32 %v283, 16
      %v676 = vrot.slane %v674, 5
      %v677 = vor.u32 %v673, %v676
      %v678 = vrot.slane %v677, 4
      %v680 = vshll.u32 %v284, 16
      %v682 = vrot.slane %v680, 5
      %v683 = vsel %vm309, %v678, %v682
      %v684 = vshrl.u32 %v284, 16
      %v686 = vrot.slane %v684, 4
      %v687 = vor.u32 %v686, %v682
      %v688 = vrot.slane %v687, 4
      %v690 = vshll.u32 %v304, 16
      %v692 = vrot.slane %v690, 5
      %v693 = vsel %vm309, %v688, %v692
      %v695 = vshrl.u32 %v285, 16
      %v697 = vrot.slane %v695, 4
      %v698 = vshll.u32 %v285, 16
      %v700 = vrot.slane %v698, 5
      %v701 = vor.u32 %v697, %v700
      %v702 = vrot.slane %v701, 4
      %v704 = vshll.u32 %v286, 16
      %v706 = vrot.slane %v704, 5
      %v707 = vsel %vm309, %v702, %v706
      %v708 = vshrl.u32 %v286, 16
      %v710 = vrot.slane %v708, 4
      %v711 = vor.u32 %v710, %v706
      %v712 = vrot.slane %v711, 4
      %v714 = vshll.u32 %v305, 16
      %v716 = vrot.slane %v714, 5
      %v717 = vsel %vm309, %v712, %v716
      %v719 = vshrl.u32 %v287, 16
      %v721 = vrot.slane %v719, 4
      %v722 = vshll.u32 %v287, 16
      %v724 = vrot.slane %v722, 5
      %v725 = vor.u32 %v721, %v724
      %v726 = vrot.slane %v725, 4
      %v728 = vshll.u32 %v288, 16
      %v730 = vrot.slane %v728, 5
      %v731 = vsel %vm309, %v726, %v730
      %v732 = vshrl.u32 %v288, 16
      %v734 = vrot.slane %v732, 4
      %v735 = vor.u32 %v734, %v730
      %v736 = vrot.slane %v735, 4
      %v738 = vshll.u32 %v306, 16
      %v740 = vrot.slane %v738, 5
      %v741 = vsel %vm309, %v736, %v740
      %v742 = vld [vmem:[%s252] sm:$0xe]
      %v743 = vld [vmem:[%s252 + $0xc] sm:$0xe]
      %v744 = vld [vmem:[%s252 + $0x18] sm:$0xe]
      %v745 = vld [vmem:[%s252 + $0x24] sm:$0xe]
      %v746 = vld [vmem:[%s252 + $0x30] sm:$0xe]
      %v747 = vld [vmem:[%s252 + $0x3c] sm:$0xe]
      %v748 = vld [vmem:[%s252 + $0x48] sm:$0xe]
      %v749 = vld [vmem:[%s252 + $0x54] sm:$0xe]
      %v750 = vld [vmem:[%s252 + $0x60] sm:$0xe]
      %v751 = vld [vmem:[%s252 + $0x6c] sm:$0xe]
      %v752 = vld [vmem:[%s252 + $0x78] sm:$0xe]
      %v753 = vld [vmem:[%s252 + $0x84] sm:$0xe]
      %v754 = vld [vmem:[%s252 + $0x90] sm:$0xe]
      %v755 = vld [vmem:[%s252 + $0x9c] sm:$0xe]
      %v756 = vld [vmem:[%s252 + $0xa8] sm:$0xe]
      %v757 = vld [vmem:[%s252 + $0xb4] sm:$0xe]
      %v758 = vld [vmem:[%s252 + $0xc0] sm:$0xe]
      %v759 = vld [vmem:[%s252 + $0xcc] sm:$0xe]
      %vm814 = vcmask 1042432
      %vm815 = vcmask 1046532
      %vm816 = vmor %vm814, %vm815
      %v817 = vrot.slane %v742, 5
      %v818 = vrot.slane %v817, 4
      %v819 = vrot.slane %v254, 5
      %v820 = vsel %vm816, %v818, %v819
      %v821 = vrot.slane %v819, 4
      %v822 = vrot.slane %v289, 5
      %v823 = vsel %vm816, %v821, %v822
      %v824 = vrot.slane %v743, 5
      %v825 = vrot.slane %v824, 4
      %v826 = vrot.slane %v256, 5
      %v827 = vsel %vm816, %v825, %v826
      %v828 = vrot.slane %v826, 4
      %v829 = vrot.slane %v290, 5
      %v830 = vsel %vm816, %v828, %v829
      %v831 = vrot.slane %v744, 5
      %v832 = vrot.slane %v831, 4
      %v833 = vrot.slane %v258, 5
      %v834 = vsel %vm816, %v832, %v833
      %v835 = vrot.slane %v833, 4
      %v836 = vrot.slane %v291, 5
      %v837 = vsel %vm816, %v835, %v836
      %v838 = vrot.slane %v745, 5
      %v839 = vrot.slane %v838, 4
      %v840 = vrot.slane %v260, 5
      %v841 = vsel %vm816, %v839, %v840
      %v842 = vrot.slane %v840, 4
      %v843 = vrot.slane %v292, 5
      %v844 = vsel %vm816, %v842, %v843
      %v845 = vrot.slane %v746, 5
      %v846 = vrot.slane %v845, 4
      %v847 = vrot.slane %v262, 5
      %v848 = vsel %vm816, %v846, %v847
      %v849 = vrot.slane %v847, 4
      %v850 = vrot.slane %v293, 5
      %v851 = vsel %vm816, %v849, %v850
      %v852 = vrot.slane %v747, 5
      %v853 = vrot.slane %v852, 4
      %v854 = vrot.slane %v264, 5
      %v855 = vsel %vm816, %v853, %v854
      %v856 = vrot.slane %v854, 4
      %v857 = vrot.slane %v294, 5
      %v858 = vsel %vm816, %v856, %v857
      %v859 = vrot.slane %v748, 5
      %v860 = vrot.slane %v859, 4
      %v861 = vrot.slane %v266, 5
      %v862 = vsel %vm816, %v860, %v861
      %v863 = vrot.slane %v861, 4
      %v864 = vrot.slane %v295, 5
      %v865 = vsel %vm816, %v863, %v864
      %v866 = vrot.slane %v749, 5
      %v867 = vrot.slane %v866, 4
      %v868 = vrot.slane %v268, 5
      %v869 = vsel %vm816, %v867, %v868
      %v870 = vrot.slane %v868, 4
      %v871 = vrot.slane %v296, 5
      %v872 = vsel %vm816, %v870, %v871
      %v873 = vrot.slane %v750, 5
      %v874 = vrot.slane %v873, 4
      %v875 = vrot.slane %v270, 5
      %v876 = vsel %vm816, %v874, %v875
      %v877 = vrot.slane %v875, 4
      %v878 = vrot.slane %v297, 5
      %v879 = vsel %vm816, %v877, %v878
      %v880 = vrot.slane %v751, 5
      %v881 = vrot.slane %v880, 4
      %v882 = vrot.slane %v272, 5
      %v883 = vsel %vm816, %v881, %v882
      %v884 = vrot.slane %v882, 4
      %v885 = vrot.slane %v298, 5
      %v886 = vsel %vm816, %v884, %v885
      %v887 = vrot.slane %v752, 5
      %v888 = vrot.slane %v887, 4
      %v889 = vrot.slane %v274, 5
      %v890 = vsel %vm816, %v888, %v889
      %v891 = vrot.slane %v889, 4
      %v892 = vrot.slane %v299, 5
      %v893 = vsel %vm816, %v891, %v892
      %v894 = vrot.slane %v753, 5
      %v895 = vrot.slane %v894, 4
      %v896 = vrot.slane %v276, 5
      %v897 = vsel %vm816, %v895, %v896
      %v898 = vrot.slane %v896, 4
      %v899 = vrot.slane %v300, 5
      %v900 = vsel %vm816, %v898, %v899
      %v901 = vrot.slane %v754, 5
      %v902 = vrot.slane %v901, 4
      %v903 = vrot.slane %v278, 5
      %v904 = vsel %vm816, %v902, %v903
      %v905 = vrot.slane %v903, 4
      %v906 = vrot.slane %v301, 5
      %v907 = vsel %vm816, %v905, %v906
      %v908 = vrot.slane %v755, 5
      %v909 = vrot.slane %v908, 4
      %v910 = vrot.slane %v280, 5
      %v911 = vsel %vm816, %v909, %v910
      %v912 = vrot.slane %v910, 4
      %v913 = vrot.slane %v302, 5
      %v914 = vsel %vm816, %v912, %v913
      %v915 = vrot.slane %v756, 5
      %v916 = vrot.slane %v915, 4
      %v917 = vrot.slane %v282, 5
      %v918 = vsel %vm816, %v916, %v917
      %v919 = vrot.slane %v917, 4
      %v920 = vrot.slane %v303, 5
      %v921 = vsel %vm816, %v919, %v920
      %v922 = vrot.slane %v757, 5
      %v923 = vrot.slane %v922, 4
      %v924 = vrot.slane %v284, 5
      %v925 = vsel %vm816, %v923, %v924
      %v926 = vrot.slane %v924, 4
      %v927 = vrot.slane %v304, 5
      %v928 = vsel %vm816, %v926, %v927
      %v929 = vrot.slane %v758, 5
      %v930 = vrot.slane %v929, 4
      %v931 = vrot.slane %v286, 5
      %v932 = vsel %vm816, %v930, %v931
      %v933 = vrot.slane %v931, 4
      %v934 = vrot.slane %v305, 5
      %v935 = vsel %vm816, %v933, %v934
      %v936 = vrot.slane %v759, 5
      %v937 = vrot.slane %v936, 4
      %v938 = vrot.slane %v288, 5
      %v939 = vsel %vm816, %v937, %v938
      %v940 = vrot.slane %v938, 4
      %v941 = vrot.slane %v306, 5
      %v942 = vsel %vm816, %v940, %v941
      %s943 = sadd.s32 %s249, 1
      %s944 = smul.u32 %s943, 3
      %s945 = smul.addr %s944, 4
      %s946 = scalar_lea.vmem %s237, %s945
      %v947 = vld [vmem:[%s946] sm:$0xf]
      %v948 = vld [vmem:[%s946 + $0x4] sm:$0xf]
      %v949 = vld [vmem:[%s946 + $0xc] sm:$0xf]
      %v950 = vld [vmem:[%s946 + $0x10] sm:$0xf]
      %v951 = vld [vmem:[%s946 + $0x18] sm:$0xf]
      %v952 = vld [vmem:[%s946 + $0x1c] sm:$0xf]
      %v953 = vld [vmem:[%s946 + $0x24] sm:$0xf]
      %v954 = vld [vmem:[%s946 + $0x28] sm:$0xf]
      %v955 = vld [vmem:[%s946 + $0x30] sm:$0xf]
      %v956 = vld [vmem:[%s946 + $0x34] sm:$0xf]
      %v957 = vld [vmem:[%s946 + $0x3c] sm:$0xf]
      %v958 = vld [vmem:[%s946 + $0x40] sm:$0xf]
      %v959 = vld [vmem:[%s946 + $0x48] sm:$0xf]
      %v960 = vld [vmem:[%s946 + $0x4c] sm:$0xf]
      %v961 = vld [vmem:[%s946 + $0x54] sm:$0xf]
      %v962 = vld [vmem:[%s946 + $0x58] sm:$0xf]
      %v963 = vld [vmem:[%s946 + $0x60] sm:$0xf]
      %v964 = vld [vmem:[%s946 + $0x64] sm:$0xf]
      %v965 = vld [vmem:[%s946 + $0x6c] sm:$0xf]
      %v966 = vld [vmem:[%s946 + $0x70] sm:$0xf]
      %v967 = vld [vmem:[%s946 + $0x78] sm:$0xf]
      %v968 = vld [vmem:[%s946 + $0x7c] sm:$0xf]
      %v969 = vld [vmem:[%s946 + $0x84] sm:$0xf]
      %v970 = vld [vmem:[%s946 + $0x88] sm:$0xf]
      %v971 = vld [vmem:[%s946 + $0x90] sm:$0xf]
      %v972 = vld [vmem:[%s946 + $0x94] sm:$0xf]
      %v973 = vld [vmem:[%s946 + $0x9c] sm:$0xf]
      %v974 = vld [vmem:[%s946 + $0xa0] sm:$0xf]
      %v975 = vld [vmem:[%s946 + $0xa8] sm:$0xf]
      %v976 = vld [vmem:[%s946 + $0xac] sm:$0xf]
      %v977 = vld [vmem:[%s946 + $0xb4] sm:$0xf]
      %v978 = vld [vmem:[%s946 + $0xb8] sm:$0xf]
      %v979 = vld [vmem:[%s946 + $0xc0] sm:$0xf]
      %v980 = vld [vmem:[%s946 + $0xc4] sm:$0xf]
      %v981 = vld [vmem:[%s946 + $0xcc] sm:$0xf]
      %v982 = vld [vmem:[%s946 + $0xd0] sm:$0xf]
      %v983 = vld [vmem:[%s946 + $0x8] sm:$0x1]
      %v984 = vld [vmem:[%s946 + $0x14] sm:$0x1]
      %v985 = vld [vmem:[%s946 + $0x20] sm:$0x1]
      %v986 = vld [vmem:[%s946 + $0x2c] sm:$0x1]
      %v987 = vld [vmem:[%s946 + $0x38] sm:$0x1]
      %v988 = vld [vmem:[%s946 + $0x44] sm:$0x1]
      %v989 = vld [vmem:[%s946 + $0x50] sm:$0x1]
      %v990 = vld [vmem:[%s946 + $0x5c] sm:$0x1]
      %v991 = vld [vmem:[%s946 + $0x68] sm:$0x1]
      %v992 = vld [vmem:[%s946 + $0x74] sm:$0x1]
      %v993 = vld [vmem:[%s946 + $0x80] sm:$0x1]
      %v994 = vld [vmem:[%s946 + $0x8c] sm:$0x1]
      %v995 = vld [vmem:[%s946 + $0x98] sm:$0x1]
      %v996 = vld [vmem:[%s946 + $0xa4] sm:$0x1]
      %v997 = vld [vmem:[%s946 + $0xb0] sm:$0x1]
      %v998 = vld [vmem:[%s946 + $0xbc] sm:$0x1]
      %v999 = vld [vmem:[%s946 + $0xc8] sm:$0x1]
      %v1000 = vld [vmem:[%s946 + $0xd4] sm:$0x1]
      %v1002 = vshrl.u32 %v947, 16
      %v1004 = vrot.slane %v1002, 4
      %v1005 = vshll.u32 %v947, 16
      %v1007 = vrot.slane %v1005, 5
      %v1008 = vor.u32 %v1004, %v1007
      %v1009 = vrot.slane %v1008, 4
      %v1011 = vshll.u32 %v948, 16
      %v1013 = vrot.slane %v1011, 5
      %v1014 = vsel %vm309, %v1009, %v1013
      %v1015 = vshrl.u32 %v948, 16
      %v1017 = vrot.slane %v1015, 4
      %v1018 = vor.u32 %v1017, %v1013
      %v1019 = vrot.slane %v1018, 4
      %v1021 = vshll.u32 %v983, 16
      %v1023 = vrot.slane %v1021, 5
      %v1024 = vsel %vm309, %v1019, %v1023
      %v1026 = vshrl.u32 %v949, 16
      %v1028 = vrot.slane %v1026, 4
      %v1029 = vshll.u32 %v949, 16
      %v1031 = vrot.slane %v1029, 5
      %v1032 = vor.u32 %v1028, %v1031
      %v1033 = vrot.slane %v1032, 4
      %v1035 = vshll.u32 %v950, 16
      %v1037 = vrot.slane %v1035, 5
      %v1038 = vsel %vm309, %v1033, %v1037
      %v1039 = vshrl.u32 %v950, 16
      %v1041 = vrot.slane %v1039, 4
      %v1042 = vor.u32 %v1041, %v1037
      %v1043 = vrot.slane %v1042, 4
      %v1045 = vshll.u32 %v984, 16
      %v1047 = vrot.slane %v1045, 5
      %v1048 = vsel %vm309, %v1043, %v1047
      %v1050 = vshrl.u32 %v951, 16
      %v1052 = vrot.slane %v1050, 4
      %v1053 = vshll.u32 %v951, 16
      %v1055 = vrot.slane %v1053, 5
      %v1056 = vor.u32 %v1052, %v1055
      %v1057 = vrot.slane %v1056, 4
      %v1059 = vshll.u32 %v952, 16
      %v1061 = vrot.slane %v1059, 5
      %v1062 = vsel %vm309, %v1057, %v1061
      %v1063 = vshrl.u32 %v952, 16
      %v1065 = vrot.slane %v1063, 4
      %v1066 = vor.u32 %v1065, %v1061
      %v1067 = vrot.slane %v1066, 4
      %v1069 = vshll.u32 %v985, 16
      %v1071 = vrot.slane %v1069, 5
      %v1072 = vsel %vm309, %v1067, %v1071
      %v1074 = vshrl.u32 %v953, 16
      %v1076 = vrot.slane %v1074, 4
      %v1077 = vshll.u32 %v953, 16
      %v1079 = vrot.slane %v1077, 5
      %v1080 = vor.u32 %v1076, %v1079
      %v1081 = vrot.slane %v1080, 4
      %v1083 = vshll.u32 %v954, 16
      %v1085 = vrot.slane %v1083, 5
      %v1086 = vsel %vm309, %v1081, %v1085
      %v1087 = vshrl.u32 %v954, 16
      %v1089 = vrot.slane %v1087, 4
      %v1090 = vor.u32 %v1089, %v1085
      %v1091 = vrot.slane %v1090, 4
      %v1093 = vshll.u32 %v986, 16
      %v1095 = vrot.slane %v1093, 5
      %v1096 = vsel %vm309, %v1091, %v1095
      %v1098 = vshrl.u32 %v955, 16
      %v1100 = vrot.slane %v1098, 4
      %v1101 = vshll.u32 %v955, 16
      %v1103 = vrot.slane %v1101, 5
      %v1104 = vor.u32 %v1100, %v1103
      %v1105 = vrot.slane %v1104, 4
      %v1107 = vshll.u32 %v956, 16
      %v1109 = vrot.slane %v1107, 5
      %v1110 = vsel %vm309, %v1105, %v1109
      %v1111 = vshrl.u32 %v956, 16
      %v1113 = vrot.slane %v1111, 4
      %v1114 = vor.u32 %v1113, %v1109
      %v1115 = vrot.slane %v1114, 4
      %v1117 = vshll.u32 %v987, 16
      %v1119 = vrot.slane %v1117, 5
      %v1120 = vsel %vm309, %v1115, %v1119
      %v1122 = vshrl.u32 %v957, 16
      %v1124 = vrot.slane %v1122, 4
      %v1125 = vshll.u32 %v957, 16
      %v1127 = vrot.slane %v1125, 5
      %v1128 = vor.u32 %v1124, %v1127
      %v1129 = vrot.slane %v1128, 4
      %v1131 = vshll.u32 %v958, 16
      %v1133 = vrot.slane %v1131, 5
      %v1134 = vsel %vm309, %v1129, %v1133
      %v1135 = vshrl.u32 %v958, 16
      %v1137 = vrot.slane %v1135, 4
      %v1138 = vor.u32 %v1137, %v1133
      %v1139 = vrot.slane %v1138, 4
      %v1141 = vshll.u32 %v988, 16
      %v1143 = vrot.slane %v1141, 5
      %v1144 = vsel %vm309, %v1139, %v1143
      %v1146 = vshrl.u32 %v959, 16
      %v1148 = vrot.slane %v1146, 4
      %v1149 = vshll.u32 %v959, 16
      %v1151 = vrot.slane %v1149, 5
      %v1152 = vor.u32 %v1148, %v1151
      %v1153 = vrot.slane %v1152, 4
      %v1155 = vshll.u32 %v960, 16
      %v1157 = vrot.slane %v1155, 5
      %v1158 = vsel %vm309, %v1153, %v1157
      %v1159 = vshrl.u32 %v960, 16
      %v1161 = vrot.slane %v1159, 4
      %v1162 = vor.u32 %v1161, %v1157
      %v1163 = vrot.slane %v1162, 4
      %v1165 = vshll.u32 %v989, 16
      %v1167 = vrot.slane %v1165, 5
      %v1168 = vsel %vm309, %v1163, %v1167
      %v1170 = vshrl.u32 %v961, 16
      %v1172 = vrot.slane %v1170, 4
      %v1173 = vshll.u32 %v961, 16
      %v1175 = vrot.slane %v1173, 5
      %v1176 = vor.u32 %v1172, %v1175
      %v1177 = vrot.slane %v1176, 4
      %v1179 = vshll.u32 %v962, 16
      %v1181 = vrot.slane %v1179, 5
      %v1182 = vsel %vm309, %v1177, %v1181
      %v1183 = vshrl.u32 %v962, 16
      %v1185 = vrot.slane %v1183, 4
      %v1186 = vor.u32 %v1185, %v1181
      %v1187 = vrot.slane %v1186, 4
      %v1189 = vshll.u32 %v990, 16
      %v1191 = vrot.slane %v1189, 5
      %v1192 = vsel %vm309, %v1187, %v1191
      %v1194 = vshrl.u32 %v963, 16
      %v1196 = vrot.slane %v1194, 4
      %v1197 = vshll.u32 %v963, 16
      %v1199 = vrot.slane %v1197, 5
      %v1200 = vor.u32 %v1196, %v1199
      %v1201 = vrot.slane %v1200, 4
      %v1203 = vshll.u32 %v964, 16
      %v1205 = vrot.slane %v1203, 5
      %v1206 = vsel %vm309, %v1201, %v1205
      %v1207 = vshrl.u32 %v964, 16
      %v1209 = vrot.slane %v1207, 4
      %v1210 = vor.u32 %v1209, %v1205
      %v1211 = vrot.slane %v1210, 4
      %v1213 = vshll.u32 %v991, 16
      %v1215 = vrot.slane %v1213, 5
      %v1216 = vsel %vm309, %v1211, %v1215
      %v1218 = vshrl.u32 %v965, 16
      %v1220 = vrot.slane %v1218, 4
      %v1221 = vshll.u32 %v965, 16
      %v1223 = vrot.slane %v1221, 5
      %v1224 = vor.u32 %v1220, %v1223
      %v1225 = vrot.slane %v1224, 4
      %v1227 = vshll.u32 %v966, 16
      %v1229 = vrot.slane %v1227, 5
      %v1230 = vsel %vm309, %v1225, %v1229
      %v1231 = vshrl.u32 %v966, 16
      %v1233 = vrot.slane %v1231, 4
      %v1234 = vor.u32 %v1233, %v1229
      %v1235 = vrot.slane %v1234, 4
      %v1237 = vshll.u32 %v992, 16
      %v1239 = vrot.slane %v1237, 5
      %v1240 = vsel %vm309, %v1235, %v1239
      %v1242 = vshrl.u32 %v967, 16
      %v1244 = vrot.slane %v1242, 4
      %v1245 = vshll.u32 %v967, 16
      %v1247 = vrot.slane %v1245, 5
      %v1248 = vor.u32 %v1244, %v1247
      %v1249 = vrot.slane %v1248, 4
      %v1251 = vshll.u32 %v968, 16
      %v1253 = vrot.slane %v1251, 5
      %v1254 = vsel %vm309, %v1249, %v1253
      %v1255 = vshrl.u32 %v968, 16
      %v1257 = vrot.slane %v1255, 4
      %v1258 = vor.u32 %v1257, %v1253
      %v1259 = vrot.slane %v1258, 4
      %v1261 = vshll.u32 %v993, 16
      %v1263 = vrot.slane %v1261, 5
      %v1264 = vsel %vm309, %v1259, %v1263
      %v1266 = vshrl.u32 %v969, 16
      %v1268 = vrot.slane %v1266, 4
      %v1269 = vshll.u32 %v969, 16
      %v1271 = vrot.slane %v1269, 5
      %v1272 = vor.u32 %v1268, %v1271
      %v1273 = vrot.slane %v1272, 4
      %v1275 = vshll.u32 %v970, 16
      %v1277 = vrot.slane %v1275, 5
      %v1278 = vsel %vm309, %v1273, %v1277
      %v1279 = vshrl.u32 %v970, 16
      %v1281 = vrot.slane %v1279, 4
      %v1282 = vor.u32 %v1281, %v1277
      %v1283 = vrot.slane %v1282, 4
      %v1285 = vshll.u32 %v994, 16
      %v1287 = vrot.slane %v1285, 5
      %v1288 = vsel %vm309, %v1283, %v1287
      %v1290 = vshrl.u32 %v971, 16
      %v1292 = vrot.slane %v1290, 4
      %v1293 = vshll.u32 %v971, 16
      %v1295 = vrot.slane %v1293, 5
      %v1296 = vor.u32 %v1292, %v1295
      %v1297 = vrot.slane %v1296, 4
      %v1299 = vshll.u32 %v972, 16
      %v1301 = vrot.slane %v1299, 5
      %v1302 = vsel %vm309, %v1297, %v1301
      %v1303 = vshrl.u32 %v972, 16
      %v1305 = vrot.slane %v1303, 4
      %v1306 = vor.u32 %v1305, %v1301
      %v1307 = vrot.slane %v1306, 4
      %v1309 = vshll.u32 %v995, 16
      %v1311 = vrot.slane %v1309, 5
      %v1312 = vsel %vm309, %v1307, %v1311
      %v1314 = vshrl.u32 %v973, 16
      %v1316 = vrot.slane %v1314, 4
      %v1317 = vshll.u32 %v973, 16
      %v1319 = vrot.slane %v1317, 5
      %v1320 = vor.u32 %v1316, %v1319
      %v1321 = vrot.slane %v1320, 4
      %v1323 = vshll.u32 %v974, 16
      %v1325 = vrot.slane %v1323, 5
      %v1326 = vsel %vm309, %v1321, %v1325
      %v1327 = vshrl.u32 %v974, 16
      %v1329 = vrot.slane %v1327, 4
      %v1330 = vor.u32 %v1329, %v1325
      %v1331 = vrot.slane %v1330, 4
      %v1333 = vshll.u32 %v996, 16
      %v1335 = vrot.slane %v1333, 5
      %v1336 = vsel %vm309, %v1331, %v1335
      %v1338 = vshrl.u32 %v975, 16
      %v1340 = vrot.slane %v1338, 4
      %v1341 = vshll.u32 %v975, 16
      %v1343 = vrot.slane %v1341, 5
      %v1344 = vor.u32 %v1340, %v1343
      %v1345 = vrot.slane %v1344, 4
      %v1347 = vshll.u32 %v976, 16
      %v1349 = vrot.slane %v1347, 5
      %v1350 = vsel %vm309, %v1345, %v1349
      %v1351 = vshrl.u32 %v976, 16
      %v1353 = vrot.slane %v1351, 4
      %v1354 = vor.u32 %v1353, %v1349
      %v1355 = vrot.slane %v1354, 4
      %v1357 = vshll.u32 %v997, 16
      %v1359 = vrot.slane %v1357, 5
      %v1360 = vsel %vm309, %v1355, %v1359
      %v1362 = vshrl.u32 %v977, 16
      %v1364 = vrot.slane %v1362, 4
      %v1365 = vshll.u32 %v977, 16
      %v1367 = vrot.slane %v1365, 5
      %v1368 = vor.u32 %v1364, %v1367
      %v1369 = vrot.slane %v1368, 4
      %v1371 = vshll.u32 %v978, 16
      %v1373 = vrot.slane %v1371, 5
      %v1374 = vsel %vm309, %v1369, %v1373
      %v1375 = vshrl.u32 %v978, 16
      %v1377 = vrot.slane %v1375, 4
      %v1378 = vor.u32 %v1377, %v1373
      %v1379 = vrot.slane %v1378, 4
      %v1381 = vshll.u32 %v998, 16
      %v1383 = vrot.slane %v1381, 5
      %v1384 = vsel %vm309, %v1379, %v1383
      %v1386 = vshrl.u32 %v979, 16
      %v1388 = vrot.slane %v1386, 4
      %v1389 = vshll.u32 %v979, 16
      %v1391 = vrot.slane %v1389, 5
      %v1392 = vor.u32 %v1388, %v1391
      %v1393 = vrot.slane %v1392, 4
      %v1395 = vshll.u32 %v980, 16
      %v1397 = vrot.slane %v1395, 5
      %v1398 = vsel %vm309, %v1393, %v1397
      %v1399 = vshrl.u32 %v980, 16
      %v1401 = vrot.slane %v1399, 4
      %v1402 = vor.u32 %v1401, %v1397
      %v1403 = vrot.slane %v1402, 4
      %v1405 = vshll.u32 %v999, 16
      %v1407 = vrot.slane %v1405, 5
      %v1408 = vsel %vm309, %v1403, %v1407
      %v1410 = vshrl.u32 %v981, 16
      %v1412 = vrot.slane %v1410, 4
      %v1413 = vshll.u32 %v981, 16
      %v1415 = vrot.slane %v1413, 5
      %v1416 = vor.u32 %v1412, %v1415
      %v1417 = vrot.slane %v1416, 4
      %v1419 = vshll.u32 %v982, 16
      %v1421 = vrot.slane %v1419, 5
      %v1422 = vsel %vm309, %v1417, %v1421
      %v1423 = vshrl.u32 %v982, 16
      %v1425 = vrot.slane %v1423, 4
      %v1426 = vor.u32 %v1425, %v1421
      %v1427 = vrot.slane %v1426, 4
      %v1429 = vshll.u32 %v1000, 16
      %v1431 = vrot.slane %v1429, 5
      %v1432 = vsel %vm309, %v1427, %v1431
      %v1433 = vld [vmem:[%s946] sm:$0xe]
      %v1434 = vld [vmem:[%s946 + $0xc] sm:$0xe]
      %v1435 = vld [vmem:[%s946 + $0x18] sm:$0xe]
      %v1436 = vld [vmem:[%s946 + $0x24] sm:$0xe]
      %v1437 = vld [vmem:[%s946 + $0x30] sm:$0xe]
      %v1438 = vld [vmem:[%s946 + $0x3c] sm:$0xe]
      %v1439 = vld [vmem:[%s946 + $0x48] sm:$0xe]
      %v1440 = vld [vmem:[%s946 + $0x54] sm:$0xe]
      %v1441 = vld [vmem:[%s946 + $0x60] sm:$0xe]
      %v1442 = vld [vmem:[%s946 + $0x6c] sm:$0xe]
      %v1443 = vld [vmem:[%s946 + $0x78] sm:$0xe]
      %v1444 = vld [vmem:[%s946 + $0x84] sm:$0xe]
      %v1445 = vld [vmem:[%s946 + $0x90] sm:$0xe]
      %v1446 = vld [vmem:[%s946 + $0x9c] sm:$0xe]
      %v1447 = vld [vmem:[%s946 + $0xa8] sm:$0xe]
      %v1448 = vld [vmem:[%s946 + $0xb4] sm:$0xe]
      %v1449 = vld [vmem:[%s946 + $0xc0] sm:$0xe]
      %v1450 = vld [vmem:[%s946 + $0xcc] sm:$0xe]
      %v1505 = vrot.slane %v1433, 5
      %v1506 = vrot.slane %v1505, 4
      %v1507 = vrot.slane %v948, 5
      %v1508 = vsel %vm816, %v1506, %v1507
      %v1509 = vrot.slane %v1507, 4
      %v1510 = vrot.slane %v983, 5
      %v1511 = vsel %vm816, %v1509, %v1510
      %v1512 = vrot.slane %v1434, 5
      %v1513 = vrot.slane %v1512, 4
      %v1514 = vrot.slane %v950, 5
      %v1515 = vsel %vm816, %v1513, %v1514
      %v1516 = vrot.slane %v1514, 4
      %v1517 = vrot.slane %v984, 5
      %v1518 = vsel %vm816, %v1516, %v1517
      %v1519 = vrot.slane %v1435, 5
      %v1520 = vrot.slane %v1519, 4
      %v1521 = vrot.slane %v952, 5
      %v1522 = vsel %vm816, %v1520, %v1521
      %v1523 = vrot.slane %v1521, 4
      %v1524 = vrot.slane %v985, 5
      %v1525 = vsel %vm816, %v1523, %v1524
      %v1526 = vrot.slane %v1436, 5
      %v1527 = vrot.slane %v1526, 4
      %v1528 = vrot.slane %v954, 5
      %v1529 = vsel %vm816, %v1527, %v1528
      %v1530 = vrot.slane %v1528, 4
      %v1531 = vrot.slane %v986, 5
      %v1532 = vsel %vm816, %v1530, %v1531
      %v1533 = vrot.slane %v1437, 5
      %v1534 = vrot.slane %v1533, 4
      %v1535 = vrot.slane %v956, 5
      %v1536 = vsel %vm816, %v1534, %v1535
      %v1537 = vrot.slane %v1535, 4
      %v1538 = vrot.slane %v987, 5
      %v1539 = vsel %vm816, %v1537, %v1538
      %v1540 = vrot.slane %v1438, 5
      %v1541 = vrot.slane %v1540, 4
      %v1542 = vrot.slane %v958, 5
      %v1543 = vsel %vm816, %v1541, %v1542
      %v1544 = vrot.slane %v1542, 4
      %v1545 = vrot.slane %v988, 5
      %v1546 = vsel %vm816, %v1544, %v1545
      %v1547 = vrot.slane %v1439, 5
      %v1548 = vrot.slane %v1547, 4
      %v1549 = vrot.slane %v960, 5
      %v1550 = vsel %vm816, %v1548, %v1549
      %v1551 = vrot.slane %v1549, 4
      %v1552 = vrot.slane %v989, 5
      %v1553 = vsel %vm816, %v1551, %v1552
      %v1554 = vrot.slane %v1440, 5
      %v1555 = vrot.slane %v1554, 4
      %v1556 = vrot.slane %v962, 5
      %v1557 = vsel %vm816, %v1555, %v1556
      %v1558 = vrot.slane %v1556, 4
      %v1559 = vrot.slane %v990, 5
      %v1560 = vsel %vm816, %v1558, %v1559
      %v1561 = vrot.slane %v1441, 5
      %v1562 = vrot.slane %v1561, 4
      %v1563 = vrot.slane %v964, 5
      %v1564 = vsel %vm816, %v1562, %v1563
      %v1565 = vrot.slane %v1563, 4
      %v1566 = vrot.slane %v991, 5
      %v1567 = vsel %vm816, %v1565, %v1566
      %v1568 = vrot.slane %v1442, 5
      %v1569 = vrot.slane %v1568, 4
      %v1570 = vrot.slane %v966, 5
      %v1571 = vsel %vm816, %v1569, %v1570
      %v1572 = vrot.slane %v1570, 4
      %v1573 = vrot.slane %v992, 5
      %v1574 = vsel %vm816, %v1572, %v1573
      %v1575 = vrot.slane %v1443, 5
      %v1576 = vrot.slane %v1575, 4
      %v1577 = vrot.slane %v968, 5
      %v1578 = vsel %vm816, %v1576, %v1577
      %v1579 = vrot.slane %v1577, 4
      %v1580 = vrot.slane %v993, 5
      %v1581 = vsel %vm816, %v1579, %v1580
      %v1582 = vrot.slane %v1444, 5
      %v1583 = vrot.slane %v1582, 4
      %v1584 = vrot.slane %v970, 5
      %v1585 = vsel %vm816, %v1583, %v1584
      %v1586 = vrot.slane %v1584, 4
      %v1587 = vrot.slane %v994, 5
      %v1588 = vsel %vm816, %v1586, %v1587
      %v1589 = vrot.slane %v1445, 5
      %v1590 = vrot.slane %v1589, 4
      %v1591 = vrot.slane %v972, 5
      %v1592 = vsel %vm816, %v1590, %v1591
      %v1593 = vrot.slane %v1591, 4
      %v1594 = vrot.slane %v995, 5
      %v1595 = vsel %vm816, %v1593, %v1594
      %v1596 = vrot.slane %v1446, 5
      %v1597 = vrot.slane %v1596, 4
      %v1598 = vrot.slane %v974, 5
      %v1599 = vsel %vm816, %v1597, %v1598
      %v1600 = vrot.slane %v1598, 4
      %v1601 = vrot.slane %v996, 5
      %v1602 = vsel %vm816, %v1600, %v1601
      %v1603 = vrot.slane %v1447, 5
      %v1604 = vrot.slane %v1603, 4
      %v1605 = vrot.slane %v976, 5
      %v1606 = vsel %vm816, %v1604, %v1605
      %v1607 = vrot.slane %v1605, 4
      %v1608 = vrot.slane %v997, 5
      %v1609 = vsel %vm816, %v1607, %v1608
      %v1610 = vrot.slane %v1448, 5
      %v1611 = vrot.slane %v1610, 4
      %v1612 = vrot.slane %v978, 5
      %v1613 = vsel %vm816, %v1611, %v1612
      %v1614 = vrot.slane %v1612, 4
      %v1615 = vrot.slane %v998, 5
      %v1616 = vsel %vm816, %v1614, %v1615
      %v1617 = vrot.slane %v1449, 5
      %v1618 = vrot.slane %v1617, 4
      %v1619 = vrot.slane %v980, 5
      %v1620 = vsel %vm816, %v1618, %v1619
      %v1621 = vrot.slane %v1619, 4
      %v1622 = vrot.slane %v999, 5
      %v1623 = vsel %vm816, %v1621, %v1622
      %v1624 = vrot.slane %v1450, 5
      %v1625 = vrot.slane %v1624, 4
      %v1626 = vrot.slane %v982, 5
      %v1627 = vsel %vm816, %v1625, %v1626
      %v1628 = vrot.slane %v1626, 4
      %v1629 = vrot.slane %v1000, 5
      %v1630 = vsel %vm816, %v1628, %v1629
      %s1631 = sadd.s32 %s249, 2
      %s1632 = smul.u32 %s1631, 3
      %s1633 = smul.addr %s1632, 4
      %s1634 = scalar_lea.vmem %s237, %s1633
      %v1635 = vld [vmem:[%s1634] sm:$0xf]
      %v1636 = vld [vmem:[%s1634 + $0x4] sm:$0xf]
      %v1637 = vld [vmem:[%s1634 + $0xc] sm:$0xf]
      %v1638 = vld [vmem:[%s1634 + $0x10] sm:$0xf]
      %v1639 = vld [vmem:[%s1634 + $0x18] sm:$0xf]
      %v1640 = vld [vmem:[%s1634 + $0x1c] sm:$0xf]
      %v1641 = vld [vmem:[%s1634 + $0x24] sm:$0xf]
      %v1642 = vld [vmem:[%s1634 + $0x28] sm:$0xf]
      %v1643 = vld [vmem:[%s1634 + $0x30] sm:$0xf]
      %v1644 = vld [vmem:[%s1634 + $0x34] sm:$0xf]
      %v1645 = vld [vmem:[%s1634 + $0x3c] sm:$0xf]
      %v1646 = vld [vmem:[%s1634 + $0x40] sm:$0xf]
      %v1647 = vld [vmem:[%s1634 + $0x48] sm:$0xf]
      %v1648 = vld [vmem:[%s1634 + $0x4c] sm:$0xf]
      %v1649 = vld [vmem:[%s1634 + $0x54] sm:$0xf]
      %v1650 = vld [vmem:[%s1634 + $0x58] sm:$0xf]
      %v1651 = vld [vmem:[%s1634 + $0x60] sm:$0xf]
      %v1652 = vld [vmem:[%s1634 + $0x64] sm:$0xf]
      %v1653 = vld [vmem:[%s1634 + $0x6c] sm:$0xf]
      %v1654 = vld [vmem:[%s1634 + $0x70] sm:$0xf]
      %v1655 = vld [vmem:[%s1634 + $0x78] sm:$0xf]
      %v1656 = vld [vmem:[%s1634 + $0x7c] sm:$0xf]
      %v1657 = vld [vmem:[%s1634 + $0x84] sm:$0xf]
      %v1658 = vld [vmem:[%s1634 + $0x88] sm:$0xf]
      %v1659 = vld [vmem:[%s1634 + $0x90] sm:$0xf]
      %v1660 = vld [vmem:[%s1634 + $0x94] sm:$0xf]
      %v1661 = vld [vmem:[%s1634 + $0x9c] sm:$0xf]
      %v1662 = vld [vmem:[%s1634 + $0xa0] sm:$0xf]
      %v1663 = vld [vmem:[%s1634 + $0xa8] sm:$0xf]
      %v1664 = vld [vmem:[%s1634 + $0xac] sm:$0xf]
      %v1665 = vld [vmem:[%s1634 + $0xb4] sm:$0xf]
      %v1666 = vld [vmem:[%s1634 + $0xb8] sm:$0xf]
      %v1667 = vld [vmem:[%s1634 + $0xc0] sm:$0xf]
      %v1668 = vld [vmem:[%s1634 + $0xc4] sm:$0xf]
      %v1669 = vld [vmem:[%s1634 + $0xcc] sm:$0xf]
      %v1670 = vld [vmem:[%s1634 + $0xd0] sm:$0xf]
      %v1671 = vld [vmem:[%s1634 + $0x8] sm:$0x1]
      %v1672 = vld [vmem:[%s1634 + $0x14] sm:$0x1]
      %v1673 = vld [vmem:[%s1634 + $0x20] sm:$0x1]
      %v1674 = vld [vmem:[%s1634 + $0x2c] sm:$0x1]
      %v1675 = vld [vmem:[%s1634 + $0x38] sm:$0x1]
      %v1676 = vld [vmem:[%s1634 + $0x44] sm:$0x1]
      %v1677 = vld [vmem:[%s1634 + $0x50] sm:$0x1]
      %v1678 = vld [vmem:[%s1634 + $0x5c] sm:$0x1]
      %v1679 = vld [vmem:[%s1634 + $0x68] sm:$0x1]
      %v1680 = vld [vmem:[%s1634 + $0x74] sm:$0x1]
      %v1681 = vld [vmem:[%s1634 + $0x80] sm:$0x1]
      %v1682 = vld [vmem:[%s1634 + $0x8c] sm:$0x1]
      %v1683 = vld [vmem:[%s1634 + $0x98] sm:$0x1]
      %v1684 = vld [vmem:[%s1634 + $0xa4] sm:$0x1]
      %v1685 = vld [vmem:[%s1634 + $0xb0] sm:$0x1]
      %v1686 = vld [vmem:[%s1634 + $0xbc] sm:$0x1]
      %v1687 = vld [vmem:[%s1634 + $0xc8] sm:$0x1]
      %v1688 = vld [vmem:[%s1634 + $0xd4] sm:$0x1]
      %v1690 = vshrl.u32 %v1635, 16
      %v1692 = vrot.slane %v1690, 4
      %v1693 = vshll.u32 %v1635, 16
      %v1695 = vrot.slane %v1693, 5
      %v1696 = vor.u32 %v1692, %v1695
      %v1697 = vrot.slane %v1696, 4
      %v1699 = vshll.u32 %v1636, 16
      %v1701 = vrot.slane %v1699, 5
      %v1702 = vsel %vm309, %v1697, %v1701
      %v1703 = vshrl.u32 %v1636, 16
      %v1705 = vrot.slane %v1703, 4
      %v1706 = vor.u32 %v1705, %v1701
      %v1707 = vrot.slane %v1706, 4
      %v1709 = vshll.u32 %v1671, 16
      %v1711 = vrot.slane %v1709, 5
      %v1712 = vsel %vm309, %v1707, %v1711
      %v1714 = vshrl.u32 %v1637, 16
      %v1716 = vrot.slane %v1714, 4
      %v1717 = vshll.u32 %v1637, 16
      %v1719 = vrot.slane %v1717, 5
      %v1720 = vor.u32 %v1716, %v1719
      %v1721 = vrot.slane %v1720, 4
      %v1723 = vshll.u32 %v1638, 16
      %v1725 = vrot.slane %v1723, 5
      %v1726 = vsel %vm309, %v1721, %v1725
      %v1727 = vshrl.u32 %v1638, 16
      %v1729 = vrot.slane %v1727, 4
      %v1730 = vor.u32 %v1729, %v1725
      %v1731 = vrot.slane %v1730, 4
      %v1733 = vshll.u32 %v1672, 16
      %v1735 = vrot.slane %v1733, 5
      %v1736 = vsel %vm309, %v1731, %v1735
      %v1738 = vshrl.u32 %v1639, 16
      %v1740 = vrot.slane %v1738, 4
      %v1741 = vshll.u32 %v1639, 16
      %v1743 = vrot.slane %v1741, 5
      %v1744 = vor.u32 %v1740, %v1743
      %v1745 = vrot.slane %v1744, 4
      %v1747 = vshll.u32 %v1640, 16
      %v1749 = vrot.slane %v1747, 5
      %v1750 = vsel %vm309, %v1745, %v1749
      %v1751 = vshrl.u32 %v1640, 16
      %v1753 = vrot.slane %v1751, 4
      %v1754 = vor.u32 %v1753, %v1749
      %v1755 = vrot.slane %v1754, 4
      %v1757 = vshll.u32 %v1673, 16
      %v1759 = vrot.slane %v1757, 5
      %v1760 = vsel %vm309, %v1755, %v1759
      %v1762 = vshrl.u32 %v1641, 16
      %v1764 = vrot.slane %v1762, 4
      %v1765 = vshll.u32 %v1641, 16
      %v1767 = vrot.slane %v1765, 5
      %v1768 = vor.u32 %v1764, %v1767
      %v1769 = vrot.slane %v1768, 4
      %v1771 = vshll.u32 %v1642, 16
      %v1773 = vrot.slane %v1771, 5
      %v1774 = vsel %vm309, %v1769, %v1773
      %v1775 = vshrl.u32 %v1642, 16
      %v1777 = vrot.slane %v1775, 4
      %v1778 = vor.u32 %v1777, %v1773
      %v1779 = vrot.slane %v1778, 4
      %v1781 = vshll.u32 %v1674, 16
      %v1783 = vrot.slane %v1781, 5
      %v1784 = vsel %vm309, %v1779, %v1783
      %v1786 = vshrl.u32 %v1643, 16
      %v1788 = vrot.slane %v1786, 4
      %v1789 = vshll.u32 %v1643, 16
      %v1791 = vrot.slane %v1789, 5
      %v1792 = vor.u32 %v1788, %v1791
      %v1793 = vrot.slane %v1792, 4
      %v1795 = vshll.u32 %v1644, 16
      %v1797 = vrot.slane %v1795, 5
      %v1798 = vsel %vm309, %v1793, %v1797
      %v1799 = vshrl.u32 %v1644, 16
      %v1801 = vrot.slane %v1799, 4
      %v1802 = vor.u32 %v1801, %v1797
      %v1803 = vrot.slane %v1802, 4
      %v1805 = vshll.u32 %v1675, 16
      %v1807 = vrot.slane %v1805, 5
      %v1808 = vsel %vm309, %v1803, %v1807
      %v1810 = vshrl.u32 %v1645, 16
      %v1812 = vrot.slane %v1810, 4
      %v1813 = vshll.u32 %v1645, 16
      %v1815 = vrot.slane %v1813, 5
      %v1816 = vor.u32 %v1812, %v1815
      %v1817 = vrot.slane %v1816, 4
      %v1819 = vshll.u32 %v1646, 16
      %v1821 = vrot.slane %v1819, 5
      %v1822 = vsel %vm309, %v1817, %v1821
      %v1823 = vshrl.u32 %v1646, 16
      %v1825 = vrot.slane %v1823, 4
      %v1826 = vor.u32 %v1825, %v1821
      %v1827 = vrot.slane %v1826, 4
      %v1829 = vshll.u32 %v1676, 16
      %v1831 = vrot.slane %v1829, 5
      %v1832 = vsel %vm309, %v1827, %v1831
      %v1834 = vshrl.u32 %v1647, 16
      %v1836 = vrot.slane %v1834, 4
      %v1837 = vshll.u32 %v1647, 16
      %v1839 = vrot.slane %v1837, 5
      %v1840 = vor.u32 %v1836, %v1839
      %v1841 = vrot.slane %v1840, 4
      %v1843 = vshll.u32 %v1648, 16
      %v1845 = vrot.slane %v1843, 5
      %v1846 = vsel %vm309, %v1841, %v1845
      %v1847 = vshrl.u32 %v1648, 16
      %v1849 = vrot.slane %v1847, 4
      %v1850 = vor.u32 %v1849, %v1845
      %v1851 = vrot.slane %v1850, 4
      %v1853 = vshll.u32 %v1677, 16
      %v1855 = vrot.slane %v1853, 5
      %v1856 = vsel %vm309, %v1851, %v1855
      %v1858 = vshrl.u32 %v1649, 16
      %v1860 = vrot.slane %v1858, 4
      %v1861 = vshll.u32 %v1649, 16
      %v1863 = vrot.slane %v1861, 5
      %v1864 = vor.u32 %v1860, %v1863
      %v1865 = vrot.slane %v1864, 4
      %v1867 = vshll.u32 %v1650, 16
      %v1869 = vrot.slane %v1867, 5
      %v1870 = vsel %vm309, %v1865, %v1869
      %v1871 = vshrl.u32 %v1650, 16
      %v1873 = vrot.slane %v1871, 4
      %v1874 = vor.u32 %v1873, %v1869
      %v1875 = vrot.slane %v1874, 4
      %v1877 = vshll.u32 %v1678, 16
      %v1879 = vrot.slane %v1877, 5
      %v1880 = vsel %vm309, %v1875, %v1879
      %v1882 = vshrl.u32 %v1651, 16
      %v1884 = vrot.slane %v1882, 4
      %v1885 = vshll.u32 %v1651, 16
      %v1887 = vrot.slane %v1885, 5
      %v1888 = vor.u32 %v1884, %v1887
      %v1889 = vrot.slane %v1888, 4
      %v1891 = vshll.u32 %v1652, 16
      %v1893 = vrot.slane %v1891, 5
      %v1894 = vsel %vm309, %v1889, %v1893
      %v1895 = vshrl.u32 %v1652, 16
      %v1897 = vrot.slane %v1895, 4
      %v1898 = vor.u32 %v1897, %v1893
      %v1899 = vrot.slane %v1898, 4
      %v1901 = vshll.u32 %v1679, 16
      %v1903 = vrot.slane %v1901, 5
      %v1904 = vsel %vm309, %v1899, %v1903
      %v1906 = vshrl.u32 %v1653, 16
      %v1908 = vrot.slane %v1906, 4
      %v1909 = vshll.u32 %v1653, 16
      %v1911 = vrot.slane %v1909, 5
      %v1912 = vor.u32 %v1908, %v1911
      %v1913 = vrot.slane %v1912, 4
      %v1915 = vshll.u32 %v1654, 16
      %v1917 = vrot.slane %v1915, 5
      %v1918 = vsel %vm309, %v1913, %v1917
      %v1919 = vshrl.u32 %v1654, 16
      %v1921 = vrot.slane %v1919, 4
      %v1922 = vor.u32 %v1921, %v1917
      %v1923 = vrot.slane %v1922, 4
      %v1925 = vshll.u32 %v1680, 16
      %v1927 = vrot.slane %v1925, 5
      %v1928 = vsel %vm309, %v1923, %v1927
      %v1930 = vshrl.u32 %v1655, 16
      %v1932 = vrot.slane %v1930, 4
      %v1933 = vshll.u32 %v1655, 16
      %v1935 = vrot.slane %v1933, 5
      %v1936 = vor.u32 %v1932, %v1935
      %v1937 = vrot.slane %v1936, 4
      %v1939 = vshll.u32 %v1656, 16
      %v1941 = vrot.slane %v1939, 5
      %v1942 = vsel %vm309, %v1937, %v1941
      %v1943 = vshrl.u32 %v1656, 16
      %v1945 = vrot.slane %v1943, 4
      %v1946 = vor.u32 %v1945, %v1941
      %v1947 = vrot.slane %v1946, 4
      %v1949 = vshll.u32 %v1681, 16
      %v1951 = vrot.slane %v1949, 5
      %v1952 = vsel %vm309, %v1947, %v1951
      %v1954 = vshrl.u32 %v1657, 16
      %v1956 = vrot.slane %v1954, 4
      %v1957 = vshll.u32 %v1657, 16
      %v1959 = vrot.slane %v1957, 5
      %v1960 = vor.u32 %v1956, %v1959
      %v1961 = vrot.slane %v1960, 4
      %v1963 = vshll.u32 %v1658, 16
      %v1965 = vrot.slane %v1963, 5
      %v1966 = vsel %vm309, %v1961, %v1965
      %v1967 = vshrl.u32 %v1658, 16
      %v1969 = vrot.slane %v1967, 4
      %v1970 = vor.u32 %v1969, %v1965
      %v1971 = vrot.slane %v1970, 4
      %v1973 = vshll.u32 %v1682, 16
      %v1975 = vrot.slane %v1973, 5
      %v1976 = vsel %vm309, %v1971, %v1975
      %v1978 = vshrl.u32 %v1659, 16
      %v1980 = vrot.slane %v1978, 4
      %v1981 = vshll.u32 %v1659, 16
      %v1983 = vrot.slane %v1981, 5
      %v1984 = vor.u32 %v1980, %v1983
      %v1985 = vrot.slane %v1984, 4
      %v1987 = vshll.u32 %v1660, 16
      %v1989 = vrot.slane %v1987, 5
      %v1990 = vsel %vm309, %v1985, %v1989
      %v1991 = vshrl.u32 %v1660, 16
      %v1993 = vrot.slane %v1991, 4
      %v1994 = vor.u32 %v1993, %v1989
      %v1995 = vrot.slane %v1994, 4
      %v1997 = vshll.u32 %v1683, 16
      %v1999 = vrot.slane %v1997, 5
      %v2000 = vsel %vm309, %v1995, %v1999
      %v2002 = vshrl.u32 %v1661, 16
      %v2004 = vrot.slane %v2002, 4
      %v2005 = vshll.u32 %v1661, 16
      %v2007 = vrot.slane %v2005, 5
      %v2008 = vor.u32 %v2004, %v2007
      %v2009 = vrot.slane %v2008, 4
      %v2011 = vshll.u32 %v1662, 16
      %v2013 = vrot.slane %v2011, 5
      %v2014 = vsel %vm309, %v2009, %v2013
      %v2015 = vshrl.u32 %v1662, 16
      %v2017 = vrot.slane %v2015, 4
      %v2018 = vor.u32 %v2017, %v2013
      %v2019 = vrot.slane %v2018, 4
      %v2021 = vshll.u32 %v1684, 16
      %v2023 = vrot.slane %v2021, 5
      %v2024 = vsel %vm309, %v2019, %v2023
      %v2026 = vshrl.u32 %v1663, 16
      %v2028 = vrot.slane %v2026, 4
      %v2029 = vshll.u32 %v1663, 16
      %v2031 = vrot.slane %v2029, 5
      %v2032 = vor.u32 %v2028, %v2031
      %v2033 = vrot.slane %v2032, 4
      %v2035 = vshll.u32 %v1664, 16
      %v2037 = vrot.slane %v2035, 5
      %v2038 = vsel %vm309, %v2033, %v2037
      %v2039 = vshrl.u32 %v1664, 16
      %v2041 = vrot.slane %v2039, 4
      %v2042 = vor.u32 %v2041, %v2037
      %v2043 = vrot.slane %v2042, 4
      %v2045 = vshll.u32 %v1685, 16
      %v2047 = vrot.slane %v2045, 5
      %v2048 = vsel %vm309, %v2043, %v2047
      %v2050 = vshrl.u32 %v1665, 16
      %v2052 = vrot.slane %v2050, 4
      %v2053 = vshll.u32 %v1665, 16
      %v2055 = vrot.slane %v2053, 5
      %v2056 = vor.u32 %v2052, %v2055
      %v2057 = vrot.slane %v2056, 4
      %v2059 = vshll.u32 %v1666, 16
      %v2061 = vrot.slane %v2059, 5
      %v2062 = vsel %vm309, %v2057, %v2061
      %v2063 = vshrl.u32 %v1666, 16
      %v2065 = vrot.slane %v2063, 4
      %v2066 = vor.u32 %v2065, %v2061
      %v2067 = vrot.slane %v2066, 4
      %v2069 = vshll.u32 %v1686, 16
      %v2071 = vrot.slane %v2069, 5
      %v2072 = vsel %vm309, %v2067, %v2071
      %v2074 = vshrl.u32 %v1667, 16
      %v2076 = vrot.slane %v2074, 4
      %v2077 = vshll.u32 %v1667, 16
      %v2079 = vrot.slane %v2077, 5
      %v2080 = vor.u32 %v2076, %v2079
      %v2081 = vrot.slane %v2080, 4
      %v2083 = vshll.u32 %v1668, 16
      %v2085 = vrot.slane %v2083, 5
      %v2086 = vsel %vm309, %v2081, %v2085
      %v2087 = vshrl.u32 %v1668, 16
      %v2089 = vrot.slane %v2087, 4
      %v2090 = vor.u32 %v2089, %v2085
      %v2091 = vrot.slane %v2090, 4
      %v2093 = vshll.u32 %v1687, 16
      %v2095 = vrot.slane %v2093, 5
      %v2096 = vsel %vm309, %v2091, %v2095
      %v2098 = vshrl.u32 %v1669, 16
      %v2100 = vrot.slane %v2098, 4
      %v2101 = vshll.u32 %v1669, 16
      %v2103 = vrot.slane %v2101, 5
      %v2104 = vor.u32 %v2100, %v2103
      %v2105 = vrot.slane %v2104, 4
      %v2107 = vshll.u32 %v1670, 16
      %v2109 = vrot.slane %v2107, 5
      %v2110 = vsel %vm309, %v2105, %v2109
      %v2111 = vshrl.u32 %v1670, 16
      %v2113 = vrot.slane %v2111, 4
      %v2114 = vor.u32 %v2113, %v2109
      %v2115 = vrot.slane %v2114, 4
      %v2117 = vshll.u32 %v1688, 16
      %v2119 = vrot.slane %v2117, 5
      %v2120 = vsel %vm309, %v2115, %v2119
      %v2121 = vld [vmem:[%s1634] sm:$0xe]
      %v2122 = vld [vmem:[%s1634 + $0xc] sm:$0xe]
      %v2123 = vld [vmem:[%s1634 + $0x18] sm:$0xe]
      %v2124 = vld [vmem:[%s1634 + $0x24] sm:$0xe]
      %v2125 = vld [vmem:[%s1634 + $0x30] sm:$0xe]
      %v2126 = vld [vmem:[%s1634 + $0x3c] sm:$0xe]
      %v2127 = vld [vmem:[%s1634 + $0x48] sm:$0xe]
      %v2128 = vld [vmem:[%s1634 + $0x54] sm:$0xe]
      %v2129 = vld [vmem:[%s1634 + $0x60] sm:$0xe]
      %v2130 = vld [vmem:[%s1634 + $0x6c] sm:$0xe]
      %v2131 = vld [vmem:[%s1634 + $0x78] sm:$0xe]
      %v2132 = vld [vmem:[%s1634 + $0x84] sm:$0xe]
      %v2133 = vld [vmem:[%s1634 + $0x90] sm:$0xe]
      %v2134 = vld [vmem:[%s1634 + $0x9c] sm:$0xe]
      %v2135 = vld [vmem:[%s1634 + $0xa8] sm:$0xe]
      %v2136 = vld [vmem:[%s1634 + $0xb4] sm:$0xe]
      %v2137 = vld [vmem:[%s1634 + $0xc0] sm:$0xe]
      %v2138 = vld [vmem:[%s1634 + $0xcc] sm:$0xe]
      %v2193 = vrot.slane %v2121, 5
      %v2194 = vrot.slane %v2193, 4
      %v2195 = vrot.slane %v1636, 5
      %v2196 = vsel %vm816, %v2194, %v2195
      %v2197 = vrot.slane %v2195, 4
      %v2198 = vrot.slane %v1671, 5
      %v2199 = vsel %vm816, %v2197, %v2198
      %v2200 = vrot.slane %v2122, 5
      %v2201 = vrot.slane %v2200, 4
      %v2202 = vrot.slane %v1638, 5
      %v2203 = vsel %vm816, %v2201, %v2202
      %v2204 = vrot.slane %v2202, 4
      %v2205 = vrot.slane %v1672, 5
      %v2206 = vsel %vm816, %v2204, %v2205
      %v2207 = vrot.slane %v2123, 5
      %v2208 = vrot.slane %v2207, 4
      %v2209 = vrot.slane %v1640, 5
      %v2210 = vsel %vm816, %v2208, %v2209
      %v2211 = vrot.slane %v2209, 4
      %v2212 = vrot.slane %v1673, 5
      %v2213 = vsel %vm816, %v2211, %v2212
      %v2214 = vrot.slane %v2124, 5
      %v2215 = vrot.slane %v2214, 4
      %v2216 = vrot.slane %v1642, 5
      %v2217 = vsel %vm816, %v2215, %v2216
      %v2218 = vrot.slane %v2216, 4
      %v2219 = vrot.slane %v1674, 5
      %v2220 = vsel %vm816, %v2218, %v2219
      %v2221 = vrot.slane %v2125, 5
      %v2222 = vrot.slane %v2221, 4
      %v2223 = vrot.slane %v1644, 5
      %v2224 = vsel %vm816, %v2222, %v2223
      %v2225 = vrot.slane %v2223, 4
      %v2226 = vrot.slane %v1675, 5
      %v2227 = vsel %vm816, %v2225, %v2226
      %v2228 = vrot.slane %v2126, 5
      %v2229 = vrot.slane %v2228, 4
      %v2230 = vrot.slane %v1646, 5
      %v2231 = vsel %vm816, %v2229, %v2230
      %v2232 = vrot.slane %v2230, 4
      %v2233 = vrot.slane %v1676, 5
      %v2234 = vsel %vm816, %v2232, %v2233
      %v2235 = vrot.slane %v2127, 5
      %v2236 = vrot.slane %v2235, 4
      %v2237 = vrot.slane %v1648, 5
      %v2238 = vsel %vm816, %v2236, %v2237
      %v2239 = vrot.slane %v2237, 4
      %v2240 = vrot.slane %v1677, 5
      %v2241 = vsel %vm816, %v2239, %v2240
      %v2242 = vrot.slane %v2128, 5
      %v2243 = vrot.slane %v2242, 4
      %v2244 = vrot.slane %v1650, 5
      %v2245 = vsel %vm816, %v2243, %v2244
      %v2246 = vrot.slane %v2244, 4
      %v2247 = vrot.slane %v1678, 5
      %v2248 = vsel %vm816, %v2246, %v2247
      %v2249 = vrot.slane %v2129, 5
      %v2250 = vrot.slane %v2249, 4
      %v2251 = vrot.slane %v1652, 5
      %v2252 = vsel %vm816, %v2250, %v2251
      %v2253 = vrot.slane %v2251, 4
      %v2254 = vrot.slane %v1679, 5
      %v2255 = vsel %vm816, %v2253, %v2254
      %v2256 = vrot.slane %v2130, 5
      %v2257 = vrot.slane %v2256, 4
      %v2258 = vrot.slane %v1654, 5
      %v2259 = vsel %vm816, %v2257, %v2258
      %v2260 = vrot.slane %v2258, 4
      %v2261 = vrot.slane %v1680, 5
      %v2262 = vsel %vm816, %v2260, %v2261
      %v2263 = vrot.slane %v2131, 5
      %v2264 = vrot.slane %v2263, 4
      %v2265 = vrot.slane %v1656, 5
      %v2266 = vsel %vm816, %v2264, %v2265
      %v2267 = vrot.slane %v2265, 4
      %v2268 = vrot.slane %v1681, 5
      %v2269 = vsel %vm816, %v2267, %v2268
      %v2270 = vrot.slane %v2132, 5
      %v2271 = vrot.slane %v2270, 4
      %v2272 = vrot.slane %v1658, 5
      %v2273 = vsel %vm816, %v2271, %v2272
      %v2274 = vrot.slane %v2272, 4
      %v2275 = vrot.slane %v1682, 5
      %v2276 = vsel %vm816, %v2274, %v2275
      %v2277 = vrot.slane %v2133, 5
      %v2278 = vrot.slane %v2277, 4
      %v2279 = vrot.slane %v1660, 5
      %v2280 = vsel %vm816, %v2278, %v2279
      %v2281 = vrot.slane %v2279, 4
      %v2282 = vrot.slane %v1683, 5
      %v2283 = vsel %vm816, %v2281, %v2282
      %v2284 = vrot.slane %v2134, 5
      %v2285 = vrot.slane %v2284, 4
      %v2286 = vrot.slane %v1662, 5
      %v2287 = vsel %vm816, %v2285, %v2286
      %v2288 = vrot.slane %v2286, 4
      %v2289 = vrot.slane %v1684, 5
      %v2290 = vsel %vm816, %v2288, %v2289
      %v2291 = vrot.slane %v2135, 5
      %v2292 = vrot.slane %v2291, 4
      %v2293 = vrot.slane %v1664, 5
      %v2294 = vsel %vm816, %v2292, %v2293
      %v2295 = vrot.slane %v2293, 4
      %v2296 = vrot.slane %v1685, 5
      %v2297 = vsel %vm816, %v2295, %v2296
      %v2298 = vrot.slane %v2136, 5
      %v2299 = vrot.slane %v2298, 4
      %v2300 = vrot.slane %v1666, 5
      %v2301 = vsel %vm816, %v2299, %v2300
      %v2302 = vrot.slane %v2300, 4
      %v2303 = vrot.slane %v1686, 5
      %v2304 = vsel %vm816, %v2302, %v2303
      %v2305 = vrot.slane %v2137, 5
      %v2306 = vrot.slane %v2305, 4
      %v2307 = vrot.slane %v1668, 5
      %v2308 = vsel %vm816, %v2306, %v2307
      %v2309 = vrot.slane %v2307, 4
      %v2310 = vrot.slane %v1687, 5
      %v2311 = vsel %vm816, %v2309, %v2310
      %v2312 = vrot.slane %v2138, 5
      %v2313 = vrot.slane %v2312, 4
      %v2314 = vrot.slane %v1670, 5
      %v2315 = vsel %vm816, %v2313, %v2314
      %v2316 = vrot.slane %v2314, 4
      %v2317 = vrot.slane %v1688, 5
      %v2318 = vsel %vm816, %v2316, %v2317
      %v2337 = vunpack.c.l.b16 %v253
      %v2338 = vunpack.c.l.b16 %v254
      %v2339 = vunpack.c.l.b16 %v255
      %v2340 = vunpack.c.l.b16 %v256
      %v2341 = vunpack.c.l.b16 %v257
      %v2342 = vunpack.c.l.b16 %v258
      %v2343 = vunpack.c.l.b16 %v259
      %v2344 = vunpack.c.l.b16 %v260
      %v2345 = vunpack.c.l.b16 %v261
      %v2346 = vunpack.c.l.b16 %v262
      %v2347 = vunpack.c.l.b16 %v263
      %v2348 = vunpack.c.l.b16 %v264
      %v2349 = vunpack.c.l.b16 %v265
      %v2350 = vunpack.c.l.b16 %v266
      %v2351 = vunpack.c.l.b16 %v267
      %v2352 = vunpack.c.l.b16 %v268
      %v2353 = vunpack.c.l.b16 %v269
      %v2354 = vunpack.c.l.b16 %v270
      %v2355 = vunpack.c.l.b16 %v271
      %v2356 = vunpack.c.l.b16 %v272
      %v2357 = vunpack.c.l.b16 %v273
      %v2358 = vunpack.c.l.b16 %v274
      %v2359 = vunpack.c.l.b16 %v275
      %v2360 = vunpack.c.l.b16 %v276
      %v2361 = vunpack.c.l.b16 %v277
      %v2362 = vunpack.c.l.b16 %v278
      %v2363 = vunpack.c.l.b16 %v279
      %v2364 = vunpack.c.l.b16 %v280
      %v2365 = vunpack.c.l.b16 %v281
      %v2366 = vunpack.c.l.b16 %v282
      %v2367 = vunpack.c.l.b16 %v283
      %v2368 = vunpack.c.l.b16 %v284
      %v2369 = vunpack.c.l.b16 %v285
      %v2370 = vunpack.c.l.b16 %v286
      %v2371 = vunpack.c.l.b16 %v287
      %v2372 = vunpack.c.l.b16 %v288
      %v2373 = vpack.c.b16 %v2338, %v2337
      %v2374 = vpack.c.b16 %v2340, %v2339
      %v2375 = vpack.c.b16 %v2342, %v2341
      %v2376 = vpack.c.b16 %v2344, %v2343
      %v2377 = vpack.c.b16 %v2346, %v2345
      %v2378 = vpack.c.b16 %v2348, %v2347
      %v2379 = vpack.c.b16 %v2350, %v2349
      %v2380 = vpack.c.b16 %v2352, %v2351
      %v2381 = vpack.c.b16 %v2354, %v2353
      %v2382 = vpack.c.b16 %v2356, %v2355
      %v2383 = vpack.c.b16 %v2358, %v2357
      %v2384 = vpack.c.b16 %v2360, %v2359
      %v2385 = vpack.c.b16 %v2362, %v2361
      %v2386 = vpack.c.b16 %v2364, %v2363
      %v2387 = vpack.c.b16 %v2366, %v2365
      %v2388 = vpack.c.b16 %v2368, %v2367
      %v2389 = vpack.c.b16 %v2370, %v2369
      %v2390 = vpack.c.b16 %v2372, %v2371
      %v2391 = vunpack.c.l.b16 %v323
      %v2392 = vunpack.c.l.b16 %v333
      %v2393 = vunpack.c.l.b16 %v347
      %v2394 = vunpack.c.l.b16 %v357
      %v2395 = vunpack.c.l.b16 %v371
      %v2396 = vunpack.c.l.b16 %v381
      %v2397 = vunpack.c.l.b16 %v395
      %v2398 = vunpack.c.l.b16 %v405
      %v2399 = vunpack.c.l.b16 %v419
      %v2400 = vunpack.c.l.b16 %v429
      %v2401 = vunpack.c.l.b16 %v443
      %v2402 = vunpack.c.l.b16 %v453
      %v2403 = vunpack.c.l.b16 %v467
      %v2404 = vunpack.c.l.b16 %v477
      %v2405 = vunpack.c.l.b16 %v491
      %v2406 = vunpack.c.l.b16 %v501
      %v2407 = vunpack.c.l.b16 %v515
      %v2408 = vunpack.c.l.b16 %v525
      %v2409 = vunpack.c.l.b16 %v539
      %v2410 = vunpack.c.l.b16 %v549
      %v2411 = vunpack.c.l.b16 %v563
      %v2412 = vunpack.c.l.b16 %v573
      %v2413 = vunpack.c.l.b16 %v587
      %v2414 = vunpack.c.l.b16 %v597
      %v2415 = vunpack.c.l.b16 %v611
      %v2416 = vunpack.c.l.b16 %v621
      %v2417 = vunpack.c.l.b16 %v635
      %v2418 = vunpack.c.l.b16 %v645
      %v2419 = vunpack.c.l.b16 %v659
      %v2420 = vunpack.c.l.b16 %v669
      %v2421 = vunpack.c.l.b16 %v683
      %v2422 = vunpack.c.l.b16 %v693
      %v2423 = vunpack.c.l.b16 %v707
      %v2424 = vunpack.c.l.b16 %v717
      %v2425 = vunpack.c.l.b16 %v731
      %v2426 = vunpack.c.l.b16 %v741
      %v2427 = vpack.c.b16 %v2392, %v2391
      %v2428 = vpack.c.b16 %v2394, %v2393
      %v2429 = vpack.c.b16 %v2396, %v2395
      %v2430 = vpack.c.b16 %v2398, %v2397
      %v2431 = vpack.c.b16 %v2400, %v2399
      %v2432 = vpack.c.b16 %v2402, %v2401
      %v2433 = vpack.c.b16 %v2404, %v2403
      %v2434 = vpack.c.b16 %v2406, %v2405
      %v2435 = vpack.c.b16 %v2408, %v2407
      %v2436 = vpack.c.b16 %v2410, %v2409
      %v2437 = vpack.c.b16 %v2412, %v2411
      %v2438 = vpack.c.b16 %v2414, %v2413
      %v2439 = vpack.c.b16 %v2416, %v2415
      %v2440 = vpack.c.b16 %v2418, %v2417
      %v2441 = vpack.c.b16 %v2420, %v2419
      %v2442 = vpack.c.b16 %v2422, %v2421
      %v2443 = vpack.c.b16 %v2424, %v2423
      %v2444 = vpack.c.b16 %v2426, %v2425
      %2445 = vrot.lane.b32.xlu0 %v2427, 4
      %v2446 = vpop.permute.xlu0 %2445
      %2447 = vrot.lane.b32.xlu0 %v2428, 4
      %v2448 = vpop.permute.xlu0 %2447
      %2449 = vrot.lane.b32.xlu0 %v2429, 4
      %v2450 = vpop.permute.xlu0 %2449
      %2451 = vrot.lane.b32.xlu0 %v2430, 4
      %v2452 = vpop.permute.xlu0 %2451
      %2453 = vrot.lane.b32.xlu0 %v2431, 4
      %v2454 = vpop.permute.xlu0 %2453
      %2455 = vrot.lane.b32.xlu0 %v2432, 4
      %v2456 = vpop.permute.xlu0 %2455
      %2457 = vrot.lane.b32.xlu0 %v2433, 4
      %v2458 = vpop.permute.xlu0 %2457
      %2459 = vrot.lane.b32.xlu0 %v2434, 4
      %v2460 = vpop.permute.xlu0 %2459
      %2461 = vrot.lane.b32.xlu0 %v2435, 4
      %v2462 = vpop.permute.xlu0 %2461
      %2463 = vrot.lane.b32.xlu0 %v2436, 4
      %v2464 = vpop.permute.xlu0 %2463
      %2465 = vrot.lane.b32.xlu0 %v2437, 4
      %v2466 = vpop.permute.xlu0 %2465
      %2467 = vrot.lane.b32.xlu0 %v2438, 4
      %v2468 = vpop.permute.xlu0 %2467
      %2469 = vrot.lane.b32.xlu0 %v2439, 4
      %v2470 = vpop.permute.xlu0 %2469
      %2471 = vrot.lane.b32.xlu0 %v2440, 4
      %v2472 = vpop.permute.xlu0 %2471
      %2473 = vrot.lane.b32.xlu0 %v2441, 4
      %v2474 = vpop.permute.xlu0 %2473
      %2475 = vrot.lane.b32.xlu0 %v2442, 4
      %v2476 = vpop.permute.xlu0 %2475
      %2477 = vrot.lane.b32.xlu0 %v2443, 4
      %v2478 = vpop.permute.xlu0 %2477
      %2479 = vrot.lane.b32.xlu0 %v2444, 4
      %v2480 = vpop.permute.xlu0 %2479
      %v2481 = vunpack.c.l.b16 %v820
      %v2482 = vunpack.c.l.b16 %v823
      %v2483 = vunpack.c.l.b16 %v827
      %v2484 = vunpack.c.l.b16 %v830
      %v2485 = vunpack.c.l.b16 %v834
      %v2486 = vunpack.c.l.b16 %v837
      %v2487 = vunpack.c.l.b16 %v841
      %v2488 = vunpack.c.l.b16 %v844
      %v2489 = vunpack.c.l.b16 %v848
      %v2490 = vunpack.c.l.b16 %v851
      %v2491 = vunpack.c.l.b16 %v855
      %v2492 = vunpack.c.l.b16 %v858
      %v2493 = vunpack.c.l.b16 %v862
      %v2494 = vunpack.c.l.b16 %v865
      %v2495 = vunpack.c.l.b16 %v869
      %v2496 = vunpack.c.l.b16 %v872
      %v2497 = vunpack.c.l.b16 %v876
      %v2498 = vunpack.c.l.b16 %v879
      %v2499 = vunpack.c.l.b16 %v883
      %v2500 = vunpack.c.l.b16 %v886
      %v2501 = vunpack.c.l.b16 %v890
      %v2502 = vunpack.c.l.b16 %v893
      %v2503 = vunpack.c.l.b16 %v897
      %v2504 = vunpack.c.l.b16 %v900
      %v2505 = vunpack.c.l.b16 %v904
      %v2506 = vunpack.c.l.b16 %v907
      %v2507 = vunpack.c.l.b16 %v911
      %v2508 = vunpack.c.l.b16 %v914
      %v2509 = vunpack.c.l.b16 %v918
      %v2510 = vunpack.c.l.b16 %v921
      %v2511 = vunpack.c.l.b16 %v925
      %v2512 = vunpack.c.l.b16 %v928
      %v2513 = vunpack.c.l.b16 %v932
      %v2514 = vunpack.c.l.b16 %v935
      %v2515 = vunpack.c.l.b16 %v939
      %v2516 = vunpack.c.l.b16 %v942
      %v2517 = vpack.c.b16 %v2482, %v2481
      %v2518 = vpack.c.b16 %v2484, %v2483
      %v2519 = vpack.c.b16 %v2486, %v2485
      %v2520 = vpack.c.b16 %v2488, %v2487
      %v2521 = vpack.c.b16 %v2490, %v2489
      %v2522 = vpack.c.b16 %v2492, %v2491
      %v2523 = vpack.c.b16 %v2494, %v2493
      %v2524 = vpack.c.b16 %v2496, %v2495
      %v2525 = vpack.c.b16 %v2498, %v2497
      %v2526 = vpack.c.b16 %v2500, %v2499
      %v2527 = vpack.c.b16 %v2502, %v2501
      %v2528 = vpack.c.b16 %v2504, %v2503
      %v2529 = vpack.c.b16 %v2506, %v2505
      %v2530 = vpack.c.b16 %v2508, %v2507
      %v2531 = vpack.c.b16 %v2510, %v2509
      %v2532 = vpack.c.b16 %v2512, %v2511
      %v2533 = vpack.c.b16 %v2514, %v2513
      %v2534 = vpack.c.b16 %v2516, %v2515
      %2535 = vrot.lane.b32.xlu0 %v2517, 8
      %v2536 = vpop.permute.xlu0 %2535
      %2537 = vrot.lane.b32.xlu0 %v2518, 8
      %v2538 = vpop.permute.xlu0 %2537
      %2539 = vrot.lane.b32.xlu0 %v2519, 8
      %v2540 = vpop.permute.xlu0 %2539
      %2541 = vrot.lane.b32.xlu0 %v2520, 8
      %v2542 = vpop.permute.xlu0 %2541
      %2543 = vrot.lane.b32.xlu0 %v2521, 8
      %v2544 = vpop.permute.xlu0 %2543
      %2545 = vrot.lane.b32.xlu0 %v2522, 8
      %v2546 = vpop.permute.xlu0 %2545
      %2547 = vrot.lane.b32.xlu0 %v2523, 8
      %v2548 = vpop.permute.xlu0 %2547
      %2549 = vrot.lane.b32.xlu0 %v2524, 8
      %v2550 = vpop.permute.xlu0 %2549
      %2551 = vrot.lane.b32.xlu0 %v2525, 8
      %v2552 = vpop.permute.xlu0 %2551
      %2553 = vrot.lane.b32.xlu0 %v2526, 8
      %v2554 = vpop.permute.xlu0 %2553
      %2555 = vrot.lane.b32.xlu0 %v2527, 8
      %v2556 = vpop.permute.xlu0 %2555
      %2557 = vrot.lane.b32.xlu0 %v2528, 8
      %v2558 = vpop.permute.xlu0 %2557
      %2559 = vrot.lane.b32.xlu0 %v2529, 8
      %v2560 = vpop.permute.xlu0 %2559
      %2561 = vrot.lane.b32.xlu0 %v2530, 8
      %v2562 = vpop.permute.xlu0 %2561
      %2563 = vrot.lane.b32.xlu0 %v2531, 8
      %v2564 = vpop.permute.xlu0 %2563
      %2565 = vrot.lane.b32.xlu0 %v2532, 8
      %v2566 = vpop.permute.xlu0 %2565
      %2567 = vrot.lane.b32.xlu0 %v2533, 8
      %v2568 = vpop.permute.xlu0 %2567
      %2569 = vrot.lane.b32.xlu0 %v2534, 8
      %v2570 = vpop.permute.xlu0 %2569
      %v2589 = vunpack.c.l.b16 %v947
      %v2590 = vunpack.c.l.b16 %v948
      %v2591 = vunpack.c.l.b16 %v949
      %v2592 = vunpack.c.l.b16 %v950
      %v2593 = vunpack.c.l.b16 %v951
      %v2594 = vunpack.c.l.b16 %v952
      %v2595 = vunpack.c.l.b16 %v953
      %v2596 = vunpack.c.l.b16 %v954
      %v2597 = vunpack.c.l.b16 %v955
      %v2598 = vunpack.c.l.b16 %v956
      %v2599 = vunpack.c.l.b16 %v957
      %v2600 = vunpack.c.l.b16 %v958
      %v2601 = vunpack.c.l.b16 %v959
      %v2602 = vunpack.c.l.b16 %v960
      %v2603 = vunpack.c.l.b16 %v961
      %v2604 = vunpack.c.l.b16 %v962
      %v2605 = vunpack.c.l.b16 %v963
      %v2606 = vunpack.c.l.b16 %v964
      %v2607 = vunpack.c.l.b16 %v965
      %v2608 = vunpack.c.l.b16 %v966
      %v2609 = vunpack.c.l.b16 %v967
      %v2610 = vunpack.c.l.b16 %v968
      %v2611 = vunpack.c.l.b16 %v969
      %v2612 = vunpack.c.l.b16 %v970
      %v2613 = vunpack.c.l.b16 %v971
      %v2614 = vunpack.c.l.b16 %v972
      %v2615 = vunpack.c.l.b16 %v973
      %v2616 = vunpack.c.l.b16 %v974
      %v2617 = vunpack.c.l.b16 %v975
      %v2618 = vunpack.c.l.b16 %v976
      %v2619 = vunpack.c.l.b16 %v977
      %v2620 = vunpack.c.l.b16 %v978
      %v2621 = vunpack.c.l.b16 %v979
      %v2622 = vunpack.c.l.b16 %v980
      %v2623 = vunpack.c.l.b16 %v981
      %v2624 = vunpack.c.l.b16 %v982
      %v2625 = vpack.c.b16 %v2590, %v2589
      %v2626 = vpack.c.b16 %v2592, %v2591
      %v2627 = vpack.c.b16 %v2594, %v2593
      %v2628 = vpack.c.b16 %v2596, %v2595
      %v2629 = vpack.c.b16 %v2598, %v2597
      %v2630 = vpack.c.b16 %v2600, %v2599
      %v2631 = vpack.c.b16 %v2602, %v2601
      %v2632 = vpack.c.b16 %v2604, %v2603
      %v2633 = vpack.c.b16 %v2606, %v2605
      %v2634 = vpack.c.b16 %v2608, %v2607
      %v2635 = vpack.c.b16 %v2610, %v2609
      %v2636 = vpack.c.b16 %v2612, %v2611
      %v2637 = vpack.c.b16 %v2614, %v2613
      %v2638 = vpack.c.b16 %v2616, %v2615
      %v2639 = vpack.c.b16 %v2618, %v2617
      %v2640 = vpack.c.b16 %v2620, %v2619
      %v2641 = vpack.c.b16 %v2622, %v2621
      %v2642 = vpack.c.b16 %v2624, %v2623
      %2643 = vrot.lane.b32.xlu0 %v2625, 12
      %v2644 = vpop.permute.xlu0 %2643
      %2645 = vrot.lane.b32.xlu0 %v2626, 12
      %v2646 = vpop.permute.xlu0 %2645
      %2647 = vrot.lane.b32.xlu0 %v2627, 12
      %v2648 = vpop.permute.xlu0 %2647
      %2649 = vrot.lane.b32.xlu0 %v2628, 12
      %v2650 = vpop.permute.xlu0 %2649
      %2651 = vrot.lane.b32.xlu0 %v2629, 12
      %v2652 = vpop.permute.xlu0 %2651
      %2653 = vrot.lane.b32.xlu0 %v2630, 12
      %v2654 = vpop.permute.xlu0 %2653
      %2655 = vrot.lane.b32.xlu0 %v2631, 12
      %v2656 = vpop.permute.xlu0 %2655
      %2657 = vrot.lane.b32.xlu0 %v2632, 12
      %v2658 = vpop.permute.xlu0 %2657
      %2659 = vrot.lane.b32.xlu0 %v2633, 12
      %v2660 = vpop.permute.xlu0 %2659
      %2661 = vrot.lane.b32.xlu0 %v2634, 12
      %v2662 = vpop.permute.xlu0 %2661
      %2663 = vrot.lane.b32.xlu0 %v2635, 12
      %v2664 = vpop.permute.xlu0 %2663
      %2665 = vrot.lane.b32.xlu0 %v2636, 12
      %v2666 = vpop.permute.xlu0 %2665
      %2667 = vrot.lane.b32.xlu0 %v2637, 12
      %v2668 = vpop.permute.xlu0 %2667
      %2669 = vrot.lane.b32.xlu0 %v2638, 12
      %v2670 = vpop.permute.xlu0 %2669
      %2671 = vrot.lane.b32.xlu0 %v2639, 12
      %v2672 = vpop.permute.xlu0 %2671
      %2673 = vrot.lane.b32.xlu0 %v2640, 12
      %v2674 = vpop.permute.xlu0 %2673
      %2675 = vrot.lane.b32.xlu0 %v2641, 12
      %v2676 = vpop.permute.xlu0 %2675
      %2677 = vrot.lane.b32.xlu0 %v2642, 12
      %v2678 = vpop.permute.xlu0 %2677
      %v2679 = vunpack.c.l.b16 %v1014
      %v2680 = vunpack.c.l.b16 %v1024
      %v2681 = vunpack.c.l.b16 %v1038
      %v2682 = vunpack.c.l.b16 %v1048
      %v2683 = vunpack.c.l.b16 %v1062
      %v2684 = vunpack.c.l.b16 %v1072
      %v2685 = vunpack.c.l.b16 %v1086
      %v2686 = vunpack.c.l.b16 %v1096
      %v2687 = vunpack.c.l.b16 %v1110
      %v2688 = vunpack.c.l.b16 %v1120
      %v2689 = vunpack.c.l.b16 %v1134
      %v2690 = vunpack.c.l.b16 %v1144
      %v2691 = vunpack.c.l.b16 %v1158
      %v2692 = vunpack.c.l.b16 %v1168
      %v2693 = vunpack.c.l.b16 %v1182
      %v2694 = vunpack.c.l.b16 %v1192
      %v2695 = vunpack.c.l.b16 %v1206
      %v2696 = vunpack.c.l.b16 %v1216
      %v2697 = vunpack.c.l.b16 %v1230
      %v2698 = vunpack.c.l.b16 %v1240
      %v2699 = vunpack.c.l.b16 %v1254
      %v2700 = vunpack.c.l.b16 %v1264
      %v2701 = vunpack.c.l.b16 %v1278
      %v2702 = vunpack.c.l.b16 %v1288
      %v2703 = vunpack.c.l.b16 %v1302
      %v2704 = vunpack.c.l.b16 %v1312
      %v2705 = vunpack.c.l.b16 %v1326
      %v2706 = vunpack.c.l.b16 %v1336
      %v2707 = vunpack.c.l.b16 %v1350
      %v2708 = vunpack.c.l.b16 %v1360
      %v2709 = vunpack.c.l.b16 %v1374
      %v2710 = vunpack.c.l.b16 %v1384
      %v2711 = vunpack.c.l.b16 %v1398
      %v2712 = vunpack.c.l.b16 %v1408
      %v2713 = vunpack.c.l.b16 %v1422
      %v2714 = vunpack.c.l.b16 %v1432
      %v2715 = vpack.c.b16 %v2680, %v2679
      %v2716 = vpack.c.b16 %v2682, %v2681
      %v2717 = vpack.c.b16 %v2684, %v2683
      %v2718 = vpack.c.b16 %v2686, %v2685
      %v2719 = vpack.c.b16 %v2688, %v2687
      %v2720 = vpack.c.b16 %v2690, %v2689
      %v2721 = vpack.c.b16 %v2692, %v2691
      %v2722 = vpack.c.b16 %v2694, %v2693
      %v2723 = vpack.c.b16 %v2696, %v2695
      %v2724 = vpack.c.b16 %v2698, %v2697
      %v2725 = vpack.c.b16 %v2700, %v2699
      %v2726 = vpack.c.b16 %v2702, %v2701
      %v2727 = vpack.c.b16 %v2704, %v2703
      %v2728 = vpack.c.b16 %v2706, %v2705
      %v2729 = vpack.c.b16 %v2708, %v2707
      %v2730 = vpack.c.b16 %v2710, %v2709
      %v2731 = vpack.c.b16 %v2712, %v2711
      %v2732 = vpack.c.b16 %v2714, %v2713
      %2733 = vrot.lane.b32.xlu0 %v2715, 16
      %v2734 = vpop.permute.xlu0 %2733
      %2735 = vrot.lane.b32.xlu0 %v2716, 16
      %v2736 = vpop.permute.xlu0 %2735
      %2737 = vrot.lane.b32.xlu0 %v2717, 16
      %v2738 = vpop.permute.xlu0 %2737
      %2739 = vrot.lane.b32.xlu0 %v2718, 16
      %v2740 = vpop.permute.xlu0 %2739
      %2741 = vrot.lane.b32.xlu0 %v2719, 16
      %v2742 = vpop.permute.xlu0 %2741
      %2743 = vrot.lane.b32.xlu0 %v2720, 16
      %v2744 = vpop.permute.xlu0 %2743
      %2745 = vrot.lane.b32.xlu0 %v2721, 16
      %v2746 = vpop.permute.xlu0 %2745
      %2747 = vrot.lane.b32.xlu0 %v2722, 16
      %v2748 = vpop.permute.xlu0 %2747
      %2749 = vrot.lane.b32.xlu0 %v2723, 16
      %v2750 = vpop.permute.xlu0 %2749
      %2751 = vrot.lane.b32.xlu0 %v2724, 16
      %v2752 = vpop.permute.xlu0 %2751
      %2753 = vrot.lane.b32.xlu0 %v2725, 16
      %v2754 = vpop.permute.xlu0 %2753
      %2755 = vrot.lane.b32.xlu0 %v2726, 16
      %v2756 = vpop.permute.xlu0 %2755
      %2757 = vrot.lane.b32.xlu0 %v2727, 16
      %v2758 = vpop.permute.xlu0 %2757
      %2759 = vrot.lane.b32.xlu0 %v2728, 16
      %v2760 = vpop.permute.xlu0 %2759
      %2761 = vrot.lane.b32.xlu0 %v2729, 16
      %v2762 = vpop.permute.xlu0 %2761
      %2763 = vrot.lane.b32.xlu0 %v2730, 16
      %v2764 = vpop.permute.xlu0 %2763
      %2765 = vrot.lane.b32.xlu0 %v2731, 16
      %v2766 = vpop.permute.xlu0 %2765
      %2767 = vrot.lane.b32.xlu0 %v2732, 16
      %v2768 = vpop.permute.xlu0 %2767
      %v2769 = vunpack.c.l.b16 %v1508
      %v2770 = vunpack.c.l.b16 %v1511
      %v2771 = vunpack.c.l.b16 %v1515
      %v2772 = vunpack.c.l.b16 %v1518
      %v2773 = vunpack.c.l.b16 %v1522
      %v2774 = vunpack.c.l.b16 %v1525
      %v2775 = vunpack.c.l.b16 %v1529
      %v2776 = vunpack.c.l.b16 %v1532
      %v2777 = vunpack.c.l.b16 %v1536
      %v2778 = vunpack.c.l.b16 %v1539
      %v2779 = vunpack.c.l.b16 %v1543
      %v2780 = vunpack.c.l.b16 %v1546
      %v2781 = vunpack.c.l.b16 %v1550
      %v2782 = vunpack.c.l.b16 %v1553
      %v2783 = vunpack.c.l.b16 %v1557
      %v2784 = vunpack.c.l.b16 %v1560
      %v2785 = vunpack.c.l.b16 %v1564
      %v2786 = vunpack.c.l.b16 %v1567
      %v2787 = vunpack.c.l.b16 %v1571
      %v2788 = vunpack.c.l.b16 %v1574
      %v2789 = vunpack.c.l.b16 %v1578
      %v2790 = vunpack.c.l.b16 %v1581
      %v2791 = vunpack.c.l.b16 %v1585
      %v2792 = vunpack.c.l.b16 %v1588
      %v2793 = vunpack.c.l.b16 %v1592
      %v2794 = vunpack.c.l.b16 %v1595
      %v2795 = vunpack.c.l.b16 %v1599
      %v2796 = vunpack.c.l.b16 %v1602
      %v2797 = vunpack.c.l.b16 %v1606
      %v2798 = vunpack.c.l.b16 %v1609
      %v2799 = vunpack.c.l.b16 %v1613
      %v2800 = vunpack.c.l.b16 %v1616
      %v2801 = vunpack.c.l.b16 %v1620
      %v2802 = vunpack.c.l.b16 %v1623
      %v2803 = vunpack.c.l.b16 %v1627
      %v2804 = vunpack.c.l.b16 %v1630
      %v2805 = vpack.c.b16 %v2770, %v2769
      %v2806 = vpack.c.b16 %v2772, %v2771
      %v2807 = vpack.c.b16 %v2774, %v2773
      %v2808 = vpack.c.b16 %v2776, %v2775
      %v2809 = vpack.c.b16 %v2778, %v2777
      %v2810 = vpack.c.b16 %v2780, %v2779
      %v2811 = vpack.c.b16 %v2782, %v2781
      %v2812 = vpack.c.b16 %v2784, %v2783
      %v2813 = vpack.c.b16 %v2786, %v2785
      %v2814 = vpack.c.b16 %v2788, %v2787
      %v2815 = vpack.c.b16 %v2790, %v2789
      %v2816 = vpack.c.b16 %v2792, %v2791
      %v2817 = vpack.c.b16 %v2794, %v2793
      %v2818 = vpack.c.b16 %v2796, %v2795
      %v2819 = vpack.c.b16 %v2798, %v2797
      %v2820 = vpack.c.b16 %v2800, %v2799
      %v2821 = vpack.c.b16 %v2802, %v2801
      %v2822 = vpack.c.b16 %v2804, %v2803
      %2823 = vrot.lane.b32.xlu0 %v2805, 20
      %v2824 = vpop.permute.xlu0 %2823
      %2825 = vrot.lane.b32.xlu0 %v2806, 20
      %v2826 = vpop.permute.xlu0 %2825
      %2827 = vrot.lane.b32.xlu0 %v2807, 20
      %v2828 = vpop.permute.xlu0 %2827
      %2829 = vrot.lane.b32.xlu0 %v2808, 20
      %v2830 = vpop.permute.xlu0 %2829
      %2831 = vrot.lane.b32.xlu0 %v2809, 20
      %v2832 = vpop.permute.xlu0 %2831
      %2833 = vrot.lane.b32.xlu0 %v2810, 20
      %v2834 = vpop.permute.xlu0 %2833
      %2835 = vrot.lane.b32.xlu0 %v2811, 20
      %v2836 = vpop.permute.xlu0 %2835
      %2837 = vrot.lane.b32.xlu0 %v2812, 20
      %v2838 = vpop.permute.xlu0 %2837
      %2839 = vrot.lane.b32.xlu0 %v2813, 20
      %v2840 = vpop.permute.xlu0 %2839
      %2841 = vrot.lane.b32.xlu0 %v2814, 20
      %v2842 = vpop.permute.xlu0 %2841
      %2843 = vrot.lane.b32.xlu0 %v2815, 20
      %v2844 = vpop.permute.xlu0 %2843
      %2845 = vrot.lane.b32.xlu0 %v2816, 20
      %v2846 = vpop.permute.xlu0 %2845
      %2847 = vrot.lane.b32.xlu0 %v2817, 20
      %v2848 = vpop.permute.xlu0 %2847
      %2849 = vrot.lane.b32.xlu0 %v2818, 20
      %v2850 = vpop.permute.xlu0 %2849
      %2851 = vrot.lane.b32.xlu0 %v2819, 20
      %v2852 = vpop.permute.xlu0 %2851
      %2853 = vrot.lane.b32.xlu0 %v2820, 20
      %v2854 = vpop.permute.xlu0 %2853
      %2855 = vrot.lane.b32.xlu0 %v2821, 20
      %v2856 = vpop.permute.xlu0 %2855
      %2857 = vrot.lane.b32.xlu0 %v2822, 20
      %v2858 = vpop.permute.xlu0 %2857
      %v2877 = vunpack.c.l.b16 %v1635
      %v2878 = vunpack.c.l.b16 %v1636
      %v2879 = vunpack.c.l.b16 %v1637
      %v2880 = vunpack.c.l.b16 %v1638
      %v2881 = vunpack.c.l.b16 %v1639
      %v2882 = vunpack.c.l.b16 %v1640
      %v2883 = vunpack.c.l.b16 %v1641
      %v2884 = vunpack.c.l.b16 %v1642
      %v2885 = vunpack.c.l.b16 %v1643
      %v2886 = vunpack.c.l.b16 %v1644
      %v2887 = vunpack.c.l.b16 %v1645
      %v2888 = vunpack.c.l.b16 %v1646
      %v2889 = vunpack.c.l.b16 %v1647
      %v2890 = vunpack.c.l.b16 %v1648
      %v2891 = vunpack.c.l.b16 %v1649
      %v2892 = vunpack.c.l.b16 %v1650
      %v2893 = vunpack.c.l.b16 %v1651
      %v2894 = vunpack.c.l.b16 %v1652
      %v2895 = vunpack.c.l.b16 %v1653
      %v2896 = vunpack.c.l.b16 %v1654
      %v2897 = vunpack.c.l.b16 %v1655
      %v2898 = vunpack.c.l.b16 %v1656
      %v2899 = vunpack.c.l.b16 %v1657
      %v2900 = vunpack.c.l.b16 %v1658
      %v2901 = vunpack.c.l.b16 %v1659
      %v2902 = vunpack.c.l.b16 %v1660
      %v2903 = vunpack.c.l.b16 %v1661
      %v2904 = vunpack.c.l.b16 %v1662
      %v2905 = vunpack.c.l.b16 %v1663
      %v2906 = vunpack.c.l.b16 %v1664
      %v2907 = vunpack.c.l.b16 %v1665
      %v2908 = vunpack.c.l.b16 %v1666
      %v2909 = vunpack.c.l.b16 %v1667
      %v2910 = vunpack.c.l.b16 %v1668
      %v2911 = vunpack.c.l.b16 %v1669
      %v2912 = vunpack.c.l.b16 %v1670
      %v2913 = vpack.c.b16 %v2878, %v2877
      %v2914 = vpack.c.b16 %v2880, %v2879
      %v2915 = vpack.c.b16 %v2882, %v2881
      %v2916 = vpack.c.b16 %v2884, %v2883
      %v2917 = vpack.c.b16 %v2886, %v2885
      %v2918 = vpack.c.b16 %v2888, %v2887
      %v2919 = vpack.c.b16 %v2890, %v2889
      %v2920 = vpack.c.b16 %v2892, %v2891
      %v2921 = vpack.c.b16 %v2894, %v2893
      %v2922 = vpack.c.b16 %v2896, %v2895
      %v2923 = vpack.c.b16 %v2898, %v2897
      %v2924 = vpack.c.b16 %v2900, %v2899
      %v2925 = vpack.c.b16 %v2902, %v2901
      %v2926 = vpack.c.b16 %v2904, %v2903
      %v2927 = vpack.c.b16 %v2906, %v2905
      %v2928 = vpack.c.b16 %v2908, %v2907
      %v2929 = vpack.c.b16 %v2910, %v2909
      %v2930 = vpack.c.b16 %v2912, %v2911
      %2931 = vrot.lane.b32.xlu0 %v2913, 24
      %v2932 = vpop.permute.xlu0 %2931
      %2933 = vrot.lane.b32.xlu0 %v2914, 24
      %v2934 = vpop.permute.xlu0 %2933
      %2935 = vrot.lane.b32.xlu0 %v2915, 24
      %v2936 = vpop.permute.xlu0 %2935
      %2937 = vrot.lane.b32.xlu0 %v2916, 24
      %v2938 = vpop.permute.xlu0 %2937
      %2939 = vrot.lane.b32.xlu0 %v2917, 24
      %v2940 = vpop.permute.xlu0 %2939
      %2941 = vrot.lane.b32.xlu0 %v2918, 24
      %v2942 = vpop.permute.xlu0 %2941
      %2943 = vrot.lane.b32.xlu0 %v2919, 24
      %v2944 = vpop.permute.xlu0 %2943
      %2945 = vrot.lane.b32.xlu0 %v2920, 24
      %v2946 = vpop.permute.xlu0 %2945
      %2947 = vrot.lane.b32.xlu0 %v2921, 24
      %v2948 = vpop.permute.xlu0 %2947
      %2949 = vrot.lane.b32.xlu0 %v2922, 24
      %v2950 = vpop.permute.xlu0 %2949
      %2951 = vrot.lane.b32.xlu0 %v2923, 24
      %v2952 = vpop.permute.xlu0 %2951
      %2953 = vrot.lane.b32.xlu0 %v2924, 24
      %v2954 = vpop.permute.xlu0 %2953
      %2955 = vrot.lane.b32.xlu0 %v2925, 24
      %v2956 = vpop.permute.xlu0 %2955
      %2957 = vrot.lane.b32.xlu0 %v2926, 24
      %v2958 = vpop.permute.xlu0 %2957
      %2959 = vrot.lane.b32.xlu0 %v2927, 24
      %v2960 = vpop.permute.xlu0 %2959
      %2961 = vrot.lane.b32.xlu0 %v2928, 24
      %v2962 = vpop.permute.xlu0 %2961
      %2963 = vrot.lane.b32.xlu0 %v2929, 24
      %v2964 = vpop.permute.xlu0 %2963
      %2965 = vrot.lane.b32.xlu0 %v2930, 24
      %v2966 = vpop.permute.xlu0 %2965
      %v2967 = vunpack.c.l.b16 %v1702
      %v2968 = vunpack.c.l.b16 %v1712
      %v2969 = vunpack.c.l.b16 %v1726
      %v2970 = vunpack.c.l.b16 %v1736
      %v2971 = vunpack.c.l.b16 %v1750
      %v2972 = vunpack.c.l.b16 %v1760
      %v2973 = vunpack.c.l.b16 %v1774
      %v2974 = vunpack.c.l.b16 %v1784
      %v2975 = vunpack.c.l.b16 %v1798
      %v2976 = vunpack.c.l.b16 %v1808
      %v2977 = vunpack.c.l.b16 %v1822
      %v2978 = vunpack.c.l.b16 %v1832
      %v2979 = vunpack.c.l.b16 %v1846
      %v2980 = vunpack.c.l.b16 %v1856
      %v2981 = vunpack.c.l.b16 %v1870
      %v2982 = vunpack.c.l.b16 %v1880
      %v2983 = vunpack.c.l.b16 %v1894
      %v2984 = vunpack.c.l.b16 %v1904
      %v2985 = vunpack.c.l.b16 %v1918
      %v2986 = vunpack.c.l.b16 %v1928
      %v2987 = vunpack.c.l.b16 %v1942
      %v2988 = vunpack.c.l.b16 %v1952
      %v2989 = vunpack.c.l.b16 %v1966
      %v2990 = vunpack.c.l.b16 %v1976
      %v2991 = vunpack.c.l.b16 %v1990
      %v2992 = vunpack.c.l.b16 %v2000
      %v2993 = vunpack.c.l.b16 %v2014
      %v2994 = vunpack.c.l.b16 %v2024
      %v2995 = vunpack.c.l.b16 %v2038
      %v2996 = vunpack.c.l.b16 %v2048
      %v2997 = vunpack.c.l.b16 %v2062
      %v2998 = vunpack.c.l.b16 %v2072
      %v2999 = vunpack.c.l.b16 %v2086
      %v3000 = vunpack.c.l.b16 %v2096
      %v3001 = vunpack.c.l.b16 %v2110
      %v3002 = vunpack.c.l.b16 %v2120
      %v3003 = vpack.c.b16 %v2968, %v2967
      %v3004 = vpack.c.b16 %v2970, %v2969
      %v3005 = vpack.c.b16 %v2972, %v2971
      %v3006 = vpack.c.b16 %v2974, %v2973
      %v3007 = vpack.c.b16 %v2976, %v2975
      %v3008 = vpack.c.b16 %v2978, %v2977
      %v3009 = vpack.c.b16 %v2980, %v2979
      %v3010 = vpack.c.b16 %v2982, %v2981
      %v3011 = vpack.c.b16 %v2984, %v2983
      %v3012 = vpack.c.b16 %v2986, %v2985
      %v3013 = vpack.c.b16 %v2988, %v2987
      %v3014 = vpack.c.b16 %v2990, %v2989
      %v3015 = vpack.c.b16 %v2992, %v2991
      %v3016 = vpack.c.b16 %v2994, %v2993
      %v3017 = vpack.c.b16 %v2996, %v2995
      %v3018 = vpack.c.b16 %v2998, %v2997
      %v3019 = vpack.c.b16 %v3000, %v2999
      %v3020 = vpack.c.b16 %v3002, %v3001
      %3021 = vrot.lane.b32.xlu0 %v3003, 28
      %v3022 = vpop.permute.xlu0 %3021
      %3023 = vrot.lane.b32.xlu0 %v3004, 28
      %v3024 = vpop.permute.xlu0 %3023
      %3025 = vrot.lane.b32.xlu0 %v3005, 28
      %v3026 = vpop.permute.xlu0 %3025
      %3027 = vrot.lane.b32.xlu0 %v3006, 28
      %v3028 = vpop.permute.xlu0 %3027
      %3029 = vrot.lane.b32.xlu0 %v3007, 28
      %v3030 = vpop.permute.xlu0 %3029
      %3031 = vrot.lane.b32.xlu0 %v3008, 28
      %v3032 = vpop.permute.xlu0 %3031
      %3033 = vrot.lane.b32.xlu0 %v3009, 28
      %v3034 = vpop.permute.xlu0 %3033
      %3035 = vrot.lane.b32.xlu0 %v3010, 28
      %v3036 = vpop.permute.xlu0 %3035
      %3037 = vrot.lane.b32.xlu0 %v3011, 28
      %v3038 = vpop.permute.xlu0 %3037
      %3039 = vrot.lane.b32.xlu0 %v3012, 28
      %v3040 = vpop.permute.xlu0 %3039
      %3041 = vrot.lane.b32.xlu0 %v3013, 28
      %v3042 = vpop.permute.xlu0 %3041
      %3043 = vrot.lane.b32.xlu0 %v3014, 28
      %v3044 = vpop.permute.xlu0 %3043
      %3045 = vrot.lane.b32.xlu0 %v3015, 28
      %v3046 = vpop.permute.xlu0 %3045
      %3047 = vrot.lane.b32.xlu0 %v3016, 28
      %v3048 = vpop.permute.xlu0 %3047
      %3049 = vrot.lane.b32.xlu0 %v3017, 28
      %v3050 = vpop.permute.xlu0 %3049
      %3051 = vrot.lane.b32.xlu0 %v3018, 28
      %v3052 = vpop.permute.xlu0 %3051
      %3053 = vrot.lane.b32.xlu0 %v3019, 28
      %v3054 = vpop.permute.xlu0 %3053
      %3055 = vrot.lane.b32.xlu0 %v3020, 28
      %v3056 = vpop.permute.xlu0 %3055
      %v3057 = vunpack.c.l.b16 %v2196
      %v3058 = vunpack.c.l.b16 %v2199
      %v3059 = vunpack.c.l.b16 %v2203
      %v3060 = vunpack.c.l.b16 %v2206
      %v3061 = vunpack.c.l.b16 %v2210
      %v3062 = vunpack.c.l.b16 %v2213
      %v3063 = vunpack.c.l.b16 %v2217
      %v3064 = vunpack.c.l.b16 %v2220
      %v3065 = vunpack.c.l.b16 %v2224
      %v3066 = vunpack.c.l.b16 %v2227
      %v3067 = vunpack.c.l.b16 %v2231
      %v3068 = vunpack.c.l.b16 %v2234
      %v3069 = vunpack.c.l.b16 %v2238
      %v3070 = vunpack.c.l.b16 %v2241
      %v3071 = vunpack.c.l.b16 %v2245
      %v3072 = vunpack.c.l.b16 %v2248
      %v3073 = vunpack.c.l.b16 %v2252
      %v3074 = vunpack.c.l.b16 %v2255
      %v3075 = vunpack.c.l.b16 %v2259
      %v3076 = vunpack.c.l.b16 %v2262
      %v3077 = vunpack.c.l.b16 %v2266
      %v3078 = vunpack.c.l.b16 %v2269
      %v3079 = vunpack.c.l.b16 %v2273
      %v3080 = vunpack.c.l.b16 %v2276
      %v3081 = vunpack.c.l.b16 %v2280
      %v3082 = vunpack.c.l.b16 %v2283
      %v3083 = vunpack.c.l.b16 %v2287
      %v3084 = vunpack.c.l.b16 %v2290
      %v3085 = vunpack.c.l.b16 %v2294
      %v3086 = vunpack.c.l.b16 %v2297
      %v3087 = vunpack.c.l.b16 %v2301
      %v3088 = vunpack.c.l.b16 %v2304
      %v3089 = vunpack.c.l.b16 %v2308
      %v3090 = vunpack.c.l.b16 %v2311
      %v3091 = vunpack.c.l.b16 %v2315
      %v3092 = vunpack.c.l.b16 %v2318
      %v3093 = vpack.c.b16 %v3058, %v3057
      %v3094 = vpack.c.b16 %v3060, %v3059
      %v3095 = vpack.c.b16 %v3062, %v3061
      %v3096 = vpack.c.b16 %v3064, %v3063
      %v3097 = vpack.c.b16 %v3066, %v3065
      %v3098 = vpack.c.b16 %v3068, %v3067
      %v3099 = vpack.c.b16 %v3070, %v3069
      %v3100 = vpack.c.b16 %v3072, %v3071
      %v3101 = vpack.c.b16 %v3074, %v3073
      %v3102 = vpack.c.b16 %v3076, %v3075
      %v3103 = vpack.c.b16 %v3078, %v3077
      %v3104 = vpack.c.b16 %v3080, %v3079
      %v3105 = vpack.c.b16 %v3082, %v3081
      %v3106 = vpack.c.b16 %v3084, %v3083
      %v3107 = vpack.c.b16 %v3086, %v3085
      %v3108 = vpack.c.b16 %v3088, %v3087
      %v3109 = vpack.c.b16 %v3090, %v3089
      %v3110 = vpack.c.b16 %v3092, %v3091
      %3111 = vrot.lane.b32.xlu0 %v3093, 32
      %v3112 = vpop.permute.xlu0 %3111
      %3113 = vrot.lane.b32.xlu0 %v3094, 32
      %v3114 = vpop.permute.xlu0 %3113
      %3115 = vrot.lane.b32.xlu0 %v3095, 32
      %v3116 = vpop.permute.xlu0 %3115
      %3117 = vrot.lane.b32.xlu0 %v3096, 32
      %v3118 = vpop.permute.xlu0 %3117
      %3119 = vrot.lane.b32.xlu0 %v3097, 32
      %v3120 = vpop.permute.xlu0 %3119
      %3121 = vrot.lane.b32.xlu0 %v3098, 32
      %v3122 = vpop.permute.xlu0 %3121
      %3123 = vrot.lane.b32.xlu0 %v3099, 32
      %v3124 = vpop.permute.xlu0 %3123
      %3125 = vrot.lane.b32.xlu0 %v3100, 32
      %v3126 = vpop.permute.xlu0 %3125
      %3127 = vrot.lane.b32.xlu0 %v3101, 32
      %v3128 = vpop.permute.xlu0 %3127
      %3129 = vrot.lane.b32.xlu0 %v3102, 32
      %v3130 = vpop.permute.xlu0 %3129
      %3131 = vrot.lane.b32.xlu0 %v3103, 32
      %v3132 = vpop.permute.xlu0 %3131
      %3133 = vrot.lane.b32.xlu0 %v3104, 32
      %v3134 = vpop.permute.xlu0 %3133
      %3135 = vrot.lane.b32.xlu0 %v3105, 32
      %v3136 = vpop.permute.xlu0 %3135
      %3137 = vrot.lane.b32.xlu0 %v3106, 32
      %v3138 = vpop.permute.xlu0 %3137
      %3139 = vrot.lane.b32.xlu0 %v3107, 32
      %v3140 = vpop.permute.xlu0 %3139
      %3141 = vrot.lane.b32.xlu0 %v3108, 32
      %v3142 = vpop.permute.xlu0 %3141
      %3143 = vrot.lane.b32.xlu0 %v3109, 32
      %v3144 = vpop.permute.xlu0 %3143
      %3145 = vrot.lane.b32.xlu0 %v3110, 32
      %v3146 = vpop.permute.xlu0 %3145
      %vm3147 = vcmask 31744
      %v3150 = vsel %vm3147, %v2373, %v2446
      %v3153 = vsel %vm3147, %v2374, %v2448
      %v3156 = vsel %vm3147, %v2375, %v2450
      %v3159 = vsel %vm3147, %v2376, %v2452
      %v3162 = vsel %vm3147, %v2377, %v2454
      %v3165 = vsel %vm3147, %v2378, %v2456
      %v3168 = vsel %vm3147, %v2379, %v2458
      %v3171 = vsel %vm3147, %v2380, %v2460
      %v3174 = vsel %vm3147, %v2381, %v2462
      %v3177 = vsel %vm3147, %v2382, %v2464
      %v3180 = vsel %vm3147, %v2383, %v2466
      %v3183 = vsel %vm3147, %v2384, %v2468
      %v3186 = vsel %vm3147, %v2385, %v2470
      %v3189 = vsel %vm3147, %v2386, %v2472
      %v3192 = vsel %vm3147, %v2387, %v2474
      %v3195 = vsel %vm3147, %v2388, %v2476
      %v3198 = vsel %vm3147, %v2389, %v2478
      %v3201 = vsel %vm3147, %v2390, %v2480
      %vm3202 = vcmask 64512
      %v3204 = vsel %vm3202, %v3150, %v2536
      %v3206 = vsel %vm3202, %v3153, %v2538
      %v3208 = vsel %vm3202, %v3156, %v2540
      %v3210 = vsel %vm3202, %v3159, %v2542
      %v3212 = vsel %vm3202, %v3162, %v2544
      %v3214 = vsel %vm3202, %v3165, %v2546
      %v3216 = vsel %vm3202, %v3168, %v2548
      %v3218 = vsel %vm3202, %v3171, %v2550
      %v3220 = vsel %vm3202, %v3174, %v2552
      %v3222 = vsel %vm3202, %v3177, %v2554
      %v3224 = vsel %vm3202, %v3180, %v2556
      %v3226 = vsel %vm3202, %v3183, %v2558
      %v3228 = vsel %vm3202, %v3186, %v2560
      %v3230 = vsel %vm3202, %v3189, %v2562
      %v3232 = vsel %vm3202, %v3192, %v2564
      %v3234 = vsel %vm3202, %v3195, %v2566
      %v3236 = vsel %vm3202, %v3198, %v2568
      %v3238 = vsel %vm3202, %v3201, %v2570
      %vm3239 = vcmask 97280
      %v3241 = vsel %vm3239, %v3204, %v2644
      %v3243 = vsel %vm3239, %v3206, %v2646
      %v3245 = vsel %vm3239, %v3208, %v2648
      %v3247 = vsel %vm3239, %v3210, %v2650
      %v3249 = vsel %vm3239, %v3212, %v2652
      %v3251 = vsel %vm3239, %v3214, %v2654
      %v3253 = vsel %vm3239, %v3216, %v2656
      %v3255 = vsel %vm3239, %v3218, %v2658
      %v3257 = vsel %vm3239, %v3220, %v2660
      %v3259 = vsel %vm3239, %v3222, %v2662
      %v3261 = vsel %vm3239, %v3224, %v2664
      %v3263 = vsel %vm3239, %v3226, %v2666
      %v3265 = vsel %vm3239, %v3228, %v2668
      %v3267 = vsel %vm3239, %v3230, %v2670
      %v3269 = vsel %vm3239, %v3232, %v2672
      %v3271 = vsel %vm3239, %v3234, %v2674
      %v3273 = vsel %vm3239, %v3236, %v2676
      %v3275 = vsel %vm3239, %v3238, %v2678
      %vm3276 = vcmask 130048
      %v3278 = vsel %vm3276, %v3241, %v2734
      %v3280 = vsel %vm3276, %v3243, %v2736
      %v3282 = vsel %vm3276, %v3245, %v2738
      %v3284 = vsel %vm3276, %v3247, %v2740
      %v3286 = vsel %vm3276, %v3249, %v2742
      %v3288 = vsel %vm3276, %v3251, %v2744
      %v3290 = vsel %vm3276, %v3253, %v2746
      %v3292 = vsel %vm3276, %v3255, %v2748
      %v3294 = vsel %vm3276, %v3257, %v2750
      %v3296 = vsel %vm3276, %v3259, %v2752
      %v3298 = vsel %vm3276, %v3261, %v2754
      %v3300 = vsel %vm3276, %v3263, %v2756
      %v3302 = vsel %vm3276, %v3265, %v2758
      %v3304 = vsel %vm3276, %v3267, %v2760
      %v3306 = vsel %vm3276, %v3269, %v2762
      %v3308 = vsel %vm3276, %v3271, %v2764
      %v3310 = vsel %vm3276, %v3273, %v2766
      %v3312 = vsel %vm3276, %v3275, %v2768
      %vm3313 = vcmask 162816
      %v3315 = vsel %vm3313, %v3278, %v2824
      %v3317 = vsel %vm3313, %v3280, %v2826
      %v3319 = vsel %vm3313, %v3282, %v2828
      %v3321 = vsel %vm3313, %v3284, %v2830
      %v3323 = vsel %vm3313, %v3286, %v2832
      %v3325 = vsel %vm3313, %v3288, %v2834
      %v3327 = vsel %vm3313, %v3290, %v2836
      %v3329 = vsel %vm3313, %v3292, %v2838
      %v3331 = vsel %vm3313, %v3294, %v2840
      %v3333 = vsel %vm3313, %v3296, %v2842
      %v3335 = vsel %vm3313, %v3298, %v2844
      %v3337 = vsel %vm3313, %v3300, %v2846
      %v3339 = vsel %vm3313, %v3302, %v2848
      %v3341 = vsel %vm3313, %v3304, %v2850
      %v3343 = vsel %vm3313, %v3306, %v2852
      %v3345 = vsel %vm3313, %v3308, %v2854
      %v3347 = vsel %vm3313, %v3310, %v2856
      %v3349 = vsel %vm3313, %v3312, %v2858
      %vm3350 = vcmask 195584
      %v3352 = vsel %vm3350, %v3315, %v2932
      %v3354 = vsel %vm3350, %v3317, %v2934
      %v3356 = vsel %vm3350, %v3319, %v2936
      %v3358 = vsel %vm3350, %v3321, %v2938
      %v3360 = vsel %vm3350, %v3323, %v2940
      %v3362 = vsel %vm3350, %v3325, %v2942
      %v3364 = vsel %vm3350, %v3327, %v2944
      %v3366 = vsel %vm3350, %v3329, %v2946
      %v3368 = vsel %vm3350, %v3331, %v2948
      %v3370 = vsel %vm3350, %v3333, %v2950
      %v3372 = vsel %vm3350, %v3335, %v2952
      %v3374 = vsel %vm3350, %v3337, %v2954
      %v3376 = vsel %vm3350, %v3339, %v2956
      %v3378 = vsel %vm3350, %v3341, %v2958
      %v3380 = vsel %vm3350, %v3343, %v2960
      %v3382 = vsel %vm3350, %v3345, %v2962
      %v3384 = vsel %vm3350, %v3347, %v2964
      %v3386 = vsel %vm3350, %v3349, %v2966
      %vm3387 = vcmask 228352
      %v3389 = vsel %vm3387, %v3352, %v3022
      %v3391 = vsel %vm3387, %v3354, %v3024
      %v3393 = vsel %vm3387, %v3356, %v3026
      %v3395 = vsel %vm3387, %v3358, %v3028
      %v3397 = vsel %vm3387, %v3360, %v3030
      %v3399 = vsel %vm3387, %v3362, %v3032
      %v3401 = vsel %vm3387, %v3364, %v3034
      %v3403 = vsel %vm3387, %v3366, %v3036
      %v3405 = vsel %vm3387, %v3368, %v3038
      %v3407 = vsel %vm3387, %v3370, %v3040
      %v3409 = vsel %vm3387, %v3372, %v3042
      %v3411 = vsel %vm3387, %v3374, %v3044
      %v3413 = vsel %vm3387, %v3376, %v3046
      %v3415 = vsel %vm3387, %v3378, %v3048
      %v3417 = vsel %vm3387, %v3380, %v3050
      %v3419 = vsel %vm3387, %v3382, %v3052
      %v3421 = vsel %vm3387, %v3384, %v3054
      %v3423 = vsel %vm3387, %v3386, %v3056
      %vm3424 = vcmask 261120
      %v3426 = vsel %vm3424, %v3389, %v3112
      %v3428 = vsel %vm3424, %v3391, %v3114
      %v3430 = vsel %vm3424, %v3393, %v3116
      %v3432 = vsel %vm3424, %v3395, %v3118
      %v3434 = vsel %vm3424, %v3397, %v3120
      %v3436 = vsel %vm3424, %v3399, %v3122
      %v3438 = vsel %vm3424, %v3401, %v3124
      %v3440 = vsel %vm3424, %v3403, %v3126
      %v3442 = vsel %vm3424, %v3405, %v3128
      %v3444 = vsel %vm3424, %v3407, %v3130
      %v3446 = vsel %vm3424, %v3409, %v3132
      %v3448 = vsel %vm3424, %v3411, %v3134
      %v3450 = vsel %vm3424, %v3413, %v3136
      %v3452 = vsel %vm3424, %v3415, %v3138
      %v3454 = vsel %vm3424, %v3417, %v3140
      %v3456 = vsel %vm3424, %v3419, %v3142
      %v3458 = vsel %vm3424, %v3421, %v3144
      %v3460 = vsel %vm3424, %v3423, %v3146
      %v3461 = vld [vmem:[%s1] sm:$0xf]
      %v3462 = vld [vmem:[%s1 + $0x4] sm:$0xf]
      %v3463 = vld [vmem:[%s1 + $0x8] sm:$0xf]
      %v3464 = vld [vmem:[%s1 + $0xc] sm:$0xf]
      %v3465 = vld [vmem:[%s1 + $0x10] sm:$0x3]
      %v3466 = vld [vmem:[%s2] sm:$0x1]
      %v3468 = vlaneseq
      %v3469 = vshrl.u32 %v3468, 7
      %v3470 = vsub.s32 0, %v3469
      %v3471 = vrot.slane %v3466, %v3470
      %v3478 = vunpack.c.l.b16 %v3461
      %v3479 = vunpack.c.l.b16 %v3462
      %v3480 = vunpack.c.l.b16 %v3463
      %v3481 = vunpack.c.l.b16 %v3464
      %v3482 = vunpack.c.l.b16 %v3465
      %v3483 = vpack.c.b16 %v3479, %v3478
      %v3484 = vpack.c.b16 %v3481, %v3480
      %v3485 = vpack.c.b16 %v3482, %v3482
      %vm3488 = vcmask 293888
      %v3489 = vsel %vm3488, %v3426, 0
      %v3491 = vsel %vm3488, %v3428, 0
      %v3493 = vsel %vm3488, %v3430, 0
      %v3495 = vsel %vm3488, %v3432, 0
      %v3497 = vsel %vm3488, %v3434, 0
      %v3499 = vsel %vm3488, %v3436, 0
      %v3501 = vsel %vm3488, %v3438, 0
      %v3503 = vsel %vm3488, %v3440, 0
      %v3505 = vsel %vm3488, %v3442, 0
      %v3507 = vsel %vm3488, %v3444, 0
      %v3509 = vsel %vm3488, %v3446, 0
      %v3511 = vsel %vm3488, %v3448, 0
      %v3513 = vsel %vm3488, %v3450, 0
      %v3515 = vsel %vm3488, %v3452, 0
      %v3517 = vsel %vm3488, %v3454, 0
      %v3519 = vsel %vm3488, %v3456, 0
      %v3521 = vsel %vm3488, %v3458, 0
      %v3523 = vsel %vm3488, %v3460, 0
      %vm3525 = vcmask 1041408
      %v3527 = vsel %vm3525, %v3485, 0
      %3529 = vmatprep.subr.bf16.mxu0 0
      %3530 = vmatpush1.bf16.msra.mxu0 %v3483
      %3531 = vmatprep.subr.bf16.mxu0 0
      %3532 = vmatpush1.bf16.msra.mxu0 %v3484
      %3533 = vmatprep.subr.bf16.mxu0 0
      %3534 = vmatpush1.bf16.msra.mxu0 %v3527
      %3535 = vmatprep.subr.bf16.mxu0 0
      %3536 = vmatpush1.bf16.msra.mxu0 0
      %3537 = vmatprep.subr.bf16.mxu0 0
      %3538 = vmatpush1.bf16.msra.mxu0 0
      %3539 = vmatprep.subr.bf16.mxu0 0
      %3540 = vmatpush1.bf16.msra.mxu0 0
      %3541 = vmatprep.subr.bf16.mxu0 0
      %3542 = vmatpush1.bf16.msra.mxu0 0
      %3543 = vmatprep.subr.bf16.mxu0 0
      %3544 = vmatpush1.bf16.msra.mxu0 0
      %3545 = vmatprep.subr.bf16.mxu0 0
      %3546 = vmatpush1.bf16.msra.mxu0 0
      %3547 = vmatprep.subr.bf16.mxu0 0
      %3548 = vmatpush1.bf16.msra.mxu0 0
      %3549 = vmatprep.subr.bf16.mxu0 0
      %3550 = vmatpush1.bf16.msra.mxu0 0
      %3551 = vmatprep.subr.bf16.mxu0 0
      %3552 = vmatpush1.bf16.msra.mxu0 0
      %3553 = vmatprep.subr.bf16.mxu0 0
      %3554 = vmatpush1.bf16.msra.mxu0 0
      %3555 = vmatprep.subr.bf16.mxu0 0
      %3556 = vmatpush1.bf16.msra.mxu0 0
      %3557 = vmatprep.subr.bf16.mxu0 0
      %3558 = vmatpush1.bf16.msra.mxu0 0
      %3559 = vmatprep.subr.bf16.mxu0 0
      %3560 = vmatpush1.bf16.msra.mxu0 0
      %3561 = vmatprep.mubr.bf16.mxu0 0
      %3562 = vmatmul.mubr.bf16.gmra.mrb[0].mxu0 %v3489
      %v3563 = vpop.f32.mrb[0].mxu0
      %v3564 = vadd.f32 %v3471, %v3563
      %v3565 = vpop.f32.mrb[0].mxu0
      %v3566 = vpop.f32.mrb[0].mxu0
      %v3567 = vadd.f32 %v3471, %v3566
      %v3568 = vpop.f32.mrb[0].mxu0
      %3569 = vmatprep.mubr.bf16.mxu0 0
      %3570 = vmatmul.mubr.bf16.gmra.mrb[0].mxu0 %v3491
      %v3571 = vpop.f32.mrb[0].mxu0
      %v3572 = vadd.f32 %v3471, %v3571
      %v3573 = vpop.f32.mrb[0].mxu0
      %v3574 = vpop.f32.mrb[0].mxu0
      %v3575 = vadd.f32 %v3471, %v3574
      %v3576 = vpop.f32.mrb[0].mxu0
      %3577 = vmatprep.mubr.bf16.mxu0 0
      %3578 = vmatmul.mubr.bf16.gmra.mrb[0].mxu0 %v3493
      %v3579 = vpop.f32.mrb[0].mxu0
      %v3580 = vadd.f32 %v3471, %v3579
      %v3581 = vpop.f32.mrb[0].mxu0
      %v3582 = vpop.f32.mrb[0].mxu0
      %v3583 = vadd.f32 %v3471, %v3582
      %v3584 = vpop.f32.mrb[0].mxu0
      %3585 = vmatprep.mubr.bf16.mxu0 0
      %3586 = vmatmul.mubr.bf16.gmra.mrb[0].mxu0 %v3495
      %v3587 = vpop.f32.mrb[0].mxu0
      %v3588 = vadd.f32 %v3471, %v3587
      %v3589 = vpop.f32.mrb[0].mxu0
      %v3590 = vpop.f32.mrb[0].mxu0
      %v3591 = vadd.f32 %v3471, %v3590
      %v3592 = vpop.f32.mrb[0].mxu0
      %3593 = vmatprep.mubr.bf16.mxu0 0
      %3594 = vmatmul.mubr.bf16.gmra.mrb[0].mxu0 %v3497
      %v3595 = vpop.f32.mrb[0].mxu0
      %v3596 = vadd.f32 %v3471, %v3595
      %v3597 = vpop.f32.mrb[0].mxu0
      %v3598 = vpop.f32.mrb[0].mxu0
      %v3599 = vadd.f32 %v3471, %v3598
      %v3600 = vpop.f32.mrb[0].mxu0
      %3601 = vmatprep.mubr.bf16.mxu0 0
      %3602 = vmatmul.mubr.bf16.gmra.mrb[0].mxu0 %v3499
      %v3603 = vpop.f32.mrb[0].mxu0
      %v3604 = vadd.f32 %v3471, %v3603
      %v3605 = vpop.f32.mrb[0].mxu0
      %v3606 = vpop.f32.mrb[0].mxu0
      %v3607 = vadd.f32 %v3471, %v3606
      %v3608 = vpop.f32.mrb[0].mxu0
      %3609 = vmatprep.mubr.bf16.mxu0 0
      %3610 = vmatmul.mubr.bf16.gmra.mrb[0].mxu0 %v3501
      %v3611 = vpop.f32.mrb[0].mxu0
      %v3612 = vadd.f32 %v3471, %v3611
      %v3613 = vpop.f32.mrb[0].mxu0
      %v3614 = vpop.f32.mrb[0].mxu0
      %v3615 = vadd.f32 %v3471, %v3614
      %v3616 = vpop.f32.mrb[0].mxu0
      %3617 = vmatprep.mubr.bf16.mxu0 0
      %3618 = vmatmul.mubr.bf16.gmra.mrb[0].mxu0 %v3503
      %v3619 = vpop.f32.mrb[0].mxu0
      %v3620 = vadd.f32 %v3471, %v3619
      %v3621 = vpop.f32.mrb[0].mxu0
      %v3622 = vpop.f32.mrb[0].mxu0
      %v3623 = vadd.f32 %v3471, %v3622
      %v3624 = vpop.f32.mrb[0].mxu0
      %3625 = vmatprep.mubr.bf16.mxu0 0
      %3626 = vmatmul.mubr.bf16.gmra.mrb[0].mxu0 %v3505
      %v3627 = vpop.f32.mrb[0].mxu0
      %v3628 = vadd.f32 %v3471, %v3627
      %v3629 = vpop.f32.mrb[0].mxu0
      %v3630 = vpop.f32.mrb[0].mxu0
      %v3631 = vadd.f32 %v3471, %v3630
      %v3632 = vpop.f32.mrb[0].mxu0
      %3633 = vmatprep.mubr.bf16.mxu0 0
      %3634 = vmatmul.mubr.bf16.gmra.mrb[0].mxu0 %v3507
      %v3635 = vpop.f32.mrb[0].mxu0
      %v3636 = vadd.f32 %v3471, %v3635
      %v3637 = vpop.f32.mrb[0].mxu0
      %v3638 = vpop.f32.mrb[0].mxu0
      %v3639 = vadd.f32 %v3471, %v3638
      %v3640 = vpop.f32.mrb[0].mxu0
      %3641 = vmatprep.mubr.bf16.mxu0 0
      %3642 = vmatmul.mubr.bf16.gmra.mrb[0].mxu0 %v3509
      %v3643 = vpop.f32.mrb[0].mxu0
      %v3644 = vadd.f32 %v3471, %v3643
      %v3645 = vpop.f32.mrb[0].mxu0
      %v3646 = vpop.f32.mrb[0].mxu0
      %v3647 = vadd.f32 %v3471, %v3646
      %v3648 = vpop.f32.mrb[0].mxu0
      %3649 = vmatprep.mubr.bf16.mxu0 0
      %3650 = vmatmul.mubr.bf16.gmra.mrb[0].mxu0 %v3511
      %v3651 = vpop.f32.mrb[0].mxu0
      %v3652 = vadd.f32 %v3471, %v3651
      %v3653 = vpop.f32.mrb[0].mxu0
      %v3654 = vpop.f32.mrb[0].mxu0
      %v3655 = vadd.f32 %v3471, %v3654
      %v3656 = vpop.f32.mrb[0].mxu0
      %3657 = vmatprep.mubr.bf16.mxu0 0
      %3658 = vmatmul.mubr.bf16.gmra.mrb[0].mxu0 %v3513
      %v3659 = vpop.f32.mrb[0].mxu0
      %v3660 = vadd.f32 %v3471, %v3659
      %v3661 = vpop.f32.mrb[0].mxu0
      %v3662 = vpop.f32.mrb[0].mxu0
      %v3663 = vadd.f32 %v3471, %v3662
      %v3664 = vpop.f32.mrb[0].mxu0
      %3665 = vmatprep.mubr.bf16.mxu0 0
      %3666 = vmatmul.mubr.bf16.gmra.mrb[0].mxu0 %v3515
      %v3667 = vpop.f32.mrb[0].mxu0
      %v3668 = vadd.f32 %v3471, %v3667
      %v3669 = vpop.f32.mrb[0].mxu0
      %v3670 = vpop.f32.mrb[0].mxu0
      %v3671 = vadd.f32 %v3471, %v3670
      %v3672 = vpop.f32.mrb[0].mxu0
      %3673 = vmatprep.mubr.bf16.mxu0 0
      %3674 = vmatmul.mubr.bf16.gmra.mrb[0].mxu0 %v3517
      %v3675 = vpop.f32.mrb[0].mxu0
      %v3676 = vadd.f32 %v3471, %v3675
      %v3677 = vpop.f32.mrb[0].mxu0
      %v3678 = vpop.f32.mrb[0].mxu0
      %v3679 = vadd.f32 %v3471, %v3678
      %v3680 = vpop.f32.mrb[0].mxu0
      %3681 = vmatprep.mubr.bf16.mxu0 0
      %3682 = vmatmul.mubr.bf16.gmra.mrb[0].mxu0 %v3519
      %v3683 = vpop.f32.mrb[0].mxu0
      %v3684 = vadd.f32 %v3471, %v3683
      %v3685 = vpop.f32.mrb[0].mxu0
      %v3686 = vpop.f32.mrb[0].mxu0
      %v3687 = vadd.f32 %v3471, %v3686
      %v3688 = vpop.f32.mrb[0].mxu0
      %3689 = vmatprep.mubr.bf16.mxu0 0
      %3690 = vmatmul.mubr.bf16.gmra.mrb[0].mxu0 %v3521
      %v3691 = vpop.f32.mrb[0].mxu0
      %v3692 = vadd.f32 %v3471, %v3691
      %v3693 = vpop.f32.mrb[0].mxu0
      %v3694 = vpop.f32.mrb[0].mxu0
      %v3695 = vadd.f32 %v3471, %v3694
      %v3696 = vpop.f32.mrb[0].mxu0
      %3697 = vmatprep.mubr.bf16.mxu0 0
      %3698 = vmatmul.mubr.bf16.gmra.mrb[0].mxu0 %v3523
      %v3699 = vpop.f32.mrb[0].mxu0
      %v3700 = vadd.f32 %v3471, %v3699
      %v3701 = vpop.f32.mrb[0].mxu0
      %v3702 = vpop.f32.mrb[0].mxu0
      %v3703 = vadd.f32 %v3471, %v3702
      %v3704 = vpop.f32.mrb[0].mxu0
      %3705 = vdwg.mxu0
      %v3706 = vmax.f32 %v3564, 0.0
      %v3707 = vmax.f32 %v3567, 0.0
      %v3708 = vmax.f32 %v3572, 0.0
      %v3709 = vmax.f32 %v3575, 0.0
      %v3710 = vmax.f32 %v3580, 0.0
      %v3711 = vmax.f32 %v3583, 0.0
      %v3712 = vmax.f32 %v3588, 0.0
      %v3713 = vmax.f32 %v3591, 0.0
      %v3714 = vmax.f32 %v3596, 0.0
      %v3715 = vmax.f32 %v3599, 0.0
      %v3716 = vmax.f32 %v3604, 0.0
      %v3717 = vmax.f32 %v3607, 0.0
      %v3718 = vmax.f32 %v3612, 0.0
      %v3719 = vmax.f32 %v3615, 0.0
      %v3720 = vmax.f32 %v3620, 0.0
      %v3721 = vmax.f32 %v3623, 0.0
      %v3722 = vmax.f32 %v3628, 0.0
      %v3723 = vmax.f32 %v3631, 0.0
      %v3724 = vmax.f32 %v3636, 0.0
      %v3725 = vmax.f32 %v3639, 0.0
      %v3726 = vmax.f32 %v3644, 0.0
      %v3727 = vmax.f32 %v3647, 0.0
      %v3728 = vmax.f32 %v3652, 0.0
      %v3729 = vmax.f32 %v3655, 0.0
      %v3730 = vmax.f32 %v3660, 0.0
      %v3731 = vmax.f32 %v3663, 0.0
      %v3732 = vmax.f32 %v3668, 0.0
      %v3733 = vmax.f32 %v3671, 0.0
      %v3734 = vmax.f32 %v3676, 0.0
      %v3735 = vmax.f32 %v3679, 0.0
      %v3736 = vmax.f32 %v3684, 0.0
      %v3737 = vmax.f32 %v3687, 0.0
      %v3738 = vmax.f32 %v3692, 0.0
      %v3739 = vmax.f32 %v3695, 0.0
      %v3740 = vmax.f32 %v3700, 0.0
      %v3741 = vmax.f32 %v3703, 0.0
      %vm3742 = vcmask 57344
      %vm3743 = vsmask.f32 256
      %vm3744 = vmand %vm3742, %vm3743
      %v3745 = vld [vmem:[#allocation2] sm:$0x1]
      %v3746 = vsel %vm3744, 0, %v3745
      %3747 = vst [vmem:[#allocation2] sm:$0x1] %v3746
      %v3748 = vld [vmem:[#allocation2 + $0xc] sm:$0x1]
      %v3749 = vsel %vm3744, 0, %v3748
      %3750 = vst [vmem:[#allocation2 + $0xc] sm:$0x1] %v3749
      %v3751 = vld [vmem:[#allocation2 + $0x18] sm:$0x1]
      %v3752 = vsel %vm3744, 0, %v3751
      %3753 = vst [vmem:[#allocation2 + $0x18] sm:$0x1] %v3752
      %v3754 = vld [vmem:[#allocation2 + $0x24] sm:$0x1]
      %v3755 = vsel %vm3744, 0, %v3754
      %3756 = vst [vmem:[#allocation2 + $0x24] sm:$0x1] %v3755
      %v3757 = vld [vmem:[#allocation2 + $0x30] sm:$0x1]
      %v3758 = vsel %vm3744, 0, %v3757
      %3759 = vst [vmem:[#allocation2 + $0x30] sm:$0x1] %v3758
      %v3760 = vld [vmem:[#allocation2 + $0x3c] sm:$0x1]
      %v3761 = vsel %vm3744, 0, %v3760
      %3762 = vst [vmem:[#allocation2 + $0x3c] sm:$0x1] %v3761
      %v3763 = vld [vmem:[#allocation2 + $0x48] sm:$0x1]
      %v3764 = vsel %vm3744, 0, %v3763
      %3765 = vst [vmem:[#allocation2 + $0x48] sm:$0x1] %v3764
      %v3766 = vld [vmem:[#allocation2 + $0x54] sm:$0x1]
      %v3767 = vsel %vm3744, 0, %v3766
      %3768 = vst [vmem:[#allocation2 + $0x54] sm:$0x1] %v3767
      %v3769 = vld [vmem:[#allocation2 + $0x60] sm:$0x1]
      %v3770 = vsel %vm3744, 0, %v3769
      %3771 = vst [vmem:[#allocation2 + $0x60] sm:$0x1] %v3770
      %v3772 = vld [vmem:[#allocation2 + $0x6c] sm:$0x1]
      %v3773 = vsel %vm3744, 0, %v3772
      %3774 = vst [vmem:[#allocation2 + $0x6c] sm:$0x1] %v3773
      %v3775 = vld [vmem:[#allocation2 + $0x78] sm:$0x1]
      %v3776 = vsel %vm3744, 0, %v3775
      %3777 = vst [vmem:[#allocation2 + $0x78] sm:$0x1] %v3776
      %v3778 = vld [vmem:[#allocation2 + $0x84] sm:$0x1]
      %v3779 = vsel %vm3744, 0, %v3778
      %3780 = vst [vmem:[#allocation2 + $0x84] sm:$0x1] %v3779
      %v3781 = vld [vmem:[#allocation2 + $0x90] sm:$0x1]
      %v3782 = vsel %vm3744, 0, %v3781
      %3783 = vst [vmem:[#allocation2 + $0x90] sm:$0x1] %v3782
      %v3784 = vld [vmem:[#allocation2 + $0x9c] sm:$0x1]
      %v3785 = vsel %vm3744, 0, %v3784
      %3786 = vst [vmem:[#allocation2 + $0x9c] sm:$0x1] %v3785
      %v3787 = vld [vmem:[#allocation2 + $0xa8] sm:$0x1]
      %v3788 = vsel %vm3744, 0, %v3787
      %3789 = vst [vmem:[#allocation2 + $0xa8] sm:$0x1] %v3788
      %v3790 = vld [vmem:[#allocation2 + $0xb4] sm:$0x1]
      %v3791 = vsel %vm3744, 0, %v3790
      %3792 = vst [vmem:[#allocation2 + $0xb4] sm:$0x1] %v3791
      %v3793 = vld [vmem:[#allocation2 + $0xc0] sm:$0x1]
      %v3794 = vsel %vm3744, 0, %v3793
      %3795 = vst [vmem:[#allocation2 + $0xc0] sm:$0x1] %v3794
      %v3796 = vld [vmem:[#allocation2 + $0xcc] sm:$0x1]
      %v3797 = vsel %vm3744, 0, %v3796
      %3798 = vst [vmem:[#allocation2 + $0xcc] sm:$0x1] %v3797
      %vm3799 = vsmask.f32 7938
      %vm3800 = vmand %vm3742, %vm3799
      %v3801 = vld [vmem:[#allocation2 + $0x8] sm:$0x1]
      %v3802 = vsel %vm3800, 0, %v3801
      %3803 = vst [vmem:[#allocation2 + $0x8] sm:$0x1] %v3802
      %v3804 = vld [vmem:[#allocation2 + $0x14] sm:$0x1]
      %v3805 = vsel %vm3800, 0, %v3804
      %3806 = vst [vmem:[#allocation2 + $0x14] sm:$0x1] %v3805
      %v3807 = vld [vmem:[#allocation2 + $0x20] sm:$0x1]
      %v3808 = vsel %vm3800, 0, %v3807
      %3809 = vst [vmem:[#allocation2 + $0x20] sm:$0x1] %v3808
      %v3810 = vld [vmem:[#allocation2 + $0x2c] sm:$0x1]
      %v3811 = vsel %vm3800, 0, %v3810
      %3812 = vst [vmem:[#allocation2 + $0x2c] sm:$0x1] %v3811
      %v3813 = vld [vmem:[#allocation2 + $0x38] sm:$0x1]
      %v3814 = vsel %vm3800, 0, %v3813
      %3815 = vst [vmem:[#allocation2 + $0x38] sm:$0x1] %v3814
      %v3816 = vld [vmem:[#allocation2 + $0x44] sm:$0x1]
      %v3817 = vsel %vm3800, 0, %v3816
      %3818 = vst [vmem:[#allocation2 + $0x44] sm:$0x1] %v3817
      %v3819 = vld [vmem:[#allocation2 + $0x50] sm:$0x1]
      %v3820 = vsel %vm3800, 0, %v3819
      %3821 = vst [vmem:[#allocation2 + $0x50] sm:$0x1] %v3820
      %v3822 = vld [vmem:[#allocation2 + $0x5c] sm:$0x1]
      %v3823 = vsel %vm3800, 0, %v3822
      %3824 = vst [vmem:[#allocation2 + $0x5c] sm:$0x1] %v3823
      %v3825 = vld [vmem:[#allocation2 + $0x68] sm:$0x1]
      %v3826 = vsel %vm3800, 0, %v3825
      %3827 = vst [vmem:[#allocation2 + $0x68] sm:$0x1] %v3826
      %v3828 = vld [vmem:[#allocation2 + $0x74] sm:$0x1]
      %v3829 = vsel %vm3800, 0, %v3828
      %3830 = vst [vmem:[#allocation2 + $0x74] sm:$0x1] %v3829
      %v3831 = vld [vmem:[#allocation2 + $0x80] sm:$0x1]
      %v3832 = vsel %vm3800, 0, %v3831
      %3833 = vst [vmem:[#allocation2 + $0x80] sm:$0x1] %v3832
      %v3834 = vld [vmem:[#allocation2 + $0x8c] sm:$0x1]
      %v3835 = vsel %vm3800, 0, %v3834
      %3836 = vst [vmem:[#allocation2 + $0x8c] sm:$0x1] %v3835
      %v3837 = vld [vmem:[#allocation2 + $0x98] sm:$0x1]
      %v3838 = vsel %vm3800, 0, %v3837
      %3839 = vst [vmem:[#allocation2 + $0x98] sm:$0x1] %v3838
      %v3840 = vld [vmem:[#allocation2 + $0xa4] sm:$0x1]
      %v3841 = vsel %vm3800, 0, %v3840
      %3842 = vst [vmem:[#allocation2 + $0xa4] sm:$0x1] %v3841
      %v3843 = vld [vmem:[#allocation2 + $0xb0] sm:$0x1]
      %v3844 = vsel %vm3800, 0, %v3843
      %3845 = vst [vmem:[#allocation2 + $0xb0] sm:$0x1] %v3844
      %v3846 = vld [vmem:[#allocation2 + $0xbc] sm:$0x1]
      %v3847 = vsel %vm3800, 0, %v3846
      %3848 = vst [vmem:[#allocation2 + $0xbc] sm:$0x1] %v3847
      %v3849 = vld [vmem:[#allocation2 + $0xc8] sm:$0x1]
      %v3850 = vsel %vm3800, 0, %v3849
      %3851 = vst [vmem:[#allocation2 + $0xc8] sm:$0x1] %v3850
      %v3852 = vld [vmem:[#allocation2 + $0xd4] sm:$0x1]
      %v3853 = vsel %vm3800, 0, %v3852
      %3854 = vst [vmem:[#allocation2 + $0xd4] sm:$0x1] %v3853
      %v3855 = vpack.c.bf16 %v3707, %v3706
      %v3856 = vpack.c.bf16 %v3709, %v3708
      %v3857 = vpack.c.bf16 %v3711, %v3710
      %v3858 = vpack.c.bf16 %v3713, %v3712
      %v3859 = vpack.c.bf16 %v3715, %v3714
      %v3860 = vpack.c.bf16 %v3717, %v3716
      %v3861 = vpack.c.bf16 %v3719, %v3718
      %v3862 = vpack.c.bf16 %v3721, %v3720
      %v3863 = vpack.c.bf16 %v3723, %v3722
      %v3864 = vpack.c.bf16 %v3725, %v3724
      %v3865 = vpack.c.bf16 %v3727, %v3726
      %v3866 = vpack.c.bf16 %v3729, %v3728
      %v3867 = vpack.c.bf16 %v3731, %v3730
      %v3868 = vpack.c.bf16 %v3733, %v3732
      %v3869 = vpack.c.bf16 %v3735, %v3734
      %v3870 = vpack.c.bf16 %v3737, %v3736
      %v3871 = vpack.c.bf16 %v3739, %v3738
      %v3872 = vpack.c.bf16 %v3741, %v3740
      %v3891 = vunpack.c.l.b16 %v3855
      %v3892 = vunpack.c.h.b16 %v3855
      %v3893 = vunpack.c.l.b16 %v3856
      %v3894 = vunpack.c.h.b16 %v3856
      %v3895 = vunpack.c.l.b16 %v3857
      %v3896 = vunpack.c.h.b16 %v3857
      %v3897 = vunpack.c.l.b16 %v3858
      %v3898 = vunpack.c.h.b16 %v3858
      %v3899 = vunpack.c.l.b16 %v3859
      %v3900 = vunpack.c.h.b16 %v3859
      %v3901 = vunpack.c.l.b16 %v3860
      %v3902 = vunpack.c.h.b16 %v3860
      %v3903 = vunpack.c.l.b16 %v3861
      %v3904 = vunpack.c.h.b16 %v3861
      %v3905 = vunpack.c.l.b16 %v3862
      %v3906 = vunpack.c.h.b16 %v3862
      %v3907 = vunpack.c.l.b16 %v3863
      %v3908 = vunpack.c.h.b16 %v3863
      %v3909 = vunpack.c.l.b16 %v3864
      %v3910 = vunpack.c.h.b16 %v3864
      %v3911 = vunpack.c.l.b16 %v3865
      %v3912 = vunpack.c.h.b16 %v3865
      %v3913 = vunpack.c.l.b16 %v3866
      %v3914 = vunpack.c.h.b16 %v3866
      %v3915 = vunpack.c.l.b16 %v3867
      %v3916 = vunpack.c.h.b16 %v3867
      %v3917 = vunpack.c.l.b16 %v3868
      %v3918 = vunpack.c.h.b16 %v3868
      %v3919 = vunpack.c.l.b16 %v3869
      %v3920 = vunpack.c.h.b16 %v3869
      %v3921 = vunpack.c.l.b16 %v3870
      %v3922 = vunpack.c.h.b16 %v3870
      %v3923 = vunpack.c.l.b16 %v3871
      %v3924 = vunpack.c.h.b16 %v3871
      %v3925 = vunpack.c.l.b16 %v3872
      %v3926 = vunpack.c.h.b16 %v3872
      %v3927 = vpack.c.b16 %v3891, %v3891
      %v3928 = vpack.c.b16 %v3892, %v3892
      %v3929 = vpack.c.b16 %v3893, %v3893
      %v3930 = vpack.c.b16 %v3894, %v3894
      %v3931 = vpack.c.b16 %v3895, %v3895
      %v3932 = vpack.c.b16 %v3896, %v3896
      %v3933 = vpack.c.b16 %v3897, %v3897
      %v3934 = vpack.c.b16 %v3898, %v3898
      %v3935 = vpack.c.b16 %v3899, %v3899
      %v3936 = vpack.c.b16 %v3900, %v3900
      %v3937 = vpack.c.b16 %v3901, %v3901
      %v3938 = vpack.c.b16 %v3902, %v3902
      %v3939 = vpack.c.b16 %v3903, %v3903
      %v3940 = vpack.c.b16 %v3904, %v3904
      %v3941 = vpack.c.b16 %v3905, %v3905
      %v3942 = vpack.c.b16 %v3906, %v3906
      %v3943 = vpack.c.b16 %v3907, %v3907
      %v3944 = vpack.c.b16 %v3908, %v3908
      %v3945 = vpack.c.b16 %v3909, %v3909
      %v3946 = vpack.c.b16 %v3910, %v3910
      %v3947 = vpack.c.b16 %v3911, %v3911
      %v3948 = vpack.c.b16 %v3912, %v3912
      %v3949 = vpack.c.b16 %v3913, %v3913
      %v3950 = vpack.c.b16 %v3914, %v3914
      %v3951 = vpack.c.b16 %v3915, %v3915
      %v3952 = vpack.c.b16 %v3916, %v3916
      %v3953 = vpack.c.b16 %v3917, %v3917
      %v3954 = vpack.c.b16 %v3918, %v3918
      %v3955 = vpack.c.b16 %v3919, %v3919
      %v3956 = vpack.c.b16 %v3920, %v3920
      %v3957 = vpack.c.b16 %v3921, %v3921
      %v3958 = vpack.c.b16 %v3922, %v3922
      %v3959 = vpack.c.b16 %v3923, %v3923
      %v3960 = vpack.c.b16 %v3924, %v3924
      %v3961 = vpack.c.b16 %v3925, %v3925
      %v3962 = vpack.c.b16 %v3926, %v3926
      %vm3963 = vsmask.f32 4368
      %vm3964 = vmor %vm3743, %vm3963
      %v3966 = vshrl.u32 %v3927, 16
      %v3968 = vrot.slane %v3966, 7
      %v3969 = vshll.u32 %v3927, 16
      %v3971 = vor.u32 %v3968, %v3969
      %v3972 = vrot.slane %v3968, 4
      %v3974 = vshrl.u32 %v3928, 16
      %v3976 = vrot.slane %v3974, 7
      %v3977 = vshll.u32 %v3928, 16
      %v3979 = vor.u32 %v3976, %v3977
      %v3980 = vsel %vm3964, %v3972, %v3979
      %v3981 = vrot.slane %v3976, 4
      %v3983 = vshrl.u32 %v3929, 16
      %v3985 = vrot.slane %v3983, 7
      %v3986 = vshll.u32 %v3929, 16
      %v3988 = vor.u32 %v3985, %v3986
      %v3989 = vrot.slane %v3985, 4
      %v3991 = vshrl.u32 %v3930, 16
      %v3993 = vrot.slane %v3991, 7
      %v3994 = vshll.u32 %v3930, 16
      %v3996 = vor.u32 %v3993, %v3994
      %v3997 = vsel %vm3964, %v3989, %v3996
      %v3998 = vrot.slane %v3993, 4
      %v4000 = vshrl.u32 %v3931, 16
      %v4002 = vrot.slane %v4000, 7
      %v4003 = vshll.u32 %v3931, 16
      %v4005 = vor.u32 %v4002, %v4003
      %v4006 = vrot.slane %v4002, 4
      %v4008 = vshrl.u32 %v3932, 16
      %v4010 = vrot.slane %v4008, 7
      %v4011 = vshll.u32 %v3932, 16
      %v4013 = vor.u32 %v4010, %v4011
      %v4014 = vsel %vm3964, %v4006, %v4013
      %v4015 = vrot.slane %v4010, 4
      %v4017 = vshrl.u32 %v3933, 16
      %v4019 = vrot.slane %v4017, 7
      %v4020 = vshll.u32 %v3933, 16
      %v4022 = vor.u32 %v4019, %v4020
      %v4023 = vrot.slane %v4019, 4
      %v4025 = vshrl.u32 %v3934, 16
      %v4027 = vrot.slane %v4025, 7
      %v4028 = vshll.u32 %v3934, 16
      %v4030 = vor.u32 %v4027, %v4028
      %v4031 = vsel %vm3964, %v4023, %v4030
      %v4032 = vrot.slane %v4027, 4
      %v4034 = vshrl.u32 %v3935, 16
      %v4036 = vrot.slane %v4034, 7
      %v4037 = vshll.u32 %v3935, 16
      %v4039 = vor.u32 %v4036, %v4037
      %v4040 = vrot.slane %v4036, 4
      %v4042 = vshrl.u32 %v3936, 16
      %v4044 = vrot.slane %v4042, 7
      %v4045 = vshll.u32 %v3936, 16
      %v4047 = vor.u32 %v4044, %v4045
      %v4048 = vsel %vm3964, %v4040, %v4047
      %v4049 = vrot.slane %v4044, 4
      %v4051 = vshrl.u32 %v3937, 16
      %v4053 = vrot.slane %v4051, 7
      %v4054 = vshll.u32 %v3937, 16
      %v4056 = vor.u32 %v4053, %v4054
      %v4057 = vrot.slane %v4053, 4
      %v4059 = vshrl.u32 %v3938, 16
      %v4061 = vrot.slane %v4059, 7
      %v4062 = vshll.u32 %v3938, 16
      %v4064 = vor.u32 %v4061, %v4062
      %v4065 = vsel %vm3964, %v4057, %v4064
      %v4066 = vrot.slane %v4061, 4
      %v4068 = vshrl.u32 %v3939, 16
      %v4070 = vrot.slane %v4068, 7
      %v4071 = vshll.u32 %v3939, 16
      %v4073 = vor.u32 %v4070, %v4071
      %v4074 = vrot.slane %v4070, 4
      %v4076 = vshrl.u32 %v3940, 16
      %v4078 = vrot.slane %v4076, 7
      %v4079 = vshll.u32 %v3940, 16
      %v4081 = vor.u32 %v4078, %v4079
      %v4082 = vsel %vm3964, %v4074, %v4081
      %v4083 = vrot.slane %v4078, 4
      %v4085 = vshrl.u32 %v3941, 16
      %v4087 = vrot.slane %v4085, 7
      %v4088 = vshll.u32 %v3941, 16
      %v4090 = vor.u32 %v4087, %v4088
      %v4091 = vrot.slane %v4087, 4
      %v4093 = vshrl.u32 %v3942, 16
      %v4095 = vrot.slane %v4093, 7
      %v4096 = vshll.u32 %v3942, 16
      %v4098 = vor.u32 %v4095, %v4096
      %v4099 = vsel %vm3964, %v4091, %v4098
      %v4100 = vrot.slane %v4095, 4
      %v4102 = vshrl.u32 %v3943, 16
      %v4104 = vrot.slane %v4102, 7
      %v4105 = vshll.u32 %v3943, 16
      %v4107 = vor.u32 %v4104, %v4105
      %v4108 = vrot.slane %v4104, 4
      %v4110 = vshrl.u32 %v3944, 16
      %v4112 = vrot.slane %v4110, 7
      %v4113 = vshll.u32 %v3944, 16
      %v4115 = vor.u32 %v4112, %v4113
      %v4116 = vsel %vm3964, %v4108, %v4115
      %v4117 = vrot.slane %v4112, 4
      %v4119 = vshrl.u32 %v3945, 16
      %v4121 = vrot.slane %v4119, 7
      %v4122 = vshll.u32 %v3945, 16
      %v4124 = vor.u32 %v4121, %v4122
      %v4125 = vrot.slane %v4121, 4
      %v4127 = vshrl.u32 %v3946, 16
      %v4129 = vrot.slane %v4127, 7
      %v4130 = vshll.u32 %v3946, 16
      %v4132 = vor.u32 %v4129, %v4130
      %v4133 = vsel %vm3964, %v4125, %v4132
      %v4134 = vrot.slane %v4129, 4
      %v4136 = vshrl.u32 %v3947, 16
      %v4138 = vrot.slane %v4136, 7
      %v4139 = vshll.u32 %v3947, 16
      %v4141 = vor.u32 %v4138, %v4139
      %v4142 = vrot.slane %v4138, 4
      %v4144 = vshrl.u32 %v3948, 16
      %v4146 = vrot.slane %v4144, 7
      %v4147 = vshll.u32 %v3948, 16
      %v4149 = vor.u32 %v4146, %v4147
      %v4150 = vsel %vm3964, %v4142, %v4149
      %v4151 = vrot.slane %v4146, 4
      %v4153 = vshrl.u32 %v3949, 16
      %v4155 = vrot.slane %v4153, 7
      %v4156 = vshll.u32 %v3949, 16
      %v4158 = vor.u32 %v4155, %v4156
      %v4159 = vrot.slane %v4155, 4
      %v4161 = vshrl.u32 %v3950, 16
      %v4163 = vrot.slane %v4161, 7
      %v4164 = vshll.u32 %v3950, 16
      %v4166 = vor.u32 %v4163, %v4164
      %v4167 = vsel %vm3964, %v4159, %v4166
      %v4168 = vrot.slane %v4163, 4
      %v4170 = vshrl.u32 %v3951, 16
      %v4172 = vrot.slane %v4170, 7
      %v4173 = vshll.u32 %v3951, 16
      %v4175 = vor.u32 %v4172, %v4173
      %v4176 = vrot.slane %v4172, 4
      %v4178 = vshrl.u32 %v3952, 16
      %v4180 = vrot.slane %v4178, 7
      %v4181 = vshll.u32 %v3952, 16
      %v4183 = vor.u32 %v4180, %v4181
      %v4184 = vsel %vm3964, %v4176, %v4183
      %v4185 = vrot.slane %v4180, 4
      %v4187 = vshrl.u32 %v3953, 16
      %v4189 = vrot.slane %v4187, 7
      %v4190 = vshll.u32 %v3953, 16
      %v4192 = vor.u32 %v4189, %v4190
      %v4193 = vrot.slane %v4189, 4
      %v4195 = vshrl.u32 %v3954, 16
      %v4197 = vrot.slane %v4195, 7
      %v4198 = vshll.u32 %v3954, 16
      %v4200 = vor.u32 %v4197, %v4198
      %v4201 = vsel %vm3964, %v4193, %v4200
      %v4202 = vrot.slane %v4197, 4
      %v4204 = vshrl.u32 %v3955, 16
      %v4206 = vrot.slane %v4204, 7
      %v4207 = vshll.u32 %v3955, 16
      %v4209 = vor.u32 %v4206, %v4207
      %v4210 = vrot.slane %v4206, 4
      %v4212 = vshrl.u32 %v3956, 16
      %v4214 = vrot.slane %v4212, 7
      %v4215 = vshll.u32 %v3956, 16
      %v4217 = vor.u32 %v4214, %v4215
      %v4218 = vsel %vm3964, %v4210, %v4217
      %v4219 = vrot.slane %v4214, 4
      %v4221 = vshrl.u32 %v3957, 16
      %v4223 = vrot.slane %v4221, 7
      %v4224 = vshll.u32 %v3957, 16
      %v4226 = vor.u32 %v4223, %v4224
      %v4227 = vrot.slane %v4223, 4
      %v4229 = vshrl.u32 %v3958, 16
      %v4231 = vrot.slane %v4229, 7
      %v4232 = vshll.u32 %v3958, 16
      %v4234 = vor.u32 %v4231, %v4232
      %v4235 = vsel %vm3964, %v4227, %v4234
      %v4236 = vrot.slane %v4231, 4
      %v4238 = vshrl.u32 %v3959, 16
      %v4240 = vrot.slane %v4238, 7
      %v4241 = vshll.u32 %v3959, 16
      %v4243 = vor.u32 %v4240, %v4241
      %v4244 = vrot.slane %v4240, 4
      %v4246 = vshrl.u32 %v3960, 16
      %v4248 = vrot.slane %v4246, 7
      %v4249 = vshll.u32 %v3960, 16
      %v4251 = vor.u32 %v4248, %v4249
      %v4252 = vsel %vm3964, %v4244, %v4251
      %v4253 = vrot.slane %v4248, 4
      %v4255 = vshrl.u32 %v3961, 16
      %v4257 = vrot.slane %v4255, 7
      %v4258 = vshll.u32 %v3961, 16
      %v4260 = vor.u32 %v4257, %v4258
      %v4261 = vrot.slane %v4257, 4
      %v4263 = vshrl.u32 %v3962, 16
      %v4265 = vrot.slane %v4263, 7
      %v4266 = vshll.u32 %v3962, 16
      %v4268 = vor.u32 %v4265, %v4266
      %v4269 = vsel %vm3964, %v4261, %v4268
      %v4270 = vrot.slane %v4265, 4
      %vm4325 = vcmask 60416
      %vm4326 = vmand %vm4325, %vm3799
      %v4327 = vld [vmem:[#allocation2] sm:$0xf]
      %v4328 = vsel %vm4326, %v3971, %v4327
      %4329 = vst [vmem:[#allocation2] sm:$0xf] %v4328
      %vm4330 = vcmask 60416
      %4331 = vst.msk [vmem:[#allocation2 + $0x4] sm:$0xf] %vm4330, %v3980
      %v4332 = vld [vmem:[#allocation2 + $0x8] sm:$0x1]
      %v4333 = vsel %vm3744, %v3981, %v4332
      %4334 = vst [vmem:[#allocation2 + $0x8] sm:$0x1] %v4333
      %v4335 = vld [vmem:[#allocation2 + $0xc] sm:$0xf]
      %v4336 = vsel %vm4326, %v3988, %v4335
      %4337 = vst [vmem:[#allocation2 + $0xc] sm:$0xf] %v4336
      %4338 = vst.msk [vmem:[#allocation2 + $0x10] sm:$0xf] %vm4330, %v3997
      %v4339 = vld [vmem:[#allocation2 + $0x14] sm:$0x1]
      %v4340 = vsel %vm3744, %v3998, %v4339
      %4341 = vst [vmem:[#allocation2 + $0x14] sm:$0x1] %v4340
      %v4342 = vld [vmem:[#allocation2 + $0x18] sm:$0xf]
      %v4343 = vsel %vm4326, %v4005, %v4342
      %4344 = vst [vmem:[#allocation2 + $0x18] sm:$0xf] %v4343
      %4345 = vst.msk [vmem:[#allocation2 + $0x1c] sm:$0xf] %vm4330, %v4014
      %v4346 = vld [vmem:[#allocation2 + $0x20] sm:$0x1]
      %v4347 = vsel %vm3744, %v4015, %v4346
      %4348 = vst [vmem:[#allocation2 + $0x20] sm:$0x1] %v4347
      %v4349 = vld [vmem:[#allocation2 + $0x24] sm:$0xf]
      %v4350 = vsel %vm4326, %v4022, %v4349
      %4351 = vst [vmem:[#allocation2 + $0x24] sm:$0xf] %v4350
      %4352 = vst.msk [vmem:[#allocation2 + $0x28] sm:$0xf] %vm4330, %v4031
      %v4353 = vld [vmem:[#allocation2 + $0x2c] sm:$0x1]
      %v4354 = vsel %vm3744, %v4032, %v4353
      %4355 = vst [vmem:[#allocation2 + $0x2c] sm:$0x1] %v4354
      %v4356 = vld [vmem:[#allocation2 + $0x30] sm:$0xf]
      %v4357 = vsel %vm4326, %v4039, %v4356
      %4358 = vst [vmem:[#allocation2 + $0x30] sm:$0xf] %v4357
      %4359 = vst.msk [vmem:[#allocation2 + $0x34] sm:$0xf] %vm4330, %v4048
      %v4360 = vld [vmem:[#allocation2 + $0x38] sm:$0x1]
      %v4361 = vsel %vm3744, %v4049, %v4360
      %4362 = vst [vmem:[#allocation2 + $0x38] sm:$0x1] %v4361
      %v4363 = vld [vmem:[#allocation2 + $0x3c] sm:$0xf]
      %v4364 = vsel %vm4326, %v4056, %v4363
      %4365 = vst [vmem:[#allocation2 + $0x3c] sm:$0xf] %v4364
      %4366 = vst.msk [vmem:[#allocation2 + $0x40] sm:$0xf] %vm4330, %v4065
      %v4367 = vld [vmem:[#allocation2 + $0x44] sm:$0x1]
      %v4368 = vsel %vm3744, %v4066, %v4367
      %4369 = vst [vmem:[#allocation2 + $0x44] sm:$0x1] %v4368
      %v4370 = vld [vmem:[#allocation2 + $0x48] sm:$0xf]
      %v4371 = vsel %vm4326, %v4073, %v4370
      %4372 = vst [vmem:[#allocation2 + $0x48] sm:$0xf] %v4371
      %4373 = vst.msk [vmem:[#allocation2 + $0x4c] sm:$0xf] %vm4330, %v4082
      %v4374 = vld [vmem:[#allocation2 + $0x50] sm:$0x1]
      %v4375 = vsel %vm3744, %v4083, %v4374
      %4376 = vst [vmem:[#allocation2 + $0x50] sm:$0x1] %v4375
      %v4377 = vld [vmem:[#allocation2 + $0x54] sm:$0xf]
      %v4378 = vsel %vm4326, %v4090, %v4377
      %4379 = vst [vmem:[#allocation2 + $0x54] sm:$0xf] %v4378
      %4380 = vst.msk [vmem:[#allocation2 + $0x58] sm:$0xf] %vm4330, %v4099
      %v4381 = vld [vmem:[#allocation2 + $0x5c] sm:$0x1]
      %v4382 = vsel %vm3744, %v4100, %v4381
      %4383 = vst [vmem:[#allocation2 + $0x5c] sm:$0x1] %v4382
      %v4384 = vld [vmem:[#allocation2 + $0x60] sm:$0xf]
      %v4385 = vsel %vm4326, %v4107, %v4384
      %4386 = vst [vmem:[#allocation2 + $0x60] sm:$0xf] %v4385
      %4387 = vst.msk [vmem:[#allocation2 + $0x64] sm:$0xf] %vm4330, %v4116
      %v4388 = vld [vmem:[#allocation2 + $0x68] sm:$0x1]
      %v4389 = vsel %vm3744, %v4117, %v4388
      %4390 = vst [vmem:[#allocation2 + $0x68] sm:$0x1] %v4389
      %v4391 = vld [vmem:[#allocation2 + $0x6c] sm:$0xf]
      %v4392 = vsel %vm4326, %v4124, %v4391
      %4393 = vst [vmem:[#allocation2 + $0x6c] sm:$0xf] %v4392
      %4394 = vst.msk [vmem:[#allocation2 + $0x70] sm:$0xf] %vm4330, %v4133
      %v4395 = vld [vmem:[#allocation2 + $0x74] sm:$0x1]
      %v4396 = vsel %vm3744, %v4134, %v4395
      %4397 = vst [vmem:[#allocation2 + $0x74] sm:$0x1] %v4396
      %v4398 = vld [vmem:[#allocation2 + $0x78] sm:$0xf]
      %v4399 = vsel %vm4326, %v4141, %v4398
      %4400 = vst [vmem:[#allocation2 + $0x78] sm:$0xf] %v4399
      %4401 = vst.msk [vmem:[#allocation2 + $0x7c] sm:$0xf] %vm4330, %v4150
      %v4402 = vld [vmem:[#allocation2 + $0x80] sm:$0x1]
      %v4403 = vsel %vm3744, %v4151, %v4402
      %4404 = vst [vmem:[#allocation2 + $0x80] sm:$0x1] %v4403
      %v4405 = vld [vmem:[#allocation2 + $0x84] sm:$0xf]
      %v4406 = vsel %vm4326, %v4158, %v4405
      %4407 = vst [vmem:[#allocation2 + $0x84] sm:$0xf] %v4406
      %4408 = vst.msk [vmem:[#allocation2 + $0x88] sm:$0xf] %vm4330, %v4167
      %v4409 = vld [vmem:[#allocation2 + $0x8c] sm:$0x1]
      %v4410 = vsel %vm3744, %v4168, %v4409
      %4411 = vst [vmem:[#allocation2 + $0x8c] sm:$0x1] %v4410
      %v4412 = vld [vmem:[#allocation2 + $0x90] sm:$0xf]
      %v4413 = vsel %vm4326, %v4175, %v4412
      %4414 = vst [vmem:[#allocation2 + $0x90] sm:$0xf] %v4413
      %4415 = vst.msk [vmem:[#allocation2 + $0x94] sm:$0xf] %vm4330, %v4184
      %v4416 = vld [vmem:[#allocation2 + $0x98] sm:$0x1]
      %v4417 = vsel %vm3744, %v4185, %v4416
      %4418 = vst [vmem:[#allocation2 + $0x98] sm:$0x1] %v4417
      %v4419 = vld [vmem:[#allocation2 + $0x9c] sm:$0xf]
      %v4420 = vsel %vm4326, %v4192, %v4419
      %4421 = vst [vmem:[#allocation2 + $0x9c] sm:$0xf] %v4420
      %4422 = vst.msk [vmem:[#allocation2 + $0xa0] sm:$0xf] %vm4330, %v4201
      %v4423 = vld [vmem:[#allocation2 + $0xa4] sm:$0x1]
      %v4424 = vsel %vm3744, %v4202, %v4423
      %4425 = vst [vmem:[#allocation2 + $0xa4] sm:$0x1] %v4424
      %v4426 = vld [vmem:[#allocation2 + $0xa8] sm:$0xf]
      %v4427 = vsel %vm4326, %v4209, %v4426
      %4428 = vst [vmem:[#allocation2 + $0xa8] sm:$0xf] %v4427
      %4429 = vst.msk [vmem:[#allocation2 + $0xac] sm:$0xf] %vm4330, %v4218
      %v4430 = vld [vmem:[#allocation2 + $0xb0] sm:$0x1]
      %v4431 = vsel %vm3744, %v4219, %v4430
      %4432 = vst [vmem:[#allocation2 + $0xb0] sm:$0x1] %v4431
      %v4433 = vld [vmem:[#allocation2 + $0xb4] sm:$0xf]
      %v4434 = vsel %vm4326, %v4226, %v4433
      %4435 = vst [vmem:[#allocation2 + $0xb4] sm:$0xf] %v4434
      %4436 = vst.msk [vmem:[#allocation2 + $0xb8] sm:$0xf] %vm4330, %v4235
      %v4437 = vld [vmem:[#allocation2 + $0xbc] sm:$0x1]
      %v4438 = vsel %vm3744, %v4236, %v4437
      %4439 = vst [vmem:[#allocation2 + $0xbc] sm:$0x1] %v4438
      %v4440 = vld [vmem:[#allocation2 + $0xc0] sm:$0xf]
      %v4441 = vsel %vm4326, %v4243, %v4440
      %4442 = vst [vmem:[#allocation2 + $0xc0] sm:$0xf] %v4441
      %4443 = vst.msk [vmem:[#allocation2 + $0xc4] sm:$0xf] %vm4330, %v4252
      %v4444 = vld [vmem:[#allocation2 + $0xc8] sm:$0x1]
      %v4445 = vsel %vm3744, %v4253, %v4444
      %4446 = vst [vmem:[#allocation2 + $0xc8] sm:$0x1] %v4445
      %v4447 = vld [vmem:[#allocation2 + $0xcc] sm:$0xf]
      %v4448 = vsel %vm4326, %v4260, %v4447
      %4449 = vst [vmem:[#allocation2 + $0xcc] sm:$0xf] %v4448
      %4450 = vst.msk [vmem:[#allocation2 + $0xd0] sm:$0xf] %vm4330, %v4269
      %v4451 = vld [vmem:[#allocation2 + $0xd4] sm:$0x1]
      %v4452 = vsel %vm3744, %v4270, %v4451
      %4453 = vst [vmem:[#allocation2 + $0xd4] sm:$0x1] %v4452
      %p4454 = scmp.eq.s32.totalorder %s21, 0
      // Predicated region
      $region41: #{double_conv_forward.1} parent=39 // pred_check
        %p4455 = pneg %p4454
      $region42: #{double_conv_forward.1} parent=39 // pred_check_branch
        %4457 = sbr.rel (%p4455) target = $region44
      $region43: #{double_conv_forward.1} parent=39 // pred_region
        %4458 = vst.msk [vmem:[#allocation2] sm:$0xf] %vm4330, 0
        %4459 = vst.msk [vmem:[#allocation2 + $0x4] sm:$0xf] %vm4330, 0
        %vm4460 = vcmask 57344
        %4461 = vst.msk [vmem:[#allocation2 + $0x8] sm:$0x1] %vm4460, 0
        %s4462 = scalar_lea.vmem [#allocation2], 204
        %4463 = vst.msk [vmem:[%s4462] sm:$0xf] %vm4330, 0
        %4464 = vst.msk [vmem:[%s4462 + $0x4] sm:$0xf] %vm4330, 0
        %4465 = vst.msk [vmem:[%s4462 + $0x8] sm:$0x1] %vm4460, 0
      $region44: #{double_conv_forward.1} parent=39 // pred_fallthru
        _
      %v4466 = vld [vmem:[#allocation2] sm:$0xf]
      %v4467 = vld [vmem:[#allocation2 + $0x4] sm:$0xf]
      %v4468 = vld [vmem:[#allocation2 + $0xc] sm:$0xf]
      %v4469 = vld [vmem:[#allocation2 + $0x10] sm:$0xf]
      %v4470 = vld [vmem:[#allocation2 + $0x18] sm:$0xf]
      %v4471 = vld [vmem:[#allocation2 + $0x1c] sm:$0xf]
      %v4472 = vld [vmem:[#allocation2 + $0x24] sm:$0xf]
      %v4473 = vld [vmem:[#allocation2 + $0x28] sm:$0xf]
      %v4474 = vld [vmem:[#allocation2 + $0x30] sm:$0xf]
      %v4475 = vld [vmem:[#allocation2 + $0x34] sm:$0xf]
      %v4476 = vld [vmem:[#allocation2 + $0x3c] sm:$0xf]
      %v4477 = vld [vmem:[#allocation2 + $0x40] sm:$0xf]
      %v4478 = vld [vmem:[#allocation2 + $0x48] sm:$0xf]
      %v4479 = vld [vmem:[#allocation2 + $0x4c] sm:$0xf]
      %v4480 = vld [vmem:[#allocation2 + $0x54] sm:$0xf]
      %v4481 = vld [vmem:[#allocation2 + $0x58] sm:$0xf]
      %v4482 = vld [vmem:[#allocation2 + $0x60] sm:$0xf]
      %v4483 = vld [vmem:[#allocation2 + $0x64] sm:$0xf]
      %v4484 = vld [vmem:[#allocation2 + $0x6c] sm:$0xf]
      %v4485 = vld [vmem:[#allocation2 + $0x70] sm:$0xf]
      %v4486 = vld [vmem:[#allocation2 + $0x78] sm:$0xf]
      %v4487 = vld [vmem:[#allocation2 + $0x7c] sm:$0xf]
      %v4488 = vld [vmem:[#allocation2 + $0x84] sm:$0xf]
      %v4489 = vld [vmem:[#allocation2 + $0x88] sm:$0xf]
      %v4490 = vld [vmem:[#allocation2 + $0x90] sm:$0xf]
      %v4491 = vld [vmem:[#allocation2 + $0x94] sm:$0xf]
      %v4492 = vld [vmem:[#allocation2 + $0x9c] sm:$0xf]
      %v4493 = vld [vmem:[#allocation2 + $0xa0] sm:$0xf]
      %v4494 = vld [vmem:[#allocation2 + $0xa8] sm:$0xf]
      %v4495 = vld [vmem:[#allocation2 + $0xac] sm:$0xf]
      %v4496 = vld [vmem:[#allocation2 + $0xb4] sm:$0xf]
      %v4497 = vld [vmem:[#allocation2 + $0xb8] sm:$0xf]
      %v4498 = vld [vmem:[%s3] sm:$0xf]
      %v4499 = vld [vmem:[#allocation2 + $0x8] sm:$0x1]
      %v4500 = vld [vmem:[#allocation2 + $0x14] sm:$0x1]
      %v4501 = vld [vmem:[#allocation2 + $0x20] sm:$0x1]
      %v4502 = vld [vmem:[#allocation2 + $0x2c] sm:$0x1]
      %v4503 = vld [vmem:[#allocation2 + $0x38] sm:$0x1]
      %v4504 = vld [vmem:[#allocation2 + $0x44] sm:$0x1]
      %v4505 = vld [vmem:[#allocation2 + $0x50] sm:$0x1]
      %v4506 = vld [vmem:[#allocation2 + $0x5c] sm:$0x1]
      %v4507 = vld [vmem:[#allocation2 + $0x68] sm:$0x1]
      %v4508 = vld [vmem:[#allocation2 + $0x74] sm:$0x1]
      %v4509 = vld [vmem:[#allocation2 + $0x80] sm:$0x1]
      %v4510 = vld [vmem:[#allocation2 + $0x8c] sm:$0x1]
      %v4511 = vld [vmem:[#allocation2 + $0x98] sm:$0x1]
      %v4512 = vld [vmem:[#allocation2 + $0xa4] sm:$0x1]
      %v4513 = vld [vmem:[#allocation2 + $0xb0] sm:$0x1]
      %v4514 = vld [vmem:[#allocation2 + $0xbc] sm:$0x1]
      %v4516 = vshrl.u32 %v4466, 16
      %v4518 = vrot.slane %v4516, 4
      %v4519 = vshll.u32 %v4466, 16
      %v4521 = vrot.slane %v4519, 5
      %v4522 = vor.u32 %v4518, %v4521
      %v4523 = vrot.slane %v4522, 4
      %v4525 = vshll.u32 %v4467, 16
      %v4527 = vrot.slane %v4525, 5
      %v4528 = vsel %vm309, %v4523, %v4527
      %v4529 = vshrl.u32 %v4467, 16
      %v4531 = vrot.slane %v4529, 4
      %v4532 = vor.u32 %v4531, %v4527
      %v4533 = vrot.slane %v4532, 4
      %v4535 = vshll.u32 %v4499, 16
      %v4537 = vrot.slane %v4535, 5
      %v4538 = vsel %vm309, %v4533, %v4537
      %v4540 = vshrl.u32 %v4468, 16
      %v4542 = vrot.slane %v4540, 4
      %v4543 = vshll.u32 %v4468, 16
      %v4545 = vrot.slane %v4543, 5
      %v4546 = vor.u32 %v4542, %v4545
      %v4547 = vrot.slane %v4546, 4
      %v4549 = vshll.u32 %v4469, 16
      %v4551 = vrot.slane %v4549, 5
      %v4552 = vsel %vm309, %v4547, %v4551
      %v4553 = vshrl.u32 %v4469, 16
      %v4555 = vrot.slane %v4553, 4
      %v4556 = vor.u32 %v4555, %v4551
      %v4557 = vrot.slane %v4556, 4
      %v4559 = vshll.u32 %v4500, 16
      %v4561 = vrot.slane %v4559, 5
      %v4562 = vsel %vm309, %v4557, %v4561
      %v4564 = vshrl.u32 %v4470, 16
      %v4566 = vrot.slane %v4564, 4
      %v4567 = vshll.u32 %v4470, 16
      %v4569 = vrot.slane %v4567, 5
      %v4570 = vor.u32 %v4566, %v4569
      %v4571 = vrot.slane %v4570, 4
      %v4573 = vshll.u32 %v4471, 16
      %v4575 = vrot.slane %v4573, 5
      %v4576 = vsel %vm309, %v4571, %v4575
      %v4577 = vshrl.u32 %v4471, 16
      %v4579 = vrot.slane %v4577, 4
      %v4580 = vor.u32 %v4579, %v4575
      %v4581 = vrot.slane %v4580, 4
      %v4583 = vshll.u32 %v4501, 16
      %v4585 = vrot.slane %v4583, 5
      %v4586 = vsel %vm309, %v4581, %v4585
      %v4588 = vshrl.u32 %v4472, 16
      %v4590 = vrot.slane %v4588, 4
      %v4591 = vshll.u32 %v4472, 16
      %v4593 = vrot.slane %v4591, 5
      %v4594 = vor.u32 %v4590, %v4593
      %v4595 = vrot.slane %v4594, 4
      %v4597 = vshll.u32 %v4473, 16
      %v4599 = vrot.slane %v4597, 5
      %v4600 = vsel %vm309, %v4595, %v4599
      %v4601 = vshrl.u32 %v4473, 16
      %v4603 = vrot.slane %v4601, 4
      %v4604 = vor.u32 %v4603, %v4599
      %v4605 = vrot.slane %v4604, 4
      %v4607 = vshll.u32 %v4502, 16
      %v4609 = vrot.slane %v4607, 5
      %v4610 = vsel %vm309, %v4605, %v4609
      %v4612 = vshrl.u32 %v4474, 16
      %v4614 = vrot.slane %v4612, 4
      %v4615 = vshll.u32 %v4474, 16
      %v4617 = vrot.slane %v4615, 5
      %v4618 = vor.u32 %v4614, %v4617
      %v4619 = vrot.slane %v4618, 4
      %v4621 = vshll.u32 %v4475, 16
      %v4623 = vrot.slane %v4621, 5
      %v4624 = vsel %vm309, %v4619, %v4623
      %v4625 = vshrl.u32 %v4475, 16
      %v4627 = vrot.slane %v4625, 4
      %v4628 = vor.u32 %v4627, %v4623
      %v4629 = vrot.slane %v4628, 4
      %v4631 = vshll.u32 %v4503, 16
      %v4633 = vrot.slane %v4631, 5
      %v4634 = vsel %vm309, %v4629, %v4633
      %v4636 = vshrl.u32 %v4476, 16
      %v4638 = vrot.slane %v4636, 4
      %v4639 = vshll.u32 %v4476, 16
      %v4641 = vrot.slane %v4639, 5
      %v4642 = vor.u32 %v4638, %v4641
      %v4643 = vrot.slane %v4642, 4
      %v4645 = vshll.u32 %v4477, 16
      %v4647 = vrot.slane %v4645, 5
      %v4648 = vsel %vm309, %v4643, %v4647
      %v4649 = vshrl.u32 %v4477, 16
      %v4651 = vrot.slane %v4649, 4
      %v4652 = vor.u32 %v4651, %v4647
      %v4653 = vrot.slane %v4652, 4
      %v4655 = vshll.u32 %v4504, 16
      %v4657 = vrot.slane %v4655, 5
      %v4658 = vsel %vm309, %v4653, %v4657
      %v4660 = vshrl.u32 %v4478, 16
      %v4662 = vrot.slane %v4660, 4
      %v4663 = vshll.u32 %v4478, 16
      %v4665 = vrot.slane %v4663, 5
      %v4666 = vor.u32 %v4662, %v4665
      %v4667 = vrot.slane %v4666, 4
      %v4669 = vshll.u32 %v4479, 16
      %v4671 = vrot.slane %v4669, 5
      %v4672 = vsel %vm309, %v4667, %v4671
      %v4673 = vshrl.u32 %v4479, 16
      %v4675 = vrot.slane %v4673, 4
      %v4676 = vor.u32 %v4675, %v4671
      %v4677 = vrot.slane %v4676, 4
      %v4679 = vshll.u32 %v4505, 16
      %v4681 = vrot.slane %v4679, 5
      %v4682 = vsel %vm309, %v4677, %v4681
      %v4684 = vshrl.u32 %v4480, 16
      %v4686 = vrot.slane %v4684, 4
      %v4687 = vshll.u32 %v4480, 16
      %v4689 = vrot.slane %v4687, 5
      %v4690 = vor.u32 %v4686, %v4689
      %v4691 = vrot.slane %v4690, 4
      %v4693 = vshll.u32 %v4481, 16
      %v4695 = vrot.slane %v4693, 5
      %v4696 = vsel %vm309, %v4691, %v4695
      %v4697 = vshrl.u32 %v4481, 16
      %v4699 = vrot.slane %v4697, 4
      %v4700 = vor.u32 %v4699, %v4695
      %v4701 = vrot.slane %v4700, 4
      %v4703 = vshll.u32 %v4506, 16
      %v4705 = vrot.slane %v4703, 5
      %v4706 = vsel %vm309, %v4701, %v4705
      %v4708 = vshrl.u32 %v4482, 16
      %v4710 = vrot.slane %v4708, 4
      %v4711 = vshll.u32 %v4482, 16
      %v4713 = vrot.slane %v4711, 5
      %v4714 = vor.u32 %v4710, %v4713
      %v4715 = vrot.slane %v4714, 4
      %v4717 = vshll.u32 %v4483, 16
      %v4719 = vrot.slane %v4717, 5
      %v4720 = vsel %vm309, %v4715, %v4719
      %v4721 = vshrl.u32 %v4483, 16
      %v4723 = vrot.slane %v4721, 4
      %v4724 = vor.u32 %v4723, %v4719
      %v4725 = vrot.slane %v4724, 4
      %v4727 = vshll.u32 %v4507, 16
      %v4729 = vrot.slane %v4727, 5
      %v4730 = vsel %vm309, %v4725, %v4729
      %v4732 = vshrl.u32 %v4484, 16
      %v4734 = vrot.slane %v4732, 4
      %v4735 = vshll.u32 %v4484, 16
      %v4737 = vrot.slane %v4735, 5
      %v4738 = vor.u32 %v4734, %v4737
      %v4739 = vrot.slane %v4738, 4
      %v4741 = vshll.u32 %v4485, 16
      %v4743 = vrot.slane %v4741, 5
      %v4744 = vsel %vm309, %v4739, %v4743
      %v4745 = vshrl.u32 %v4485, 16
      %v4747 = vrot.slane %v4745, 4
      %v4748 = vor.u32 %v4747, %v4743
      %v4749 = vrot.slane %v4748, 4
      %v4751 = vshll.u32 %v4508, 16
      %v4753 = vrot.slane %v4751, 5
      %v4754 = vsel %vm309, %v4749, %v4753
      %v4756 = vshrl.u32 %v4486, 16
      %v4758 = vrot.slane %v4756, 4
      %v4759 = vshll.u32 %v4486, 16
      %v4761 = vrot.slane %v4759, 5
      %v4762 = vor.u32 %v4758, %v4761
      %v4763 = vrot.slane %v4762, 4
      %v4765 = vshll.u32 %v4487, 16
      %v4767 = vrot.slane %v4765, 5
      %v4768 = vsel %vm309, %v4763, %v4767
      %v4769 = vshrl.u32 %v4487, 16
      %v4771 = vrot.slane %v4769, 4
      %v4772 = vor.u32 %v4771, %v4767
      %v4773 = vrot.slane %v4772, 4
      %v4775 = vshll.u32 %v4509, 16
      %v4777 = vrot.slane %v4775, 5
      %v4778 = vsel %vm309, %v4773, %v4777
      %v4780 = vshrl.u32 %v4488, 16
      %v4782 = vrot.slane %v4780, 4
      %v4783 = vshll.u32 %v4488, 16
      %v4785 = vrot.slane %v4783, 5
      %v4786 = vor.u32 %v4782, %v4785
      %v4787 = vrot.slane %v4786, 4
      %v4789 = vshll.u32 %v4489, 16
      %v4791 = vrot.slane %v4789, 5
      %v4792 = vsel %vm309, %v4787, %v4791
      %v4793 = vshrl.u32 %v4489, 16
      %v4795 = vrot.slane %v4793, 4
      %v4796 = vor.u32 %v4795, %v4791
      %v4797 = vrot.slane %v4796, 4
      %v4799 = vshll.u32 %v4510, 16
      %v4801 = vrot.slane %v4799, 5
      %v4802 = vsel %vm309, %v4797, %v4801
      %v4804 = vshrl.u32 %v4490, 16
      %v4806 = vrot.slane %v4804, 4
      %v4807 = vshll.u32 %v4490, 16
      %v4809 = vrot.slane %v4807, 5
      %v4810 = vor.u32 %v4806, %v4809
      %v4811 = vrot.slane %v4810, 4
      %v4813 = vshll.u32 %v4491, 16
      %v4815 = vrot.slane %v4813, 5
      %v4816 = vsel %vm309, %v4811, %v4815
      %v4817 = vshrl.u32 %v4491, 16
      %v4819 = vrot.slane %v4817, 4
      %v4820 = vor.u32 %v4819, %v4815
      %v4821 = vrot.slane %v4820, 4
      %v4823 = vshll.u32 %v4511, 16
      %v4825 = vrot.slane %v4823, 5
      %v4826 = vsel %vm309, %v4821, %v4825
      %v4828 = vshrl.u32 %v4492, 16
      %v4830 = vrot.slane %v4828, 4
      %v4831 = vshll.u32 %v4492, 16
      %v4833 = vrot.slane %v4831, 5
      %v4834 = vor.u32 %v4830, %v4833
      %v4835 = vrot.slane %v4834, 4
      %v4837 = vshll.u32 %v4493, 16
      %v4839 = vrot.slane %v4837, 5
      %v4840 = vsel %vm309, %v4835, %v4839
      %v4841 = vshrl.u32 %v4493, 16
      %v4843 = vrot.slane %v4841, 4
      %v4844 = vor.u32 %v4843, %v4839
      %v4845 = vrot.slane %v4844, 4
      %v4847 = vshll.u32 %v4512, 16
      %v4849 = vrot.slane %v4847, 5
      %v4850 = vsel %vm309, %v4845, %v4849
      %v4852 = vshrl.u32 %v4494, 16
      %v4854 = vrot.slane %v4852, 4
      %v4855 = vshll.u32 %v4494, 16
      %v4857 = vrot.slane %v4855, 5
      %v4858 = vor.u32 %v4854, %v4857
      %v4859 = vrot.slane %v4858, 4
      %v4861 = vshll.u32 %v4495, 16
      %v4863 = vrot.slane %v4861, 5
      %v4864 = vsel %vm309, %v4859, %v4863
      %v4865 = vshrl.u32 %v4495, 16
      %v4867 = vrot.slane %v4865, 4
      %v4868 = vor.u32 %v4867, %v4863
      %v4869 = vrot.slane %v4868, 4
      %v4871 = vshll.u32 %v4513, 16
      %v4873 = vrot.slane %v4871, 5
      %v4874 = vsel %vm309, %v4869, %v4873
      %v4876 = vshrl.u32 %v4496, 16
      %v4878 = vrot.slane %v4876, 4
      %v4879 = vshll.u32 %v4496, 16
      %v4881 = vrot.slane %v4879, 5
      %v4882 = vor.u32 %v4878, %v4881
      %v4883 = vrot.slane %v4882, 4
      %v4885 = vshll.u32 %v4497, 16
      %v4887 = vrot.slane %v4885, 5
      %v4888 = vsel %vm309, %v4883, %v4887
      %v4889 = vshrl.u32 %v4497, 16
      %v4891 = vrot.slane %v4889, 4
      %v4892 = vor.u32 %v4891, %v4887
      %v4893 = vrot.slane %v4892, 4
      %v4895 = vshll.u32 %v4514, 16
      %v4897 = vrot.slane %v4895, 5
      %v4898 = vsel %vm309, %v4893, %v4897
      %s4899 = scalar_lea.vmem %s3, 4
      %v4900 = vld [vmem:[%s4899] sm:$0xf]
      %v4901 = vunpack.c.l.b16 %v4528
      %v4902 = vunpack.c.l.b16 %v4538
      %v4903 = vunpack.c.l.b16 %v4552
      %v4904 = vunpack.c.l.b16 %v4562
      %v4905 = vunpack.c.l.b16 %v4576
      %v4906 = vunpack.c.l.b16 %v4586
      %v4907 = vunpack.c.l.b16 %v4600
      %v4908 = vunpack.c.l.b16 %v4610
      %v4909 = vunpack.c.l.b16 %v4624
      %v4910 = vunpack.c.l.b16 %v4634
      %v4911 = vunpack.c.l.b16 %v4648
      %v4912 = vunpack.c.l.b16 %v4658
      %v4913 = vunpack.c.l.b16 %v4672
      %v4914 = vunpack.c.l.b16 %v4682
      %v4915 = vunpack.c.l.b16 %v4696
      %v4916 = vunpack.c.l.b16 %v4706
      %v4917 = vunpack.c.l.b16 %v4720
      %v4918 = vunpack.c.l.b16 %v4730
      %v4919 = vunpack.c.l.b16 %v4744
      %v4920 = vunpack.c.l.b16 %v4754
      %v4921 = vunpack.c.l.b16 %v4768
      %v4922 = vunpack.c.l.b16 %v4778
      %v4923 = vunpack.c.l.b16 %v4792
      %v4924 = vunpack.c.l.b16 %v4802
      %v4925 = vunpack.c.l.b16 %v4816
      %v4926 = vunpack.c.l.b16 %v4826
      %v4927 = vunpack.c.l.b16 %v4840
      %v4928 = vunpack.c.l.b16 %v4850
      %v4929 = vunpack.c.l.b16 %v4864
      %v4930 = vunpack.c.l.b16 %v4874
      %v4931 = vunpack.c.l.b16 %v4888
      %v4932 = vunpack.c.l.b16 %v4898
      %v4933 = vpack.c.b16 %v4902, %v4901
      %v4934 = vpack.c.b16 %v4904, %v4903
      %v4935 = vpack.c.b16 %v4906, %v4905
      %v4936 = vpack.c.b16 %v4908, %v4907
      %v4937 = vpack.c.b16 %v4910, %v4909
      %v4938 = vpack.c.b16 %v4912, %v4911
      %v4939 = vpack.c.b16 %v4914, %v4913
      %v4940 = vpack.c.b16 %v4916, %v4915
      %v4941 = vpack.c.b16 %v4918, %v4917
      %v4942 = vpack.c.b16 %v4920, %v4919
      %v4943 = vpack.c.b16 %v4922, %v4921
      %v4944 = vpack.c.b16 %v4924, %v4923
      %v4945 = vpack.c.b16 %v4926, %v4925
      %v4946 = vpack.c.b16 %v4928, %v4927
      %v4947 = vpack.c.b16 %v4930, %v4929
      %v4948 = vpack.c.b16 %v4932, %v4931
      %v4950 = vsel %vm3202, %v4933, 0
      %v4953 = vsel %vm3202, %v4934, 0
      %v4956 = vsel %vm3202, %v4935, 0
      %v4959 = vsel %vm3202, %v4936, 0
      %v4962 = vsel %vm3202, %v4937, 0
      %v4965 = vsel %vm3202, %v4938, 0
      %v4968 = vsel %vm3202, %v4939, 0
      %v4971 = vsel %vm3202, %v4940, 0
      %v4974 = vsel %vm3202, %v4941, 0
      %v4977 = vsel %vm3202, %v4942, 0
      %v4980 = vsel %vm3202, %v4943, 0
      %v4983 = vsel %vm3202, %v4944, 0
      %v4986 = vsel %vm3202, %v4945, 0
      %v4989 = vsel %vm3202, %v4946, 0
      %v4992 = vsel %vm3202, %v4947, 0
      %v4995 = vsel %vm3202, %v4948, 0
      %vm4997 = vcmask 1043456
      %v4999 = vsel %vm4997, %v4900, 0
      %5001 = vmatprep.subr.bf16.mxu0 0
      %5002 = vmatpush1.bf16.msra.mxu0 %v4999
      %5003 = vmatprep.subr.bf16.mxu0 0
      %5004 = vmatpush1.bf16.msra.mxu0 0
      %5005 = vmatprep.subr.bf16.mxu0 0
      %5006 = vmatpush1.bf16.msra.mxu0 0
      %5007 = vmatprep.subr.bf16.mxu0 0
      %5008 = vmatpush1.bf16.msra.mxu0 0
      %5009 = vmatprep.subr.bf16.mxu0 0
      %5010 = vmatpush1.bf16.msra.mxu0 0
      %5011 = vmatprep.subr.bf16.mxu0 0
      %5012 = vmatpush1.bf16.msra.mxu0 0
      %5013 = vmatprep.subr.bf16.mxu0 0
      %5014 = vmatpush1.bf16.msra.mxu0 0
      %5015 = vmatprep.subr.bf16.mxu0 0
      %5016 = vmatpush1.bf16.msra.mxu0 0
      %5017 = vmatprep.subr.bf16.mxu0 0
      %5018 = vmatpush1.bf16.msra.mxu0 0
      %5019 = vmatprep.subr.bf16.mxu0 0
      %5020 = vmatpush1.bf16.msra.mxu0 0
      %5021 = vmatprep.subr.bf16.mxu0 0
      %5022 = vmatpush1.bf16.msra.mxu0 0
      %5023 = vmatprep.subr.bf16.mxu0 0
      %5024 = vmatpush1.bf16.msra.mxu0 0
      %5025 = vmatprep.subr.bf16.mxu0 0
      %5026 = vmatpush1.bf16.msra.mxu0 0
      %5027 = vmatprep.subr.bf16.mxu0 0
      %5028 = vmatpush1.bf16.msra.mxu0 0
      %5029 = vmatprep.subr.bf16.mxu0 0
      %5030 = vmatpush1.bf16.msra.mxu0 0
      %5031 = vmatprep.subr.bf16.mxu0 0
      %5032 = vmatpush1.bf16.msra.mxu0 0
      %5033 = vmatprep.mubr.bf16.mxu0 0
      %5034 = vmatmul.mubr.bf16.gmra.mrb[0].mxu0 %v4950
      %v5035 = vpop.f32.mrb[0].mxu0
      %v5036 = vadd.f32 0.0, %v5035
      %v5037 = vpop.f32.mrb[0].mxu0
      %v5038 = vpop.f32.mrb[0].mxu0
      %v5039 = vadd.f32 0.0, %v5038
      %v5040 = vpop.f32.mrb[0].mxu0
      %5041 = vmatprep.mubr.bf16.mxu0 0
      %5042 = vmatmul.mubr.bf16.gmra.mrb[0].mxu0 %v4953
      %v5043 = vpop.f32.mrb[0].mxu0
      %v5044 = vadd.f32 0.0, %v5043
      %v5045 = vpop.f32.mrb[0].mxu0
      %v5046 = vpop.f32.mrb[0].mxu0
      %v5047 = vadd.f32 0.0, %v5046
      %v5048 = vpop.f32.mrb[0].mxu0
      %5049 = vmatprep.mubr.bf16.mxu0 0
      %5050 = vmatmul.mubr.bf16.gmra.mrb[0].mxu0 %v4956
      %v5051 = vpop.f32.mrb[0].mxu0
      %v5052 = vadd.f32 0.0, %v5051
      %v5053 = vpop.f32.mrb[0].mxu0
      %v5054 = vpop.f32.mrb[0].mxu0
      %v5055 = vadd.f32 0.0, %v5054
      %v5056 = vpop.f32.mrb[0].mxu0
      %5057 = vmatprep.mubr.bf16.mxu0 0
      %5058 = vmatmul.mubr.bf16.gmra.mrb[0].mxu0 %v4959
      %v5059 = vpop.f32.mrb[0].mxu0
      %v5060 = vadd.f32 0.0, %v5059
      %v5061 = vpop.f32.mrb[0].mxu0
      %v5062 = vpop.f32.mrb[0].mxu0
      %v5063 = vadd.f32 0.0, %v5062
      %v5064 = vpop.f32.mrb[0].mxu0
      %5065 = vmatprep.mubr.bf16.mxu0 0
      %5066 = vmatmul.mubr.bf16.gmra.mrb[0].mxu0 %v4962
      %v5067 = vpop.f32.mrb[0].mxu0
      %v5068 = vadd.f32 0.0, %v5067
      %v5069 = vpop.f32.mrb[0].mxu0
      %v5070 = vpop.f32.mrb[0].mxu0
      %v5071 = vadd.f32 0.0, %v5070
      %v5072 = vpop.f32.mrb[0].mxu0
      %5073 = vmatprep.mubr.bf16.mxu0 0
      %5074 = vmatmul.mubr.bf16.gmra.mrb[0].mxu0 %v4965
      %v5075 = vpop.f32.mrb[0].mxu0
      %v5076 = vadd.f32 0.0, %v5075
      %v5077 = vpop.f32.mrb[0].mxu0
      %v5078 = vpop.f32.mrb[0].mxu0
      %v5079 = vadd.f32 0.0, %v5078
      %v5080 = vpop.f32.mrb[0].mxu0
      %5081 = vmatprep.mubr.bf16.mxu0 0
      %5082 = vmatmul.mubr.bf16.gmra.mrb[0].mxu0 %v4968
      %v5083 = vpop.f32.mrb[0].mxu0
      %v5084 = vadd.f32 0.0, %v5083
      %v5085 = vpop.f32.mrb[0].mxu0
      %v5086 = vpop.f32.mrb[0].mxu0
      %v5087 = vadd.f32 0.0, %v5086
      %v5088 = vpop.f32.mrb[0].mxu0
      %5089 = vmatprep.mubr.bf16.mxu0 0
      %5090 = vmatmul.mubr.bf16.gmra.mrb[0].mxu0 %v4971
      %v5091 = vpop.f32.mrb[0].mxu0
      %v5092 = vadd.f32 0.0, %v5091
      %v5093 = vpop.f32.mrb[0].mxu0
      %v5094 = vpop.f32.mrb[0].mxu0
      %v5095 = vadd.f32 0.0, %v5094
      %v5096 = vpop.f32.mrb[0].mxu0
      %5097 = vmatprep.mubr.bf16.mxu0 0
      %5098 = vmatmul.mubr.bf16.gmra.mrb[0].mxu0 %v4974
      %v5099 = vpop.f32.mrb[0].mxu0
      %v5100 = vadd.f32 0.0, %v5099
      %v5101 = vpop.f32.mrb[0].mxu0
      %v5102 = vpop.f32.mrb[0].mxu0
      %v5103 = vadd.f32 0.0, %v5102
      %v5104 = vpop.f32.mrb[0].mxu0
      %5105 = vmatprep.mubr.bf16.mxu0 0
      %5106 = vmatmul.mubr.bf16.gmra.mrb[0].mxu0 %v4977
      %v5107 = vpop.f32.mrb[0].mxu0
      %v5108 = vadd.f32 0.0, %v5107
      %v5109 = vpop.f32.mrb[0].mxu0
      %v5110 = vpop.f32.mrb[0].mxu0
      %v5111 = vadd.f32 0.0, %v5110
      %v5112 = vpop.f32.mrb[0].mxu0
      %5113 = vmatprep.mubr.bf16.mxu0 0
      %5114 = vmatmul.mubr.bf16.gmra.mrb[0].mxu0 %v4980
      %v5115 = vpop.f32.mrb[0].mxu0
      %v5116 = vadd.f32 0.0, %v5115
      %v5117 = vpop.f32.mrb[0].mxu0
      %v5118 = vpop.f32.mrb[0].mxu0
      %v5119 = vadd.f32 0.0, %v5118
      %v5120 = vpop.f32.mrb[0].mxu0
      %5121 = vmatprep.mubr.bf16.mxu0 0
      %5122 = vmatmul.mubr.bf16.gmra.mrb[0].mxu0 %v4983
      %v5123 = vpop.f32.mrb[0].mxu0
      %v5124 = vadd.f32 0.0, %v5123
      %v5125 = vpop.f32.mrb[0].mxu0
      %v5126 = vpop.f32.mrb[0].mxu0
      %v5127 = vadd.f32 0.0, %v5126
      %v5128 = vpop.f32.mrb[0].mxu0
      %5129 = vmatprep.mubr.bf16.mxu0 0
      %5130 = vmatmul.mubr.bf16.gmra.mrb[0].mxu0 %v4986
      %v5131 = vpop.f32.mrb[0].mxu0
      %v5132 = vadd.f32 0.0, %v5131
      %v5133 = vpop.f32.mrb[0].mxu0
      %v5134 = vpop.f32.mrb[0].mxu0
      %v5135 = vadd.f32 0.0, %v5134
      %v5136 = vpop.f32.mrb[0].mxu0
      %5137 = vmatprep.mubr.bf16.mxu0 0
      %5138 = vmatmul.mubr.bf16.gmra.mrb[0].mxu0 %v4989
      %v5139 = vpop.f32.mrb[0].mxu0
      %v5140 = vadd.f32 0.0, %v5139
      %v5141 = vpop.f32.mrb[0].mxu0
      %v5142 = vpop.f32.mrb[0].mxu0
      %v5143 = vadd.f32 0.0, %v5142
      %v5144 = vpop.f32.mrb[0].mxu0
      %5145 = vmatprep.mubr.bf16.mxu0 0
      %5146 = vmatmul.mubr.bf16.gmra.mrb[0].mxu0 %v4992
      %v5147 = vpop.f32.mrb[0].mxu0
      %v5148 = vadd.f32 0.0, %v5147
      %v5149 = vpop.f32.mrb[0].mxu0
      %v5150 = vpop.f32.mrb[0].mxu0
      %v5151 = vadd.f32 0.0, %v5150
      %v5152 = vpop.f32.mrb[0].mxu0
      %5153 = vmatprep.mubr.bf16.mxu0 0
      %5154 = vmatmul.mubr.bf16.gmra.mrb[0].mxu0 %v4995
      %v5155 = vpop.f32.mrb[0].mxu0
      %v5156 = vadd.f32 0.0, %v5155
      %v5157 = vpop.f32.mrb[0].mxu0
      %v5158 = vpop.f32.mrb[0].mxu0
      %v5159 = vadd.f32 0.0, %v5158
      %v5160 = vpop.f32.mrb[0].mxu0
      %5161 = vdwg.mxu0
      %v5194 = vunpack.c.l.b16 %v4466
      %v5195 = vunpack.c.l.b16 %v4467
      %v5196 = vunpack.c.l.b16 %v4468
      %v5197 = vunpack.c.l.b16 %v4469
      %v5198 = vunpack.c.l.b16 %v4470
      %v5199 = vunpack.c.l.b16 %v4471
      %v5200 = vunpack.c.l.b16 %v4472
      %v5201 = vunpack.c.l.b16 %v4473
      %v5202 = vunpack.c.l.b16 %v4474
      %v5203 = vunpack.c.l.b16 %v4475
      %v5204 = vunpack.c.l.b16 %v4476
      %v5205 = vunpack.c.l.b16 %v4477
      %v5206 = vunpack.c.l.b16 %v4478
      %v5207 = vunpack.c.l.b16 %v4479
      %v5208 = vunpack.c.l.b16 %v4480
      %v5209 = vunpack.c.l.b16 %v4481
      %v5210 = vunpack.c.l.b16 %v4482
      %v5211 = vunpack.c.l.b16 %v4483
      %v5212 = vunpack.c.l.b16 %v4484
      %v5213 = vunpack.c.l.b16 %v4485
      %v5214 = vunpack.c.l.b16 %v4486
      %v5215 = vunpack.c.l.b16 %v4487
      %v5216 = vunpack.c.l.b16 %v4488
      %v5217 = vunpack.c.l.b16 %v4489
      %v5218 = vunpack.c.l.b16 %v4490
      %v5219 = vunpack.c.l.b16 %v4491
      %v5220 = vunpack.c.l.b16 %v4492
      %v5221 = vunpack.c.l.b16 %v4493
      %v5222 = vunpack.c.l.b16 %v4494
      %v5223 = vunpack.c.l.b16 %v4495
      %v5224 = vunpack.c.l.b16 %v4496
      %v5225 = vunpack.c.l.b16 %v4497
      %v5226 = vpack.c.b16 %v5195, %v5194
      %v5227 = vpack.c.b16 %v5197, %v5196
      %v5228 = vpack.c.b16 %v5199, %v5198
      %v5229 = vpack.c.b16 %v5201, %v5200
      %v5230 = vpack.c.b16 %v5203, %v5202
      %v5231 = vpack.c.b16 %v5205, %v5204
      %v5232 = vpack.c.b16 %v5207, %v5206
      %v5233 = vpack.c.b16 %v5209, %v5208
      %v5234 = vpack.c.b16 %v5211, %v5210
      %v5235 = vpack.c.b16 %v5213, %v5212
      %v5236 = vpack.c.b16 %v5215, %v5214
      %v5237 = vpack.c.b16 %v5217, %v5216
      %v5238 = vpack.c.b16 %v5219, %v5218
      %v5239 = vpack.c.b16 %v5221, %v5220
      %v5240 = vpack.c.b16 %v5223, %v5222
      %v5241 = vpack.c.b16 %v5225, %v5224
      %v5243 = vsel %vm3202, %v5226, 0
      %v5246 = vsel %vm3202, %v5227, 0
      %v5249 = vsel %vm3202, %v5228, 0
      %v5252 = vsel %vm3202, %v5229, 0
      %v5255 = vsel %vm3202, %v5230, 0
      %v5258 = vsel %vm3202, %v5231, 0
      %v5261 = vsel %vm3202, %v5232, 0
      %v5264 = vsel %vm3202, %v5233, 0
      %v5267 = vsel %vm3202, %v5234, 0
      %v5270 = vsel %vm3202, %v5235, 0
      %v5273 = vsel %vm3202, %v5236, 0
      %v5276 = vsel %vm3202, %v5237, 0
      %v5279 = vsel %vm3202, %v5238, 0
      %v5282 = vsel %vm3202, %v5239, 0
      %v5285 = vsel %vm3202, %v5240, 0
      %v5288 = vsel %vm3202, %v5241, 0
      %v5291 = vsel %vm4997, %v4498, 0
      %5293 = vmatprep.subr.bf16.mxu0 0
      %5294 = vmatpush1.bf16.msra.mxu0 %v5291
      %5295 = vmatprep.subr.bf16.mxu0 0
      %5296 = vmatpush1.bf16.msra.mxu0 0
      %5297 = vmatprep.subr.bf16.mxu0 0
      %5298 = vmatpush1.bf16.msra.mxu0 0
      %5299 = vmatprep.subr.bf16.mxu0 0
      %5300 = vmatpush1.bf16.msra.mxu0 0
      %5301 = vmatprep.subr.bf16.mxu0 0
      %5302 = vmatpush1.bf16.msra.mxu0 0
      %5303 = vmatprep.subr.bf16.mxu0 0
      %5304 = vmatpush1.bf16.msra.mxu0 0
      %5305 = vmatprep.subr.bf16.mxu0 0
      %5306 = vmatpush1.bf16.msra.mxu0 0
      %5307 = vmatprep.subr.bf16.mxu0 0
      %5308 = vmatpush1.bf16.msra.mxu0 0
      %5309 = vmatprep.subr.bf16.mxu0 0
      %5310 = vmatpush1.bf16.msra.mxu0 0
      %5311 = vmatprep.subr.bf16.mxu0 0
      %5312 = vmatpush1.bf16.msra.mxu0 0
      %5313 = vmatprep.subr.bf16.mxu0 0
      %5314 = vmatpush1.bf16.msra.mxu0 0
      %5315 = vmatprep.subr.bf16.mxu0 0
      %5316 = vmatpush1.bf16.msra.mxu0 0
      %5317 = vmatprep.subr.bf16.mxu0 0
      %5318 = vmatpush1.bf16.msra.mxu0 0
      %5319 = vmatprep.subr.bf16.mxu0 0
      %5320 = vmatpush1.bf16.msra.mxu0 0
      %5321 = vmatprep.subr.bf16.mxu0 0
      %5322 = vmatpush1.bf16.msra.mxu0 0
      %5323 = vmatprep.subr.bf16.mxu0 0
      %5324 = vmatpush1.bf16.msra.mxu0 0
      %5325 = vmatprep.mubr.bf16.mxu0 0
      %5326 = vmatmul.mubr.bf16.gmra.mrb[0].mxu0 %v5243
      %v5327 = vpop.f32.mrb[0].mxu0
      %v5328 = vadd.f32 %v5036, %v5327
      %v5329 = vpop.f32.mrb[0].mxu0
      %v5330 = vpop.f32.mrb[0].mxu0
      %v5331 = vadd.f32 %v5039, %v5330
      %v5332 = vpop.f32.mrb[0].mxu0
      %5333 = vmatprep.mubr.bf16.mxu0 0
      %5334 = vmatmul.mubr.bf16.gmra.mrb[0].mxu0 %v5246
      %v5335 = vpop.f32.mrb[0].mxu0
      %v5336 = vadd.f32 %v5044, %v5335
      %v5337 = vpop.f32.mrb[0].mxu0
      %v5338 = vpop.f32.mrb[0].mxu0
      %v5339 = vadd.f32 %v5047, %v5338
      %v5340 = vpop.f32.mrb[0].mxu0
      %5341 = vmatprep.mubr.bf16.mxu0 0
      %5342 = vmatmul.mubr.bf16.gmra.mrb[0].mxu0 %v5249
      %v5343 = vpop.f32.mrb[0].mxu0
      %v5344 = vadd.f32 %v5052, %v5343
      %v5345 = vpop.f32.mrb[0].mxu0
      %v5346 = vpop.f32.mrb[0].mxu0
      %v5347 = vadd.f32 %v5055, %v5346
      %v5348 = vpop.f32.mrb[0].mxu0
      %5349 = vmatprep.mubr.bf16.mxu0 0
      %5350 = vmatmul.mubr.bf16.gmra.mrb[0].mxu0 %v5252
      %v5351 = vpop.f32.mrb[0].mxu0
      %v5352 = vadd.f32 %v5060, %v5351
      %v5353 = vpop.f32.mrb[0].mxu0
      %v5354 = vpop.f32.mrb[0].mxu0
      %v5355 = vadd.f32 %v5063, %v5354
      %v5356 = vpop.f32.mrb[0].mxu0
      %5357 = vmatprep.mubr.bf16.mxu0 0
      %5358 = vmatmul.mubr.bf16.gmra.mrb[0].mxu0 %v5255
      %v5359 = vpop.f32.mrb[0].mxu0
      %v5360 = vadd.f32 %v5068, %v5359
      %v5361 = vpop.f32.mrb[0].mxu0
      %v5362 = vpop.f32.mrb[0].mxu0
      %v5363 = vadd.f32 %v5071, %v5362
      %v5364 = vpop.f32.mrb[0].mxu0
      %5365 = vmatprep.mubr.bf16.mxu0 0
      %5366 = vmatmul.mubr.bf16.gmra.mrb[0].mxu0 %v5258
      %v5367 = vpop.f32.mrb[0].mxu0
      %v5368 = vadd.f32 %v5076, %v5367
      %v5369 = vpop.f32.mrb[0].mxu0
      %v5370 = vpop.f32.mrb[0].mxu0
      %v5371 = vadd.f32 %v5079, %v5370
      %v5372 = vpop.f32.mrb[0].mxu0
      %5373 = vmatprep.mubr.bf16.mxu0 0
      %5374 = vmatmul.mubr.bf16.gmra.mrb[0].mxu0 %v5261
      %v5375 = vpop.f32.mrb[0].mxu0
      %v5376 = vadd.f32 %v5084, %v5375
      %v5377 = vpop.f32.mrb[0].mxu0
      %v5378 = vpop.f32.mrb[0].mxu0
      %v5379 = vadd.f32 %v5087, %v5378
      %v5380 = vpop.f32.mrb[0].mxu0
      %5381 = vmatprep.mubr.bf16.mxu0 0
      %5382 = vmatmul.mubr.bf16.gmra.mrb[0].mxu0 %v5264
      %v5383 = vpop.f32.mrb[0].mxu0
      %v5384 = vadd.f32 %v5092, %v5383
      %v5385 = vpop.f32.mrb[0].mxu0
      %v5386 = vpop.f32.mrb[0].mxu0
      %v5387 = vadd.f32 %v5095, %v5386
      %v5388 = vpop.f32.mrb[0].mxu0
      %5389 = vmatprep.mubr.bf16.mxu0 0
      %5390 = vmatmul.mubr.bf16.gmra.mrb[0].mxu0 %v5267
      %v5391 = vpop.f32.mrb[0].mxu0
      %v5392 = vadd.f32 %v5100, %v5391
      %v5393 = vpop.f32.mrb[0].mxu0
      %v5394 = vpop.f32.mrb[0].mxu0
      %v5395 = vadd.f32 %v5103, %v5394
      %v5396 = vpop.f32.mrb[0].mxu0
      %5397 = vmatprep.mubr.bf16.mxu0 0
      %5398 = vmatmul.mubr.bf16.gmra.mrb[0].mxu0 %v5270
      %v5399 = vpop.f32.mrb[0].mxu0
      %v5400 = vadd.f32 %v5108, %v5399
      %v5401 = vpop.f32.mrb[0].mxu0
      %v5402 = vpop.f32.mrb[0].mxu0
      %v5403 = vadd.f32 %v5111, %v5402
      %v5404 = vpop.f32.mrb[0].mxu0
      %5405 = vmatprep.mubr.bf16.mxu0 0
      %5406 = vmatmul.mubr.bf16.gmra.mrb[0].mxu0 %v5273
      %v5407 = vpop.f32.mrb[0].mxu0
      %v5408 = vadd.f32 %v5116, %v5407
      %v5409 = vpop.f32.mrb[0].mxu0
      %v5410 = vpop.f32.mrb[0].mxu0
      %v5411 = vadd.f32 %v5119, %v5410
      %v5412 = vpop.f32.mrb[0].mxu0
      %5413 = vmatprep.mubr.bf16.mxu0 0
      %5414 = vmatmul.mubr.bf16.gmra.mrb[0].mxu0 %v5276
      %v5415 = vpop.f32.mrb[0].mxu0
      %v5416 = vadd.f32 %v5124, %v5415
      %v5417 = vpop.f32.mrb[0].mxu0
      %v5418 = vpop.f32.mrb[0].mxu0
      %v5419 = vadd.f32 %v5127, %v5418
      %v5420 = vpop.f32.mrb[0].mxu0
      %5421 = vmatprep.mubr.bf16.mxu0 0
      %5422 = vmatmul.mubr.bf16.gmra.mrb[0].mxu0 %v5279
      %v5423 = vpop.f32.mrb[0].mxu0
      %v5424 = vadd.f32 %v5132, %v5423
      %v5425 = vpop.f32.mrb[0].mxu0
      %v5426 = vpop.f32.mrb[0].mxu0
      %v5427 = vadd.f32 %v5135, %v5426
      %v5428 = vpop.f32.mrb[0].mxu0
      %5429 = vmatprep.mubr.bf16.mxu0 0
      %5430 = vmatmul.mubr.bf16.gmra.mrb[0].mxu0 %v5282
      %v5431 = vpop.f32.mrb[0].mxu0
      %v5432 = vadd.f32 %v5140, %v5431
      %v5433 = vpop.f32.mrb[0].mxu0
      %v5434 = vpop.f32.mrb[0].mxu0
      %v5435 = vadd.f32 %v5143, %v5434
      %v5436 = vpop.f32.mrb[0].mxu0
      %5437 = vmatprep.mubr.bf16.mxu0 0
      %5438 = vmatmul.mubr.bf16.gmra.mrb[0].mxu0 %v5285
      %v5439 = vpop.f32.mrb[0].mxu0
      %v5440 = vadd.f32 %v5148, %v5439
      %v5441 = vpop.f32.mrb[0].mxu0
      %v5442 = vpop.f32.mrb[0].mxu0
      %v5443 = vadd.f32 %v5151, %v5442
      %v5444 = vpop.f32.mrb[0].mxu0
      %5445 = vmatprep.mubr.bf16.mxu0 0
      %5446 = vmatmul.mubr.bf16.gmra.mrb[0].mxu0 %v5288
      %v5447 = vpop.f32.mrb[0].mxu0
      %v5448 = vadd.f32 %v5156, %v5447
      %v5449 = vpop.f32.mrb[0].mxu0
      %v5450 = vpop.f32.mrb[0].mxu0
      %v5451 = vadd.f32 %v5159, %v5450
      %v5452 = vpop.f32.mrb[0].mxu0
      %5453 = vdwg.mxu0
      %v5454 = vld [vmem:[#allocation2] sm:$0xe]
      %v5455 = vld [vmem:[#allocation2 + $0xc] sm:$0xe]
      %v5456 = vld [vmem:[#allocation2 + $0x18] sm:$0xe]
      %v5457 = vld [vmem:[#allocation2 + $0x24] sm:$0xe]
      %v5458 = vld [vmem:[#allocation2 + $0x30] sm:$0xe]
      %v5459 = vld [vmem:[#allocation2 + $0x3c] sm:$0xe]
      %v5460 = vld [vmem:[#allocation2 + $0x48] sm:$0xe]
      %v5461 = vld [vmem:[#allocation2 + $0x54] sm:$0xe]
      %v5462 = vld [vmem:[#allocation2 + $0x60] sm:$0xe]
      %v5463 = vld [vmem:[#allocation2 + $0x6c] sm:$0xe]
      %v5464 = vld [vmem:[#allocation2 + $0x78] sm:$0xe]
      %v5465 = vld [vmem:[#allocation2 + $0x84] sm:$0xe]
      %v5466 = vld [vmem:[#allocation2 + $0x90] sm:$0xe]
      %v5467 = vld [vmem:[#allocation2 + $0x9c] sm:$0xe]
      %v5468 = vld [vmem:[#allocation2 + $0xa8] sm:$0xe]
      %v5469 = vld [vmem:[#allocation2 + $0xb4] sm:$0xe]
      %v5502 = vrot.slane %v5454, 5
      %v5503 = vrot.slane %v5502, 4
      %v5504 = vrot.slane %v4467, 5
      %v5505 = vsel %vm816, %v5503, %v5504
      %v5506 = vrot.slane %v5504, 4
      %v5507 = vrot.slane %v4499, 5
      %v5508 = vsel %vm816, %v5506, %v5507
      %v5509 = vrot.slane %v5455, 5
      %v5510 = vrot.slane %v5509, 4
      %v5511 = vrot.slane %v4469, 5
      %v5512 = vsel %vm816, %v5510, %v5511
      %v5513 = vrot.slane %v5511, 4
      %v5514 = vrot.slane %v4500, 5
      %v5515 = vsel %vm816, %v5513, %v5514
      %v5516 = vrot.slane %v5456, 5
      %v5517 = vrot.slane %v5516, 4
      %v5518 = vrot.slane %v4471, 5
      %v5519 = vsel %vm816, %v5517, %v5518
      %v5520 = vrot.slane %v5518, 4
      %v5521 = vrot.slane %v4501, 5
      %v5522 = vsel %vm816, %v5520, %v5521
      %v5523 = vrot.slane %v5457, 5
      %v5524 = vrot.slane %v5523, 4
      %v5525 = vrot.slane %v4473, 5
      %v5526 = vsel %vm816, %v5524, %v5525
      %v5527 = vrot.slane %v5525, 4
      %v5528 = vrot.slane %v4502, 5
      %v5529 = vsel %vm816, %v5527, %v5528
      %v5530 = vrot.slane %v5458, 5
      %v5531 = vrot.slane %v5530, 4
      %v5532 = vrot.slane %v4475, 5
      %v5533 = vsel %vm816, %v5531, %v5532
      %v5534 = vrot.slane %v5532, 4
      %v5535 = vrot.slane %v4503, 5
      %v5536 = vsel %vm816, %v5534, %v5535
      %v5537 = vrot.slane %v5459, 5
      %v5538 = vrot.slane %v5537, 4
      %v5539 = vrot.slane %v4477, 5
      %v5540 = vsel %vm816, %v5538, %v5539
      %v5541 = vrot.slane %v5539, 4
      %v5542 = vrot.slane %v4504, 5
      %v5543 = vsel %vm816, %v5541, %v5542
      %v5544 = vrot.slane %v5460, 5
      %v5545 = vrot.slane %v5544, 4
      %v5546 = vrot.slane %v4479, 5
      %v5547 = vsel %vm816, %v5545, %v5546
      %v5548 = vrot.slane %v5546, 4
      %v5549 = vrot.slane %v4505, 5
      %v5550 = vsel %vm816, %v5548, %v5549
      %v5551 = vrot.slane %v5461, 5
      %v5552 = vrot.slane %v5551, 4
      %v5553 = vrot.slane %v4481, 5
      %v5554 = vsel %vm816, %v5552, %v5553
      %v5555 = vrot.slane %v5553, 4
      %v5556 = vrot.slane %v4506, 5
      %v5557 = vsel %vm816, %v5555, %v5556
      %v5558 = vrot.slane %v5462, 5
      %v5559 = vrot.slane %v5558, 4
      %v5560 = vrot.slane %v4483, 5
      %v5561 = vsel %vm816, %v5559, %v5560
      %v5562 = vrot.slane %v5560, 4
      %v5563 = vrot.slane %v4507, 5
      %v5564 = vsel %vm816, %v5562, %v5563
      %v5565 = vrot.slane %v5463, 5
      %v5566 = vrot.slane %v5565, 4
      %v5567 = vrot.slane %v4485, 5
      %v5568 = vsel %vm816, %v5566, %v5567
      %v5569 = vrot.slane %v5567, 4
      %v5570 = vrot.slane %v4508, 5
      %v5571 = vsel %vm816, %v5569, %v5570
      %v5572 = vrot.slane %v5464, 5
      %v5573 = vrot.slane %v5572, 4
      %v5574 = vrot.slane %v4487, 5
      %v5575 = vsel %vm816, %v5573, %v5574
      %v5576 = vrot.slane %v5574, 4
      %v5577 = vrot.slane %v4509, 5
      %v5578 = vsel %vm816, %v5576, %v5577
      %v5579 = vrot.slane %v5465, 5
      %v5580 = vrot.slane %v5579, 4
      %v5581 = vrot.slane %v4489, 5
      %v5582 = vsel %vm816, %v5580, %v5581
      %v5583 = vrot.slane %v5581, 4
      %v5584 = vrot.slane %v4510, 5
      %v5585 = vsel %vm816, %v5583, %v5584
      %v5586 = vrot.slane %v5466, 5
      %v5587 = vrot.slane %v5586, 4
      %v5588 = vrot.slane %v4491, 5
      %v5589 = vsel %vm816, %v5587, %v5588
      %v5590 = vrot.slane %v5588, 4
      %v5591 = vrot.slane %v4511, 5
      %v5592 = vsel %vm816, %v5590, %v5591
      %v5593 = vrot.slane %v5467, 5
      %v5594 = vrot.slane %v5593, 4
      %v5595 = vrot.slane %v4493, 5
      %v5596 = vsel %vm816, %v5594, %v5595
      %v5597 = vrot.slane %v5595, 4
      %v5598 = vrot.slane %v4512, 5
      %v5599 = vsel %vm816, %v5597, %v5598
      %v5600 = vrot.slane %v5468, 5
      %v5601 = vrot.slane %v5600, 4
      %v5602 = vrot.slane %v4495, 5
      %v5603 = vsel %vm816, %v5601, %v5602
      %v5604 = vrot.slane %v5602, 4
      %v5605 = vrot.slane %v4513, 5
      %v5606 = vsel %vm816, %v5604, %v5605
      %v5607 = vrot.slane %v5469, 5
      %v5608 = vrot.slane %v5607, 4
      %v5609 = vrot.slane %v4497, 5
      %v5610 = vsel %vm816, %v5608, %v5609
      %v5611 = vrot.slane %v5609, 4
      %v5612 = vrot.slane %v4514, 5
      %v5613 = vsel %vm816, %v5611, %v5612
      %s5614 = scalar_lea.vmem %s3, 8
      %v5615 = vld [vmem:[%s5614] sm:$0xf]
      %v5616 = vunpack.c.l.b16 %v5505
      %v5617 = vunpack.c.l.b16 %v5508
      %v5618 = vunpack.c.l.b16 %v5512
      %v5619 = vunpack.c.l.b16 %v5515
      %v5620 = vunpack.c.l.b16 %v5519
      %v5621 = vunpack.c.l.b16 %v5522
      %v5622 = vunpack.c.l.b16 %v5526
      %v5623 = vunpack.c.l.b16 %v5529
      %v5624 = vunpack.c.l.b16 %v5533
      %v5625 = vunpack.c.l.b16 %v5536
      %v5626 = vunpack.c.l.b16 %v5540
      %v5627 = vunpack.c.l.b16 %v5543
      %v5628 = vunpack.c.l.b16 %v5547
      %v5629 = vunpack.c.l.b16 %v5550
      %v5630 = vunpack.c.l.b16 %v5554
      %v5631 = vunpack.c.l.b16 %v5557
      %v5632 = vunpack.c.l.b16 %v5561
      %v5633 = vunpack.c.l.b16 %v5564
      %v5634 = vunpack.c.l.b16 %v5568
      %v5635 = vunpack.c.l.b16 %v5571
      %v5636 = vunpack.c.l.b16 %v5575
      %v5637 = vunpack.c.l.b16 %v5578
      %v5638 = vunpack.c.l.b16 %v5582
      %v5639 = vunpack.c.l.b16 %v5585
      %v5640 = vunpack.c.l.b16 %v5589
      %v5641 = vunpack.c.l.b16 %v5592
      %v5642 = vunpack.c.l.b16 %v5596
      %v5643 = vunpack.c.l.b16 %v5599
      %v5644 = vunpack.c.l.b16 %v5603
      %v5645 = vunpack.c.l.b16 %v5606
      %v5646 = vunpack.c.l.b16 %v5610
      %v5647 = vunpack.c.l.b16 %v5613
      %v5648 = vpack.c.b16 %v5617, %v5616
      %v5649 = vpack.c.b16 %v5619, %v5618
      %v5650 = vpack.c.b16 %v5621, %v5620
      %v5651 = vpack.c.b16 %v5623, %v5622
      %v5652 = vpack.c.b16 %v5625, %v5624
      %v5653 = vpack.c.b16 %v5627, %v5626
      %v5654 = vpack.c.b16 %v5629, %v5628
      %v5655 = vpack.c.b16 %v5631, %v5630
      %v5656 = vpack.c.b16 %v5633, %v5632
      %v5657 = vpack.c.b16 %v5635, %v5634
      %v5658 = vpack.c.b16 %v5637, %v5636
      %v5659 = vpack.c.b16 %v5639, %v5638
      %v5660 = vpack.c.b16 %v5641, %v5640
      %v5661 = vpack.c.b16 %v5643, %v5642
      %v5662 = vpack.c.b16 %v5645, %v5644
      %v5663 = vpack.c.b16 %v5647, %v5646
      %v5665 = vsel %vm3202, %v5648, 0
      %v5668 = vsel %vm3202, %v5649, 0
      %v5671 = vsel %vm3202, %v5650, 0
      %v5674 = vsel %vm3202, %v5651, 0
      %v5677 = vsel %vm3202, %v5652, 0
      %v5680 = vsel %vm3202, %v5653, 0
      %v5683 = vsel %vm3202, %v5654, 0
      %v5686 = vsel %vm3202, %v5655, 0
      %v5689 = vsel %vm3202, %v5656, 0
      %v5692 = vsel %vm3202, %v5657, 0
      %v5695 = vsel %vm3202, %v5658, 0
      %v5698 = vsel %vm3202, %v5659, 0
      %v5701 = vsel %vm3202, %v5660, 0
      %v5704 = vsel %vm3202, %v5661, 0
      %v5707 = vsel %vm3202, %v5662, 0
      %v5710 = vsel %vm3202, %v5663, 0
      %v5713 = vsel %vm4997, %v5615, 0
      %5715 = vmatprep.subr.bf16.mxu0 0
      %5716 = vmatpush1.bf16.msra.mxu0 %v5713
      %5717 = vmatprep.subr.bf16.mxu0 0
      %5718 = vmatpush1.bf16.msra.mxu0 0
      %5719 = vmatprep.subr.bf16.mxu0 0
      %5720 = vmatpush1.bf16.msra.mxu0 0
      %5721 = vmatprep.subr.bf16.mxu0 0
      %5722 = vmatpush1.bf16.msra.mxu0 0
      %5723 = vmatprep.subr.bf16.mxu0 0
      %5724 = vmatpush1.bf16.msra.mxu0 0
      %5725 = vmatprep.subr.bf16.mxu0 0
      %5726 = vmatpush1.bf16.msra.mxu0 0
      %5727 = vmatprep.subr.bf16.mxu0 0
      %5728 = vmatpush1.bf16.msra.mxu0 0
      %5729 = vmatprep.subr.bf16.mxu0 0
      %5730 = vmatpush1.bf16.msra.mxu0 0
      %5731 = vmatprep.subr.bf16.mxu0 0
      %5732 = vmatpush1.bf16.msra.mxu0 0
      %5733 = vmatprep.subr.bf16.mxu0 0
      %5734 = vmatpush1.bf16.msra.mxu0 0
      %5735 = vmatprep.subr.bf16.mxu0 0
      %5736 = vmatpush1.bf16.msra.mxu0 0
      %5737 = vmatprep.subr.bf16.mxu0 0
      %5738 = vmatpush1.bf16.msra.mxu0 0
      %5739 = vmatprep.subr.bf16.mxu0 0
      %5740 = vmatpush1.bf16.msra.mxu0 0
      %5741 = vmatprep.subr.bf16.mxu0 0
      %5742 = vmatpush1.bf16.msra.mxu0 0
      %5743 = vmatprep.subr.bf16.mxu0 0
      %5744 = vmatpush1.bf16.msra.mxu0 0
      %5745 = vmatprep.subr.bf16.mxu0 0
      %5746 = vmatpush1.bf16.msra.mxu0 0
      %5747 = vmatprep.mubr.bf16.mxu0 0
      %5748 = vmatmul.mubr.bf16.gmra.mrb[0].mxu0 %v5665
      %v5749 = vpop.f32.mrb[0].mxu0
      %v5750 = vadd.f32 0.0, %v5749
      %v5751 = vpop.f32.mrb[0].mxu0
      %v5752 = vpop.f32.mrb[0].mxu0
      %v5753 = vadd.f32 0.0, %v5752
      %v5754 = vpop.f32.mrb[0].mxu0
      %5755 = vmatprep.mubr.bf16.mxu0 0
      %5756 = vmatmul.mubr.bf16.gmra.mrb[0].mxu0 %v5668
      %v5757 = vpop.f32.mrb[0].mxu0
      %v5758 = vadd.f32 0.0, %v5757
      %v5759 = vpop.f32.mrb[0].mxu0
      %v5760 = vpop.f32.mrb[0].mxu0
      %v5761 = vadd.f32 0.0, %v5760
      %v5762 = vpop.f32.mrb[0].mxu0
      %5763 = vmatprep.mubr.bf16.mxu0 0
      %5764 = vmatmul.mubr.bf16.gmra.mrb[0].mxu0 %v5671
      %v5765 = vpop.f32.mrb[0].mxu0
      %v5766 = vadd.f32 0.0, %v5765
      %v5767 = vpop.f32.mrb[0].mxu0
      %v5768 = vpop.f32.mrb[0].mxu0
      %v5769 = vadd.f32 0.0, %v5768
      %v5770 = vpop.f32.mrb[0].mxu0
      %5771 = vmatprep.mubr.bf16.mxu0 0
      %5772 = vmatmul.mubr.bf16.gmra.mrb[0].mxu0 %v5674
      %v5773 = vpop.f32.mrb[0].mxu0
      %v5774 = vadd.f32 0.0, %v5773
      %v5775 = vpop.f32.mrb[0].mxu0
      %v5776 = vpop.f32.mrb[0].mxu0
      %v5777 = vadd.f32 0.0, %v5776
      %v5778 = vpop.f32.mrb[0].mxu0
      %5779 = vmatprep.mubr.bf16.mxu0 0
      %5780 = vmatmul.mubr.bf16.gmra.mrb[0].mxu0 %v5677
      %v5781 = vpop.f32.mrb[0].mxu0
      %v5782 = vadd.f32 0.0, %v5781
      %v5783 = vpop.f32.mrb[0].mxu0
      %v5784 = vpop.f32.mrb[0].mxu0
      %v5785 = vadd.f32 0.0, %v5784
      %v5786 = vpop.f32.mrb[0].mxu0
      %5787 = vmatprep.mubr.bf16.mxu0 0
      %5788 = vmatmul.mubr.bf16.gmra.mrb[0].mxu0 %v5680
      %v5789 = vpop.f32.mrb[0].mxu0
      %v5790 = vadd.f32 0.0, %v5789
      %v5791 = vpop.f32.mrb[0].mxu0
      %v5792 = vpop.f32.mrb[0].mxu0
      %v5793 = vadd.f32 0.0, %v5792
      %v5794 = vpop.f32.mrb[0].mxu0
      %5795 = vmatprep.mubr.bf16.mxu0 0
      %5796 = vmatmul.mubr.bf16.gmra.mrb[0].mxu0 %v5683
      %v5797 = vpop.f32.mrb[0].mxu0
      %v5798 = vadd.f32 0.0, %v5797
      %v5799 = vpop.f32.mrb[0].mxu0
      %v5800 = vpop.f32.mrb[0].mxu0
      %v5801 = vadd.f32 0.0, %v5800
      %v5802 = vpop.f32.mrb[0].mxu0
      %5803 = vmatprep.mubr.bf16.mxu0 0
      %5804 = vmatmul.mubr.bf16.gmra.mrb[0].mxu0 %v5686
      %v5805 = vpop.f32.mrb[0].mxu0
      %v5806 = vadd.f32 0.0, %v5805
      %v5807 = vpop.f32.mrb[0].mxu0
      %v5808 = vpop.f32.mrb[0].mxu0
      %v5809 = vadd.f32 0.0, %v5808
      %v5810 = vpop.f32.mrb[0].mxu0
      %5811 = vmatprep.mubr.bf16.mxu0 0
      %5812 = vmatmul.mubr.bf16.gmra.mrb[0].mxu0 %v5689
      %v5813 = vpop.f32.mrb[0].mxu0
      %v5814 = vadd.f32 0.0, %v5813
      %v5815 = vpop.f32.mrb[0].mxu0
      %v5816 = vpop.f32.mrb[0].mxu0
      %v5817 = vadd.f32 0.0, %v5816
      %v5818 = vpop.f32.mrb[0].mxu0
      %5819 = vmatprep.mubr.bf16.mxu0 0
      %5820 = vmatmul.mubr.bf16.gmra.mrb[0].mxu0 %v5692
      %v5821 = vpop.f32.mrb[0].mxu0
      %v5822 = vadd.f32 0.0, %v5821
      %v5823 = vpop.f32.mrb[0].mxu0
      %v5824 = vpop.f32.mrb[0].mxu0
      %v5825 = vadd.f32 0.0, %v5824
      %v5826 = vpop.f32.mrb[0].mxu0
      %5827 = vmatprep.mubr.bf16.mxu0 0
      %5828 = vmatmul.mubr.bf16.gmra.mrb[0].mxu0 %v5695
      %v5829 = vpop.f32.mrb[0].mxu0
      %v5830 = vadd.f32 0.0, %v5829
      %v5831 = vpop.f32.mrb[0].mxu0
      %v5832 = vpop.f32.mrb[0].mxu0
      %v5833 = vadd.f32 0.0, %v5832
      %v5834 = vpop.f32.mrb[0].mxu0
      %5835 = vmatprep.mubr.bf16.mxu0 0
      %5836 = vmatmul.mubr.bf16.gmra.mrb[0].mxu0 %v5698
      %v5837 = vpop.f32.mrb[0].mxu0
      %v5838 = vadd.f32 0.0, %v5837
      %v5839 = vpop.f32.mrb[0].mxu0
      %v5840 = vpop.f32.mrb[0].mxu0
      %v5841 = vadd.f32 0.0, %v5840
      %v5842 = vpop.f32.mrb[0].mxu0
      %5843 = vmatprep.mubr.bf16.mxu0 0
      %5844 = vmatmul.mubr.bf16.gmra.mrb[0].mxu0 %v5701
      %v5845 = vpop.f32.mrb[0].mxu0
      %v5846 = vadd.f32 0.0, %v5845
      %v5847 = vpop.f32.mrb[0].mxu0
      %v5848 = vpop.f32.mrb[0].mxu0
      %v5849 = vadd.f32 0.0, %v5848
      %v5850 = vpop.f32.mrb[0].mxu0
      %5851 = vmatprep.mubr.bf16.mxu0 0
      %5852 = vmatmul.mubr.bf16.gmra.mrb[0].mxu0 %v5704
      %v5853 = vpop.f32.mrb[0].mxu0
      %v5854 = vadd.f32 0.0, %v5853
      %v5855 = vpop.f32.mrb[0].mxu0
      %v5856 = vpop.f32.mrb[0].mxu0
      %v5857 = vadd.f32 0.0, %v5856
      %v5858 = vpop.f32.mrb[0].mxu0
      %5859 = vmatprep.mubr.bf16.mxu0 0
      %5860 = vmatmul.mubr.bf16.gmra.mrb[0].mxu0 %v5707
      %v5861 = vpop.f32.mrb[0].mxu0
      %v5862 = vadd.f32 0.0, %v5861
      %v5863 = vpop.f32.mrb[0].mxu0
      %v5864 = vpop.f32.mrb[0].mxu0
      %v5865 = vadd.f32 0.0, %v5864
      %v5866 = vpop.f32.mrb[0].mxu0
      %5867 = vmatprep.mubr.bf16.mxu0 0
      %5868 = vmatmul.mubr.bf16.gmra.mrb[0].mxu0 %v5710
      %v5869 = vpop.f32.mrb[0].mxu0
      %v5870 = vadd.f32 0.0, %v5869
      %v5871 = vpop.f32.mrb[0].mxu0
      %v5872 = vpop.f32.mrb[0].mxu0
      %v5873 = vadd.f32 0.0, %v5872
      %v5874 = vpop.f32.mrb[0].mxu0
      %5875 = vdwg.mxu0
      %v5876 = vadd.f32 %v5328, %v5750
      %v5877 = vadd.f32 %v5331, %v5753
      %v5878 = vadd.f32 %v5336, %v5758
      %v5879 = vadd.f32 %v5339, %v5761
      %v5880 = vadd.f32 %v5344, %v5766
      %v5881 = vadd.f32 %v5347, %v5769
      %v5882 = vadd.f32 %v5352, %v5774
      %v5883 = vadd.f32 %v5355, %v5777
      %v5884 = vadd.f32 %v5360, %v5782
      %v5885 = vadd.f32 %v5363, %v5785
      %v5886 = vadd.f32 %v5368, %v5790
      %v5887 = vadd.f32 %v5371, %v5793
      %v5888 = vadd.f32 %v5376, %v5798
      %v5889 = vadd.f32 %v5379, %v5801
      %v5890 = vadd.f32 %v5384, %v5806
      %v5891 = vadd.f32 %v5387, %v5809
      %v5892 = vadd.f32 %v5392, %v5814
      %v5893 = vadd.f32 %v5395, %v5817
      %v5894 = vadd.f32 %v5400, %v5822
      %v5895 = vadd.f32 %v5403, %v5825
      %v5896 = vadd.f32 %v5408, %v5830
      %v5897 = vadd.f32 %v5411, %v5833
      %v5898 = vadd.f32 %v5416, %v5838
      %v5899 = vadd.f32 %v5419, %v5841
      %v5900 = vadd.f32 %v5424, %v5846
      %v5901 = vadd.f32 %v5427, %v5849
      %v5902 = vadd.f32 %v5432, %v5854
      %v5903 = vadd.f32 %v5435, %v5857
      %v5904 = vadd.f32 %v5440, %v5862
      %v5905 = vadd.f32 %v5443, %v5865
      %v5906 = vadd.f32 %v5448, %v5870
      %v5907 = vadd.f32 %v5451, %v5873
      %s5908 = scalar_lea.vmem [#allocation2], 12
      %v5909 = vld [vmem:[%s5908] sm:$0xf]
      %v5910 = vld [vmem:[%s5908 + $0x4] sm:$0xf]
      %v5911 = vld [vmem:[%s5908 + $0xc] sm:$0xf]
      %v5912 = vld [vmem:[%s5908 + $0x10] sm:$0xf]
      %v5913 = vld [vmem:[%s5908 + $0x18] sm:$0xf]
      %v5914 = vld [vmem:[%s5908 + $0x1c] sm:$0xf]
      %v5915 = vld [vmem:[%s5908 + $0x24] sm:$0xf]
      %v5916 = vld [vmem:[%s5908 + $0x28] sm:$0xf]
      %v5917 = vld [vmem:[%s5908 + $0x30] sm:$0xf]
      %v5918 = vld [vmem:[%s5908 + $0x34] sm:$0xf]
      %v5919 = vld [vmem:[%s5908 + $0x3c] sm:$0xf]
      %v5920 = vld [vmem:[%s5908 + $0x40] sm:$0xf]
      %v5921 = vld [vmem:[%s5908 + $0x48] sm:$0xf]
      %v5922 = vld [vmem:[%s5908 + $0x4c] sm:$0xf]
      %v5923 = vld [vmem:[%s5908 + $0x54] sm:$0xf]
      %v5924 = vld [vmem:[%s5908 + $0x58] sm:$0xf]
      %v5925 = vld [vmem:[%s5908 + $0x60] sm:$0xf]
      %v5926 = vld [vmem:[%s5908 + $0x64] sm:$0xf]
      %v5927 = vld [vmem:[%s5908 + $0x6c] sm:$0xf]
      %v5928 = vld [vmem:[%s5908 + $0x70] sm:$0xf]
      %v5929 = vld [vmem:[%s5908 + $0x78] sm:$0xf]
      %v5930 = vld [vmem:[%s5908 + $0x7c] sm:$0xf]
      %v5931 = vld [vmem:[%s5908 + $0x84] sm:$0xf]
      %v5932 = vld [vmem:[%s5908 + $0x88] sm:$0xf]
      %v5933 = vld [vmem:[%s5908 + $0x90] sm:$0xf]
      %v5934 = vld [vmem:[%s5908 + $0x94] sm:$0xf]
      %v5935 = vld [vmem:[%s5908 + $0x9c] sm:$0xf]
      %v5936 = vld [vmem:[%s5908 + $0xa0] sm:$0xf]
      %v5937 = vld [vmem:[%s5908 + $0xa8] sm:$0xf]
      %v5938 = vld [vmem:[%s5908 + $0xac] sm:$0xf]
      %v5939 = vld [vmem:[%s5908 + $0xb4] sm:$0xf]
      %v5940 = vld [vmem:[%s5908 + $0xb8] sm:$0xf]
      %s5941 = scalar_lea.vmem %s3, 12
      %v5942 = vld [vmem:[%s5941] sm:$0xf]
      %v5975 = vunpack.c.l.b16 %v5909
      %v5976 = vunpack.c.l.b16 %v5910
      %v5977 = vunpack.c.l.b16 %v5911
      %v5978 = vunpack.c.l.b16 %v5912
      %v5979 = vunpack.c.l.b16 %v5913
      %v5980 = vunpack.c.l.b16 %v5914
      %v5981 = vunpack.c.l.b16 %v5915
      %v5982 = vunpack.c.l.b16 %v5916
      %v5983 = vunpack.c.l.b16 %v5917
      %v5984 = vunpack.c.l.b16 %v5918
      %v5985 = vunpack.c.l.b16 %v5919
      %v5986 = vunpack.c.l.b16 %v5920
      %v5987 = vunpack.c.l.b16 %v5921
      %v5988 = vunpack.c.l.b16 %v5922
      %v5989 = vunpack.c.l.b16 %v5923
      %v5990 = vunpack.c.l.b16 %v5924
      %v5991 = vunpack.c.l.b16 %v5925
      %v5992 = vunpack.c.l.b16 %v5926
      %v5993 = vunpack.c.l.b16 %v5927
      %v5994 = vunpack.c.l.b16 %v5928
      %v5995 = vunpack.c.l.b16 %v5929
      %v5996 = vunpack.c.l.b16 %v5930
      %v5997 = vunpack.c.l.b16 %v5931
      %v5998 = vunpack.c.l.b16 %v5932
      %v5999 = vunpack.c.l.b16 %v5933
      %v6000 = vunpack.c.l.b16 %v5934
      %v6001 = vunpack.c.l.b16 %v5935
      %v6002 = vunpack.c.l.b16 %v5936
      %v6003 = vunpack.c.l.b16 %v5937
      %v6004 = vunpack.c.l.b16 %v5938
      %v6005 = vunpack.c.l.b16 %v5939
      %v6006 = vunpack.c.l.b16 %v5940
      %v6007 = vpack.c.b16 %v5976, %v5975
      %v6008 = vpack.c.b16 %v5978, %v5977
      %v6009 = vpack.c.b16 %v5980, %v5979
      %v6010 = vpack.c.b16 %v5982, %v5981
      %v6011 = vpack.c.b16 %v5984, %v5983
      %v6012 = vpack.c.b16 %v5986, %v5985
      %v6013 = vpack.c.b16 %v5988, %v5987
      %v6014 = vpack.c.b16 %v5990, %v5989
      %v6015 = vpack.c.b16 %v5992, %v5991
      %v6016 = vpack.c.b16 %v5994, %v5993
      %v6017 = vpack.c.b16 %v5996, %v5995
      %v6018 = vpack.c.b16 %v5998, %v5997
      %v6019 = vpack.c.b16 %v6000, %v5999
      %v6020 = vpack.c.b16 %v6002, %v6001
      %v6021 = vpack.c.b16 %v6004, %v6003
      %v6022 = vpack.c.b16 %v6006, %v6005
      %v6024 = vsel %vm3202, %v6007, 0
      %v6027 = vsel %vm3202, %v6008, 0
      %v6030 = vsel %vm3202, %v6009, 0
      %v6033 = vsel %vm3202, %v6010, 0
      %v6036 = vsel %vm3202, %v6011, 0
      %v6039 = vsel %vm3202, %v6012, 0
      %v6042 = vsel %vm3202, %v6013, 0
      %v6045 = vsel %vm3202, %v6014, 0
      %v6048 = vsel %vm3202, %v6015, 0
      %v6051 = vsel %vm3202, %v6016, 0
      %v6054 = vsel %vm3202, %v6017, 0
      %v6057 = vsel %vm3202, %v6018, 0
      %v6060 = vsel %vm3202, %v6019, 0
      %v6063 = vsel %vm3202, %v6020, 0
      %v6066 = vsel %vm3202, %v6021, 0
      %v6069 = vsel %vm3202, %v6022, 0
      %v6072 = vsel %vm4997, %v5942, 0
      %6074 = vmatprep.subr.bf16.mxu0 0
      %6075 = vmatpush1.bf16.msra.mxu0 %v6072
      %6076 = vmatprep.subr.bf16.mxu0 0
      %6077 = vmatpush1.bf16.msra.mxu0 0
      %6078 = vmatprep.subr.bf16.mxu0 0
      %6079 = vmatpush1.bf16.msra.mxu0 0
      %6080 = vmatprep.subr.bf16.mxu0 0
      %6081 = vmatpush1.bf16.msra.mxu0 0
      %6082 = vmatprep.subr.bf16.mxu0 0
      %6083 = vmatpush1.bf16.msra.mxu0 0
      %6084 = vmatprep.subr.bf16.mxu0 0
      %6085 = vmatpush1.bf16.msra.mxu0 0
      %6086 = vmatprep.subr.bf16.mxu0 0
      %6087 = vmatpush1.bf16.msra.mxu0 0
      %6088 = vmatprep.subr.bf16.mxu0 0
      %6089 = vmatpush1.bf16.msra.mxu0 0
      %6090 = vmatprep.subr.bf16.mxu0 0
      %6091 = vmatpush1.bf16.msra.mxu0 0
      %6092 = vmatprep.subr.bf16.mxu0 0
      %6093 = vmatpush1.bf16.msra.mxu0 0
      %6094 = vmatprep.subr.bf16.mxu0 0
      %6095 = vmatpush1.bf16.msra.mxu0 0
      %6096 = vmatprep.subr.bf16.mxu0 0
      %6097 = vmatpush1.bf16.msra.mxu0 0
      %6098 = vmatprep.subr.bf16.mxu0 0
      %6099 = vmatpush1.bf16.msra.mxu0 0
      %6100 = vmatprep.subr.bf16.mxu0 0
      %6101 = vmatpush1.bf16.msra.mxu0 0
      %6102 = vmatprep.subr.bf16.mxu0 0
      %6103 = vmatpush1.bf16.msra.mxu0 0
      %6104 = vmatprep.subr.bf16.mxu0 0
      %6105 = vmatpush1.bf16.msra.mxu0 0
      %6106 = vmatprep.mubr.bf16.mxu0 0
      %6107 = vmatmul.mubr.bf16.gmra.mrb[0].mxu0 %v6024
      %v6108 = vpop.f32.mrb[0].mxu0
      %v6109 = vadd.f32 0.0, %v6108
      %v6110 = vpop.f32.mrb[0].mxu0
      %v6111 = vpop.f32.mrb[0].mxu0
      %v6112 = vadd.f32 0.0, %v6111
      %v6113 = vpop.f32.mrb[0].mxu0
      %6114 = vmatprep.mubr.bf16.mxu0 0
      %6115 = vmatmul.mubr.bf16.gmra.mrb[0].mxu0 %v6027
      %v6116 = vpop.f32.mrb[0].mxu0
      %v6117 = vadd.f32 0.0, %v6116
      %v6118 = vpop.f32.mrb[0].mxu0
      %v6119 = vpop.f32.mrb[0].mxu0
      %v6120 = vadd.f32 0.0, %v6119
      %v6121 = vpop.f32.mrb[0].mxu0
      %6122 = vmatprep.mubr.bf16.mxu0 0
      %6123 = vmatmul.mubr.bf16.gmra.mrb[0].mxu0 %v6030
      %v6124 = vpop.f32.mrb[0].mxu0
      %v6125 = vadd.f32 0.0, %v6124
      %v6126 = vpop.f32.mrb[0].mxu0
      %v6127 = vpop.f32.mrb[0].mxu0
      %v6128 = vadd.f32 0.0, %v6127
      %v6129 = vpop.f32.mrb[0].mxu0
      %6130 = vmatprep.mubr.bf16.mxu0 0
      %6131 = vmatmul.mubr.bf16.gmra.mrb[0].mxu0 %v6033
      %v6132 = vpop.f32.mrb[0].mxu0
      %v6133 = vadd.f32 0.0, %v6132
      %v6134 = vpop.f32.mrb[0].mxu0
      %v6135 = vpop.f32.mrb[0].mxu0
      %v6136 = vadd.f32 0.0, %v6135
      %v6137 = vpop.f32.mrb[0].mxu0
      %6138 = vmatprep.mubr.bf16.mxu0 0
      %6139 = vmatmul.mubr.bf16.gmra.mrb[0].mxu0 %v6036
      %v6140 = vpop.f32.mrb[0].mxu0
      %v6141 = vadd.f32 0.0, %v6140
      %v6142 = vpop.f32.mrb[0].mxu0
      %v6143 = vpop.f32.mrb[0].mxu0
      %v6144 = vadd.f32 0.0, %v6143
      %v6145 = vpop.f32.mrb[0].mxu0
      %6146 = vmatprep.mubr.bf16.mxu0 0
      %6147 = vmatmul.mubr.bf16.gmra.mrb[0].mxu0 %v6039
      %v6148 = vpop.f32.mrb[0].mxu0
      %v6149 = vadd.f32 0.0, %v6148
      %v6150 = vpop.f32.mrb[0].mxu0
      %v6151 = vpop.f32.mrb[0].mxu0
      %v6152 = vadd.f32 0.0, %v6151
      %v6153 = vpop.f32.mrb[0].mxu0
      %6154 = vmatprep.mubr.bf16.mxu0 0
      %6155 = vmatmul.mubr.bf16.gmra.mrb[0].mxu0 %v6042
      %v6156 = vpop.f32.mrb[0].mxu0
      %v6157 = vadd.f32 0.0, %v6156
      %v6158 = vpop.f32.mrb[0].mxu0
      %v6159 = vpop.f32.mrb[0].mxu0
      %v6160 = vadd.f32 0.0, %v6159
      %v6161 = vpop.f32.mrb[0].mxu0
      %6162 = vmatprep.mubr.bf16.mxu0 0
      %6163 = vmatmul.mubr.bf16.gmra.mrb[0].mxu0 %v6045
      %v6164 = vpop.f32.mrb[0].mxu0
      %v6165 = vadd.f32 0.0, %v6164
      %v6166 = vpop.f32.mrb[0].mxu0
      %v6167 = vpop.f32.mrb[0].mxu0
      %v6168 = vadd.f32 0.0, %v6167
      %v6169 = vpop.f32.mrb[0].mxu0
      %6170 = vmatprep.mubr.bf16.mxu0 0
      %6171 = vmatmul.mubr.bf16.gmra.mrb[0].mxu0 %v6048
      %v6172 = vpop.f32.mrb[0].mxu0
      %v6173 = vadd.f32 0.0, %v6172
      %v6174 = vpop.f32.mrb[0].mxu0
      %v6175 = vpop.f32.mrb[0].mxu0
      %v6176 = vadd.f32 0.0, %v6175
      %v6177 = vpop.f32.mrb[0].mxu0
      %6178 = vmatprep.mubr.bf16.mxu0 0
      %6179 = vmatmul.mubr.bf16.gmra.mrb[0].mxu0 %v6051
      %v6180 = vpop.f32.mrb[0].mxu0
      %v6181 = vadd.f32 0.0, %v6180
      %v6182 = vpop.f32.mrb[0].mxu0
      %v6183 = vpop.f32.mrb[0].mxu0
      %v6184 = vadd.f32 0.0, %v6183
      %v6185 = vpop.f32.mrb[0].mxu0
      %6186 = vmatprep.mubr.bf16.mxu0 0
      %6187 = vmatmul.mubr.bf16.gmra.mrb[0].mxu0 %v6054
      %v6188 = vpop.f32.mrb[0].mxu0
      %v6189 = vadd.f32 0.0, %v6188
      %v6190 = vpop.f32.mrb[0].mxu0
      %v6191 = vpop.f32.mrb[0].mxu0
      %v6192 = vadd.f32 0.0, %v6191
      %v6193 = vpop.f32.mrb[0].mxu0
      %6194 = vmatprep.mubr.bf16.mxu0 0
      %6195 = vmatmul.mubr.bf16.gmra.mrb[0].mxu0 %v6057
      %v6196 = vpop.f32.mrb[0].mxu0
      %v6197 = vadd.f32 0.0, %v6196
      %v6198 = vpop.f32.mrb[0].mxu0
      %v6199 = vpop.f32.mrb[0].mxu0
      %v6200 = vadd.f32 0.0, %v6199
      %v6201 = vpop.f32.mrb[0].mxu0
      %6202 = vmatprep.mubr.bf16.mxu0 0
      %6203 = vmatmul.mubr.bf16.gmra.mrb[0].mxu0 %v6060
      %v6204 = vpop.f32.mrb[0].mxu0
      %v6205 = vadd.f32 0.0, %v6204
      %v6206 = vpop.f32.mrb[0].mxu0
      %v6207 = vpop.f32.mrb[0].mxu0
      %v6208 = vadd.f32 0.0, %v6207
      %v6209 = vpop.f32.mrb[0].mxu0
      %6210 = vmatprep.mubr.bf16.mxu0 0
      %6211 = vmatmul.mubr.bf16.gmra.mrb[0].mxu0 %v6063
      %v6212 = vpop.f32.mrb[0].mxu0
      %v6213 = vadd.f32 0.0, %v6212
      %v6214 = vpop.f32.mrb[0].mxu0
      %v6215 = vpop.f32.mrb[0].mxu0
      %v6216 = vadd.f32 0.0, %v6215
      %v6217 = vpop.f32.mrb[0].mxu0
      %6218 = vmatprep.mubr.bf16.mxu0 0
      %6219 = vmatmul.mubr.bf16.gmra.mrb[0].mxu0 %v6066
      %v6220 = vpop.f32.mrb[0].mxu0
      %v6221 = vadd.f32 0.0, %v6220
      %v6222 = vpop.f32.mrb[0].mxu0
      %v6223 = vpop.f32.mrb[0].mxu0
      %v6224 = vadd.f32 0.0, %v6223
      %v6225 = vpop.f32.mrb[0].mxu0
      %6226 = vmatprep.mubr.bf16.mxu0 0
      %6227 = vmatmul.mubr.bf16.gmra.mrb[0].mxu0 %v6069
      %v6228 = vpop.f32.mrb[0].mxu0
      %v6229 = vadd.f32 0.0, %v6228
      %v6230 = vpop.f32.mrb[0].mxu0
      %v6231 = vpop.f32.mrb[0].mxu0
      %v6232 = vadd.f32 0.0, %v6231
      %v6233 = vpop.f32.mrb[0].mxu0
      %6234 = vdwg.mxu0
      %v6235 = vadd.f32 %v5876, %v6109
      %v6236 = vadd.f32 %v5877, %v6112
      %v6237 = vadd.f32 %v5878, %v6117
      %v6238 = vadd.f32 %v5879, %v6120
      %v6239 = vadd.f32 %v5880, %v6125
      %v6240 = vadd.f32 %v5881, %v6128
      %v6241 = vadd.f32 %v5882, %v6133
      %v6242 = vadd.f32 %v5883, %v6136
      %v6243 = vadd.f32 %v5884, %v6141
      %v6244 = vadd.f32 %v5885, %v6144
      %v6245 = vadd.f32 %v5886, %v6149
      %v6246 = vadd.f32 %v5887, %v6152
      %v6247 = vadd.f32 %v5888, %v6157
      %v6248 = vadd.f32 %v5889, %v6160
      %v6249 = vadd.f32 %v5890, %v6165
      %v6250 = vadd.f32 %v5891, %v6168
      %v6251 = vadd.f32 %v5892, %v6173
      %v6252 = vadd.f32 %v5893, %v6176
      %v6253 = vadd.f32 %v5894, %v6181
      %v6254 = vadd.f32 %v5895, %v6184
      %v6255 = vadd.f32 %v5896, %v6189
      %v6256 = vadd.f32 %v5897, %v6192
      %v6257 = vadd.f32 %v5898, %v6197
      %v6258 = vadd.f32 %v5899, %v6200
      %v6259 = vadd.f32 %v5900, %v6205
      %v6260 = vadd.f32 %v5901, %v6208
      %v6261 = vadd.f32 %v5902, %v6213
      %v6262 = vadd.f32 %v5903, %v6216
      %v6263 = vadd.f32 %v5904, %v6221
      %v6264 = vadd.f32 %v5905, %v6224
      %v6265 = vadd.f32 %v5906, %v6229
      %v6266 = vadd.f32 %v5907, %v6232
      %v6267 = vld [vmem:[%s5908] sm:$0xf]
      %v6268 = vld [vmem:[%s5908 + $0x4] sm:$0xf]
      %v6269 = vld [vmem:[%s5908 + $0x8] sm:$0x1]
      %v6270 = vld [vmem:[%s5908 + $0xc] sm:$0xf]
      %v6271 = vld [vmem:[%s5908 + $0x10] sm:$0xf]
      %v6272 = vld [vmem:[%s5908 + $0x14] sm:$0x1]
      %v6273 = vld [vmem:[%s5908 + $0x18] sm:$0xf]
      %v6274 = vld [vmem:[%s5908 + $0x1c] sm:$0xf]
      %v6275 = vld [vmem:[%s5908 + $0x20] sm:$0x1]
      %v6276 = vld [vmem:[%s5908 + $0x24] sm:$0xf]
      %v6277 = vld [vmem:[%s5908 + $0x28] sm:$0xf]
      %v6278 = vld [vmem:[%s5908 + $0x2c] sm:$0x1]
      %v6279 = vld [vmem:[%s5908 + $0x30] sm:$0xf]
      %v6280 = vld [vmem:[%s5908 + $0x34] sm:$0xf]
      %v6281 = vld [vmem:[%s5908 + $0x38] sm:$0x1]
      %v6282 = vld [vmem:[%s5908 + $0x3c] sm:$0xf]
      %v6283 = vld [vmem:[%s5908 + $0x40] sm:$0xf]
      %v6284 = vld [vmem:[%s5908 + $0x44] sm:$0x1]
      %v6285 = vld [vmem:[%s5908 + $0x48] sm:$0xf]
      %v6286 = vld [vmem:[%s5908 + $0x4c] sm:$0xf]
      %v6287 = vld [vmem:[%s5908 + $0x50] sm:$0x1]
      %v6288 = vld [vmem:[%s5908 + $0x54] sm:$0xf]
      %v6289 = vld [vmem:[%s5908 + $0x58] sm:$0xf]
      %v6290 = vld [vmem:[%s5908 + $0x5c] sm:$0x1]
      %v6291 = vld [vmem:[%s5908 + $0x60] sm:$0xf]
      %v6292 = vld [vmem:[%s5908 + $0x64] sm:$0xf]
      %v6293 = vld [vmem:[%s5908 + $0x68] sm:$0x1]
      %v6294 = vld [vmem:[%s5908 + $0x6c] sm:$0xf]
      %v6295 = vld [vmem:[%s5908 + $0x70] sm:$0xf]
      %v6296 = vld [vmem:[%s5908 + $0x74] sm:$0x1]
      %v6297 = vld [vmem:[%s5908 + $0x78] sm:$0xf]
      %v6298 = vld [vmem:[%s5908 + $0x7c] sm:$0xf]
      %v6299 = vld [vmem:[%s5908 + $0x80] sm:$0x1]
      %v6300 = vld [vmem:[%s5908 + $0x84] sm:$0xf]
      %v6301 = vld [vmem:[%s5908 + $0x88] sm:$0xf]
      %v6302 = vld [vmem:[%s5908 + $0x8c] sm:$0x1]
      %v6303 = vld [vmem:[%s5908 + $0x90] sm:$0xf]
      %v6304 = vld [vmem:[%s5908 + $0x94] sm:$0xf]
      %v6305 = vld [vmem:[%s5908 + $0x98] sm:$0x1]
      %v6306 = vld [vmem:[%s5908 + $0x9c] sm:$0xf]
      %v6307 = vld [vmem:[%s5908 + $0xa0] sm:$0xf]
      %v6308 = vld [vmem:[%s5908 + $0xa4] sm:$0x1]
      %v6309 = vld [vmem:[%s5908 + $0xa8] sm:$0xf]
      %v6310 = vld [vmem:[%s5908 + $0xac] sm:$0xf]
      %v6311 = vld [vmem:[%s5908 + $0xb0] sm:$0x1]
      %v6312 = vld [vmem:[%s5908 + $0xb4] sm:$0xf]
      %v6313 = vld [vmem:[%s5908 + $0xb8] sm:$0xf]
      %v6314 = vld [vmem:[%s5908 + $0xbc] sm:$0x1]
      %v6316 = vshrl.u32 %v6267, 16
      %v6318 = vrot.slane %v6316, 4
      %v6319 = vshll.u32 %v6267, 16
      %v6321 = vrot.slane %v6319, 5
      %v6322 = vor.u32 %v6318, %v6321
      %v6323 = vrot.slane %v6322, 4
      %v6325 = vshll.u32 %v6268, 16
      %v6327 = vrot.slane %v6325, 5
      %v6328 = vsel %vm309, %v6323, %v6327
      %v6329 = vshrl.u32 %v6268, 16
      %v6331 = vrot.slane %v6329, 4
      %v6332 = vor.u32 %v6331, %v6327
      %v6333 = vrot.slane %v6332, 4
      %v6335 = vshll.u32 %v6269, 16
      %v6337 = vrot.slane %v6335, 5
      %v6338 = vsel %vm309, %v6333, %v6337
      %v6340 = vshrl.u32 %v6270, 16
      %v6342 = vrot.slane %v6340, 4
      %v6343 = vshll.u32 %v6270, 16
      %v6345 = vrot.slane %v6343, 5
      %v6346 = vor.u32 %v6342, %v6345
      %v6347 = vrot.slane %v6346, 4
      %v6349 = vshll.u32 %v6271, 16
      %v6351 = vrot.slane %v6349, 5
      %v6352 = vsel %vm309, %v6347, %v6351
      %v6353 = vshrl.u32 %v6271, 16
      %v6355 = vrot.slane %v6353, 4
      %v6356 = vor.u32 %v6355, %v6351
      %v6357 = vrot.slane %v6356, 4
      %v6359 = vshll.u32 %v6272, 16
      %v6361 = vrot.slane %v6359, 5
      %v6362 = vsel %vm309, %v6357, %v6361
      %v6364 = vshrl.u32 %v6273, 16
      %v6366 = vrot.slane %v6364, 4
      %v6367 = vshll.u32 %v6273, 16
      %v6369 = vrot.slane %v6367, 5
      %v6370 = vor.u32 %v6366, %v6369
      %v6371 = vrot.slane %v6370, 4
      %v6373 = vshll.u32 %v6274, 16
      %v6375 = vrot.slane %v6373, 5
      %v6376 = vsel %vm309, %v6371, %v6375
      %v6377 = vshrl.u32 %v6274, 16
      %v6379 = vrot.slane %v6377, 4
      %v6380 = vor.u32 %v6379, %v6375
      %v6381 = vrot.slane %v6380, 4
      %v6383 = vshll.u32 %v6275, 16
      %v6385 = vrot.slane %v6383, 5
      %v6386 = vsel %vm309, %v6381, %v6385
      %v6388 = vshrl.u32 %v6276, 16
      %v6390 = vrot.slane %v6388, 4
      %v6391 = vshll.u32 %v6276, 16
      %v6393 = vrot.slane %v6391, 5
      %v6394 = vor.u32 %v6390, %v6393
      %v6395 = vrot.slane %v6394, 4
      %v6397 = vshll.u32 %v6277, 16
      %v6399 = vrot.slane %v6397, 5
      %v6400 = vsel %vm309, %v6395, %v6399
      %v6401 = vshrl.u32 %v6277, 16
      %v6403 = vrot.slane %v6401, 4
      %v6404 = vor.u32 %v6403, %v6399
      %v6405 = vrot.slane %v6404, 4
      %v6407 = vshll.u32 %v6278, 16
      %v6409 = vrot.slane %v6407, 5
      %v6410 = vsel %vm309, %v6405, %v6409
      %v6412 = vshrl.u32 %v6279, 16
      %v6414 = vrot.slane %v6412, 4
      %v6415 = vshll.u32 %v6279, 16
      %v6417 = vrot.slane %v6415, 5
      %v6418 = vor.u32 %v6414, %v6417
      %v6419 = vrot.slane %v6418, 4
      %v6421 = vshll.u32 %v6280, 16
      %v6423 = vrot.slane %v6421, 5
      %v6424 = vsel %vm309, %v6419, %v6423
      %v6425 = vshrl.u32 %v6280, 16
      %v6427 = vrot.slane %v6425, 4
      %v6428 = vor.u32 %v6427, %v6423
      %v6429 = vrot.slane %v6428, 4
      %v6431 = vshll.u32 %v6281, 16
      %v6433 = vrot.slane %v6431, 5
      %v6434 = vsel %vm309, %v6429, %v6433
      %v6436 = vshrl.u32 %v6282, 16
      %v6438 = vrot.slane %v6436, 4
      %v6439 = vshll.u32 %v6282, 16
      %v6441 = vrot.slane %v6439, 5
      %v6442 = vor.u32 %v6438, %v6441
      %v6443 = vrot.slane %v6442, 4
      %v6445 = vshll.u32 %v6283, 16
      %v6447 = vrot.slane %v6445, 5
      %v6448 = vsel %vm309, %v6443, %v6447
      %v6449 = vshrl.u32 %v6283, 16
      %v6451 = vrot.slane %v6449, 4
      %v6452 = vor.u32 %v6451, %v6447
      %v6453 = vrot.slane %v6452, 4
      %v6455 = vshll.u32 %v6284, 16
      %v6457 = vrot.slane %v6455, 5
      %v6458 = vsel %vm309, %v6453, %v6457
      %v6460 = vshrl.u32 %v6285, 16
      %v6462 = vrot.slane %v6460, 4
      %v6463 = vshll.u32 %v6285, 16
      %v6465 = vrot.slane %v6463, 5
      %v6466 = vor.u32 %v6462, %v6465
      %v6467 = vrot.slane %v6466, 4
      %v6469 = vshll.u32 %v6286, 16
      %v6471 = vrot.slane %v6469, 5
      %v6472 = vsel %vm309, %v6467, %v6471
      %v6473 = vshrl.u32 %v6286, 16
      %v6475 = vrot.slane %v6473, 4
      %v6476 = vor.u32 %v6475, %v6471
      %v6477 = vrot.slane %v6476, 4
      %v6479 = vshll.u32 %v6287, 16
      %v6481 = vrot.slane %v6479, 5
      %v6482 = vsel %vm309, %v6477, %v6481
      %v6484 = vshrl.u32 %v6288, 16
      %v6486 = vrot.slane %v6484, 4
      %v6487 = vshll.u32 %v6288, 16
      %v6489 = vrot.slane %v6487, 5
      %v6490 = vor.u32 %v6486, %v6489
      %v6491 = vrot.slane %v6490, 4
      %v6493 = vshll.u32 %v6289, 16
      %v6495 = vrot.slane %v6493, 5
      %v6496 = vsel %vm309, %v6491, %v6495
      %v6497 = vshrl.u32 %v6289, 16
      %v6499 = vrot.slane %v6497, 4
      %v6500 = vor.u32 %v6499, %v6495
      %v6501 = vrot.slane %v6500, 4
      %v6503 = vshll.u32 %v6290, 16
      %v6505 = vrot.slane %v6503, 5
      %v6506 = vsel %vm309, %v6501, %v6505
      %v6508 = vshrl.u32 %v6291, 16
      %v6510 = vrot.slane %v6508, 4
      %v6511 = vshll.u32 %v6291, 16
      %v6513 = vrot.slane %v6511, 5
      %v6514 = vor.u32 %v6510, %v6513
      %v6515 = vrot.slane %v6514, 4
      %v6517 = vshll.u32 %v6292, 16
      %v6519 = vrot.slane %v6517, 5
      %v6520 = vsel %vm309, %v6515, %v6519
      %v6521 = vshrl.u32 %v6292, 16
      %v6523 = vrot.slane %v6521, 4
      %v6524 = vor.u32 %v6523, %v6519
      %v6525 = vrot.slane %v6524, 4
      %v6527 = vshll.u32 %v6293, 16
      %v6529 = vrot.slane %v6527, 5
      %v6530 = vsel %vm309, %v6525, %v6529
      %v6532 = vshrl.u32 %v6294, 16
      %v6534 = vrot.slane %v6532, 4
      %v6535 = vshll.u32 %v6294, 16
      %v6537 = vrot.slane %v6535, 5
      %v6538 = vor.u32 %v6534, %v6537
      %v6539 = vrot.slane %v6538, 4
      %v6541 = vshll.u32 %v6295, 16
      %v6543 = vrot.slane %v6541, 5
      %v6544 = vsel %vm309, %v6539, %v6543
      %v6545 = vshrl.u32 %v6295, 16
      %v6547 = vrot.slane %v6545, 4
      %v6548 = vor.u32 %v6547, %v6543
      %v6549 = vrot.slane %v6548, 4
      %v6551 = vshll.u32 %v6296, 16
      %v6553 = vrot.slane %v6551, 5
      %v6554 = vsel %vm309, %v6549, %v6553
      %v6556 = vshrl.u32 %v6297, 16
      %v6558 = vrot.slane %v6556, 4
      %v6559 = vshll.u32 %v6297, 16
      %v6561 = vrot.slane %v6559, 5
      %v6562 = vor.u32 %v6558, %v6561
      %v6563 = vrot.slane %v6562, 4
      %v6565 = vshll.u32 %v6298, 16
      %v6567 = vrot.slane %v6565, 5
      %v6568 = vsel %vm309, %v6563, %v6567
      %v6569 = vshrl.u32 %v6298, 16
      %v6571 = vrot.slane %v6569, 4
      %v6572 = vor.u32 %v6571, %v6567
      %v6573 = vrot.slane %v6572, 4
      %v6575 = vshll.u32 %v6299, 16
      %v6577 = vrot.slane %v6575, 5
      %v6578 = vsel %vm309, %v6573, %v6577
      %v6580 = vshrl.u32 %v6300, 16
      %v6582 = vrot.slane %v6580, 4
      %v6583 = vshll.u32 %v6300, 16
      %v6585 = vrot.slane %v6583, 5
      %v6586 = vor.u32 %v6582, %v6585
      %v6587 = vrot.slane %v6586, 4
      %v6589 = vshll.u32 %v6301, 16
      %v6591 = vrot.slane %v6589, 5
      %v6592 = vsel %vm309, %v6587, %v6591
      %v6593 = vshrl.u32 %v6301, 16
      %v6595 = vrot.slane %v6593, 4
      %v6596 = vor.u32 %v6595, %v6591
      %v6597 = vrot.slane %v6596, 4
      %v6599 = vshll.u32 %v6302, 16
      %v6601 = vrot.slane %v6599, 5
      %v6602 = vsel %vm309, %v6597, %v6601
      %v6604 = vshrl.u32 %v6303, 16
      %v6606 = vrot.slane %v6604, 4
      %v6607 = vshll.u32 %v6303, 16
      %v6609 = vrot.slane %v6607, 5
      %v6610 = vor.u32 %v6606, %v6609
      %v6611 = vrot.slane %v6610, 4
      %v6613 = vshll.u32 %v6304, 16
      %v6615 = vrot.slane %v6613, 5
      %v6616 = vsel %vm309, %v6611, %v6615
      %v6617 = vshrl.u32 %v6304, 16
      %v6619 = vrot.slane %v6617, 4
      %v6620 = vor.u32 %v6619, %v6615
      %v6621 = vrot.slane %v6620, 4
      %v6623 = vshll.u32 %v6305, 16
      %v6625 = vrot.slane %v6623, 5
      %v6626 = vsel %vm309, %v6621, %v6625
      %v6628 = vshrl.u32 %v6306, 16
      %v6630 = vrot.slane %v6628, 4
      %v6631 = vshll.u32 %v6306, 16
      %v6633 = vrot.slane %v6631, 5
      %v6634 = vor.u32 %v6630, %v6633
      %v6635 = vrot.slane %v6634, 4
      %v6637 = vshll.u32 %v6307, 16
      %v6639 = vrot.slane %v6637, 5
      %v6640 = vsel %vm309, %v6635, %v6639
      %v6641 = vshrl.u32 %v6307, 16
      %v6643 = vrot.slane %v6641, 4
      %v6644 = vor.u32 %v6643, %v6639
      %v6645 = vrot.slane %v6644, 4
      %v6647 = vshll.u32 %v6308, 16
      %v6649 = vrot.slane %v6647, 5
      %v6650 = vsel %vm309, %v6645, %v6649
      %v6652 = vshrl.u32 %v6309, 16
      %v6654 = vrot.slane %v6652, 4
      %v6655 = vshll.u32 %v6309, 16
      %v6657 = vrot.slane %v6655, 5
      %v6658 = vor.u32 %v6654, %v6657
      %v6659 = vrot.slane %v6658, 4
      %v6661 = vshll.u32 %v6310, 16
      %v6663 = vrot.slane %v6661, 5
      %v6664 = vsel %vm309, %v6659, %v6663
      %v6665 = vshrl.u32 %v6310, 16
      %v6667 = vrot.slane %v6665, 4
      %v6668 = vor.u32 %v6667, %v6663
      %v6669 = vrot.slane %v6668, 4
      %v6671 = vshll.u32 %v6311, 16
      %v6673 = vrot.slane %v6671, 5
      %v6674 = vsel %vm309, %v6669, %v6673
      %v6676 = vshrl.u32 %v6312, 16
      %v6678 = vrot.slane %v6676, 4
      %v6679 = vshll.u32 %v6312, 16
      %v6681 = vrot.slane %v6679, 5
      %v6682 = vor.u32 %v6678, %v6681
      %v6683 = vrot.slane %v6682, 4
      %v6685 = vshll.u32 %v6313, 16
      %v6687 = vrot.slane %v6685, 5
      %v6688 = vsel %vm309, %v6683, %v6687
      %v6689 = vshrl.u32 %v6313, 16
      %v6691 = vrot.slane %v6689, 4
      %v6692 = vor.u32 %v6691, %v6687
      %v6693 = vrot.slane %v6692, 4
      %v6695 = vshll.u32 %v6314, 16
      %v6697 = vrot.slane %v6695, 5
      %v6698 = vsel %vm309, %v6693, %v6697
      %s6699 = scalar_lea.vmem %s3, 16
      %v6700 = vld [vmem:[%s6699] sm:$0xf]
      %v6701 = vunpack.c.l.b16 %v6328
      %v6702 = vunpack.c.l.b16 %v6338
      %v6703 = vunpack.c.l.b16 %v6352
      %v6704 = vunpack.c.l.b16 %v6362
      %v6705 = vunpack.c.l.b16 %v6376
      %v6706 = vunpack.c.l.b16 %v6386
      %v6707 = vunpack.c.l.b16 %v6400
      %v6708 = vunpack.c.l.b16 %v6410
      %v6709 = vunpack.c.l.b16 %v6424
      %v6710 = vunpack.c.l.b16 %v6434
      %v6711 = vunpack.c.l.b16 %v6448
      %v6712 = vunpack.c.l.b16 %v6458
      %v6713 = vunpack.c.l.b16 %v6472
      %v6714 = vunpack.c.l.b16 %v6482
      %v6715 = vunpack.c.l.b16 %v6496
      %v6716 = vunpack.c.l.b16 %v6506
      %v6717 = vunpack.c.l.b16 %v6520
      %v6718 = vunpack.c.l.b16 %v6530
      %v6719 = vunpack.c.l.b16 %v6544
      %v6720 = vunpack.c.l.b16 %v6554
      %v6721 = vunpack.c.l.b16 %v6568
      %v6722 = vunpack.c.l.b16 %v6578
      %v6723 = vunpack.c.l.b16 %v6592
      %v6724 = vunpack.c.l.b16 %v6602
      %v6725 = vunpack.c.l.b16 %v6616
      %v6726 = vunpack.c.l.b16 %v6626
      %v6727 = vunpack.c.l.b16 %v6640
      %v6728 = vunpack.c.l.b16 %v6650
      %v6729 = vunpack.c.l.b16 %v6664
      %v6730 = vunpack.c.l.b16 %v6674
      %v6731 = vunpack.c.l.b16 %v6688
      %v6732 = vunpack.c.l.b16 %v6698
      %v6733 = vpack.c.b16 %v6702, %v6701
      %v6734 = vpack.c.b16 %v6704, %v6703
      %v6735 = vpack.c.b16 %v6706, %v6705
      %v6736 = vpack.c.b16 %v6708, %v6707
      %v6737 = vpack.c.b16 %v6710, %v6709
      %v6738 = vpack.c.b16 %v6712, %v6711
      %v6739 = vpack.c.b16 %v6714, %v6713
      %v6740 = vpack.c.b16 %v6716, %v6715
      %v6741 = vpack.c.b16 %v6718, %v6717
      %v6742 = vpack.c.b16 %v6720, %v6719
      %v6743 = vpack.c.b16 %v6722, %v6721
      %v6744 = vpack.c.b16 %v6724, %v6723
      %v6745 = vpack.c.b16 %v6726, %v6725
      %v6746 = vpack.c.b16 %v6728, %v6727
      %v6747 = vpack.c.b16 %v6730, %v6729
      %v6748 = vpack.c.b16 %v6732, %v6731
      %v6750 = vsel %vm3202, %v6733, 0
      %v6753 = vsel %vm3202, %v6734, 0
      %v6756 = vsel %vm3202, %v6735, 0
      %v6759 = vsel %vm3202, %v6736, 0
      %v6762 = vsel %vm3202, %v6737, 0
      %v6765 = vsel %vm3202, %v6738, 0
      %v6768 = vsel %vm3202, %v6739, 0
      %v6771 = vsel %vm3202, %v6740, 0
      %v6774 = vsel %vm3202, %v6741, 0
      %v6777 = vsel %vm3202, %v6742, 0
      %v6780 = vsel %vm3202, %v6743, 0
      %v6783 = vsel %vm3202, %v6744, 0
      %v6786 = vsel %vm3202, %v6745, 0
      %v6789 = vsel %vm3202, %v6746, 0
      %v6792 = vsel %vm3202, %v6747, 0
      %v6795 = vsel %vm3202, %v6748, 0
      %v6798 = vsel %vm4997, %v6700, 0
      %6800 = vmatprep.subr.bf16.mxu0 0
      %6801 = vmatpush1.bf16.msra.mxu0 %v6798
      %6802 = vmatprep.subr.bf16.mxu0 0
      %6803 = vmatpush1.bf16.msra.mxu0 0
      %6804 = vmatprep.subr.bf16.mxu0 0
      %6805 = vmatpush1.bf16.msra.mxu0 0
      %6806 = vmatprep.subr.bf16.mxu0 0
      %6807 = vmatpush1.bf16.msra.mxu0 0
      %6808 = vmatprep.subr.bf16.mxu0 0
      %6809 = vmatpush1.bf16.msra.mxu0 0
      %6810 = vmatprep.subr.bf16.mxu0 0
      %6811 = vmatpush1.bf16.msra.mxu0 0
      %6812 = vmatprep.subr.bf16.mxu0 0
      %6813 = vmatpush1.bf16.msra.mxu0 0
      %6814 = vmatprep.subr.bf16.mxu0 0
      %6815 = vmatpush1.bf16.msra.mxu0 0
      %6816 = vmatprep.subr.bf16.mxu0 0
      %6817 = vmatpush1.bf16.msra.mxu0 0
      %6818 = vmatprep.subr.bf16.mxu0 0
      %6819 = vmatpush1.bf16.msra.mxu0 0
      %6820 = vmatprep.subr.bf16.mxu0 0
      %6821 = vmatpush1.bf16.msra.mxu0 0
      %6822 = vmatprep.subr.bf16.mxu0 0
      %6823 = vmatpush1.bf16.msra.mxu0 0
      %6824 = vmatprep.subr.bf16.mxu0 0
      %6825 = vmatpush1.bf16.msra.mxu0 0
      %6826 = vmatprep.subr.bf16.mxu0 0
      %6827 = vmatpush1.bf16.msra.mxu0 0
      %6828 = vmatprep.subr.bf16.mxu0 0
      %6829 = vmatpush1.bf16.msra.mxu0 0
      %6830 = vmatprep.subr.bf16.mxu0 0
      %6831 = vmatpush1.bf16.msra.mxu0 0
      %6832 = vmatprep.mubr.bf16.mxu0 0
      %6833 = vmatmul.mubr.bf16.gmra.mrb[0].mxu0 %v6750
      %v6834 = vpop.f32.mrb[0].mxu0
      %v6835 = vadd.f32 0.0, %v6834
      %v6836 = vpop.f32.mrb[0].mxu0
      %v6837 = vpop.f32.mrb[0].mxu0
      %v6838 = vadd.f32 0.0, %v6837
      %v6839 = vpop.f32.mrb[0].mxu0
      %6840 = vmatprep.mubr.bf16.mxu0 0
      %6841 = vmatmul.mubr.bf16.gmra.mrb[0].mxu0 %v6753
      %v6842 = vpop.f32.mrb[0].mxu0
      %v6843 = vadd.f32 0.0, %v6842
      %v6844 = vpop.f32.mrb[0].mxu0
      %v6845 = vpop.f32.mrb[0].mxu0
      %v6846 = vadd.f32 0.0, %v6845
      %v6847 = vpop.f32.mrb[0].mxu0
      %6848 = vmatprep.mubr.bf16.mxu0 0
      %6849 = vmatmul.mubr.bf16.gmra.mrb[0].mxu0 %v6756
      %v6850 = vpop.f32.mrb[0].mxu0
      %v6851 = vadd.f32 0.0, %v6850
      %v6852 = vpop.f32.mrb[0].mxu0
      %v6853 = vpop.f32.mrb[0].mxu0
      %v6854 = vadd.f32 0.0, %v6853
      %v6855 = vpop.f32.mrb[0].mxu0
      %6856 = vmatprep.mubr.bf16.mxu0 0
      %6857 = vmatmul.mubr.bf16.gmra.mrb[0].mxu0 %v6759
      %v6858 = vpop.f32.mrb[0].mxu0
      %v6859 = vadd.f32 0.0, %v6858
      %v6860 = vpop.f32.mrb[0].mxu0
      %v6861 = vpop.f32.mrb[0].mxu0
      %v6862 = vadd.f32 0.0, %v6861
      %v6863 = vpop.f32.mrb[0].mxu0
      %6864 = vmatprep.mubr.bf16.mxu0 0
      %6865 = vmatmul.mubr.bf16.gmra.mrb[0].mxu0 %v6762
      %v6866 = vpop.f32.mrb[0].mxu0
      %v6867 = vadd.f32 0.0, %v6866
      %v6868 = vpop.f32.mrb[0].mxu0
      %v6869 = vpop.f32.mrb[0].mxu0
      %v6870 = vadd.f32 0.0, %v6869
      %v6871 = vpop.f32.mrb[0].mxu0
      %6872 = vmatprep.mubr.bf16.mxu0 0
      %6873 = vmatmul.mubr.bf16.gmra.mrb[0].mxu0 %v6765
      %v6874 = vpop.f32.mrb[0].mxu0
      %v6875 = vadd.f32 0.0, %v6874
      %v6876 = vpop.f32.mrb[0].mxu0
      %v6877 = vpop.f32.mrb[0].mxu0
      %v6878 = vadd.f32 0.0, %v6877
      %v6879 = vpop.f32.mrb[0].mxu0
      %6880 = vmatprep.mubr.bf16.mxu0 0
      %6881 = vmatmul.mubr.bf16.gmra.mrb[0].mxu0 %v6768
      %v6882 = vpop.f32.mrb[0].mxu0
      %v6883 = vadd.f32 0.0, %v6882
      %v6884 = vpop.f32.mrb[0].mxu0
      %v6885 = vpop.f32.mrb[0].mxu0
      %v6886 = vadd.f32 0.0, %v6885
      %v6887 = vpop.f32.mrb[0].mxu0
      %6888 = vmatprep.mubr.bf16.mxu0 0
      %6889 = vmatmul.mubr.bf16.gmra.mrb[0].mxu0 %v6771
      %v6890 = vpop.f32.mrb[0].mxu0
      %v6891 = vadd.f32 0.0, %v6890
      %v6892 = vpop.f32.mrb[0].mxu0
      %v6893 = vpop.f32.mrb[0].mxu0
      %v6894 = vadd.f32 0.0, %v6893
      %v6895 = vpop.f32.mrb[0].mxu0
      %6896 = vmatprep.mubr.bf16.mxu0 0
      %6897 = vmatmul.mubr.bf16.gmra.mrb[0].mxu0 %v6774
      %v6898 = vpop.f32.mrb[0].mxu0
      %v6899 = vadd.f32 0.0, %v6898
      %v6900 = vpop.f32.mrb[0].mxu0
      %v6901 = vpop.f32.mrb[0].mxu0
      %v6902 = vadd.f32 0.0, %v6901
      %v6903 = vpop.f32.mrb[0].mxu0
      %6904 = vmatprep.mubr.bf16.mxu0 0
      %6905 = vmatmul.mubr.bf16.gmra.mrb[0].mxu0 %v6777
      %v6906 = vpop.f32.mrb[0].mxu0
      %v6907 = vadd.f32 0.0, %v6906
      %v6908 = vpop.f32.mrb[0].mxu0
      %v6909 = vpop.f32.mrb[0].mxu0
      %v6910 = vadd.f32 0.0, %v6909
      %v6911 = vpop.f32.mrb[0].mxu0
      %6912 = vmatprep.mubr.bf16.mxu0 0
      %6913 = vmatmul.mubr.bf16.gmra.mrb[0].mxu0 %v6780
      %v6914 = vpop.f32.mrb[0].mxu0
      %v6915 = vadd.f32 0.0, %v6914
      %v6916 = vpop.f32.mrb[0].mxu0
      %v6917 = vpop.f32.mrb[0].mxu0
      %v6918 = vadd.f32 0.0, %v6917
      %v6919 = vpop.f32.mrb[0].mxu0
      %6920 = vmatprep.mubr.bf16.mxu0 0
      %6921 = vmatmul.mubr.bf16.gmra.mrb[0].mxu0 %v6783
      %v6922 = vpop.f32.mrb[0].mxu0
      %v6923 = vadd.f32 0.0, %v6922
      %v6924 = vpop.f32.mrb[0].mxu0
      %v6925 = vpop.f32.mrb[0].mxu0
      %v6926 = vadd.f32 0.0, %v6925
      %v6927 = vpop.f32.mrb[0].mxu0
      %6928 = vmatprep.mubr.bf16.mxu0 0
      %6929 = vmatmul.mubr.bf16.gmra.mrb[0].mxu0 %v6786
      %v6930 = vpop.f32.mrb[0].mxu0
      %v6931 = vadd.f32 0.0, %v6930
      %v6932 = vpop.f32.mrb[0].mxu0
      %v6933 = vpop.f32.mrb[0].mxu0
      %v6934 = vadd.f32 0.0, %v6933
      %v6935 = vpop.f32.mrb[0].mxu0
      %6936 = vmatprep.mubr.bf16.mxu0 0
      %6937 = vmatmul.mubr.bf16.gmra.mrb[0].mxu0 %v6789
      %v6938 = vpop.f32.mrb[0].mxu0
      %v6939 = vadd.f32 0.0, %v6938
      %v6940 = vpop.f32.mrb[0].mxu0
      %v6941 = vpop.f32.mrb[0].mxu0
      %v6942 = vadd.f32 0.0, %v6941
      %v6943 = vpop.f32.mrb[0].mxu0
      %6944 = vmatprep.mubr.bf16.mxu0 0
      %6945 = vmatmul.mubr.bf16.gmra.mrb[0].mxu0 %v6792
      %v6946 = vpop.f32.mrb[0].mxu0
      %v6947 = vadd.f32 0.0, %v6946
      %v6948 = vpop.f32.mrb[0].mxu0
      %v6949 = vpop.f32.mrb[0].mxu0
      %v6950 = vadd.f32 0.0, %v6949
      %v6951 = vpop.f32.mrb[0].mxu0
      %6952 = vmatprep.mubr.bf16.mxu0 0
      %6953 = vmatmul.mubr.bf16.gmra.mrb[0].mxu0 %v6795
      %v6954 = vpop.f32.mrb[0].mxu0
      %v6955 = vadd.f32 0.0, %v6954
      %v6956 = vpop.f32.mrb[0].mxu0
      %v6957 = vpop.f32.mrb[0].mxu0
      %v6958 = vadd.f32 0.0, %v6957
      %v6959 = vpop.f32.mrb[0].mxu0
      %6960 = vdwg.mxu0
      %v6961 = vadd.f32 %v6235, %v6835
      %v6962 = vadd.f32 %v6236, %v6838
      %v6963 = vadd.f32 %v6237, %v6843
      %v6964 = vadd.f32 %v6238, %v6846
      %v6965 = vadd.f32 %v6239, %v6851
      %v6966 = vadd.f32 %v6240, %v6854
      %v6967 = vadd.f32 %v6241, %v6859
      %v6968 = vadd.f32 %v6242, %v6862
      %v6969 = vadd.f32 %v6243, %v6867
      %v6970 = vadd.f32 %v6244, %v6870
      %v6971 = vadd.f32 %v6245, %v6875
      %v6972 = vadd.f32 %v6246, %v6878
      %v6973 = vadd.f32 %v6247, %v6883
      %v6974 = vadd.f32 %v6248, %v6886
      %v6975 = vadd.f32 %v6249, %v6891
      %v6976 = vadd.f32 %v6250, %v6894
      %v6977 = vadd.f32 %v6251, %v6899
      %v6978 = vadd.f32 %v6252, %v6902
      %v6979 = vadd.f32 %v6253, %v6907
      %v6980 = vadd.f32 %v6254, %v6910
      %v6981 = vadd.f32 %v6255, %v6915
      %v6982 = vadd.f32 %v6256, %v6918
      %v6983 = vadd.f32 %v6257, %v6923
      %v6984 = vadd.f32 %v6258, %v6926
      %v6985 = vadd.f32 %v6259, %v6931
      %v6986 = vadd.f32 %v6260, %v6934
      %v6987 = vadd.f32 %v6261, %v6939
      %v6988 = vadd.f32 %v6262, %v6942
      %v6989 = vadd.f32 %v6263, %v6947
      %v6990 = vadd.f32 %v6264, %v6950
      %v6991 = vadd.f32 %v6265, %v6955
      %v6992 = vadd.f32 %v6266, %v6958
      %v6993 = vld [vmem:[%s5908] sm:$0xe]
      %v6994 = vld [vmem:[%s5908 + $0xc] sm:$0xe]
      %v6995 = vld [vmem:[%s5908 + $0x18] sm:$0xe]
      %v6996 = vld [vmem:[%s5908 + $0x24] sm:$0xe]
      %v6997 = vld [vmem:[%s5908 + $0x30] sm:$0xe]
      %v6998 = vld [vmem:[%s5908 + $0x3c] sm:$0xe]
      %v6999 = vld [vmem:[%s5908 + $0x48] sm:$0xe]
      %v7000 = vld [vmem:[%s5908 + $0x54] sm:$0xe]
      %v7001 = vld [vmem:[%s5908 + $0x60] sm:$0xe]
      %v7002 = vld [vmem:[%s5908 + $0x6c] sm:$0xe]
      %v7003 = vld [vmem:[%s5908 + $0x78] sm:$0xe]
      %v7004 = vld [vmem:[%s5908 + $0x84] sm:$0xe]
      %v7005 = vld [vmem:[%s5908 + $0x90] sm:$0xe]
      %v7006 = vld [vmem:[%s5908 + $0x9c] sm:$0xe]
      %v7007 = vld [vmem:[%s5908 + $0xa8] sm:$0xe]
      %v7008 = vld [vmem:[%s5908 + $0xb4] sm:$0xe]
      %v7057 = vrot.slane %v6993, 5
      %v7058 = vrot.slane %v7057, 4
      %v7059 = vrot.slane %v6268, 5
      %v7060 = vsel %vm816, %v7058, %v7059
      %v7061 = vrot.slane %v7059, 4
      %v7062 = vrot.slane %v6269, 5
      %v7063 = vsel %vm816, %v7061, %v7062
      %v7064 = vrot.slane %v6994, 5
      %v7065 = vrot.slane %v7064, 4
      %v7066 = vrot.slane %v6271, 5
      %v7067 = vsel %vm816, %v7065, %v7066
      %v7068 = vrot.slane %v7066, 4
      %v7069 = vrot.slane %v6272, 5
      %v7070 = vsel %vm816, %v7068, %v7069
      %v7071 = vrot.slane %v6995, 5
      %v7072 = vrot.slane %v7071, 4
      %v7073 = vrot.slane %v6274, 5
      %v7074 = vsel %vm816, %v7072, %v7073
      %v7075 = vrot.slane %v7073, 4
      %v7076 = vrot.slane %v6275, 5
      %v7077 = vsel %vm816, %v7075, %v7076
      %v7078 = vrot.slane %v6996, 5
      %v7079 = vrot.slane %v7078, 4
      %v7080 = vrot.slane %v6277, 5
      %v7081 = vsel %vm816, %v7079, %v7080
      %v7082 = vrot.slane %v7080, 4
      %v7083 = vrot.slane %v6278, 5
      %v7084 = vsel %vm816, %v7082, %v7083
      %v7085 = vrot.slane %v6997, 5
      %v7086 = vrot.slane %v7085, 4
      %v7087 = vrot.slane %v6280, 5
      %v7088 = vsel %vm816, %v7086, %v7087
      %v7089 = vrot.slane %v7087, 4
      %v7090 = vrot.slane %v6281, 5
      %v7091 = vsel %vm816, %v7089, %v7090
      %v7092 = vrot.slane %v6998, 5
      %v7093 = vrot.slane %v7092, 4
      %v7094 = vrot.slane %v6283, 5
      %v7095 = vsel %vm816, %v7093, %v7094
      %v7096 = vrot.slane %v7094, 4
      %v7097 = vrot.slane %v6284, 5
      %v7098 = vsel %vm816, %v7096, %v7097
      %v7099 = vrot.slane %v6999, 5
      %v7100 = vrot.slane %v7099, 4
      %v7101 = vrot.slane %v6286, 5
      %v7102 = vsel %vm816, %v7100, %v7101
      %v7103 = vrot.slane %v7101, 4
      %v7104 = vrot.slane %v6287, 5
      %v7105 = vsel %vm816, %v7103, %v7104
      %v7106 = vrot.slane %v7000, 5
      %v7107 = vrot.slane %v7106, 4
      %v7108 = vrot.slane %v6289, 5
      %v7109 = vsel %vm816, %v7107, %v7108
      %v7110 = vrot.slane %v7108, 4
      %v7111 = vrot.slane %v6290, 5
      %v7112 = vsel %vm816, %v7110, %v7111
      %v7113 = vrot.slane %v7001, 5
      %v7114 = vrot.slane %v7113, 4
      %v7115 = vrot.slane %v6292, 5
      %v7116 = vsel %vm816, %v7114, %v7115
      %v7117 = vrot.slane %v7115, 4
      %v7118 = vrot.slane %v6293, 5
      %v7119 = vsel %vm816, %v7117, %v7118
      %v7120 = vrot.slane %v7002, 5
      %v7121 = vrot.slane %v7120, 4
      %v7122 = vrot.slane %v6295, 5
      %v7123 = vsel %vm816, %v7121, %v7122
      %v7124 = vrot.slane %v7122, 4
      %v7125 = vrot.slane %v6296, 5
      %v7126 = vsel %vm816, %v7124, %v7125
      %v7127 = vrot.slane %v7003, 5
      %v7128 = vrot.slane %v7127, 4
      %v7129 = vrot.slane %v6298, 5
      %v7130 = vsel %vm816, %v7128, %v7129
      %v7131 = vrot.slane %v7129, 4
      %v7132 = vrot.slane %v6299, 5
      %v7133 = vsel %vm816, %v7131, %v7132
      %v7134 = vrot.slane %v7004, 5
      %v7135 = vrot.slane %v7134, 4
      %v7136 = vrot.slane %v6301, 5
      %v7137 = vsel %vm816, %v7135, %v7136
      %v7138 = vrot.slane %v7136, 4
      %v7139 = vrot.slane %v6302, 5
      %v7140 = vsel %vm816, %v7138, %v7139
      %v7141 = vrot.slane %v7005, 5
      %v7142 = vrot.slane %v7141, 4
      %v7143 = vrot.slane %v6304, 5
      %v7144 = vsel %vm816, %v7142, %v7143
      %v7145 = vrot.slane %v7143, 4
      %v7146 = vrot.slane %v6305, 5
      %v7147 = vsel %vm816, %v7145, %v7146
      %v7148 = vrot.slane %v7006, 5
      %v7149 = vrot.slane %v7148, 4
      %v7150 = vrot.slane %v6307, 5
      %v7151 = vsel %vm816, %v7149, %v7150
      %v7152 = vrot.slane %v7150, 4
      %v7153 = vrot.slane %v6308, 5
      %v7154 = vsel %vm816, %v7152, %v7153
      %v7155 = vrot.slane %v7007, 5
      %v7156 = vrot.slane %v7155, 4
      %v7157 = vrot.slane %v6310, 5
      %v7158 = vsel %vm816, %v7156, %v7157
      %v7159 = vrot.slane %v7157, 4
      %v7160 = vrot.slane %v6311, 5
      %v7161 = vsel %vm816, %v7159, %v7160
      %v7162 = vrot.slane %v7008, 5
      %v7163 = vrot.slane %v7162, 4
      %v7164 = vrot.slane %v6313, 5
      %v7165 = vsel %vm816, %v7163, %v7164
      %v7166 = vrot.slane %v7164, 4
      %v7167 = vrot.slane %v6314, 5
      %v7168 = vsel %vm816, %v7166, %v7167
      %s7169 = scalar_lea.vmem %s3, 20
      %v7170 = vld [vmem:[%s7169] sm:$0xf]
      %v7171 = vunpack.c.l.b16 %v7060
      %v7172 = vunpack.c.l.b16 %v7063
      %v7173 = vunpack.c.l.b16 %v7067
      %v7174 = vunpack.c.l.b16 %v7070
      %v7175 = vunpack.c.l.b16 %v7074
      %v7176 = vunpack.c.l.b16 %v7077
      %v7177 = vunpack.c.l.b16 %v7081
      %v7178 = vunpack.c.l.b16 %v7084
      %v7179 = vunpack.c.l.b16 %v7088
      %v7180 = vunpack.c.l.b16 %v7091
      %v7181 = vunpack.c.l.b16 %v7095
      %v7182 = vunpack.c.l.b16 %v7098
      %v7183 = vunpack.c.l.b16 %v7102
      %v7184 = vunpack.c.l.b16 %v7105
      %v7185 = vunpack.c.l.b16 %v7109
      %v7186 = vunpack.c.l.b16 %v7112
      %v7187 = vunpack.c.l.b16 %v7116
      %v7188 = vunpack.c.l.b16 %v7119
      %v7189 = vunpack.c.l.b16 %v7123
      %v7190 = vunpack.c.l.b16 %v7126
      %v7191 = vunpack.c.l.b16 %v7130
      %v7192 = vunpack.c.l.b16 %v7133
      %v7193 = vunpack.c.l.b16 %v7137
      %v7194 = vunpack.c.l.b16 %v7140
      %v7195 = vunpack.c.l.b16 %v7144
      %v7196 = vunpack.c.l.b16 %v7147
      %v7197 = vunpack.c.l.b16 %v7151
      %v7198 = vunpack.c.l.b16 %v7154
      %v7199 = vunpack.c.l.b16 %v7158
      %v7200 = vunpack.c.l.b16 %v7161
      %v7201 = vunpack.c.l.b16 %v7165
      %v7202 = vunpack.c.l.b16 %v7168
      %v7203 = vpack.c.b16 %v7172, %v7171
      %v7204 = vpack.c.b16 %v7174, %v7173
      %v7205 = vpack.c.b16 %v7176, %v7175
      %v7206 = vpack.c.b16 %v7178, %v7177
      %v7207 = vpack.c.b16 %v7180, %v7179
      %v7208 = vpack.c.b16 %v7182, %v7181
      %v7209 = vpack.c.b16 %v7184, %v7183
      %v7210 = vpack.c.b16 %v7186, %v7185
      %v7211 = vpack.c.b16 %v7188, %v7187
      %v7212 = vpack.c.b16 %v7190, %v7189
      %v7213 = vpack.c.b16 %v7192, %v7191
      %v7214 = vpack.c.b16 %v7194, %v7193
      %v7215 = vpack.c.b16 %v7196, %v7195
      %v7216 = vpack.c.b16 %v7198, %v7197
      %v7217 = vpack.c.b16 %v7200, %v7199
      %v7218 = vpack.c.b16 %v7202, %v7201
      %v7220 = vsel %vm3202, %v7203, 0
      %v7223 = vsel %vm3202, %v7204, 0
      %v7226 = vsel %vm3202, %v7205, 0
      %v7229 = vsel %vm3202, %v7206, 0
      %v7232 = vsel %vm3202, %v7207, 0
      %v7235 = vsel %vm3202, %v7208, 0
      %v7238 = vsel %vm3202, %v7209, 0
      %v7241 = vsel %vm3202, %v7210, 0
      %v7244 = vsel %vm3202, %v7211, 0
      %v7247 = vsel %vm3202, %v7212, 0
      %v7250 = vsel %vm3202, %v7213, 0
      %v7253 = vsel %vm3202, %v7214, 0
      %v7256 = vsel %vm3202, %v7215, 0
      %v7259 = vsel %vm3202, %v7216, 0
      %v7262 = vsel %vm3202, %v7217, 0
      %v7265 = vsel %vm3202, %v7218, 0
      %v7268 = vsel %vm4997, %v7170, 0
      %7270 = vmatprep.subr.bf16.mxu0 0
      %7271 = vmatpush1.bf16.msra.mxu0 %v7268
      %7272 = vmatprep.subr.bf16.mxu0 0
      %7273 = vmatpush1.bf16.msra.mxu0 0
      %7274 = vmatprep.subr.bf16.mxu0 0
      %7275 = vmatpush1.bf16.msra.mxu0 0
      %7276 = vmatprep.subr.bf16.mxu0 0
      %7277 = vmatpush1.bf16.msra.mxu0 0
      %7278 = vmatprep.subr.bf16.mxu0 0
      %7279 = vmatpush1.bf16.msra.mxu0 0
      %7280 = vmatprep.subr.bf16.mxu0 0
      %7281 = vmatpush1.bf16.msra.mxu0 0
      %7282 = vmatprep.subr.bf16.mxu0 0
      %7283 = vmatpush1.bf16.msra.mxu0 0
      %7284 = vmatprep.subr.bf16.mxu0 0
      %7285 = vmatpush1.bf16.msra.mxu0 0
      %7286 = vmatprep.subr.bf16.mxu0 0
      %7287 = vmatpush1.bf16.msra.mxu0 0
      %7288 = vmatprep.subr.bf16.mxu0 0
      %7289 = vmatpush1.bf16.msra.mxu0 0
      %7290 = vmatprep.subr.bf16.mxu0 0
      %7291 = vmatpush1.bf16.msra.mxu0 0
      %7292 = vmatprep.subr.bf16.mxu0 0
      %7293 = vmatpush1.bf16.msra.mxu0 0
      %7294 = vmatprep.subr.bf16.mxu0 0
      %7295 = vmatpush1.bf16.msra.mxu0 0
      %7296 = vmatprep.subr.bf16.mxu0 0
      %7297 = vmatpush1.bf16.msra.mxu0 0
      %7298 = vmatprep.subr.bf16.mxu0 0
      %7299 = vmatpush1.bf16.msra.mxu0 0
      %7300 = vmatprep.subr.bf16.mxu0 0
      %7301 = vmatpush1.bf16.msra.mxu0 0
      %7302 = vmatprep.mubr.bf16.mxu0 0
      %7303 = vmatmul.mubr.bf16.gmra.mrb[0].mxu0 %v7220
      %v7304 = vpop.f32.mrb[0].mxu0
      %v7305 = vadd.f32 0.0, %v7304
      %v7306 = vpop.f32.mrb[0].mxu0
      %v7307 = vpop.f32.mrb[0].mxu0
      %v7308 = vadd.f32 0.0, %v7307
      %v7309 = vpop.f32.mrb[0].mxu0
      %7310 = vmatprep.mubr.bf16.mxu0 0
      %7311 = vmatmul.mubr.bf16.gmra.mrb[0].mxu0 %v7223
      %v7312 = vpop.f32.mrb[0].mxu0
      %v7313 = vadd.f32 0.0, %v7312
      %v7314 = vpop.f32.mrb[0].mxu0
      %v7315 = vpop.f32.mrb[0].mxu0
      %v7316 = vadd.f32 0.0, %v7315
      %v7317 = vpop.f32.mrb[0].mxu0
      %7318 = vmatprep.mubr.bf16.mxu0 0
      %7319 = vmatmul.mubr.bf16.gmra.mrb[0].mxu0 %v7226
      %v7320 = vpop.f32.mrb[0].mxu0
      %v7321 = vadd.f32 0.0, %v7320
      %v7322 = vpop.f32.mrb[0].mxu0
      %v7323 = vpop.f32.mrb[0].mxu0
      %v7324 = vadd.f32 0.0, %v7323
      %v7325 = vpop.f32.mrb[0].mxu0
      %7326 = vmatprep.mubr.bf16.mxu0 0
      %7327 = vmatmul.mubr.bf16.gmra.mrb[0].mxu0 %v7229
      %v7328 = vpop.f32.mrb[0].mxu0
      %v7329 = vadd.f32 0.0, %v7328
      %v7330 = vpop.f32.mrb[0].mxu0
      %v7331 = vpop.f32.mrb[0].mxu0
      %v7332 = vadd.f32 0.0, %v7331
      %v7333 = vpop.f32.mrb[0].mxu0
      %7334 = vmatprep.mubr.bf16.mxu0 0
      %7335 = vmatmul.mubr.bf16.gmra.mrb[0].mxu0 %v7232
      %v7336 = vpop.f32.mrb[0].mxu0
      %v7337 = vadd.f32 0.0, %v7336
      %v7338 = vpop.f32.mrb[0].mxu0
      %v7339 = vpop.f32.mrb[0].mxu0
      %v7340 = vadd.f32 0.0, %v7339
      %v7341 = vpop.f32.mrb[0].mxu0
      %7342 = vmatprep.mubr.bf16.mxu0 0
      %7343 = vmatmul.mubr.bf16.gmra.mrb[0].mxu0 %v7235
      %v7344 = vpop.f32.mrb[0].mxu0
      %v7345 = vadd.f32 0.0, %v7344
      %v7346 = vpop.f32.mrb[0].mxu0
      %v7347 = vpop.f32.mrb[0].mxu0
      %v7348 = vadd.f32 0.0, %v7347
      %v7349 = vpop.f32.mrb[0].mxu0
      %7350 = vmatprep.mubr.bf16.mxu0 0
      %7351 = vmatmul.mubr.bf16.gmra.mrb[0].mxu0 %v7238
      %v7352 = vpop.f32.mrb[0].mxu0
      %v7353 = vadd.f32 0.0, %v7352
      %v7354 = vpop.f32.mrb[0].mxu0
      %v7355 = vpop.f32.mrb[0].mxu0
      %v7356 = vadd.f32 0.0, %v7355
      %v7357 = vpop.f32.mrb[0].mxu0
      %7358 = vmatprep.mubr.bf16.mxu0 0
      %7359 = vmatmul.mubr.bf16.gmra.mrb[0].mxu0 %v7241
      %v7360 = vpop.f32.mrb[0].mxu0
      %v7361 = vadd.f32 0.0, %v7360
      %v7362 = vpop.f32.mrb[0].mxu0
      %v7363 = vpop.f32.mrb[0].mxu0
      %v7364 = vadd.f32 0.0, %v7363
      %v7365 = vpop.f32.mrb[0].mxu0
      %7366 = vmatprep.mubr.bf16.mxu0 0
      %7367 = vmatmul.mubr.bf16.gmra.mrb[0].mxu0 %v7244
      %v7368 = vpop.f32.mrb[0].mxu0
      %v7369 = vadd.f32 0.0, %v7368
      %v7370 = vpop.f32.mrb[0].mxu0
      %v7371 = vpop.f32.mrb[0].mxu0
      %v7372 = vadd.f32 0.0, %v7371
      %v7373 = vpop.f32.mrb[0].mxu0
      %7374 = vmatprep.mubr.bf16.mxu0 0
      %7375 = vmatmul.mubr.bf16.gmra.mrb[0].mxu0 %v7247
      %v7376 = vpop.f32.mrb[0].mxu0
      %v7377 = vadd.f32 0.0, %v7376
      %v7378 = vpop.f32.mrb[0].mxu0
      %v7379 = vpop.f32.mrb[0].mxu0
      %v7380 = vadd.f32 0.0, %v7379
      %v7381 = vpop.f32.mrb[0].mxu0
      %7382 = vmatprep.mubr.bf16.mxu0 0
      %7383 = vmatmul.mubr.bf16.gmra.mrb[0].mxu0 %v7250
      %v7384 = vpop.f32.mrb[0].mxu0
      %v7385 = vadd.f32 0.0, %v7384
      %v7386 = vpop.f32.mrb[0].mxu0
      %v7387 = vpop.f32.mrb[0].mxu0
      %v7388 = vadd.f32 0.0, %v7387
      %v7389 = vpop.f32.mrb[0].mxu0
      %7390 = vmatprep.mubr.bf16.mxu0 0
      %7391 = vmatmul.mubr.bf16.gmra.mrb[0].mxu0 %v7253
      %v7392 = vpop.f32.mrb[0].mxu0
      %v7393 = vadd.f32 0.0, %v7392
      %v7394 = vpop.f32.mrb[0].mxu0
      %v7395 = vpop.f32.mrb[0].mxu0
      %v7396 = vadd.f32 0.0, %v7395
      %v7397 = vpop.f32.mrb[0].mxu0
      %7398 = vmatprep.mubr.bf16.mxu0 0
      %7399 = vmatmul.mubr.bf16.gmra.mrb[0].mxu0 %v7256
      %v7400 = vpop.f32.mrb[0].mxu0
      %v7401 = vadd.f32 0.0, %v7400
      %v7402 = vpop.f32.mrb[0].mxu0
      %v7403 = vpop.f32.mrb[0].mxu0
      %v7404 = vadd.f32 0.0, %v7403
      %v7405 = vpop.f32.mrb[0].mxu0
      %7406 = vmatprep.mubr.bf16.mxu0 0
      %7407 = vmatmul.mubr.bf16.gmra.mrb[0].mxu0 %v7259
      %v7408 = vpop.f32.mrb[0].mxu0
      %v7409 = vadd.f32 0.0, %v7408
      %v7410 = vpop.f32.mrb[0].mxu0
      %v7411 = vpop.f32.mrb[0].mxu0
      %v7412 = vadd.f32 0.0, %v7411
      %v7413 = vpop.f32.mrb[0].mxu0
      %7414 = vmatprep.mubr.bf16.mxu0 0
      %7415 = vmatmul.mubr.bf16.gmra.mrb[0].mxu0 %v7262
      %v7416 = vpop.f32.mrb[0].mxu0
      %v7417 = vadd.f32 0.0, %v7416
      %v7418 = vpop.f32.mrb[0].mxu0
      %v7419 = vpop.f32.mrb[0].mxu0
      %v7420 = vadd.f32 0.0, %v7419
      %v7421 = vpop.f32.mrb[0].mxu0
      %7422 = vmatprep.mubr.bf16.mxu0 0
      %7423 = vmatmul.mubr.bf16.gmra.mrb[0].mxu0 %v7265
      %v7424 = vpop.f32.mrb[0].mxu0
      %v7425 = vadd.f32 0.0, %v7424
      %v7426 = vpop.f32.mrb[0].mxu0
      %v7427 = vpop.f32.mrb[0].mxu0
      %v7428 = vadd.f32 0.0, %v7427
      %v7429 = vpop.f32.mrb[0].mxu0
      %7430 = vdwg.mxu0
      %v7431 = vadd.f32 %v6961, %v7305
      %v7432 = vadd.f32 %v6962, %v7308
      %v7433 = vadd.f32 %v6963, %v7313
      %v7434 = vadd.f32 %v6964, %v7316
      %v7435 = vadd.f32 %v6965, %v7321
      %v7436 = vadd.f32 %v6966, %v7324
      %v7437 = vadd.f32 %v6967, %v7329
      %v7438 = vadd.f32 %v6968, %v7332
      %v7439 = vadd.f32 %v6969, %v7337
      %v7440 = vadd.f32 %v6970, %v7340
      %v7441 = vadd.f32 %v6971, %v7345
      %v7442 = vadd.f32 %v6972, %v7348
      %v7443 = vadd.f32 %v6973, %v7353
      %v7444 = vadd.f32 %v6974, %v7356
      %v7445 = vadd.f32 %v6975, %v7361
      %v7446 = vadd.f32 %v6976, %v7364
      %v7447 = vadd.f32 %v6977, %v7369
      %v7448 = vadd.f32 %v6978, %v7372
      %v7449 = vadd.f32 %v6979, %v7377
      %v7450 = vadd.f32 %v6980, %v7380
      %v7451 = vadd.f32 %v6981, %v7385
      %v7452 = vadd.f32 %v6982, %v7388
      %v7453 = vadd.f32 %v6983, %v7393
      %v7454 = vadd.f32 %v6984, %v7396
      %v7455 = vadd.f32 %v6985, %v7401
      %v7456 = vadd.f32 %v6986, %v7404
      %v7457 = vadd.f32 %v6987, %v7409
      %v7458 = vadd.f32 %v6988, %v7412
      %v7459 = vadd.f32 %v6989, %v7417
      %v7460 = vadd.f32 %v6990, %v7420
      %v7461 = vadd.f32 %v6991, %v7425
      %v7462 = vadd.f32 %v6992, %v7428
      %s7463 = scalar_lea.vmem [#allocation2], 24
      %v7464 = vld [vmem:[%s7463] sm:$0xf]
      %v7465 = vld [vmem:[%s7463 + $0x4] sm:$0xf]
      %v7466 = vld [vmem:[%s7463 + $0xc] sm:$0xf]
      %v7467 = vld [vmem:[%s7463 + $0x10] sm:$0xf]
      %v7468 = vld [vmem:[%s7463 + $0x18] sm:$0xf]
      %v7469 = vld [vmem:[%s7463 + $0x1c] sm:$0xf]
      %v7470 = vld [vmem:[%s7463 + $0x24] sm:$0xf]
      %v7471 = vld [vmem:[%s7463 + $0x28] sm:$0xf]
      %v7472 = vld [vmem:[%s7463 + $0x30] sm:$0xf]
      %v7473 = vld [vmem:[%s7463 + $0x34] sm:$0xf]
      %v7474 = vld [vmem:[%s7463 + $0x3c] sm:$0xf]
      %v7475 = vld [vmem:[%s7463 + $0x40] sm:$0xf]
      %v7476 = vld [vmem:[%s7463 + $0x48] sm:$0xf]
      %v7477 = vld [vmem:[%s7463 + $0x4c] sm:$0xf]
      %v7478 = vld [vmem:[%s7463 + $0x54] sm:$0xf]
      %v7479 = vld [vmem:[%s7463 + $0x58] sm:$0xf]
      %v7480 = vld [vmem:[%s7463 + $0x60] sm:$0xf]
      %v7481 = vld [vmem:[%s7463 + $0x64] sm:$0xf]
      %v7482 = vld [vmem:[%s7463 + $0x6c] sm:$0xf]
      %v7483 = vld [vmem:[%s7463 + $0x70] sm:$0xf]
      %v7484 = vld [vmem:[%s7463 + $0x78] sm:$0xf]
      %v7485 = vld [vmem:[%s7463 + $0x7c] sm:$0xf]
      %v7486 = vld [vmem:[%s7463 + $0x84] sm:$0xf]
      %v7487 = vld [vmem:[%s7463 + $0x88] sm:$0xf]
      %v7488 = vld [vmem:[%s7463 + $0x90] sm:$0xf]
      %v7489 = vld [vmem:[%s7463 + $0x94] sm:$0xf]
      %v7490 = vld [vmem:[%s7463 + $0x9c] sm:$0xf]
      %v7491 = vld [vmem:[%s7463 + $0xa0] sm:$0xf]
      %v7492 = vld [vmem:[%s7463 + $0xa8] sm:$0xf]
      %v7493 = vld [vmem:[%s7463 + $0xac] sm:$0xf]
      %v7494 = vld [vmem:[%s7463 + $0xb4] sm:$0xf]
      %v7495 = vld [vmem:[%s7463 + $0xb8] sm:$0xf]
      %s7496 = scalar_lea.vmem %s3, 24
      %v7497 = vld [vmem:[%s7496] sm:$0xf]
      %v7530 = vunpack.c.l.b16 %v7464
      %v7531 = vunpack.c.l.b16 %v7465
      %v7532 = vunpack.c.l.b16 %v7466
      %v7533 = vunpack.c.l.b16 %v7467
      %v7534 = vunpack.c.l.b16 %v7468
      %v7535 = vunpack.c.l.b16 %v7469
      %v7536 = vunpack.c.l.b16 %v7470
      %v7537 = vunpack.c.l.b16 %v7471
      %v7538 = vunpack.c.l.b16 %v7472
      %v7539 = vunpack.c.l.b16 %v7473
      %v7540 = vunpack.c.l.b16 %v7474
      %v7541 = vunpack.c.l.b16 %v7475
      %v7542 = vunpack.c.l.b16 %v7476
      %v7543 = vunpack.c.l.b16 %v7477
      %v7544 = vunpack.c.l.b16 %v7478
      %v7545 = vunpack.c.l.b16 %v7479
      %v7546 = vunpack.c.l.b16 %v7480
      %v7547 = vunpack.c.l.b16 %v7481
      %v7548 = vunpack.c.l.b16 %v7482
      %v7549 = vunpack.c.l.b16 %v7483
      %v7550 = vunpack.c.l.b16 %v7484
      %v7551 = vunpack.c.l.b16 %v7485
      %v7552 = vunpack.c.l.b16 %v7486
      %v7553 = vunpack.c.l.b16 %v7487
      %v7554 = vunpack.c.l.b16 %v7488
      %v7555 = vunpack.c.l.b16 %v7489
      %v7556 = vunpack.c.l.b16 %v7490
      %v7557 = vunpack.c.l.b16 %v7491
      %v7558 = vunpack.c.l.b16 %v7492
      %v7559 = vunpack.c.l.b16 %v7493
      %v7560 = vunpack.c.l.b16 %v7494
      %v7561 = vunpack.c.l.b16 %v7495
      %v7562 = vpack.c.b16 %v7531, %v7530
      %v7563 = vpack.c.b16 %v7533, %v7532
      %v7564 = vpack.c.b16 %v7535, %v7534
      %v7565 = vpack.c.b16 %v7537, %v7536
      %v7566 = vpack.c.b16 %v7539, %v7538
      %v7567 = vpack.c.b16 %v7541, %v7540
      %v7568 = vpack.c.b16 %v7543, %v7542
      %v7569 = vpack.c.b16 %v7545, %v7544
      %v7570 = vpack.c.b16 %v7547, %v7546
      %v7571 = vpack.c.b16 %v7549, %v7548
      %v7572 = vpack.c.b16 %v7551, %v7550
      %v7573 = vpack.c.b16 %v7553, %v7552
      %v7574 = vpack.c.b16 %v7555, %v7554
      %v7575 = vpack.c.b16 %v7557, %v7556
      %v7576 = vpack.c.b16 %v7559, %v7558
      %v7577 = vpack.c.b16 %v7561, %v7560
      %v7579 = vsel %vm3202, %v7562, 0
      %v7582 = vsel %vm3202, %v7563, 0
      %v7585 = vsel %vm3202, %v7564, 0
      %v7588 = vsel %vm3202, %v7565, 0
      %v7591 = vsel %vm3202, %v7566, 0
      %v7594 = vsel %vm3202, %v7567, 0
      %v7597 = vsel %vm3202, %v7568, 0
      %v7600 = vsel %vm3202, %v7569, 0
      %v7603 = vsel %vm3202, %v7570, 0
      %v7606 = vsel %vm3202, %v7571, 0
      %v7609 = vsel %vm3202, %v7572, 0
      %v7612 = vsel %vm3202, %v7573, 0
      %v7615 = vsel %vm3202, %v7574, 0
      %v7618 = vsel %vm3202, %v7575, 0
      %v7621 = vsel %vm3202, %v7576, 0
      %v7624 = vsel %vm3202, %v7577, 0
      %v7627 = vsel %vm4997, %v7497, 0
      %7629 = vmatprep.subr.bf16.mxu0 0
      %7630 = vmatpush1.bf16.msra.mxu0 %v7627
      %7631 = vmatprep.subr.bf16.mxu0 0
      %7632 = vmatpush1.bf16.msra.mxu0 0
      %7633 = vmatprep.subr.bf16.mxu0 0
      %7634 = vmatpush1.bf16.msra.mxu0 0
      %7635 = vmatprep.subr.bf16.mxu0 0
      %7636 = vmatpush1.bf16.msra.mxu0 0
      %7637 = vmatprep.subr.bf16.mxu0 0
      %7638 = vmatpush1.bf16.msra.mxu0 0
      %7639 = vmatprep.subr.bf16.mxu0 0
      %7640 = vmatpush1.bf16.msra.mxu0 0
      %7641 = vmatprep.subr.bf16.mxu0 0
      %7642 = vmatpush1.bf16.msra.mxu0 0
      %7643 = vmatprep.subr.bf16.mxu0 0
      %7644 = vmatpush1.bf16.msra.mxu0 0
      %7645 = vmatprep.subr.bf16.mxu0 0
      %7646 = vmatpush1.bf16.msra.mxu0 0
      %7647 = vmatprep.subr.bf16.mxu0 0
      %7648 = vmatpush1.bf16.msra.mxu0 0
      %7649 = vmatprep.subr.bf16.mxu0 0
      %7650 = vmatpush1.bf16.msra.mxu0 0
      %7651 = vmatprep.subr.bf16.mxu0 0
      %7652 = vmatpush1.bf16.msra.mxu0 0
      %7653 = vmatprep.subr.bf16.mxu0 0
      %7654 = vmatpush1.bf16.msra.mxu0 0
      %7655 = vmatprep.subr.bf16.mxu0 0
      %7656 = vmatpush1.bf16.msra.mxu0 0
      %7657 = vmatprep.subr.bf16.mxu0 0
      %7658 = vmatpush1.bf16.msra.mxu0 0
      %7659 = vmatprep.subr.bf16.mxu0 0
      %7660 = vmatpush1.bf16.msra.mxu0 0
      %7661 = vmatprep.mubr.bf16.mxu0 0
      %7662 = vmatmul.mubr.bf16.gmra.mrb[0].mxu0 %v7579
      %v7663 = vpop.f32.mrb[0].mxu0
      %v7664 = vadd.f32 0.0, %v7663
      %v7665 = vpop.f32.mrb[0].mxu0
      %v7666 = vpop.f32.mrb[0].mxu0
      %v7667 = vadd.f32 0.0, %v7666
      %v7668 = vpop.f32.mrb[0].mxu0
      %7669 = vmatprep.mubr.bf16.mxu0 0
      %7670 = vmatmul.mubr.bf16.gmra.mrb[0].mxu0 %v7582
      %v7671 = vpop.f32.mrb[0].mxu0
      %v7672 = vadd.f32 0.0, %v7671
      %v7673 = vpop.f32.mrb[0].mxu0
      %v7674 = vpop.f32.mrb[0].mxu0
      %v7675 = vadd.f32 0.0, %v7674
      %v7676 = vpop.f32.mrb[0].mxu0
      %7677 = vmatprep.mubr.bf16.mxu0 0
      %7678 = vmatmul.mubr.bf16.gmra.mrb[0].mxu0 %v7585
      %v7679 = vpop.f32.mrb[0].mxu0
      %v7680 = vadd.f32 0.0, %v7679
      %v7681 = vpop.f32.mrb[0].mxu0
      %v7682 = vpop.f32.mrb[0].mxu0
      %v7683 = vadd.f32 0.0, %v7682
      %v7684 = vpop.f32.mrb[0].mxu0
      %7685 = vmatprep.mubr.bf16.mxu0 0
      %7686 = vmatmul.mubr.bf16.gmra.mrb[0].mxu0 %v7588
      %v7687 = vpop.f32.mrb[0].mxu0
      %v7688 = vadd.f32 0.0, %v7687
      %v7689 = vpop.f32.mrb[0].mxu0
      %v7690 = vpop.f32.mrb[0].mxu0
      %v7691 = vadd.f32 0.0, %v7690
      %v7692 = vpop.f32.mrb[0].mxu0
      %7693 = vmatprep.mubr.bf16.mxu0 0
      %7694 = vmatmul.mubr.bf16.gmra.mrb[0].mxu0 %v7591
      %v7695 = vpop.f32.mrb[0].mxu0
      %v7696 = vadd.f32 0.0, %v7695
      %v7697 = vpop.f32.mrb[0].mxu0
      %v7698 = vpop.f32.mrb[0].mxu0
      %v7699 = vadd.f32 0.0, %v7698
      %v7700 = vpop.f32.mrb[0].mxu0
      %7701 = vmatprep.mubr.bf16.mxu0 0
      %7702 = vmatmul.mubr.bf16.gmra.mrb[0].mxu0 %v7594
      %v7703 = vpop.f32.mrb[0].mxu0
      %v7704 = vadd.f32 0.0, %v7703
      %v7705 = vpop.f32.mrb[0].mxu0
      %v7706 = vpop.f32.mrb[0].mxu0
      %v7707 = vadd.f32 0.0, %v7706
      %v7708 = vpop.f32.mrb[0].mxu0
      %7709 = vmatprep.mubr.bf16.mxu0 0
      %7710 = vmatmul.mubr.bf16.gmra.mrb[0].mxu0 %v7597
      %v7711 = vpop.f32.mrb[0].mxu0
      %v7712 = vadd.f32 0.0, %v7711
      %v7713 = vpop.f32.mrb[0].mxu0
      %v7714 = vpop.f32.mrb[0].mxu0
      %v7715 = vadd.f32 0.0, %v7714
      %v7716 = vpop.f32.mrb[0].mxu0
      %7717 = vmatprep.mubr.bf16.mxu0 0
      %7718 = vmatmul.mubr.bf16.gmra.mrb[0].mxu0 %v7600
      %v7719 = vpop.f32.mrb[0].mxu0
      %v7720 = vadd.f32 0.0, %v7719
      %v7721 = vpop.f32.mrb[0].mxu0
      %v7722 = vpop.f32.mrb[0].mxu0
      %v7723 = vadd.f32 0.0, %v7722
      %v7724 = vpop.f32.mrb[0].mxu0
      %7725 = vmatprep.mubr.bf16.mxu0 0
      %7726 = vmatmul.mubr.bf16.gmra.mrb[0].mxu0 %v7603
      %v7727 = vpop.f32.mrb[0].mxu0
      %v7728 = vadd.f32 0.0, %v7727
      %v7729 = vpop.f32.mrb[0].mxu0
      %v7730 = vpop.f32.mrb[0].mxu0
      %v7731 = vadd.f32 0.0, %v7730
      %v7732 = vpop.f32.mrb[0].mxu0
      %7733 = vmatprep.mubr.bf16.mxu0 0
      %7734 = vmatmul.mubr.bf16.gmra.mrb[0].mxu0 %v7606
      %v7735 = vpop.f32.mrb[0].mxu0
      %v7736 = vadd.f32 0.0, %v7735
      %v7737 = vpop.f32.mrb[0].mxu0
      %v7738 = vpop.f32.mrb[0].mxu0
      %v7739 = vadd.f32 0.0, %v7738
      %v7740 = vpop.f32.mrb[0].mxu0
      %7741 = vmatprep.mubr.bf16.mxu0 0
      %7742 = vmatmul.mubr.bf16.gmra.mrb[0].mxu0 %v7609
      %v7743 = vpop.f32.mrb[0].mxu0
      %v7744 = vadd.f32 0.0, %v7743
      %v7745 = vpop.f32.mrb[0].mxu0
      %v7746 = vpop.f32.mrb[0].mxu0
      %v7747 = vadd.f32 0.0, %v7746
      %v7748 = vpop.f32.mrb[0].mxu0
      %7749 = vmatprep.mubr.bf16.mxu0 0
      %7750 = vmatmul.mubr.bf16.gmra.mrb[0].mxu0 %v7612
      %v7751 = vpop.f32.mrb[0].mxu0
      %v7752 = vadd.f32 0.0, %v7751
      %v7753 = vpop.f32.mrb[0].mxu0
      %v7754 = vpop.f32.mrb[0].mxu0
      %v7755 = vadd.f32 0.0, %v7754
      %v7756 = vpop.f32.mrb[0].mxu0
      %7757 = vmatprep.mubr.bf16.mxu0 0
      %7758 = vmatmul.mubr.bf16.gmra.mrb[0].mxu0 %v7615
      %v7759 = vpop.f32.mrb[0].mxu0
      %v7760 = vadd.f32 0.0, %v7759
      %v7761 = vpop.f32.mrb[0].mxu0
      %v7762 = vpop.f32.mrb[0].mxu0
      %v7763 = vadd.f32 0.0, %v7762
      %v7764 = vpop.f32.mrb[0].mxu0
      %7765 = vmatprep.mubr.bf16.mxu0 0
      %7766 = vmatmul.mubr.bf16.gmra.mrb[0].mxu0 %v7618
      %v7767 = vpop.f32.mrb[0].mxu0
      %v7768 = vadd.f32 0.0, %v7767
      %v7769 = vpop.f32.mrb[0].mxu0
      %v7770 = vpop.f32.mrb[0].mxu0
      %v7771 = vadd.f32 0.0, %v7770
      %v7772 = vpop.f32.mrb[0].mxu0
      %7773 = vmatprep.mubr.bf16.mxu0 0
      %7774 = vmatmul.mubr.bf16.gmra.mrb[0].mxu0 %v7621
      %v7775 = vpop.f32.mrb[0].mxu0
      %v7776 = vadd.f32 0.0, %v7775
      %v7777 = vpop.f32.mrb[0].mxu0
      %v7778 = vpop.f32.mrb[0].mxu0
      %v7779 = vadd.f32 0.0, %v7778
      %v7780 = vpop.f32.mrb[0].mxu0
      %7781 = vmatprep.mubr.bf16.mxu0 0
      %7782 = vmatmul.mubr.bf16.gmra.mrb[0].mxu0 %v7624
      %v7783 = vpop.f32.mrb[0].mxu0
      %v7784 = vadd.f32 0.0, %v7783
      %v7785 = vpop.f32.mrb[0].mxu0
      %v7786 = vpop.f32.mrb[0].mxu0
      %v7787 = vadd.f32 0.0, %v7786
      %v7788 = vpop.f32.mrb[0].mxu0
      %7789 = vdwg.mxu0
      %v7790 = vadd.f32 %v7431, %v7664
      %v7791 = vadd.f32 %v7432, %v7667
      %v7792 = vadd.f32 %v7433, %v7672
      %v7793 = vadd.f32 %v7434, %v7675
      %v7794 = vadd.f32 %v7435, %v7680
      %v7795 = vadd.f32 %v7436, %v7683
      %v7796 = vadd.f32 %v7437, %v7688
      %v7797 = vadd.f32 %v7438, %v7691
      %v7798 = vadd.f32 %v7439, %v7696
      %v7799 = vadd.f32 %v7440, %v7699
      %v7800 = vadd.f32 %v7441, %v7704
      %v7801 = vadd.f32 %v7442, %v7707
      %v7802 = vadd.f32 %v7443, %v7712
      %v7803 = vadd.f32 %v7444, %v7715
      %v7804 = vadd.f32 %v7445, %v7720
      %v7805 = vadd.f32 %v7446, %v7723
      %v7806 = vadd.f32 %v7447, %v7728
      %v7807 = vadd.f32 %v7448, %v7731
      %v7808 = vadd.f32 %v7449, %v7736
      %v7809 = vadd.f32 %v7450, %v7739
      %v7810 = vadd.f32 %v7451, %v7744
      %v7811 = vadd.f32 %v7452, %v7747
      %v7812 = vadd.f32 %v7453, %v7752
      %v7813 = vadd.f32 %v7454, %v7755
      %v7814 = vadd.f32 %v7455, %v7760
      %v7815 = vadd.f32 %v7456, %v7763
      %v7816 = vadd.f32 %v7457, %v7768
      %v7817 = vadd.f32 %v7458, %v7771
      %v7818 = vadd.f32 %v7459, %v7776
      %v7819 = vadd.f32 %v7460, %v7779
      %v7820 = vadd.f32 %v7461, %v7784
      %v7821 = vadd.f32 %v7462, %v7787
      %v7822 = vld [vmem:[%s7463] sm:$0xf]
      %v7823 = vld [vmem:[%s7463 + $0x4] sm:$0xf]
      %v7824 = vld [vmem:[%s7463 + $0x8] sm:$0x1]
      %v7825 = vld [vmem:[%s7463 + $0xc] sm:$0xf]
      %v7826 = vld [vmem:[%s7463 + $0x10] sm:$0xf]
      %v7827 = vld [vmem:[%s7463 + $0x14] sm:$0x1]
      %v7828 = vld [vmem:[%s7463 + $0x18] sm:$0xf]
      %v7829 = vld [vmem:[%s7463 + $0x1c] sm:$0xf]
      %v7830 = vld [vmem:[%s7463 + $0x20] sm:$0x1]
      %v7831 = vld [vmem:[%s7463 + $0x24] sm:$0xf]
      %v7832 = vld [vmem:[%s7463 + $0x28] sm:$0xf]
      %v7833 = vld [vmem:[%s7463 + $0x2c] sm:$0x1]
      %v7834 = vld [vmem:[%s7463 + $0x30] sm:$0xf]
      %v7835 = vld [vmem:[%s7463 + $0x34] sm:$0xf]
      %v7836 = vld [vmem:[%s7463 + $0x38] sm:$0x1]
      %v7837 = vld [vmem:[%s7463 + $0x3c] sm:$0xf]
      %v7838 = vld [vmem:[%s7463 + $0x40] sm:$0xf]
      %v7839 = vld [vmem:[%s7463 + $0x44] sm:$0x1]
      %v7840 = vld [vmem:[%s7463 + $0x48] sm:$0xf]
      %v7841 = vld [vmem:[%s7463 + $0x4c] sm:$0xf]
      %v7842 = vld [vmem:[%s7463 + $0x50] sm:$0x1]
      %v7843 = vld [vmem:[%s7463 + $0x54] sm:$0xf]
      %v7844 = vld [vmem:[%s7463 + $0x58] sm:$0xf]
      %v7845 = vld [vmem:[%s7463 + $0x5c] sm:$0x1]
      %v7846 = vld [vmem:[%s7463 + $0x60] sm:$0xf]
      %v7847 = vld [vmem:[%s7463 + $0x64] sm:$0xf]
      %v7848 = vld [vmem:[%s7463 + $0x68] sm:$0x1]
      %v7849 = vld [vmem:[%s7463 + $0x6c] sm:$0xf]
      %v7850 = vld [vmem:[%s7463 + $0x70] sm:$0xf]
      %v7851 = vld [vmem:[%s7463 + $0x74] sm:$0x1]
      %v7852 = vld [vmem:[%s7463 + $0x78] sm:$0xf]
      %v7853 = vld [vmem:[%s7463 + $0x7c] sm:$0xf]
      %v7854 = vld [vmem:[%s7463 + $0x80] sm:$0x1]
      %v7855 = vld [vmem:[%s7463 + $0x84] sm:$0xf]
      %v7856 = vld [vmem:[%s7463 + $0x88] sm:$0xf]
      %v7857 = vld [vmem:[%s7463 + $0x8c] sm:$0x1]
      %v7858 = vld [vmem:[%s7463 + $0x90] sm:$0xf]
      %v7859 = vld [vmem:[%s7463 + $0x94] sm:$0xf]
      %v7860 = vld [vmem:[%s7463 + $0x98] sm:$0x1]
      %v7861 = vld [vmem:[%s7463 + $0x9c] sm:$0xf]
      %v7862 = vld [vmem:[%s7463 + $0xa0] sm:$0xf]
      %v7863 = vld [vmem:[%s7463 + $0xa4] sm:$0x1]
      %v7864 = vld [vmem:[%s7463 + $0xa8] sm:$0xf]
      %v7865 = vld [vmem:[%s7463 + $0xac] sm:$0xf]
      %v7866 = vld [vmem:[%s7463 + $0xb0] sm:$0x1]
      %v7867 = vld [vmem:[%s7463 + $0xb4] sm:$0xf]
      %v7868 = vld [vmem:[%s7463 + $0xb8] sm:$0xf]
      %v7869 = vld [vmem:[%s7463 + $0xbc] sm:$0x1]
      %v7871 = vshrl.u32 %v7822, 16
      %v7873 = vrot.slane %v7871, 4
      %v7874 = vshll.u32 %v7822, 16
      %v7876 = vrot.slane %v7874, 5
      %v7877 = vor.u32 %v7873, %v7876
      %v7878 = vrot.slane %v7877, 4
      %v7880 = vshll.u32 %v7823, 16
      %v7882 = vrot.slane %v7880, 5
      %v7883 = vsel %vm309, %v7878, %v7882
      %v7884 = vshrl.u32 %v7823, 16
      %v7886 = vrot.slane %v7884, 4
      %v7887 = vor.u32 %v7886, %v7882
      %v7888 = vrot.slane %v7887, 4
      %v7890 = vshll.u32 %v7824, 16
      %v7892 = vrot.slane %v7890, 5
      %v7893 = vsel %vm309, %v7888, %v7892
      %v7895 = vshrl.u32 %v7825, 16
      %v7897 = vrot.slane %v7895, 4
      %v7898 = vshll.u32 %v7825, 16
      %v7900 = vrot.slane %v7898, 5
      %v7901 = vor.u32 %v7897, %v7900
      %v7902 = vrot.slane %v7901, 4
      %v7904 = vshll.u32 %v7826, 16
      %v7906 = vrot.slane %v7904, 5
      %v7907 = vsel %vm309, %v7902, %v7906
      %v7908 = vshrl.u32 %v7826, 16
      %v7910 = vrot.slane %v7908, 4
      %v7911 = vor.u32 %v7910, %v7906
      %v7912 = vrot.slane %v7911, 4
      %v7914 = vshll.u32 %v7827, 16
      %v7916 = vrot.slane %v7914, 5
      %v7917 = vsel %vm309, %v7912, %v7916
      %v7919 = vshrl.u32 %v7828, 16
      %v7921 = vrot.slane %v7919, 4
      %v7922 = vshll.u32 %v7828, 16
      %v7924 = vrot.slane %v7922, 5
      %v7925 = vor.u32 %v7921, %v7924
      %v7926 = vrot.slane %v7925, 4
      %v7928 = vshll.u32 %v7829, 16
      %v7930 = vrot.slane %v7928, 5
      %v7931 = vsel %vm309, %v7926, %v7930
      %v7932 = vshrl.u32 %v7829, 16
      %v7934 = vrot.slane %v7932, 4
      %v7935 = vor.u32 %v7934, %v7930
      %v7936 = vrot.slane %v7935, 4
      %v7938 = vshll.u32 %v7830, 16
      %v7940 = vrot.slane %v7938, 5
      %v7941 = vsel %vm309, %v7936, %v7940
      %v7943 = vshrl.u32 %v7831, 16
      %v7945 = vrot.slane %v7943, 4
      %v7946 = vshll.u32 %v7831, 16
      %v7948 = vrot.slane %v7946, 5
      %v7949 = vor.u32 %v7945, %v7948
      %v7950 = vrot.slane %v7949, 4
      %v7952 = vshll.u32 %v7832, 16
      %v7954 = vrot.slane %v7952, 5
      %v7955 = vsel %vm309, %v7950, %v7954
      %v7956 = vshrl.u32 %v7832, 16
      %v7958 = vrot.slane %v7956, 4
      %v7959 = vor.u32 %v7958, %v7954
      %v7960 = vrot.slane %v7959, 4
      %v7962 = vshll.u32 %v7833, 16
      %v7964 = vrot.slane %v7962, 5
      %v7965 = vsel %vm309, %v7960, %v7964
      %v7967 = vshrl.u32 %v7834, 16
      %v7969 = vrot.slane %v7967, 4
      %v7970 = vshll.u32 %v7834, 16
      %v7972 = vrot.slane %v7970, 5
      %v7973 = vor.u32 %v7969, %v7972
      %v7974 = vrot.slane %v7973, 4
      %v7976 = vshll.u32 %v7835, 16
      %v7978 = vrot.slane %v7976, 5
      %v7979 = vsel %vm309, %v7974, %v7978
      %v7980 = vshrl.u32 %v7835, 16
      %v7982 = vrot.slane %v7980, 4
      %v7983 = vor.u32 %v7982, %v7978
      %v7984 = vrot.slane %v7983, 4
      %v7986 = vshll.u32 %v7836, 16
      %v7988 = vrot.slane %v7986, 5
      %v7989 = vsel %vm309, %v7984, %v7988
      %v7991 = vshrl.u32 %v7837, 16
      %v7993 = vrot.slane %v7991, 4
      %v7994 = vshll.u32 %v7837, 16
      %v7996 = vrot.slane %v7994, 5
      %v7997 = vor.u32 %v7993, %v7996
      %v7998 = vrot.slane %v7997, 4
      %v8000 = vshll.u32 %v7838, 16
      %v8002 = vrot.slane %v8000, 5
      %v8003 = vsel %vm309, %v7998, %v8002
      %v8004 = vshrl.u32 %v7838, 16
      %v8006 = vrot.slane %v8004, 4
      %v8007 = vor.u32 %v8006, %v8002
      %v8008 = vrot.slane %v8007, 4
      %v8010 = vshll.u32 %v7839, 16
      %v8012 = vrot.slane %v8010, 5
      %v8013 = vsel %vm309, %v8008, %v8012
      %v8015 = vshrl.u32 %v7840, 16
      %v8017 = vrot.slane %v8015, 4
      %v8018 = vshll.u32 %v7840, 16
      %v8020 = vrot.slane %v8018, 5
      %v8021 = vor.u32 %v8017, %v8020
      %v8022 = vrot.slane %v8021, 4
      %v8024 = vshll.u32 %v7841, 16
      %v8026 = vrot.slane %v8024, 5
      %v8027 = vsel %vm309, %v8022, %v8026
      %v8028 = vshrl.u32 %v7841, 16
      %v8030 = vrot.slane %v8028, 4
      %v8031 = vor.u32 %v8030, %v8026
      %v8032 = vrot.slane %v8031, 4
      %v8034 = vshll.u32 %v7842, 16
      %v8036 = vrot.slane %v8034, 5
      %v8037 = vsel %vm309, %v8032, %v8036
      %v8039 = vshrl.u32 %v7843, 16
      %v8041 = vrot.slane %v8039, 4
      %v8042 = vshll.u32 %v7843, 16
      %v8044 = vrot.slane %v8042, 5
      %v8045 = vor.u32 %v8041, %v8044
      %v8046 = vrot.slane %v8045, 4
      %v8048 = vshll.u32 %v7844, 16
      %v8050 = vrot.slane %v8048, 5
      %v8051 = vsel %vm309, %v8046, %v8050
      %v8052 = vshrl.u32 %v7844, 16
      %v8054 = vrot.slane %v8052, 4
      %v8055 = vor.u32 %v8054, %v8050
      %v8056 = vrot.slane %v8055, 4
      %v8058 = vshll.u32 %v7845, 16
      %v8060 = vrot.slane %v8058, 5
      %v8061 = vsel %vm309, %v8056, %v8060
      %v8063 = vshrl.u32 %v7846, 16
      %v8065 = vrot.slane %v8063, 4
      %v8066 = vshll.u32 %v7846, 16
      %v8068 = vrot.slane %v8066, 5
      %v8069 = vor.u32 %v8065, %v8068
      %v8070 = vrot.slane %v8069, 4
      %v8072 = vshll.u32 %v7847, 16
      %v8074 = vrot.slane %v8072, 5
      %v8075 = vsel %vm309, %v8070, %v8074
      %v8076 = vshrl.u32 %v7847, 16
      %v8078 = vrot.slane %v8076, 4
      %v8079 = vor.u32 %v8078, %v8074
      %v8080 = vrot.slane %v8079, 4
      %v8082 = vshll.u32 %v7848, 16
      %v8084 = vrot.slane %v8082, 5
      %v8085 = vsel %vm309, %v8080, %v8084
      %v8087 = vshrl.u32 %v7849, 16
      %v8089 = vrot.slane %v8087, 4
      %v8090 = vshll.u32 %v7849, 16
      %v8092 = vrot.slane %v8090, 5
      %v8093 = vor.u32 %v8089, %v8092
      %v8094 = vrot.slane %v8093, 4
      %v8096 = vshll.u32 %v7850, 16
      %v8098 = vrot.slane %v8096, 5
      %v8099 = vsel %vm309, %v8094, %v8098
      %v8100 = vshrl.u32 %v7850, 16
      %v8102 = vrot.slane %v8100, 4
      %v8103 = vor.u32 %v8102, %v8098
      %v8104 = vrot.slane %v8103, 4
      %v8106 = vshll.u32 %v7851, 16
      %v8108 = vrot.slane %v8106, 5
      %v8109 = vsel %vm309, %v8104, %v8108
      %v8111 = vshrl.u32 %v7852, 16
      %v8113 = vrot.slane %v8111, 4
      %v8114 = vshll.u32 %v7852, 16
      %v8116 = vrot.slane %v8114, 5
      %v8117 = vor.u32 %v8113, %v8116
      %v8118 = vrot.slane %v8117, 4
      %v8120 = vshll.u32 %v7853, 16
      %v8122 = vrot.slane %v8120, 5
      %v8123 = vsel %vm309, %v8118, %v8122
      %v8124 = vshrl.u32 %v7853, 16
      %v8126 = vrot.slane %v8124, 4
      %v8127 = vor.u32 %v8126, %v8122
      %v8128 = vrot.slane %v8127, 4
      %v8130 = vshll.u32 %v7854, 16
      %v8132 = vrot.slane %v8130, 5
      %v8133 = vsel %vm309, %v8128, %v8132
      %v8135 = vshrl.u32 %v7855, 16
      %v8137 = vrot.slane %v8135, 4
      %v8138 = vshll.u32 %v7855, 16
      %v8140 = vrot.slane %v8138, 5
      %v8141 = vor.u32 %v8137, %v8140
      %v8142 = vrot.slane %v8141, 4
      %v8144 = vshll.u32 %v7856, 16
      %v8146 = vrot.slane %v8144, 5
      %v8147 = vsel %vm309, %v8142, %v8146
      %v8148 = vshrl.u32 %v7856, 16
      %v8150 = vrot.slane %v8148, 4
      %v8151 = vor.u32 %v8150, %v8146
      %v8152 = vrot.slane %v8151, 4
      %v8154 = vshll.u32 %v7857, 16
      %v8156 = vrot.slane %v8154, 5
      %v8157 = vsel %vm309, %v8152, %v8156
      %v8159 = vshrl.u32 %v7858, 16
      %v8161 = vrot.slane %v8159, 4
      %v8162 = vshll.u32 %v7858, 16
      %v8164 = vrot.slane %v8162, 5
      %v8165 = vor.u32 %v8161, %v8164
      %v8166 = vrot.slane %v8165, 4
      %v8168 = vshll.u32 %v7859, 16
      %v8170 = vrot.slane %v8168, 5
      %v8171 = vsel %vm309, %v8166, %v8170
      %v8172 = vshrl.u32 %v7859, 16
      %v8174 = vrot.slane %v8172, 4
      %v8175 = vor.u32 %v8174, %v8170
      %v8176 = vrot.slane %v8175, 4
      %v8178 = vshll.u32 %v7860, 16
      %v8180 = vrot.slane %v8178, 5
      %v8181 = vsel %vm309, %v8176, %v8180
      %v8183 = vshrl.u32 %v7861, 16
      %v8185 = vrot.slane %v8183, 4
      %v8186 = vshll.u32 %v7861, 16
      %v8188 = vrot.slane %v8186, 5
      %v8189 = vor.u32 %v8185, %v8188
      %v8190 = vrot.slane %v8189, 4
      %v8192 = vshll.u32 %v7862, 16
      %v8194 = vrot.slane %v8192, 5
      %v8195 = vsel %vm309, %v8190, %v8194
      %v8196 = vshrl.u32 %v7862, 16
      %v8198 = vrot.slane %v8196, 4
      %v8199 = vor.u32 %v8198, %v8194
      %v8200 = vrot.slane %v8199, 4
      %v8202 = vshll.u32 %v7863, 16
      %v8204 = vrot.slane %v8202, 5
      %v8205 = vsel %vm309, %v8200, %v8204
      %v8207 = vshrl.u32 %v7864, 16
      %v8209 = vrot.slane %v8207, 4
      %v8210 = vshll.u32 %v7864, 16
      %v8212 = vrot.slane %v8210, 5
      %v8213 = vor.u32 %v8209, %v8212
      %v8214 = vrot.slane %v8213, 4
      %v8216 = vshll.u32 %v7865, 16
      %v8218 = vrot.slane %v8216, 5
      %v8219 = vsel %vm309, %v8214, %v8218
      %v8220 = vshrl.u32 %v7865, 16
      %v8222 = vrot.slane %v8220, 4
      %v8223 = vor.u32 %v8222, %v8218
      %v8224 = vrot.slane %v8223, 4
      %v8226 = vshll.u32 %v7866, 16
      %v8228 = vrot.slane %v8226, 5
      %v8229 = vsel %vm309, %v8224, %v8228
      %v8231 = vshrl.u32 %v7867, 16
      %v8233 = vrot.slane %v8231, 4
      %v8234 = vshll.u32 %v7867, 16
      %v8236 = vrot.slane %v8234, 5
      %v8237 = vor.u32 %v8233, %v8236
      %v8238 = vrot.slane %v8237, 4
      %v8240 = vshll.u32 %v7868, 16
      %v8242 = vrot.slane %v8240, 5
      %v8243 = vsel %vm309, %v8238, %v8242
      %v8244 = vshrl.u32 %v7868, 16
      %v8246 = vrot.slane %v8244, 4
      %v8247 = vor.u32 %v8246, %v8242
      %v8248 = vrot.slane %v8247, 4
      %v8250 = vshll.u32 %v7869, 16
      %v8252 = vrot.slane %v8250, 5
      %v8253 = vsel %vm309, %v8248, %v8252
      %s8254 = scalar_lea.vmem %s3, 28
      %v8255 = vld [vmem:[%s8254] sm:$0xf]
      %v8256 = vunpack.c.l.b16 %v7883
      %v8257 = vunpack.c.l.b16 %v7893
      %v8258 = vunpack.c.l.b16 %v7907
      %v8259 = vunpack.c.l.b16 %v7917
      %v8260 = vunpack.c.l.b16 %v7931
      %v8261 = vunpack.c.l.b16 %v7941
      %v8262 = vunpack.c.l.b16 %v7955
      %v8263 = vunpack.c.l.b16 %v7965
      %v8264 = vunpack.c.l.b16 %v7979
      %v8265 = vunpack.c.l.b16 %v7989
      %v8266 = vunpack.c.l.b16 %v8003
      %v8267 = vunpack.c.l.b16 %v8013
      %v8268 = vunpack.c.l.b16 %v8027
      %v8269 = vunpack.c.l.b16 %v8037
      %v8270 = vunpack.c.l.b16 %v8051
      %v8271 = vunpack.c.l.b16 %v8061
      %v8272 = vunpack.c.l.b16 %v8075
      %v8273 = vunpack.c.l.b16 %v8085
      %v8274 = vunpack.c.l.b16 %v8099
      %v8275 = vunpack.c.l.b16 %v8109
      %v8276 = vunpack.c.l.b16 %v8123
      %v8277 = vunpack.c.l.b16 %v8133
      %v8278 = vunpack.c.l.b16 %v8147
      %v8279 = vunpack.c.l.b16 %v8157
      %v8280 = vunpack.c.l.b16 %v8171
      %v8281 = vunpack.c.l.b16 %v8181
      %v8282 = vunpack.c.l.b16 %v8195
      %v8283 = vunpack.c.l.b16 %v8205
      %v8284 = vunpack.c.l.b16 %v8219
      %v8285 = vunpack.c.l.b16 %v8229
      %v8286 = vunpack.c.l.b16 %v8243
      %v8287 = vunpack.c.l.b16 %v8253
      %v8288 = vpack.c.b16 %v8257, %v8256
      %v8289 = vpack.c.b16 %v8259, %v8258
      %v8290 = vpack.c.b16 %v8261, %v8260
      %v8291 = vpack.c.b16 %v8263, %v8262
      %v8292 = vpack.c.b16 %v8265, %v8264
      %v8293 = vpack.c.b16 %v8267, %v8266
      %v8294 = vpack.c.b16 %v8269, %v8268
      %v8295 = vpack.c.b16 %v8271, %v8270
      %v8296 = vpack.c.b16 %v8273, %v8272
      %v8297 = vpack.c.b16 %v8275, %v8274
      %v8298 = vpack.c.b16 %v8277, %v8276
      %v8299 = vpack.c.b16 %v8279, %v8278
      %v8300 = vpack.c.b16 %v8281, %v8280
      %v8301 = vpack.c.b16 %v8283, %v8282
      %v8302 = vpack.c.b16 %v8285, %v8284
      %v8303 = vpack.c.b16 %v8287, %v8286
      %v8305 = vsel %vm3202, %v8288, 0
      %v8308 = vsel %vm3202, %v8289, 0
      %v8311 = vsel %vm3202, %v8290, 0
      %v8314 = vsel %vm3202, %v8291, 0
      %v8317 = vsel %vm3202, %v8292, 0
      %v8320 = vsel %vm3202, %v8293, 0
      %v8323 = vsel %vm3202, %v8294, 0
      %v8326 = vsel %vm3202, %v8295, 0
      %v8329 = vsel %vm3202, %v8296, 0
      %v8332 = vsel %vm3202, %v8297, 0
      %v8335 = vsel %vm3202, %v8298, 0
      %v8338 = vsel %vm3202, %v8299, 0
      %v8341 = vsel %vm3202, %v8300, 0
      %v8344 = vsel %vm3202, %v8301, 0
      %v8347 = vsel %vm3202, %v8302, 0
      %v8350 = vsel %vm3202, %v8303, 0
      %v8353 = vsel %vm4997, %v8255, 0
      %8355 = vmatprep.subr.bf16.mxu0 0
      %8356 = vmatpush1.bf16.msra.mxu0 %v8353
      %8357 = vmatprep.subr.bf16.mxu0 0
      %8358 = vmatpush1.bf16.msra.mxu0 0
      %8359 = vmatprep.subr.bf16.mxu0 0
      %8360 = vmatpush1.bf16.msra.mxu0 0
      %8361 = vmatprep.subr.bf16.mxu0 0
      %8362 = vmatpush1.bf16.msra.mxu0 0
      %8363 = vmatprep.subr.bf16.mxu0 0
      %8364 = vmatpush1.bf16.msra.mxu0 0
      %8365 = vmatprep.subr.bf16.mxu0 0
      %8366 = vmatpush1.bf16.msra.mxu0 0
      %8367 = vmatprep.subr.bf16.mxu0 0
      %8368 = vmatpush1.bf16.msra.mxu0 0
      %8369 = vmatprep.subr.bf16.mxu0 0
      %8370 = vmatpush1.bf16.msra.mxu0 0
      %8371 = vmatprep.subr.bf16.mxu0 0
      %8372 = vmatpush1.bf16.msra.mxu0 0
      %8373 = vmatprep.subr.bf16.mxu0 0
      %8374 = vmatpush1.bf16.msra.mxu0 0
      %8375 = vmatprep.subr.bf16.mxu0 0
      %8376 = vmatpush1.bf16.msra.mxu0 0
      %8377 = vmatprep.subr.bf16.mxu0 0
      %8378 = vmatpush1.bf16.msra.mxu0 0
      %8379 = vmatprep.subr.bf16.mxu0 0
      %8380 = vmatpush1.bf16.msra.mxu0 0
      %8381 = vmatprep.subr.bf16.mxu0 0
      %8382 = vmatpush1.bf16.msra.mxu0 0
      %8383 = vmatprep.subr.bf16.mxu0 0
      %8384 = vmatpush1.bf16.msra.mxu0 0
      %8385 = vmatprep.subr.bf16.mxu0 0
      %8386 = vmatpush1.bf16.msra.mxu0 0
      %8387 = vmatprep.mubr.bf16.mxu0 0
      %8388 = vmatmul.mubr.bf16.gmra.mrb[0].mxu0 %v8305
      %v8389 = vpop.f32.mrb[0].mxu0
      %v8390 = vadd.f32 0.0, %v8389
      %v8391 = vpop.f32.mrb[0].mxu0
      %v8392 = vpop.f32.mrb[0].mxu0
      %v8393 = vadd.f32 0.0, %v8392
      %v8394 = vpop.f32.mrb[0].mxu0
      %8395 = vmatprep.mubr.bf16.mxu0 0
      %8396 = vmatmul.mubr.bf16.gmra.mrb[0].mxu0 %v8308
      %v8397 = vpop.f32.mrb[0].mxu0
      %v8398 = vadd.f32 0.0, %v8397
      %v8399 = vpop.f32.mrb[0].mxu0
      %v8400 = vpop.f32.mrb[0].mxu0
      %v8401 = vadd.f32 0.0, %v8400
      %v8402 = vpop.f32.mrb[0].mxu0
      %8403 = vmatprep.mubr.bf16.mxu0 0
      %8404 = vmatmul.mubr.bf16.gmra.mrb[0].mxu0 %v8311
      %v8405 = vpop.f32.mrb[0].mxu0
      %v8406 = vadd.f32 0.0, %v8405
      %v8407 = vpop.f32.mrb[0].mxu0
      %v8408 = vpop.f32.mrb[0].mxu0
      %v8409 = vadd.f32 0.0, %v8408
      %v8410 = vpop.f32.mrb[0].mxu0
      %8411 = vmatprep.mubr.bf16.mxu0 0
      %8412 = vmatmul.mubr.bf16.gmra.mrb[0].mxu0 %v8314
      %v8413 = vpop.f32.mrb[0].mxu0
      %v8414 = vadd.f32 0.0, %v8413
      %v8415 = vpop.f32.mrb[0].mxu0
      %v8416 = vpop.f32.mrb[0].mxu0
      %v8417 = vadd.f32 0.0, %v8416
      %v8418 = vpop.f32.mrb[0].mxu0
      %8419 = vmatprep.mubr.bf16.mxu0 0
      %8420 = vmatmul.mubr.bf16.gmra.mrb[0].mxu0 %v8317
      %v8421 = vpop.f32.mrb[0].mxu0
      %v8422 = vadd.f32 0.0, %v8421
      %v8423 = vpop.f32.mrb[0].mxu0
      %v8424 = vpop.f32.mrb[0].mxu0
      %v8425 = vadd.f32 0.0, %v8424
      %v8426 = vpop.f32.mrb[0].mxu0
      %8427 = vmatprep.mubr.bf16.mxu0 0
      %8428 = vmatmul.mubr.bf16.gmra.mrb[0].mxu0 %v8320
      %v8429 = vpop.f32.mrb[0].mxu0
      %v8430 = vadd.f32 0.0, %v8429
      %v8431 = vpop.f32.mrb[0].mxu0
      %v8432 = vpop.f32.mrb[0].mxu0
      %v8433 = vadd.f32 0.0, %v8432
      %v8434 = vpop.f32.mrb[0].mxu0
      %8435 = vmatprep.mubr.bf16.mxu0 0
      %8436 = vmatmul.mubr.bf16.gmra.mrb[0].mxu0 %v8323
      %v8437 = vpop.f32.mrb[0].mxu0
      %v8438 = vadd.f32 0.0, %v8437
      %v8439 = vpop.f32.mrb[0].mxu0
      %v8440 = vpop.f32.mrb[0].mxu0
      %v8441 = vadd.f32 0.0, %v8440
      %v8442 = vpop.f32.mrb[0].mxu0
      %8443 = vmatprep.mubr.bf16.mxu0 0
      %8444 = vmatmul.mubr.bf16.gmra.mrb[0].mxu0 %v8326
      %v8445 = vpop.f32.mrb[0].mxu0
      %v8446 = vadd.f32 0.0, %v8445
      %v8447 = vpop.f32.mrb[0].mxu0
      %v8448 = vpop.f32.mrb[0].mxu0
      %v8449 = vadd.f32 0.0, %v8448
      %v8450 = vpop.f32.mrb[0].mxu0
      %8451 = vmatprep.mubr.bf16.mxu0 0
      %8452 = vmatmul.mubr.bf16.gmra.mrb[0].mxu0 %v8329
      %v8453 = vpop.f32.mrb[0].mxu0
      %v8454 = vadd.f32 0.0, %v8453
      %v8455 = vpop.f32.mrb[0].mxu0
      %v8456 = vpop.f32.mrb[0].mxu0
      %v8457 = vadd.f32 0.0, %v8456
      %v8458 = vpop.f32.mrb[0].mxu0
      %8459 = vmatprep.mubr.bf16.mxu0 0
      %8460 = vmatmul.mubr.bf16.gmra.mrb[0].mxu0 %v8332
      %v8461 = vpop.f32.mrb[0].mxu0
      %v8462 = vadd.f32 0.0, %v8461
      %v8463 = vpop.f32.mrb[0].mxu0
      %v8464 = vpop.f32.mrb[0].mxu0
      %v8465 = vadd.f32 0.0, %v8464
      %v8466 = vpop.f32.mrb[0].mxu0
      %8467 = vmatprep.mubr.bf16.mxu0 0
      %8468 = vmatmul.mubr.bf16.gmra.mrb[0].mxu0 %v8335
      %v8469 = vpop.f32.mrb[0].mxu0
      %v8470 = vadd.f32 0.0, %v8469
      %v8471 = vpop.f32.mrb[0].mxu0
      %v8472 = vpop.f32.mrb[0].mxu0
      %v8473 = vadd.f32 0.0, %v8472
      %v8474 = vpop.f32.mrb[0].mxu0
      %8475 = vmatprep.mubr.bf16.mxu0 0
      %8476 = vmatmul.mubr.bf16.gmra.mrb[0].mxu0 %v8338
      %v8477 = vpop.f32.mrb[0].mxu0
      %v8478 = vadd.f32 0.0, %v8477
      %v8479 = vpop.f32.mrb[0].mxu0
      %v8480 = vpop.f32.mrb[0].mxu0
      %v8481 = vadd.f32 0.0, %v8480
      %v8482 = vpop.f32.mrb[0].mxu0
      %8483 = vmatprep.mubr.bf16.mxu0 0
      %8484 = vmatmul.mubr.bf16.gmra.mrb[0].mxu0 %v8341
      %v8485 = vpop.f32.mrb[0].mxu0
      %v8486 = vadd.f32 0.0, %v8485
      %v8487 = vpop.f32.mrb[0].mxu0
      %v8488 = vpop.f32.mrb[0].mxu0
      %v8489 = vadd.f32 0.0, %v8488
      %v8490 = vpop.f32.mrb[0].mxu0
      %8491 = vmatprep.mubr.bf16.mxu0 0
      %8492 = vmatmul.mubr.bf16.gmra.mrb[0].mxu0 %v8344
      %v8493 = vpop.f32.mrb[0].mxu0
      %v8494 = vadd.f32 0.0, %v8493
      %v8495 = vpop.f32.mrb[0].mxu0
      %v8496 = vpop.f32.mrb[0].mxu0
      %v8497 = vadd.f32 0.0, %v8496
      %v8498 = vpop.f32.mrb[0].mxu0
      %8499 = vmatprep.mubr.bf16.mxu0 0
      %8500 = vmatmul.mubr.bf16.gmra.mrb[0].mxu0 %v8347
      %v8501 = vpop.f32.mrb[0].mxu0
      %v8502 = vadd.f32 0.0, %v8501
      %v8503 = vpop.f32.mrb[0].mxu0
      %v8504 = vpop.f32.mrb[0].mxu0
      %v8505 = vadd.f32 0.0, %v8504
      %v8506 = vpop.f32.mrb[0].mxu0
      %8507 = vmatprep.mubr.bf16.mxu0 0
      %8508 = vmatmul.mubr.bf16.gmra.mrb[0].mxu0 %v8350
      %v8509 = vpop.f32.mrb[0].mxu0
      %v8510 = vadd.f32 0.0, %v8509
      %v8511 = vpop.f32.mrb[0].mxu0
      %v8512 = vpop.f32.mrb[0].mxu0
      %v8513 = vadd.f32 0.0, %v8512
      %v8514 = vpop.f32.mrb[0].mxu0
      %8515 = vdwg.mxu0
      %v8516 = vadd.f32 %v7790, %v8390
      %v8517 = vadd.f32 %v7791, %v8393
      %v8518 = vadd.f32 %v7792, %v8398
      %v8519 = vadd.f32 %v7793, %v8401
      %v8520 = vadd.f32 %v7794, %v8406
      %v8521 = vadd.f32 %v7795, %v8409
      %v8522 = vadd.f32 %v7796, %v8414
      %v8523 = vadd.f32 %v7797, %v8417
      %v8524 = vadd.f32 %v7798, %v8422
      %v8525 = vadd.f32 %v7799, %v8425
      %v8526 = vadd.f32 %v7800, %v8430
      %v8527 = vadd.f32 %v7801, %v8433
      %v8528 = vadd.f32 %v7802, %v8438
      %v8529 = vadd.f32 %v7803, %v8441
      %v8530 = vadd.f32 %v7804, %v8446
      %v8531 = vadd.f32 %v7805, %v8449
      %v8532 = vadd.f32 %v7806, %v8454
      %v8533 = vadd.f32 %v7807, %v8457
      %v8534 = vadd.f32 %v7808, %v8462
      %v8535 = vadd.f32 %v7809, %v8465
      %v8536 = vadd.f32 %v7810, %v8470
      %v8537 = vadd.f32 %v7811, %v8473
      %v8538 = vadd.f32 %v7812, %v8478
      %v8539 = vadd.f32 %v7813, %v8481
      %v8540 = vadd.f32 %v7814, %v8486
      %v8541 = vadd.f32 %v7815, %v8489
      %v8542 = vadd.f32 %v7816, %v8494
      %v8543 = vadd.f32 %v7817, %v8497
      %v8544 = vadd.f32 %v7818, %v8502
      %v8545 = vadd.f32 %v7819, %v8505
      %v8546 = vadd.f32 %v7820, %v8510
      %v8547 = vadd.f32 %v7821, %v8513
      %v8548 = vld [vmem:[%s7463] sm:$0xe]
      %v8549 = vld [vmem:[%s7463 + $0xc] sm:$0xe]
      %v8550 = vld [vmem:[%s7463 + $0x18] sm:$0xe]
      %v8551 = vld [vmem:[%s7463 + $0x24] sm:$0xe]
      %v8552 = vld [vmem:[%s7463 + $0x30] sm:$0xe]
      %v8553 = vld [vmem:[%s7463 + $0x3c] sm:$0xe]
      %v8554 = vld [vmem:[%s7463 + $0x48] sm:$0xe]
      %v8555 = vld [vmem:[%s7463 + $0x54] sm:$0xe]
      %v8556 = vld [vmem:[%s7463 + $0x60] sm:$0xe]
      %v8557 = vld [vmem:[%s7463 + $0x6c] sm:$0xe]
      %v8558 = vld [vmem:[%s7463 + $0x78] sm:$0xe]
      %v8559 = vld [vmem:[%s7463 + $0x84] sm:$0xe]
      %v8560 = vld [vmem:[%s7463 + $0x90] sm:$0xe]
      %v8561 = vld [vmem:[%s7463 + $0x9c] sm:$0xe]
      %v8562 = vld [vmem:[%s7463 + $0xa8] sm:$0xe]
      %v8563 = vld [vmem:[%s7463 + $0xb4] sm:$0xe]
      %v8612 = vrot.slane %v8548, 5
      %v8613 = vrot.slane %v8612, 4
      %v8614 = vrot.slane %v7823, 5
      %v8615 = vsel %vm816, %v8613, %v8614
      %v8616 = vrot.slane %v8614, 4
      %v8617 = vrot.slane %v7824, 5
      %v8618 = vsel %vm816, %v8616, %v8617
      %v8619 = vrot.slane %v8549, 5
      %v8620 = vrot.slane %v8619, 4
      %v8621 = vrot.slane %v7826, 5
      %v8622 = vsel %vm816, %v8620, %v8621
      %v8623 = vrot.slane %v8621, 4
      %v8624 = vrot.slane %v7827, 5
      %v8625 = vsel %vm816, %v8623, %v8624
      %v8626 = vrot.slane %v8550, 5
      %v8627 = vrot.slane %v8626, 4
      %v8628 = vrot.slane %v7829, 5
      %v8629 = vsel %vm816, %v8627, %v8628
      %v8630 = vrot.slane %v8628, 4
      %v8631 = vrot.slane %v7830, 5
      %v8632 = vsel %vm816, %v8630, %v8631
      %v8633 = vrot.slane %v8551, 5
      %v8634 = vrot.slane %v8633, 4
      %v8635 = vrot.slane %v7832, 5
      %v8636 = vsel %vm816, %v8634, %v8635
      %v8637 = vrot.slane %v8635, 4
      %v8638 = vrot.slane %v7833, 5
      %v8639 = vsel %vm816, %v8637, %v8638
      %v8640 = vrot.slane %v8552, 5
      %v8641 = vrot.slane %v8640, 4
      %v8642 = vrot.slane %v7835, 5
      %v8643 = vsel %vm816, %v8641, %v8642
      %v8644 = vrot.slane %v8642, 4
      %v8645 = vrot.slane %v7836, 5
      %v8646 = vsel %vm816, %v8644, %v8645
      %v8647 = vrot.slane %v8553, 5
      %v8648 = vrot.slane %v8647, 4
      %v8649 = vrot.slane %v7838, 5
      %v8650 = vsel %vm816, %v8648, %v8649
      %v8651 = vrot.slane %v8649, 4
      %v8652 = vrot.slane %v7839, 5
      %v8653 = vsel %vm816, %v8651, %v8652
      %v8654 = vrot.slane %v8554, 5
      %v8655 = vrot.slane %v8654, 4
      %v8656 = vrot.slane %v7841, 5
      %v8657 = vsel %vm816, %v8655, %v8656
      %v8658 = vrot.slane %v8656, 4
      %v8659 = vrot.slane %v7842, 5
      %v8660 = vsel %vm816, %v8658, %v8659
      %v8661 = vrot.slane %v8555, 5
      %v8662 = vrot.slane %v8661, 4
      %v8663 = vrot.slane %v7844, 5
      %v8664 = vsel %vm816, %v8662, %v8663
      %v8665 = vrot.slane %v8663, 4
      %v8666 = vrot.slane %v7845, 5
      %v8667 = vsel %vm816, %v8665, %v8666
      %v8668 = vrot.slane %v8556, 5
      %v8669 = vrot.slane %v8668, 4
      %v8670 = vrot.slane %v7847, 5
      %v8671 = vsel %vm816, %v8669, %v8670
      %v8672 = vrot.slane %v8670, 4
      %v8673 = vrot.slane %v7848, 5
      %v8674 = vsel %vm816, %v8672, %v8673
      %v8675 = vrot.slane %v8557, 5
      %v8676 = vrot.slane %v8675, 4
      %v8677 = vrot.slane %v7850, 5
      %v8678 = vsel %vm816, %v8676, %v8677
      %v8679 = vrot.slane %v8677, 4
      %v8680 = vrot.slane %v7851, 5
      %v8681 = vsel %vm816, %v8679, %v8680
      %v8682 = vrot.slane %v8558, 5
      %v8683 = vrot.slane %v8682, 4
      %v8684 = vrot.slane %v7853, 5
      %v8685 = vsel %vm816, %v8683, %v8684
      %v8686 = vrot.slane %v8684, 4
      %v8687 = vrot.slane %v7854, 5
      %v8688 = vsel %vm816, %v8686, %v8687
      %v8689 = vrot.slane %v8559, 5
      %v8690 = vrot.slane %v8689, 4
      %v8691 = vrot.slane %v7856, 5
      %v8692 = vsel %vm816, %v8690, %v8691
      %v8693 = vrot.slane %v8691, 4
      %v8694 = vrot.slane %v7857, 5
      %v8695 = vsel %vm816, %v8693, %v8694
      %v8696 = vrot.slane %v8560, 5
      %v8697 = vrot.slane %v8696, 4
      %v8698 = vrot.slane %v7859, 5
      %v8699 = vsel %vm816, %v8697, %v8698
      %v8700 = vrot.slane %v8698, 4
      %v8701 = vrot.slane %v7860, 5
      %v8702 = vsel %vm816, %v8700, %v8701
      %v8703 = vrot.slane %v8561, 5
      %v8704 = vrot.slane %v8703, 4
      %v8705 = vrot.slane %v7862, 5
      %v8706 = vsel %vm816, %v8704, %v8705
      %v8707 = vrot.slane %v8705, 4
      %v8708 = vrot.slane %v7863, 5
      %v8709 = vsel %vm816, %v8707, %v8708
      %v8710 = vrot.slane %v8562, 5
      %v8711 = vrot.slane %v8710, 4
      %v8712 = vrot.slane %v7865, 5
      %v8713 = vsel %vm816, %v8711, %v8712
      %v8714 = vrot.slane %v8712, 4
      %v8715 = vrot.slane %v7866, 5
      %v8716 = vsel %vm816, %v8714, %v8715
      %v8717 = vrot.slane %v8563, 5
      %v8718 = vrot.slane %v8717, 4
      %v8719 = vrot.slane %v7868, 5
      %v8720 = vsel %vm816, %v8718, %v8719
      %v8721 = vrot.slane %v8719, 4
      %v8722 = vrot.slane %v7869, 5
      %v8723 = vsel %vm816, %v8721, %v8722
      %s8724 = scalar_lea.vmem %s3, 32
      %v8725 = vld [vmem:[%s8724] sm:$0xf]
      %v8726 = vunpack.c.l.b16 %v8615
      %v8727 = vunpack.c.l.b16 %v8618
      %v8728 = vunpack.c.l.b16 %v8622
      %v8729 = vunpack.c.l.b16 %v8625
      %v8730 = vunpack.c.l.b16 %v8629
      %v8731 = vunpack.c.l.b16 %v8632
      %v8732 = vunpack.c.l.b16 %v8636
      %v8733 = vunpack.c.l.b16 %v8639
      %v8734 = vunpack.c.l.b16 %v8643
      %v8735 = vunpack.c.l.b16 %v8646
      %v8736 = vunpack.c.l.b16 %v8650
      %v8737 = vunpack.c.l.b16 %v8653
      %v8738 = vunpack.c.l.b16 %v8657
      %v8739 = vunpack.c.l.b16 %v8660
      %v8740 = vunpack.c.l.b16 %v8664
      %v8741 = vunpack.c.l.b16 %v8667
      %v8742 = vunpack.c.l.b16 %v8671
      %v8743 = vunpack.c.l.b16 %v8674
      %v8744 = vunpack.c.l.b16 %v8678
      %v8745 = vunpack.c.l.b16 %v8681
      %v8746 = vunpack.c.l.b16 %v8685
      %v8747 = vunpack.c.l.b16 %v8688
      %v8748 = vunpack.c.l.b16 %v8692
      %v8749 = vunpack.c.l.b16 %v8695
      %v8750 = vunpack.c.l.b16 %v8699
      %v8751 = vunpack.c.l.b16 %v8702
      %v8752 = vunpack.c.l.b16 %v8706
      %v8753 = vunpack.c.l.b16 %v8709
      %v8754 = vunpack.c.l.b16 %v8713
      %v8755 = vunpack.c.l.b16 %v8716
      %v8756 = vunpack.c.l.b16 %v8720
      %v8757 = vunpack.c.l.b16 %v8723
      %v8758 = vpack.c.b16 %v8727, %v8726
      %v8759 = vpack.c.b16 %v8729, %v8728
      %v8760 = vpack.c.b16 %v8731, %v8730
      %v8761 = vpack.c.b16 %v8733, %v8732
      %v8762 = vpack.c.b16 %v8735, %v8734
      %v8763 = vpack.c.b16 %v8737, %v8736
      %v8764 = vpack.c.b16 %v8739, %v8738
      %v8765 = vpack.c.b16 %v8741, %v8740
      %v8766 = vpack.c.b16 %v8743, %v8742
      %v8767 = vpack.c.b16 %v8745, %v8744
      %v8768 = vpack.c.b16 %v8747, %v8746
      %v8769 = vpack.c.b16 %v8749, %v8748
      %v8770 = vpack.c.b16 %v8751, %v8750
      %v8771 = vpack.c.b16 %v8753, %v8752
      %v8772 = vpack.c.b16 %v8755, %v8754
      %v8773 = vpack.c.b16 %v8757, %v8756
      %v8775 = vsel %vm3202, %v8758, 0
      %v8778 = vsel %vm3202, %v8759, 0
      %v8781 = vsel %vm3202, %v8760, 0
      %v8784 = vsel %vm3202, %v8761, 0
      %v8787 = vsel %vm3202, %v8762, 0
      %v8790 = vsel %vm3202, %v8763, 0
      %v8793 = vsel %vm3202, %v8764, 0
      %v8796 = vsel %vm3202, %v8765, 0
      %v8799 = vsel %vm3202, %v8766, 0
      %v8802 = vsel %vm3202, %v8767, 0
      %v8805 = vsel %vm3202, %v8768, 0
      %v8808 = vsel %vm3202, %v8769, 0
      %v8811 = vsel %vm3202, %v8770, 0
      %v8814 = vsel %vm3202, %v8771, 0
      %v8817 = vsel %vm3202, %v8772, 0
      %v8820 = vsel %vm3202, %v8773, 0
      %v8823 = vsel %vm4997, %v8725, 0
      %8825 = vmatprep.subr.bf16.mxu0 0
      %8826 = vmatpush1.bf16.msra.mxu0 %v8823
      %8827 = vmatprep.subr.bf16.mxu0 0
      %8828 = vmatpush1.bf16.msra.mxu0 0
      %8829 = vmatprep.subr.bf16.mxu0 0
      %8830 = vmatpush1.bf16.msra.mxu0 0
      %8831 = vmatprep.subr.bf16.mxu0 0
      %8832 = vmatpush1.bf16.msra.mxu0 0
      %8833 = vmatprep.subr.bf16.mxu0 0
      %8834 = vmatpush1.bf16.msra.mxu0 0
      %8835 = vmatprep.subr.bf16.mxu0 0
      %8836 = vmatpush1.bf16.msra.mxu0 0
      %8837 = vmatprep.subr.bf16.mxu0 0
      %8838 = vmatpush1.bf16.msra.mxu0 0
      %8839 = vmatprep.subr.bf16.mxu0 0
      %8840 = vmatpush1.bf16.msra.mxu0 0
      %8841 = vmatprep.subr.bf16.mxu0 0
      %8842 = vmatpush1.bf16.msra.mxu0 0
      %8843 = vmatprep.subr.bf16.mxu0 0
      %8844 = vmatpush1.bf16.msra.mxu0 0
      %8845 = vmatprep.subr.bf16.mxu0 0
      %8846 = vmatpush1.bf16.msra.mxu0 0
      %8847 = vmatprep.subr.bf16.mxu0 0
      %8848 = vmatpush1.bf16.msra.mxu0 0
      %8849 = vmatprep.subr.bf16.mxu0 0
      %8850 = vmatpush1.bf16.msra.mxu0 0
      %8851 = vmatprep.subr.bf16.mxu0 0
      %8852 = vmatpush1.bf16.msra.mxu0 0
      %8853 = vmatprep.subr.bf16.mxu0 0
      %8854 = vmatpush1.bf16.msra.mxu0 0
      %8855 = vmatprep.subr.bf16.mxu0 0
      %8856 = vmatpush1.bf16.msra.mxu0 0
      %8857 = vmatprep.mubr.bf16.mxu0 0
      %8858 = vmatmul.mubr.bf16.gmra.mrb[0].mxu0 %v8775
      %v8859 = vpop.f32.mrb[0].mxu0
      %v8860 = vadd.f32 0.0, %v8859
      %v8861 = vpop.f32.mrb[0].mxu0
      %v8862 = vpop.f32.mrb[0].mxu0
      %v8863 = vadd.f32 0.0, %v8862
      %v8864 = vpop.f32.mrb[0].mxu0
      %8865 = vmatprep.mubr.bf16.mxu0 0
      %8866 = vmatmul.mubr.bf16.gmra.mrb[0].mxu0 %v8778
      %v8867 = vpop.f32.mrb[0].mxu0
      %v8868 = vadd.f32 0.0, %v8867
      %v8869 = vpop.f32.mrb[0].mxu0
      %v8870 = vpop.f32.mrb[0].mxu0
      %v8871 = vadd.f32 0.0, %v8870
      %v8872 = vpop.f32.mrb[0].mxu0
      %8873 = vmatprep.mubr.bf16.mxu0 0
      %8874 = vmatmul.mubr.bf16.gmra.mrb[0].mxu0 %v8781
      %v8875 = vpop.f32.mrb[0].mxu0
      %v8876 = vadd.f32 0.0, %v8875
      %v8877 = vpop.f32.mrb[0].mxu0
      %v8878 = vpop.f32.mrb[0].mxu0
      %v8879 = vadd.f32 0.0, %v8878
      %v8880 = vpop.f32.mrb[0].mxu0
      %8881 = vmatprep.mubr.bf16.mxu0 0
      %8882 = vmatmul.mubr.bf16.gmra.mrb[0].mxu0 %v8784
      %v8883 = vpop.f32.mrb[0].mxu0
      %v8884 = vadd.f32 0.0, %v8883
      %v8885 = vpop.f32.mrb[0].mxu0
      %v8886 = vpop.f32.mrb[0].mxu0
      %v8887 = vadd.f32 0.0, %v8886
      %v8888 = vpop.f32.mrb[0].mxu0
      %8889 = vmatprep.mubr.bf16.mxu0 0
      %8890 = vmatmul.mubr.bf16.gmra.mrb[0].mxu0 %v8787
      %v8891 = vpop.f32.mrb[0].mxu0
      %v8892 = vadd.f32 0.0, %v8891
      %v8893 = vpop.f32.mrb[0].mxu0
      %v8894 = vpop.f32.mrb[0].mxu0
      %v8895 = vadd.f32 0.0, %v8894
      %v8896 = vpop.f32.mrb[0].mxu0
      %8897 = vmatprep.mubr.bf16.mxu0 0
      %8898 = vmatmul.mubr.bf16.gmra.mrb[0].mxu0 %v8790
      %v8899 = vpop.f32.mrb[0].mxu0
      %v8900 = vadd.f32 0.0, %v8899
      %v8901 = vpop.f32.mrb[0].mxu0
      %v8902 = vpop.f32.mrb[0].mxu0
      %v8903 = vadd.f32 0.0, %v8902
      %v8904 = vpop.f32.mrb[0].mxu0
      %8905 = vmatprep.mubr.bf16.mxu0 0
      %8906 = vmatmul.mubr.bf16.gmra.mrb[0].mxu0 %v8793
      %v8907 = vpop.f32.mrb[0].mxu0
      %v8908 = vadd.f32 0.0, %v8907
      %v8909 = vpop.f32.mrb[0].mxu0
      %v8910 = vpop.f32.mrb[0].mxu0
      %v8911 = vadd.f32 0.0, %v8910
      %v8912 = vpop.f32.mrb[0].mxu0
      %8913 = vmatprep.mubr.bf16.mxu0 0
      %8914 = vmatmul.mubr.bf16.gmra.mrb[0].mxu0 %v8796
      %v8915 = vpop.f32.mrb[0].mxu0
      %v8916 = vadd.f32 0.0, %v8915
      %v8917 = vpop.f32.mrb[0].mxu0
      %v8918 = vpop.f32.mrb[0].mxu0
      %v8919 = vadd.f32 0.0, %v8918
      %v8920 = vpop.f32.mrb[0].mxu0
      %8921 = vmatprep.mubr.bf16.mxu0 0
      %8922 = vmatmul.mubr.bf16.gmra.mrb[0].mxu0 %v8799
      %v8923 = vpop.f32.mrb[0].mxu0
      %v8924 = vadd.f32 0.0, %v8923
      %v8925 = vpop.f32.mrb[0].mxu0
      %v8926 = vpop.f32.mrb[0].mxu0
      %v8927 = vadd.f32 0.0, %v8926
      %v8928 = vpop.f32.mrb[0].mxu0
      %8929 = vmatprep.mubr.bf16.mxu0 0
      %8930 = vmatmul.mubr.bf16.gmra.mrb[0].mxu0 %v8802
      %v8931 = vpop.f32.mrb[0].mxu0
      %v8932 = vadd.f32 0.0, %v8931
      %v8933 = vpop.f32.mrb[0].mxu0
      %v8934 = vpop.f32.mrb[0].mxu0
      %v8935 = vadd.f32 0.0, %v8934
      %v8936 = vpop.f32.mrb[0].mxu0
      %8937 = vmatprep.mubr.bf16.mxu0 0
      %8938 = vmatmul.mubr.bf16.gmra.mrb[0].mxu0 %v8805
      %v8939 = vpop.f32.mrb[0].mxu0
      %v8940 = vadd.f32 0.0, %v8939
      %v8941 = vpop.f32.mrb[0].mxu0
      %v8942 = vpop.f32.mrb[0].mxu0
      %v8943 = vadd.f32 0.0, %v8942
      %v8944 = vpop.f32.mrb[0].mxu0
      %8945 = vmatprep.mubr.bf16.mxu0 0
      %8946 = vmatmul.mubr.bf16.gmra.mrb[0].mxu0 %v8808
      %v8947 = vpop.f32.mrb[0].mxu0
      %v8948 = vadd.f32 0.0, %v8947
      %v8949 = vpop.f32.mrb[0].mxu0
      %v8950 = vpop.f32.mrb[0].mxu0
      %v8951 = vadd.f32 0.0, %v8950
      %v8952 = vpop.f32.mrb[0].mxu0
      %8953 = vmatprep.mubr.bf16.mxu0 0
      %8954 = vmatmul.mubr.bf16.gmra.mrb[0].mxu0 %v8811
      %v8955 = vpop.f32.mrb[0].mxu0
      %v8956 = vadd.f32 0.0, %v8955
      %v8957 = vpop.f32.mrb[0].mxu0
      %v8958 = vpop.f32.mrb[0].mxu0
      %v8959 = vadd.f32 0.0, %v8958
      %v8960 = vpop.f32.mrb[0].mxu0
      %8961 = vmatprep.mubr.bf16.mxu0 0
      %8962 = vmatmul.mubr.bf16.gmra.mrb[0].mxu0 %v8814
      %v8963 = vpop.f32.mrb[0].mxu0
      %v8964 = vadd.f32 0.0, %v8963
      %v8965 = vpop.f32.mrb[0].mxu0
      %v8966 = vpop.f32.mrb[0].mxu0
      %v8967 = vadd.f32 0.0, %v8966
      %v8968 = vpop.f32.mrb[0].mxu0
      %8969 = vmatprep.mubr.bf16.mxu0 0
      %8970 = vmatmul.mubr.bf16.gmra.mrb[0].mxu0 %v8817
      %v8971 = vpop.f32.mrb[0].mxu0
      %v8972 = vadd.f32 0.0, %v8971
      %v8973 = vpop.f32.mrb[0].mxu0
      %v8974 = vpop.f32.mrb[0].mxu0
      %v8975 = vadd.f32 0.0, %v8974
      %v8976 = vpop.f32.mrb[0].mxu0
      %8977 = vmatprep.mubr.bf16.mxu0 0
      %8978 = vmatmul.mubr.bf16.gmra.mrb[0].mxu0 %v8820
      %v8979 = vpop.f32.mrb[0].mxu0
      %v8980 = vadd.f32 0.0, %v8979
      %v8981 = vpop.f32.mrb[0].mxu0
      %v8982 = vpop.f32.mrb[0].mxu0
      %v8983 = vadd.f32 0.0, %v8982
      %v8984 = vpop.f32.mrb[0].mxu0
      %8985 = vdwg.mxu0
      %v8986 = vadd.f32 %v8516, %v8860
      %v8987 = vadd.f32 %v8517, %v8863
      %v8988 = vadd.f32 %v8518, %v8868
      %v8989 = vadd.f32 %v8519, %v8871
      %v8990 = vadd.f32 %v8520, %v8876
      %v8991 = vadd.f32 %v8521, %v8879
      %v8992 = vadd.f32 %v8522, %v8884
      %v8993 = vadd.f32 %v8523, %v8887
      %v8994 = vadd.f32 %v8524, %v8892
      %v8995 = vadd.f32 %v8525, %v8895
      %v8996 = vadd.f32 %v8526, %v8900
      %v8997 = vadd.f32 %v8527, %v8903
      %v8998 = vadd.f32 %v8528, %v8908
      %v8999 = vadd.f32 %v8529, %v8911
      %v9000 = vadd.f32 %v8530, %v8916
      %v9001 = vadd.f32 %v8531, %v8919
      %v9002 = vadd.f32 %v8532, %v8924
      %v9003 = vadd.f32 %v8533, %v8927
      %v9004 = vadd.f32 %v8534, %v8932
      %v9005 = vadd.f32 %v8535, %v8935
      %v9006 = vadd.f32 %v8536, %v8940
      %v9007 = vadd.f32 %v8537, %v8943
      %v9008 = vadd.f32 %v8538, %v8948
      %v9009 = vadd.f32 %v8539, %v8951
      %v9010 = vadd.f32 %v8540, %v8956
      %v9011 = vadd.f32 %v8541, %v8959
      %v9012 = vadd.f32 %v8542, %v8964
      %v9013 = vadd.f32 %v8543, %v8967
      %v9014 = vadd.f32 %v8544, %v8972
      %v9015 = vadd.f32 %v8545, %v8975
      %v9016 = vadd.f32 %v8546, %v8980
      %v9017 = vadd.f32 %v8547, %v8983
      %v9018 = vld [vmem:[%s4] sm:$0x1]
      %v9020 = vlaneseq
      %v9021 = vshrl.u32 %v9020, 7
      %v9022 = vsub.s32 0, %v9021
      %v9023 = vrot.slane %v9018, %v9022
      %v9025 = vadd.f32 %v8986, %v9023
      %v9026 = vadd.f32 %v8987, %v9023
      %v9027 = vadd.f32 %v8988, %v9023
      %v9028 = vadd.f32 %v8989, %v9023
      %v9029 = vadd.f32 %v8990, %v9023
      %v9030 = vadd.f32 %v8991, %v9023
      %v9031 = vadd.f32 %v8992, %v9023
      %v9032 = vadd.f32 %v8993, %v9023
      %v9033 = vadd.f32 %v8994, %v9023
      %v9034 = vadd.f32 %v8995, %v9023
      %v9035 = vadd.f32 %v8996, %v9023
      %v9036 = vadd.f32 %v8997, %v9023
      %v9037 = vadd.f32 %v8998, %v9023
      %v9038 = vadd.f32 %v8999, %v9023
      %v9039 = vadd.f32 %v9000, %v9023
      %v9040 = vadd.f32 %v9001, %v9023
      %v9041 = vadd.f32 %v9002, %v9023
      %v9042 = vadd.f32 %v9003, %v9023
      %v9043 = vadd.f32 %v9004, %v9023
      %v9044 = vadd.f32 %v9005, %v9023
      %v9045 = vadd.f32 %v9006, %v9023
      %v9046 = vadd.f32 %v9007, %v9023
      %v9047 = vadd.f32 %v9008, %v9023
      %v9048 = vadd.f32 %v9009, %v9023
      %v9049 = vadd.f32 %v9010, %v9023
      %v9050 = vadd.f32 %v9011, %v9023
      %v9051 = vadd.f32 %v9012, %v9023
      %v9052 = vadd.f32 %v9013, %v9023
      %v9053 = vadd.f32 %v9014, %v9023
      %v9054 = vadd.f32 %v9015, %v9023
      %v9055 = vadd.f32 %v9016, %v9023
      %v9056 = vadd.f32 %v9017, %v9023
      %v9057 = vmax.f32 %v9025, 0.0
      %v9058 = vmax.f32 %v9026, 0.0
      %v9059 = vmax.f32 %v9027, 0.0
      %v9060 = vmax.f32 %v9028, 0.0
      %v9061 = vmax.f32 %v9029, 0.0
      %v9062 = vmax.f32 %v9030, 0.0
      %v9063 = vmax.f32 %v9031, 0.0
      %v9064 = vmax.f32 %v9032, 0.0
      %v9065 = vmax.f32 %v9033, 0.0
      %v9066 = vmax.f32 %v9034, 0.0
      %v9067 = vmax.f32 %v9035, 0.0
      %v9068 = vmax.f32 %v9036, 0.0
      %v9069 = vmax.f32 %v9037, 0.0
      %v9070 = vmax.f32 %v9038, 0.0
      %v9071 = vmax.f32 %v9039, 0.0
      %v9072 = vmax.f32 %v9040, 0.0
      %v9073 = vmax.f32 %v9041, 0.0
      %v9074 = vmax.f32 %v9042, 0.0
      %v9075 = vmax.f32 %v9043, 0.0
      %v9076 = vmax.f32 %v9044, 0.0
      %v9077 = vmax.f32 %v9045, 0.0
      %v9078 = vmax.f32 %v9046, 0.0
      %v9079 = vmax.f32 %v9047, 0.0
      %v9080 = vmax.f32 %v9048, 0.0
      %v9081 = vmax.f32 %v9049, 0.0
      %v9082 = vmax.f32 %v9050, 0.0
      %v9083 = vmax.f32 %v9051, 0.0
      %v9084 = vmax.f32 %v9052, 0.0
      %v9085 = vmax.f32 %v9053, 0.0
      %v9086 = vmax.f32 %v9054, 0.0
      %v9087 = vmax.f32 %v9055, 0.0
      %v9088 = vmax.f32 %v9056, 0.0
      %9089 = vxpose.xlu0.b32.start [1/16] %v9057, 128
      %9090 = vxpose.xlu0.b32.cont [2/16] %v9058, 128
      %9091 = vxpose.xlu0.b32.cont [3/16] %v9059, 128
      %9092 = vxpose.xlu0.b32.cont [4/16] %v9060, 128
      %9093 = vxpose.xlu0.b32.cont [5/16] %v9061, 128
      %9094 = vxpose.xlu0.b32.cont [6/16] %v9062, 128
      %9095 = vxpose.xlu0.b32.cont [7/16] %v9063, 128
      %9096 = vxpose.xlu0.b32.cont [8/16] %v9064, 128
      %9097 = vxpose.xlu0.b32.cont [9/16] %v9065, 128
      %9098 = vxpose.xlu0.b32.cont [10/16] %v9066, 128
      %9099 = vxpose.xlu0.b32.cont [11/16] %v9067, 128
      %9100 = vxpose.xlu0.b32.cont [12/16] %v9068, 128
      %9101 = vxpose.xlu0.b32.cont [13/16] %v9069, 128
      %9102 = vxpose.xlu0.b32.cont [14/16] %v9070, 128
      %9103 = vxpose.xlu0.b32.cont [15/16] %v9071, 128
      %9104 = vxpose.xlu0.b32.end [16/16] %v9072, 128
      %v9105 = vpop.trf.xlu0
      %v9106 = vpop.trf.xlu0
      %v9107 = vpop.trf.xlu0
      %v9108 = vpop.trf.xlu0
      %v9109 = vpop.trf.xlu0
      %v9110 = vpop.trf.xlu0
      %v9111 = vpop.trf.xlu0
      %v9112 = vpop.trf.xlu0
      %v9113 = vpop.trf.xlu0
      %v9114 = vpop.trf.xlu0
      %v9115 = vpop.trf.xlu0
      %v9116 = vpop.trf.xlu0
      %v9117 = vpop.trf.xlu0
      %v9118 = vpop.trf.xlu0
      %v9119 = vpop.trf.xlu0
      %v9120 = vpop.trf.xlu0
      %9121 = vxpose.xlu0.b32.start [1/16] %v9073, 128
      %9122 = vxpose.xlu0.b32.cont [2/16] %v9074, 128
      %9123 = vxpose.xlu0.b32.cont [3/16] %v9075, 128
      %9124 = vxpose.xlu0.b32.cont [4/16] %v9076, 128
      %9125 = vxpose.xlu0.b32.cont [5/16] %v9077, 128
      %9126 = vxpose.xlu0.b32.cont [6/16] %v9078, 128
      %9127 = vxpose.xlu0.b32.cont [7/16] %v9079, 128
      %9128 = vxpose.xlu0.b32.cont [8/16] %v9080, 128
      %9129 = vxpose.xlu0.b32.cont [9/16] %v9081, 128
      %9130 = vxpose.xlu0.b32.cont [10/16] %v9082, 128
      %9131 = vxpose.xlu0.b32.cont [11/16] %v9083, 128
      %9132 = vxpose.xlu0.b32.cont [12/16] %v9084, 128
      %9133 = vxpose.xlu0.b32.cont [13/16] %v9085, 128
      %9134 = vxpose.xlu0.b32.cont [14/16] %v9086, 128
      %9135 = vxpose.xlu0.b32.cont [15/16] %v9087, 128
      %9136 = vxpose.xlu0.b32.end [16/16] %v9088, 128
      %v9137 = vpop.trf.xlu0
      %v9138 = vpop.trf.xlu0
      %v9139 = vpop.trf.xlu0
      %v9140 = vpop.trf.xlu0
      %v9141 = vpop.trf.xlu0
      %v9142 = vpop.trf.xlu0
      %v9143 = vpop.trf.xlu0
      %v9144 = vpop.trf.xlu0
      %v9145 = vpop.trf.xlu0
      %v9146 = vpop.trf.xlu0
      %v9147 = vpop.trf.xlu0
      %v9148 = vpop.trf.xlu0
      %v9149 = vpop.trf.xlu0
      %v9150 = vpop.trf.xlu0
      %v9151 = vpop.trf.xlu0
      %v9152 = vpop.trf.xlu0
      %9153 = vst [vmem:[%s246] sm:$0xff] %v9105
      %9154 = vst [vmem:[%s246 + $0x8] sm:$0xff] %v9137
      %s9155 = smul.u32 2, %s21
      %p9156 = scmp.lt.s32.totalorder %s20, 1
      %s9157 = scalar_select %p9156, %s20, 1
      %p9158 = scmp.lt.s32.totalorder %s9155, 1
      %s9159 = scalar_select %p9158, %s9155, 1
      %s9160 = smul.addr %s9157, 2
      %s9161 = sadd.s32 %s9159, %s9160
      %s9162 = smul.addr %s9161, 8
      %s9163 = scalar_lea.vmem %s5, %s9162
      // Predicated region
      $region45: #{double_conv_forward.1} parent=39 // pred_check
        %p9164 = pneg %p158
      $region46: #{double_conv_forward.1} parent=39 // pred_check_branch
        %9166 = sbr.rel (%p9164) target = $region48
      $region47: #{double_conv_forward.1} parent=39 // pred_region
        %s9167 = smul.u32 2, %s21
      $region48: #{double_conv_forward.1} parent=39 // pred_fallthru
        _
    $region40: #{double_conv_forward.1} parent=5 // pred_fallthru
      _
    %p9168 = scmp.le.s32.totalorder 2, %s11
    // Predicated region
    $region49: #{double_conv_forward.1} parent=5 // pred_check
      %p9169 = pneg %p9168
    $region50: #{double_conv_forward.1} parent=5 // pred_check_branch
      %9171 = sbr.rel (%p9169) target = $region52
    $region51: #{double_conv_forward.1} parent=5 // pred_region
      %s9172 = ssub.s32 %s11, 2
      // Predicated region
      $region53: #{double_conv_forward.1} parent=51 // pred_check
        %p9173 = pneg %p164
      $region54: #{double_conv_forward.1} parent=51 // pred_check_branch
        %9175 = sbr.rel (%p9173) target = $region56
      $region55: #{double_conv_forward.1} parent=51 // pred_region
        %s9176 = smul.u32 2, %s23
        %p9177 = scmp.lt.s32.totalorder %s22, 1
        %s9178 = scalar_select %p9177, %s22, 1
        %p9179 = scmp.lt.s32.totalorder %s9176, 1
        %s9180 = scalar_select %p9179, %s9176, 1
        %s9181 = smul.addr %s9178, 2
        %s9182 = sadd.s32 %s9180, %s9181
        %s9183 = smul.addr %s9182, 8
        %s9184 = scalar_lea.vmem %s5, %s9183
      $region56: #{double_conv_forward.1} parent=51 // pred_fallthru
        _
    $region52: #{double_conv_forward.1} parent=5 // pred_fallthru
      _
  $region6: #{double_conv_forward.1} parent=0 // loop_footer
    %s15 = sadd.s32 1, %s11
  $region7: #{double_conv_forward.1} parent=0 // loop_footer_branch
    %10 = sbr.rel target = $region3
  $region8: #{double_conv_forward.1} parent=0 // loop_exit
    _

</llo_original>
